<compile_context>
chip_gen: v5e
topology: v5e:2x2
jax: 0.10.0
libtpu: 0.0.40
codegen_flags: <defaults>
</compile_context>

<pallas_src>
import math

import numpy as np
import jax
import jax.numpy as jnp
from jax import lax
from jax.experimental import pallas as pl
from jax.experimental.pallas import tpu as pltpu

_EPS = 1e-5          # BatchNorm3d / LayerNorm default eps in PyTorch
_CIN_PAD = 8         # pad the 3 input channels to 8 (aligned matmul K + mask slot)
_COUTS = (32, 64, 128)


# ----------------------------------------------------------------------------
# Fused kernel factory (all shapes static / closed over; W == 1 collapsed)
# ----------------------------------------------------------------------------
def _make_fused_kernel(B, D, H, Dout):
    Ph = H + 2
    sD = Ph * B                       # row stride of one padded frame slab
    Np = (D + 2) * sD                 # rows of the padded (D+2, H+2, B) lattice
    G = ((sD + B + 7) // 8) * 8       # guard rows >= max |tap offset|, 8-aligned
    NT = Np + 2 * G
    N = B * D * H                     # real voxels (BatchNorm sample count, W==1)
    inv_n = 1.0 / N
    inv_d = 1.0 / D
    C3 = _COUTS[2]
    # 9 surviving taps (kw == 1): flat row offset of tap (kd, kh)
    offsets = [(kd - 1) * sD + (kh - 1) * B for kd in range(3) for kh in range(3)]

    def conv_bn_relu(src_ref, w_ref, p_ref, mask, dst_ref):
        # 9 shifted-tap MXU matmuls, accumulated in f32 (fits in vregs).
        z = None
        for t, off in enumerate(offsets):
            a = src_ref[pl.ds(G + off, Np), :]
            c = jnp.dot(a, w_ref[t], preferred_element_type=jnp.float32)
            z = c if z is None else z + c
        p = p_ref[...]                                   # (3, Cout): bias, gamma, beta
        z = z + p[0:1, :]                                # conv bias
        # Fused BatchNorm3d (training-mode batch stats) over interior rows only.
        zm = z * mask                                    # halo rows -> 0
        s1 = jnp.sum(zm, axis=0, keepdims=True)
        s2 = jnp.sum(zm * zm, axis=0, keepdims=True)
        mu = s1 * inv_n
        var = s2 * inv_n - mu * mu
        scale = lax.rsqrt(var + _EPS) * p[1:2, :]
        shift = p[2:3, :] - mu * scale
        act = jnp.maximum(z * scale + shift, 0.0)
        # Halo rows re-zeroed: they are the next layer's zero padding.
        dst_ref[pl.ds(G, Np), :] = act * mask

    def kernel(x_ref, w1_ref, p1_ref, w2_ref, p2_ref, w3_hbm, p3_ref, wl_hbm,
               lp_ref, o_ref, buf1, buf2, buf3, mean_buf, w3_vmem, wl_vmem, sem):
        # Kick off the big weight DMAs immediately; wait right before first use
        # so the transfers overlap layer-1/2 compute.
        cp_w3 = pltpu.make_async_copy(w3_hbm, w3_vmem, sem.at[0])
        cp_wl = pltpu.make_async_copy(wl_hbm, wl_vmem, sem.at[1])
        cp_w3.start()
        cp_wl.start()

        # Zero only the guard rows (never written afterwards); lattice rows
        # [G, G+Np) are fully rewritten every layer.
        for buf, c in ((buf1, _COUTS[0]), (buf2, _COUTS[1]), (buf3, _COUTS[2])):
            zg = jnp.zeros((G, c), jnp.float32)
            buf[pl.ds(0, G), :] = zg
            buf[pl.ds(G + Np, G), :] = zg

        # Interior mask rides in the last (zero-weight) padded input channel.
        mask = x_ref[pl.ds(G, Np), _CIN_PAD - 1:_CIN_PAD]    # (Np, 1)

        conv_bn_relu(x_ref, w1_ref, p1_ref, mask, buf1)
        conv_bn_relu(buf1, w2_ref, p2_ref, mask, buf2)
        cp_w3.wait()
        conv_bn_relu(buf2, w3_vmem, p3_ref, mask, buf3)

        # Frame mean over D: each frame's interior (h=1..H) rows are one
        # contiguous (H*B, 128) slab after the W collapse.
        slab = None
        for d in range(D):
            base = G + ((d + 1) * Ph + 1) * B
            s = buf3[pl.ds(base, H * B), :]
            slab = s if slab is None else slab + s
        slab = slab * inv_d                                   # (H*B, C3)
        # Stage per-site means as one lane-contiguous (B, H*C3) row block.
        for h in range(H):
            mean_buf[:, h * C3:(h + 1) * C3] = slab[h * B:(h + 1) * B, :]

        cp_wl.wait()
        # Single (B, H*128) @ (H*128, Dout) matmul for the Linear layer.
        y = jnp.dot(mean_buf[...], wl_vmem[...], preferred_element_type=jnp.float32)
        lp = lp_ref[...]                                      # (3, Dout)
        y = y + lp[0:1, :]
        # LayerNorm + ReLU
        mu = jnp.mean(y, axis=-1, keepdims=True)
        var = jnp.mean((y - mu) ** 2, axis=-1, keepdims=True)
        o_ref[...] = jnp.maximum(
            (y - mu) * lax.rsqrt(var + _EPS) * lp[1:2, :] + lp[2:3, :], 0.0)

    return kernel, Np, G, NT


# ----------------------------------------------------------------------------
# Wrapper (one-time layout plumbing on the tiny raw input / params)
# ----------------------------------------------------------------------------
def convnet3d_forward(x_ncdhw, params):
    """Pallas forward of ConvNet3D. x_ncdhw: (B, 3, F, K, 1) as in PyTorch."""
    B, Cin, D, H, W = x_ncdhw.shape
    # TODO(synk): W > 1 would need the full 27-tap (D+2,H+2,W+2,B) lattice;
    # run_MG.py feeds a trailing spatial dim of 1, which we specialize here.
    assert W == 1
    assert Cin < _CIN_PAD            # need one spare channel for the mask stash
    Dout = params["proj"][0].shape[-1]
    Ph = H + 2

    kernel, Np, G, NT = _make_fused_kernel(B, D, H, Dout)

    # input -> collapsed padded-flat layout (D+2, H+2, B, Cpad), batch innermost
    x = jnp.transpose(x_ncdhw[:, :, :, :, 0], (2, 3, 0, 1)).astype(jnp.float32)
    x = jnp.pad(x, ((1, 1), (1, 1), (0, 0), (0, _CIN_PAD - Cin)))
    # interior mask (1 = real voxel) stashed in the last padded channel; the
    # matching rows of w1 are zero so it cannot perturb conv1.
    m = np.zeros((D + 2, Ph, B, 1), np.float32)
    m[1:D + 1, 1:H + 1] = 1.0
    x = x.at[..., _CIN_PAD - 1:_CIN_PAD].set(jnp.asarray(m))
    x_flat = jnp.pad(x.reshape(Np, _CIN_PAD), ((G, G), (0, 0)))      # (NT, Cpad)

    # Statically prune the 18 dead taps (kw != 1 only ever reads the zero halo).
    keep = np.array([kd * 9 + kh * 3 + 1 for kd in range(3) for kh in range(3)])

    w1, b1, g1, be1 = params["conv1"]
    w2, b2, g2, be2 = params["conv2"]
    w3, b3, g3, be3 = params["conv3"]
    w1p = jnp.pad(w1[keep], ((0, 0), (0, _CIN_PAD - w1.shape[1]), (0, 0)))
    w2p = w2[keep]
    w3p = w3[keep]
    p1 = jnp.stack((b1, g1, be1))
    p2 = jnp.stack((b2, g2, be2))
    p3 = jnp.stack((b3, g3, be3))

    # Linear weight: fold the PyTorch (C, K, W) flatten order into a site-major
    # (H*W*128, Dout) layout consumed by a single in-kernel matmul.
    wl, bl, gl, bel = params["proj"]
    wlp = jnp.transpose(wl.reshape(_COUTS[2], H * W, Dout), (1, 0, 2))
    wlp = wlp.reshape(H * W * _COUTS[2], Dout)
    lp = jnp.stack((bl, gl, bel))

    return pl.pallas_call(
        kernel,
        out_shape=jax.ShapeDtypeStruct((B, Dout), jnp.float32),
        grid=(1,),
        in_specs=[
            pl.BlockSpec((NT, _CIN_PAD), lambda i: (0, 0)),
            pl.BlockSpec(w1p.shape, lambda i: (0, 0, 0)),
            pl.BlockSpec(p1.shape, lambda i: (0, 0)),
            pl.BlockSpec(w2p.shape, lambda i: (0, 0, 0)),
            pl.BlockSpec(p2.shape, lambda i: (0, 0)),
            pl.BlockSpec(memory_space=pl.ANY),                # w3: manual DMA
            pl.BlockSpec(p3.shape, lambda i: (0, 0)),
            pl.BlockSpec(memory_space=pl.ANY),                # wl: manual DMA
            pl.BlockSpec(lp.shape, lambda i: (0, 0)),
        ],
        out_specs=pl.BlockSpec((B, Dout), lambda i: (0, 0)),
        scratch_shapes=[
            pltpu.VMEM((NT, _COUTS[0]), jnp.float32),
            pltpu.VMEM((NT, _COUTS[1]), jnp.float32),
            pltpu.VMEM((NT, _COUTS[2]), jnp.float32),
            pltpu.VMEM((B, H * W * _COUTS[2]), jnp.float32),  # staged site means
            pltpu.VMEM(w3p.shape, jnp.float32),
            pltpu.VMEM(wlp.shape, jnp.float32),
            pltpu.SemaphoreType.DMA((2,)),
        ],
        compiler_params=pltpu.CompilerParams(dimension_semantics=("arbitrary",)),
    )(x_flat, w1p, p1, w2p, p2, w3p, p3, wlp, lp)


# ----------------------------------------------------------------------------
# Parameters & pure-JAX reference (mirrors the PyTorch module, training-mode BN)
# ----------------------------------------------------------------------------
def init_params(key, num_keypoints, out_dim):
    def conv_p(k, cin, cout):
        k1, k2, k3, k4 = jax.random.split(k, 4)
        fan_in = cin * 27
        w = jax.random.normal(k1, (3, 3, 3, cin, cout), jnp.float32) / math.sqrt(fan_in)
        b = 0.01 * jax.random.normal(k2, (cout,), jnp.float32)
        g = 1.0 + 0.1 * jax.random.normal(k3, (cout,), jnp.float32)
        be = 0.1 * jax.random.normal(k4, (cout,), jnp.float32)
        return w.reshape(27, cin, cout), b, g, be

    k1, k2, k3, k4 = jax.random.split(key, 4)
    din = 128 * num_keypoints
    kw, kb, kg, kbe = jax.random.split(k4, 4)
    return {
        "conv1": conv_p(k1, 3, 32),
        "conv2": conv_p(k2, 32, 64),
        "conv3": conv_p(k3, 64, 128),
        "proj": (
            jax.random.normal(kw, (din, out_dim), jnp.float32) / math.sqrt(din),
            0.01 * jax.random.normal(kb, (out_dim,), jnp.float32),
            1.0 + 0.1 * jax.random.normal(kg, (out_dim,), jnp.float32),
            0.1 * jax.random.normal(kbe, (out_dim,), jnp.float32),
        ),
    }


def reference_forward(x_ncdhw, params):
    """Pure-JAX reference mirroring the PyTorch forward (training-mode BN)."""
    x = jnp.transpose(x_ncdhw, (0, 2, 3, 4, 1)).astype(jnp.float32)
    for name in ("conv1", "conv2", "conv3"):
        w, b, g, be = params[name]
        cin, cout = w.shape[1], w.shape[2]
        wd = w.reshape(3, 3, 3, cin, cout)
        z = lax.conv_general_dilated(
            x, wd, window_strides=(1, 1, 1), padding="SAME",
            dimension_numbers=("NDHWC", "DHWIO", "NDHWC"),
            precision=lax.Precision.HIGHEST) + b
        mu = jnp.mean(z, axis=(0, 1, 2, 3), keepdims=True)
        var = jnp.mean((z - mu) ** 2, axis=(0, 1, 2, 3), keepdims=True)
        x = jnp.maximum(g * (z - mu) / jnp.sqrt(var + _EPS) + be, 0.0)
    B = x.shape[0]
    xm = jnp.mean(x, axis=1)                                 # mean over frames
    hm = jnp.transpose(xm, (0, 3, 1, 2)).reshape(B, -1)      # PyTorch (C,K,W) order
    wl, bl, gl, bel = params["proj"]
    y = jnp.dot(hm, wl, precision=lax.Precision.HIGHEST) + bl
    mu = jnp.mean(y, axis=-1, keepdims=True)
    var = jnp.mean((y - mu) ** 2, axis=-1, keepdims=True)
    return jnp.maximum(gl * (y - mu) / jnp.sqrt(var + _EPS) + bel, 0.0)


if __name__ == "__main__":
    # x: (B, C=3, F=frames, K=keypoints, W=1); Linear in-features = 128 * (K*W)
    B, Cin, Fr, K, W = 2, 3, 8, 8, 1
    num_keypoints = K * W  # 8
    out_dim = 64

    key = jax.random.PRNGKey(0)
    kx, kp = jax.random.split(key)
    x = jax.random.normal(kx, (B, Cin, Fr, K, W), jnp.float32)  # PyTorch NCDHW
    params = init_params(kp, num_keypoints, out_dim)

    y = convnet3d_forward(x, params)
    jax.block_until_ready(y)
    assert y.shape == (B, out_dim)

    y_ref = reference_forward(x, params)
    assert jnp.allclose(y, y_ref, rtol=1e-3, atol=1e-3), float(
        jnp.max(jnp.abs(y - y_ref))
    )
    print("KERNEL_OK")
</pallas_src>

<mosaic_0001>
module attributes {stable_mosaic.version = 11 : i64} {
  func.func @kernel(%arg0: i32, %arg1: memref<248x8xf32, #tpu.memory_space<vmem>>, %arg2: memref<9x8x32xf32, #tpu.memory_space<vmem>>, %arg3: memref<3x32xf32, #tpu.memory_space<vmem>>, %arg4: memref<9x32x64xf32, #tpu.memory_space<vmem>>, %arg5: memref<3x64xf32, #tpu.memory_space<vmem>>, %arg6: memref<9x64x128xf32, #tpu.memory_space<any>>, %arg7: memref<3x128xf32, #tpu.memory_space<vmem>>, %arg8: memref<1024x64xf32, #tpu.memory_space<any>>, %arg9: memref<3x64xf32, #tpu.memory_space<vmem>>, %arg10: memref<2x64xf32, #tpu.memory_space<vmem>>, %arg11: memref<248x32xf32, #tpu.memory_space<vmem>>, %arg12: memref<248x64xf32, #tpu.memory_space<vmem>>, %arg13: memref<248x128xf32, #tpu.memory_space<vmem>>, %arg14: memref<2x1024xf32, #tpu.memory_space<vmem>>, %arg15: memref<9x64x128xf32, #tpu.memory_space<vmem>>, %arg16: memref<1024x64xf32, #tpu.memory_space<vmem>>, %arg17: memref<2x!tpu.dma_semaphore, #tpu.memory_space<semaphore_mem>>) attributes {dimension_semantics = [#tpu.dimension_semantics<arbitrary>], iteration_bounds = array<i64: 1>, scalar_prefetch = 0 : i64, scratch_operands = 7 : i64, tpu.core_type = #tpu.core_type<tc>, window_params = [{pipeline_mode = #tpu.pipeline_mode<synchronous>, transform_indices = @transform_0, window_bounds = array<i64: 248, 8>}, {pipeline_mode = #tpu.pipeline_mode<synchronous>, transform_indices = @transform_1, window_bounds = array<i64: 9, 8, 32>}, {pipeline_mode = #tpu.pipeline_mode<synchronous>, transform_indices = @transform_2, window_bounds = array<i64: 3, 32>}, {pipeline_mode = #tpu.pipeline_mode<synchronous>, transform_indices = @transform_3, window_bounds = array<i64: 9, 32, 64>}, {pipeline_mode = #tpu.pipeline_mode<synchronous>, transform_indices = @transform_4, window_bounds = array<i64: 3, 64>}, {}, {pipeline_mode = #tpu.pipeline_mode<synchronous>, transform_indices = @transform_6, window_bounds = array<i64: 3, 128>}, {}, {pipeline_mode = #tpu.pipeline_mode<synchronous>, transform_indices = @transform_8, window_bounds = array<i64: 3, 64>}, {pipeline_mode = #tpu.pipeline_mode<synchronous>, transform_indices = @transform_9, window_bounds = array<i64: 2, 64>}]} {
    %c0_i32 = arith.constant 0 : i32
    %0 = tpu.memref_slice %arg17[%c0_i32] : memref<2x!tpu.dma_semaphore, #tpu.memory_space<semaphore_mem>> -> memref<1x!tpu.dma_semaphore, #tpu.memory_space<semaphore_mem>>
    %1 = tpu.memref_squeeze %0 : memref<1x!tpu.dma_semaphore, #tpu.memory_space<semaphore_mem>> -> memref<!tpu.dma_semaphore, #tpu.memory_space<semaphore_mem>>
    tpu.enqueue_dma source(%arg6 : memref<9x64x128xf32, #tpu.memory_space<any>>) target(%arg15 : memref<9x64x128xf32, #tpu.memory_space<vmem>>) target_semaphore(%1 : memref<!tpu.dma_semaphore, #tpu.memory_space<semaphore_mem>>)
    %c1_i32 = arith.constant 1 : i32
    %2 = tpu.memref_slice %arg17[%c1_i32] : memref<2x!tpu.dma_semaphore, #tpu.memory_space<semaphore_mem>> -> memref<1x!tpu.dma_semaphore, #tpu.memory_space<semaphore_mem>>
    %3 = tpu.memref_squeeze %2 : memref<1x!tpu.dma_semaphore, #tpu.memory_space<semaphore_mem>> -> memref<!tpu.dma_semaphore, #tpu.memory_space<semaphore_mem>>
    tpu.enqueue_dma source(%arg8 : memref<1024x64xf32, #tpu.memory_space<any>>) target(%arg16 : memref<1024x64xf32, #tpu.memory_space<vmem>>) target_semaphore(%3 : memref<!tpu.dma_semaphore, #tpu.memory_space<semaphore_mem>>)
    %cst = arith.constant 0.000000e+00 : f32
    %4 = vector.broadcast %cst : f32 to vector<24x32xf32>
    %c0 = arith.constant 0 : index
    %c0_0 = arith.constant 0 : index
    %5 = vector.load %arg11[%c0, %c0_0] : memref<248x32xf32, #tpu.memory_space<vmem>>, vector<24x32xf32>
    tpu.vector_store %arg11[%c0, %c0_0], %4 {strides = array<i32>} : memref<248x32xf32, #tpu.memory_space<vmem>>, vector<24x32xf32>,
    %c224 = arith.constant 224 : index
    %c0_1 = arith.constant 0 : index
    %6 = vector.load %arg11[%c224, %c0_1] : memref<248x32xf32, #tpu.memory_space<vmem>>, vector<24x32xf32>
    tpu.vector_store %arg11[%c224, %c0_1], %4 {strides = array<i32>} : memref<248x32xf32, #tpu.memory_space<vmem>>, vector<24x32xf32>,
    %cst_2 = arith.constant 0.000000e+00 : f32
    %7 = vector.broadcast %cst_2 : f32 to vector<24x64xf32>
    %c0_3 = arith.constant 0 : index
    %c0_4 = arith.constant 0 : index
    %8 = vector.load %arg12[%c0_3, %c0_4] : memref<248x64xf32, #tpu.memory_space<vmem>>, vector<24x64xf32>
    tpu.vector_store %arg12[%c0_3, %c0_4], %7 {strides = array<i32>} : memref<248x64xf32, #tpu.memory_space<vmem>>, vector<24x64xf32>,
    %c224_5 = arith.constant 224 : index
    %c0_6 = arith.constant 0 : index
    %9 = vector.load %arg12[%c224_5, %c0_6] : memref<248x64xf32, #tpu.memory_space<vmem>>, vector<24x64xf32>
    tpu.vector_store %arg12[%c224_5, %c0_6], %7 {strides = array<i32>} : memref<248x64xf32, #tpu.memory_space<vmem>>, vector<24x64xf32>,
    %cst_7 = arith.constant 0.000000e+00 : f32
    %10 = vector.broadcast %cst_7 : f32 to vector<24x128xf32>
    %c0_8 = arith.constant 0 : index
    %c0_9 = arith.constant 0 : index
    %11 = vector.load %arg13[%c0_8, %c0_9] : memref<248x128xf32, #tpu.memory_space<vmem>>, vector<24x128xf32>
    tpu.vector_store %arg13[%c0_8, %c0_9], %10 {strides = array<i32>} : memref<248x128xf32, #tpu.memory_space<vmem>>, vector<24x128xf32>,
    %c224_10 = arith.constant 224 : index
    %c0_11 = arith.constant 0 : index
    %12 = vector.load %arg13[%c224_10, %c0_11] : memref<248x128xf32, #tpu.memory_space<vmem>>, vector<24x128xf32>
    tpu.vector_store %arg13[%c224_10, %c0_11], %10 {strides = array<i32>} : memref<248x128xf32, #tpu.memory_space<vmem>>, vector<24x128xf32>,
    %c24 = arith.constant 24 : index
    %c7 = arith.constant 7 : index
    %13 = vector.load %arg1[%c24, %c7] : memref<248x8xf32, #tpu.memory_space<vmem>>, vector<200x1xf32>
    %c2 = arith.constant 2 : index
    %c0_12 = arith.constant 0 : index
    %14 = vector.load %arg1[%c2, %c0_12] : memref<248x8xf32, #tpu.memory_space<vmem>>, vector<200x8xf32>
    %c0_13 = arith.constant 0 : index
    %c0_14 = arith.constant 0 : index
    %c0_15 = arith.constant 0 : index
    %15 = vector.load %arg2[%c0_13, %c0_14, %c0_15] : memref<9x8x32xf32, #tpu.memory_space<vmem>>, vector<1x8x32xf32>
    %16 = vector.shape_cast %15 : vector<1x8x32xf32> to vector<8x32xf32>
    %cst_16 = arith.constant dense<0.000000e+00> : vector<200x32xf32>
    %17 = tpu.matmul %14, %16, %cst_16 {dimension_numbers = #tpu.dot_dimension_numbers<[1], [0], [0], [1], [0, 0, 1, 1], [], []>} : vector<200x8xf32>, vector<8x32xf32>, vector<200x32xf32> -> vector<200x32xf32>
    %c4 = arith.constant 4 : index
    %c0_17 = arith.constant 0 : index
    %18 = vector.load %arg1[%c4, %c0_17] : memref<248x8xf32, #tpu.memory_space<vmem>>, vector<200x8xf32>
    %c1 = arith.constant 1 : index
    %c0_18 = arith.constant 0 : index
    %c0_19 = arith.constant 0 : index
    %19 = vector.load %arg2[%c1, %c0_18, %c0_19] : memref<9x8x32xf32, #tpu.memory_space<vmem>>, vector<1x8x32xf32>
    %20 = vector.shape_cast %19 : vector<1x8x32xf32> to vector<8x32xf32>
    %cst_20 = arith.constant dense<0.000000e+00> : vector<200x32xf32>
    %21 = tpu.matmul %18, %20, %cst_20 {dimension_numbers = #tpu.dot_dimension_numbers<[1], [0], [0], [1], [0, 0, 1, 1], [], []>} : vector<200x8xf32>, vector<8x32xf32>, vector<200x32xf32> -> vector<200x32xf32>
    %22 = arith.addf %17, %21 : vector<200x32xf32>
    %c6 = arith.constant 6 : index
    %c0_21 = arith.constant 0 : index
    %23 = vector.load %arg1[%c6, %c0_21] : memref<248x8xf32, #tpu.memory_space<vmem>>, vector<200x8xf32>
    %c2_22 = arith.constant 2 : index
    %c0_23 = arith.constant 0 : index
    %c0_24 = arith.constant 0 : index
    %24 = vector.load %arg2[%c2_22, %c0_23, %c0_24] : memref<9x8x32xf32, #tpu.memory_space<vmem>>, vector<1x8x32xf32>
    %25 = vector.shape_cast %24 : vector<1x8x32xf32> to vector<8x32xf32>
    %cst_25 = arith.constant dense<0.000000e+00> : vector<200x32xf32>
    %26 = tpu.matmul %23, %25, %cst_25 {dimension_numbers = #tpu.dot_dimension_numbers<[1], [0], [0], [1], [0, 0, 1, 1], [], []>} : vector<200x8xf32>, vector<8x32xf32>, vector<200x32xf32> -> vector<200x32xf32>
    %27 = arith.addf %22, %26 : vector<200x32xf32>
    %c22 = arith.constant 22 : index
    %c0_26 = arith.constant 0 : index
    %28 = vector.load %arg1[%c22, %c0_26] : memref<248x8xf32, #tpu.memory_space<vmem>>, vector<200x8xf32>
    %c3 = arith.constant 3 : index
    %c0_27 = arith.constant 0 : index
    %c0_28 = arith.constant 0 : index
    %29 = vector.load %arg2[%c3, %c0_27, %c0_28] : memref<9x8x32xf32, #tpu.memory_space<vmem>>, vector<1x8x32xf32>
    %30 = vector.shape_cast %29 : vector<1x8x32xf32> to vector<8x32xf32>
    %cst_29 = arith.constant dense<0.000000e+00> : vector<200x32xf32>
    %31 = tpu.matmul %28, %30, %cst_29 {dimension_numbers = #tpu.dot_dimension_numbers<[1], [0], [0], [1], [0, 0, 1, 1], [], []>} : vector<200x8xf32>, vector<8x32xf32>, vector<200x32xf32> -> vector<200x32xf32>
    %32 = arith.addf %27, %31 : vector<200x32xf32>
    %c24_30 = arith.constant 24 : index
    %c0_31 = arith.constant 0 : index
    %33 = vector.load %arg1[%c24_30, %c0_31] : memref<248x8xf32, #tpu.memory_space<vmem>>, vector<200x8xf32>
    %c4_32 = arith.constant 4 : index
    %c0_33 = arith.constant 0 : index
    %c0_34 = arith.constant 0 : index
    %34 = vector.load %arg2[%c4_32, %c0_33, %c0_34] : memref<9x8x32xf32, #tpu.memory_space<vmem>>, vector<1x8x32xf32>
    %35 = vector.shape_cast %34 : vector<1x8x32xf32> to vector<8x32xf32>
    %cst_35 = arith.constant dense<0.000000e+00> : vector<200x32xf32>
    %36 = tpu.matmul %33, %35, %cst_35 {dimension_numbers = #tpu.dot_dimension_numbers<[1], [0], [0], [1], [0, 0, 1, 1], [], []>} : vector<200x8xf32>, vector<8x32xf32>, vector<200x32xf32> -> vector<200x32xf32>
    %37 = arith.addf %32, %36 : vector<200x32xf32>
    %c26 = arith.constant 26 : index
    %c0_36 = arith.constant 0 : index
    %38 = vector.load %arg1[%c26, %c0_36] : memref<248x8xf32, #tpu.memory_space<vmem>>, vector<200x8xf32>
    %c5 = arith.constant 5 : index
    %c0_37 = arith.constant 0 : index
    %c0_38 = arith.constant 0 : index
    %39 = vector.load %arg2[%c5, %c0_37, %c0_38] : memref<9x8x32xf32, #tpu.memory_space<vmem>>, vector<1x8x32xf32>
    %40 = vector.shape_cast %39 : vector<1x8x32xf32> to vector<8x32xf32>
    %cst_39 = arith.constant dense<0.000000e+00> : vector<200x32xf32>
    %41 = tpu.matmul %38, %40, %cst_39 {dimension_numbers = #tpu.dot_dimension_numbers<[1], [0], [0], [1], [0, 0, 1, 1], [], []>} : vector<200x8xf32>, vector<8x32xf32>, vector<200x32xf32> -> vector<200x32xf32>
    %42 = arith.addf %37, %41 : vector<200x32xf32>
    %c42 = arith.constant 42 : index
    %c0_40 = arith.constant 0 : index
    %43 = vector.load %arg1[%c42, %c0_40] : memref<248x8xf32, #tpu.memory_space<vmem>>, vector<200x8xf32>
    %c6_41 = arith.constant 6 : index
    %c0_42 = arith.constant 0 : index
    %c0_43 = arith.constant 0 : index
    %44 = vector.load %arg2[%c6_41, %c0_42, %c0_43] : memref<9x8x32xf32, #tpu.memory_space<vmem>>, vector<1x8x32xf32>
    %45 = vector.shape_cast %44 : vector<1x8x32xf32> to vector<8x32xf32>
    %cst_44 = arith.constant dense<0.000000e+00> : vector<200x32xf32>
    %46 = tpu.matmul %43, %45, %cst_44 {dimension_numbers = #tpu.dot_dimension_numbers<[1], [0], [0], [1], [0, 0, 1, 1], [], []>} : vector<200x8xf32>, vector<8x32xf32>, vector<200x32xf32> -> vector<200x32xf32>
    %47 = arith.addf %42, %46 : vector<200x32xf32>
    %c44 = arith.constant 44 : index
    %c0_45 = arith.constant 0 : index
    %48 = vector.load %arg1[%c44, %c0_45] : memref<248x8xf32, #tpu.memory_space<vmem>>, vector<200x8xf32>
    %c7_46 = arith.constant 7 : index
    %c0_47 = arith.constant 0 : index
    %c0_48 = arith.constant 0 : index
    %49 = vector.load %arg2[%c7_46, %c0_47, %c0_48] : memref<9x8x32xf32, #tpu.memory_space<vmem>>, vector<1x8x32xf32>
    %50 = vector.shape_cast %49 : vector<1x8x32xf32> to vector<8x32xf32>
    %cst_49 = arith.constant dense<0.000000e+00> : vector<200x32xf32>
    %51 = tpu.matmul %48, %50, %cst_49 {dimension_numbers = #tpu.dot_dimension_numbers<[1], [0], [0], [1], [0, 0, 1, 1], [], []>} : vector<200x8xf32>, vector<8x32xf32>, vector<200x32xf32> -> vector<200x32xf32>
    %52 = arith.addf %47, %51 : vector<200x32xf32>
    %c46 = arith.constant 46 : index
    %c0_50 = arith.constant 0 : index
    %53 = vector.load %arg1[%c46, %c0_50] : memref<248x8xf32, #tpu.memory_space<vmem>>, vector<200x8xf32>
    %c8 = arith.constant 8 : index
    %c0_51 = arith.constant 0 : index
    %c0_52 = arith.constant 0 : index
    %54 = vector.load %arg2[%c8, %c0_51, %c0_52] : memref<9x8x32xf32, #tpu.memory_space<vmem>>, vector<1x8x32xf32>
    %55 = vector.shape_cast %54 : vector<1x8x32xf32> to vector<8x32xf32>
    %cst_53 = arith.constant dense<0.000000e+00> : vector<200x32xf32>
    %56 = tpu.matmul %53, %55, %cst_53 {dimension_numbers = #tpu.dot_dimension_numbers<[1], [0], [0], [1], [0, 0, 1, 1], [], []>} : vector<200x8xf32>, vector<8x32xf32>, vector<200x32xf32> -> vector<200x32xf32>
    %57 = arith.addf %52, %56 : vector<200x32xf32>
    %c0_54 = arith.constant 0 : index
    %c0_55 = arith.constant 0 : index
    %58 = vector.load %arg3[%c0_54, %c0_55] : memref<3x32xf32, #tpu.memory_space<vmem>>, vector<3x32xf32>
    %59 = vector.extract_strided_slice %58 {offsets = [0, 0], sizes = [1, 32], strides = [1, 1]} : vector<3x32xf32> to vector<1x32xf32>
    %60 = vector.broadcast %59 : vector<1x32xf32> to vector<200x32xf32>
    %61 = arith.addf %57, %60 : vector<200x32xf32>
    %62 = vector.broadcast %13 : vector<200x1xf32> to vector<200x32xf32>
    %63 = arith.mulf %61, %62 : vector<200x32xf32>
    %cst_56 = arith.constant dense<0.000000e+00> : vector<32xf32>
    %64 = vector.multi_reduction <add>, %63, %cst_56 [0] : vector<200x32xf32> to vector<32xf32>
    %65 = vector.shape_cast %64 : vector<32xf32> to vector<1x32xf32>
    %66 = arith.mulf %63, %63 : vector<200x32xf32>
    %cst_57 = arith.constant dense<0.000000e+00> : vector<32xf32>
    %67 = vector.multi_reduction <add>, %66, %cst_57 [0] : vector<200x32xf32> to vector<32xf32>
    %68 = vector.shape_cast %67 : vector<32xf32> to vector<1x32xf32>
    %cst_58 = arith.constant 7.812500e-03 : f32
    %69 = vector.broadcast %cst_58 : f32 to vector<1x32xf32>
    %70 = arith.mulf %65, %69 : vector<1x32xf32>
    %cst_59 = arith.constant 7.812500e-03 : f32
    %71 = vector.broadcast %cst_59 : f32 to vector<1x32xf32>
    %72 = arith.mulf %68, %71 : vector<1x32xf32>
    %73 = arith.mulf %70, %70 : vector<1x32xf32>
    %74 = arith.subf %72, %73 : vector<1x32xf32>
    %cst_60 = arith.constant 9.99999974E-6 : f32
    %75 = vector.broadcast %cst_60 : f32 to vector<1x32xf32>
    %76 = arith.addf %74, %75 : vector<1x32xf32>
    %77 = math.rsqrt %76 : vector<1x32xf32>
    %78 = vector.extract_strided_slice %58 {offsets = [1, 0], sizes = [1, 32], strides = [1, 1]} : vector<3x32xf32> to vector<1x32xf32>
    %79 = arith.mulf %77, %78 : vector<1x32xf32>
    %80 = vector.extract_strided_slice %58 {offsets = [2, 0], sizes = [1, 32], strides = [1, 1]} : vector<3x32xf32> to vector<1x32xf32>
    %81 = arith.mulf %70, %79 : vector<1x32xf32>
    %82 = arith.subf %80, %81 : vector<1x32xf32>
    %83 = vector.broadcast %79 : vector<1x32xf32> to vector<200x32xf32>
    %84 = arith.mulf %61, %83 : vector<200x32xf32>
    %85 = vector.broadcast %82 : vector<1x32xf32> to vector<200x32xf32>
    %86 = arith.addf %84, %85 : vector<200x32xf32>
    %cst_61 = arith.constant 0.000000e+00 : f32
    %87 = vector.broadcast %cst_61 : f32 to vector<200x32xf32>
    %88 = arith.maximumf %86, %87 : vector<200x32xf32>
    %89 = vector.broadcast %13 : vector<200x1xf32> to vector<200x32xf32>
    %90 = arith.mulf %88, %89 : vector<200x32xf32>
    %c24_62 = arith.constant 24 : index
    %c0_63 = arith.constant 0 : index
    %91 = vector.load %arg11[%c24_62, %c0_63] : memref<248x32xf32, #tpu.memory_space<vmem>>, vector<200x32xf32>
    tpu.vector_store %arg11[%c24_62, %c0_63], %90 {strides = array<i32>} : memref<248x32xf32, #tpu.memory_space<vmem>>, vector<200x32xf32>,
    %c2_64 = arith.constant 2 : index
    %c0_65 = arith.constant 0 : index
    %92 = vector.load %arg11[%c2_64, %c0_65] : memref<248x32xf32, #tpu.memory_space<vmem>>, vector<200x32xf32>
    %c0_66 = arith.constant 0 : index
    %c0_67 = arith.constant 0 : index
    %c0_68 = arith.constant 0 : index
    %93 = vector.load %arg4[%c0_66, %c0_67, %c0_68] : memref<9x32x64xf32, #tpu.memory_space<vmem>>, vector<1x32x64xf32>
    %94 = vector.shape_cast %93 : vector<1x32x64xf32> to vector<32x64xf32>
    %cst_69 = arith.constant dense<0.000000e+00> : vector<200x64xf32>
    %95 = tpu.matmul %92, %94, %cst_69 {dimension_numbers = #tpu.dot_dimension_numbers<[1], [0], [0], [1], [0, 0, 1, 1], [], []>} : vector<200x32xf32>, vector<32x64xf32>, vector<200x64xf32> -> vector<200x64xf32>
    %c4_70 = arith.constant 4 : index
    %c0_71 = arith.constant 0 : index
    %96 = vector.load %arg11[%c4_70, %c0_71] : memref<248x32xf32, #tpu.memory_space<vmem>>, vector<200x32xf32>
    %c1_72 = arith.constant 1 : index
    %c0_73 = arith.constant 0 : index
    %c0_74 = arith.constant 0 : index
    %97 = vector.load %arg4[%c1_72, %c0_73, %c0_74] : memref<9x32x64xf32, #tpu.memory_space<vmem>>, vector<1x32x64xf32>
    %98 = vector.shape_cast %97 : vector<1x32x64xf32> to vector<32x64xf32>
    %cst_75 = arith.constant dense<0.000000e+00> : vector<200x64xf32>
    %99 = tpu.matmul %96, %98, %cst_75 {dimension_numbers = #tpu.dot_dimension_numbers<[1], [0], [0], [1], [0, 0, 1, 1], [], []>} : vector<200x32xf32>, vector<32x64xf32>, vector<200x64xf32> -> vector<200x64xf32>
    %100 = arith.addf %95, %99 : vector<200x64xf32>
    %c6_76 = arith.constant 6 : index
    %c0_77 = arith.constant 0 : index
    %101 = vector.load %arg11[%c6_76, %c0_77] : memref<248x32xf32, #tpu.memory_space<vmem>>, vector<200x32xf32>
    %c2_78 = arith.constant 2 : index
    %c0_79 = arith.constant 0 : index
    %c0_80 = arith.constant 0 : index
    %102 = vector.load %arg4[%c2_78, %c0_79, %c0_80] : memref<9x32x64xf32, #tpu.memory_space<vmem>>, vector<1x32x64xf32>
    %103 = vector.shape_cast %102 : vector<1x32x64xf32> to vector<32x64xf32>
    %cst_81 = arith.constant dense<0.000000e+00> : vector<200x64xf32>
    %104 = tpu.matmul %101, %103, %cst_81 {dimension_numbers = #tpu.dot_dimension_numbers<[1], [0], [0], [1], [0, 0, 1, 1], [], []>} : vector<200x32xf32>, vector<32x64xf32>, vector<200x64xf32> -> vector<200x64xf32>
    %105 = arith.addf %100, %104 : vector<200x64xf32>
    %c22_82 = arith.constant 22 : index
    %c0_83 = arith.constant 0 : index
    %106 = vector.load %arg11[%c22_82, %c0_83] : memref<248x32xf32, #tpu.memory_space<vmem>>, vector<200x32xf32>
    %c3_84 = arith.constant 3 : index
    %c0_85 = arith.constant 0 : index
    %c0_86 = arith.constant 0 : index
    %107 = vector.load %arg4[%c3_84, %c0_85, %c0_86] : memref<9x32x64xf32, #tpu.memory_space<vmem>>, vector<1x32x64xf32>
    %108 = vector.shape_cast %107 : vector<1x32x64xf32> to vector<32x64xf32>
    %cst_87 = arith.constant dense<0.000000e+00> : vector<200x64xf32>
    %109 = tpu.matmul %106, %108, %cst_87 {dimension_numbers = #tpu.dot_dimension_numbers<[1], [0], [0], [1], [0, 0, 1, 1], [], []>} : vector<200x32xf32>, vector<32x64xf32>, vector<200x64xf32> -> vector<200x64xf32>
    %110 = arith.addf %105, %109 : vector<200x64xf32>
    %c24_88 = arith.constant 24 : index
    %c0_89 = arith.constant 0 : index
    %111 = vector.load %arg11[%c24_88, %c0_89] : memref<248x32xf32, #tpu.memory_space<vmem>>, vector<200x32xf32>
    %c4_90 = arith.constant 4 : index
    %c0_91 = arith.constant 0 : index
    %c0_92 = arith.constant 0 : index
    %112 = vector.load %arg4[%c4_90, %c0_91, %c0_92] : memref<9x32x64xf32, #tpu.memory_space<vmem>>, vector<1x32x64xf32>
    %113 = vector.shape_cast %112 : vector<1x32x64xf32> to vector<32x64xf32>
    %cst_93 = arith.constant dense<0.000000e+00> : vector<200x64xf32>
    %114 = tpu.matmul %111, %113, %cst_93 {dimension_numbers = #tpu.dot_dimension_numbers<[1], [0], [0], [1], [0, 0, 1, 1], [], []>} : vector<200x32xf32>, vector<32x64xf32>, vector<200x64xf32> -> vector<200x64xf32>
    %115 = arith.addf %110, %114 : vector<200x64xf32>
    %c26_94 = arith.constant 26 : index
    %c0_95 = arith.constant 0 : index
    %116 = vector.load %arg11[%c26_94, %c0_95] : memref<248x32xf32, #tpu.memory_space<vmem>>, vector<200x32xf32>
    %c5_96 = arith.constant 5 : index
    %c0_97 = arith.constant 0 : index
    %c0_98 = arith.constant 0 : index
    %117 = vector.load %arg4[%c5_96, %c0_97, %c0_98] : memref<9x32x64xf32, #tpu.memory_space<vmem>>, vector<1x32x64xf32>
    %118 = vector.shape_cast %117 : vector<1x32x64xf32> to vector<32x64xf32>
    %cst_99 = arith.constant dense<0.000000e+00> : vector<200x64xf32>
    %119 = tpu.matmul %116, %118, %cst_99 {dimension_numbers = #tpu.dot_dimension_numbers<[1], [0], [0], [1], [0, 0, 1, 1], [], []>} : vector<200x32xf32>, vector<32x64xf32>, vector<200x64xf32> -> vector<200x64xf32>
    %120 = arith.addf %115, %119 : vector<200x64xf32>
    %c42_100 = arith.constant 42 : index
    %c0_101 = arith.constant 0 : index
    %121 = vector.load %arg11[%c42_100, %c0_101] : memref<248x32xf32, #tpu.memory_space<vmem>>, vector<200x32xf32>
    %c6_102 = arith.constant 6 : index
    %c0_103 = arith.constant 0 : index
    %c0_104 = arith.constant 0 : index
    %122 = vector.load %arg4[%c6_102, %c0_103, %c0_104] : memref<9x32x64xf32, #tpu.memory_space<vmem>>, vector<1x32x64xf32>
    %123 = vector.shape_cast %122 : vector<1x32x64xf32> to vector<32x64xf32>
    %cst_105 = arith.constant dense<0.000000e+00> : vector<200x64xf32>
    %124 = tpu.matmul %121, %123, %cst_105 {dimension_numbers = #tpu.dot_dimension_numbers<[1], [0], [0], [1], [0, 0, 1, 1], [], []>} : vector<200x32xf32>, vector<32x64xf32>, vector<200x64xf32> -> vector<200x64xf32>
    %125 = arith.addf %120, %124 : vector<200x64xf32>
    %c44_106 = arith.constant 44 : index
    %c0_107 = arith.constant 0 : index
    %126 = vector.load %arg11[%c44_106, %c0_107] : memref<248x32xf32, #tpu.memory_space<vmem>>, vector<200x32xf32>
    %c7_108 = arith.constant 7 : index
    %c0_109 = arith.constant 0 : index
    %c0_110 = arith.constant 0 : index
    %127 = vector.load %arg4[%c7_108, %c0_109, %c0_110] : memref<9x32x64xf32, #tpu.memory_space<vmem>>, vector<1x32x64xf32>
    %128 = vector.shape_cast %127 : vector<1x32x64xf32> to vector<32x64xf32>
    %cst_111 = arith.constant dense<0.000000e+00> : vector<200x64xf32>
    %129 = tpu.matmul %126, %128, %cst_111 {dimension_numbers = #tpu.dot_dimension_numbers<[1], [0], [0], [1], [0, 0, 1, 1], [], []>} : vector<200x32xf32>, vector<32x64xf32>, vector<200x64xf32> -> vector<200x64xf32>
    %130 = arith.addf %125, %129 : vector<200x64xf32>
    %c46_112 = arith.constant 46 : index
    %c0_113 = arith.constant 0 : index
    %131 = vector.load %arg11[%c46_112, %c0_113] : memref<248x32xf32, #tpu.memory_space<vmem>>, vector<200x32xf32>
    %c8_114 = arith.constant 8 : index
    %c0_115 = arith.constant 0 : index
    %c0_116 = arith.constant 0 : index
    %132 = vector.load %arg4[%c8_114, %c0_115, %c0_116] : memref<9x32x64xf32, #tpu.memory_space<vmem>>, vector<1x32x64xf32>
    %133 = vector.shape_cast %132 : vector<1x32x64xf32> to vector<32x64xf32>
    %cst_117 = arith.constant dense<0.000000e+00> : vector<200x64xf32>
    %134 = tpu.matmul %131, %133, %cst_117 {dimension_numbers = #tpu.dot_dimension_numbers<[1], [0], [0], [1], [0, 0, 1, 1], [], []>} : vector<200x32xf32>, vector<32x64xf32>, vector<200x64xf32> -> vector<200x64xf32>
    %135 = arith.addf %130, %134 : vector<200x64xf32>
    %c0_118 = arith.constant 0 : index
    %c0_119 = arith.constant 0 : index
    %136 = vector.load %arg5[%c0_118, %c0_119] : memref<3x64xf32, #tpu.memory_space<vmem>>, vector<3x64xf32>
    %137 = vector.extract_strided_slice %136 {offsets = [0, 0], sizes = [1, 64], strides = [1, 1]} : vector<3x64xf32> to vector<1x64xf32>
    %138 = vector.broadcast %137 : vector<1x64xf32> to vector<200x64xf32>
    %139 = arith.addf %135, %138 : vector<200x64xf32>
    %140 = vector.broadcast %13 : vector<200x1xf32> to vector<200x64xf32>
    %141 = arith.mulf %139, %140 : vector<200x64xf32>
    %cst_120 = arith.constant dense<0.000000e+00> : vector<64xf32>
    %142 = vector.multi_reduction <add>, %141, %cst_120 [0] : vector<200x64xf32> to vector<64xf32>
    %143 = vector.shape_cast %142 : vector<64xf32> to vector<1x64xf32>
    %144 = arith.mulf %141, %141 : vector<200x64xf32>
    %cst_121 = arith.constant dense<0.000000e+00> : vector<64xf32>
    %145 = vector.multi_reduction <add>, %144, %cst_121 [0] : vector<200x64xf32> to vector<64xf32>
    %146 = vector.shape_cast %145 : vector<64xf32> to vector<1x64xf32>
    %cst_122 = arith.constant 7.812500e-03 : f32
    %147 = vector.broadcast %cst_122 : f32 to vector<1x64xf32>
    %148 = arith.mulf %143, %147 : vector<1x64xf32>
    %cst_123 = arith.constant 7.812500e-03 : f32
    %149 = vector.broadcast %cst_123 : f32 to vector<1x64xf32>
    %150 = arith.mulf %146, %149 : vector<1x64xf32>
    %151 = arith.mulf %148, %148 : vector<1x64xf32>
    %152 = arith.subf %150, %151 : vector<1x64xf32>
    %cst_124 = arith.constant 9.99999974E-6 : f32
    %153 = vector.broadcast %cst_124 : f32 to vector<1x64xf32>
    %154 = arith.addf %152, %153 : vector<1x64xf32>
    %155 = math.rsqrt %154 : vector<1x64xf32>
    %156 = vector.extract_strided_slice %136 {offsets = [1, 0], sizes = [1, 64], strides = [1, 1]} : vector<3x64xf32> to vector<1x64xf32>
    %157 = arith.mulf %155, %156 : vector<1x64xf32>
    %158 = vector.extract_strided_slice %136 {offsets = [2, 0], sizes = [1, 64], strides = [1, 1]} : vector<3x64xf32> to vector<1x64xf32>
    %159 = arith.mulf %148, %157 : vector<1x64xf32>
    %160 = arith.subf %158, %159 : vector<1x64xf32>
    %161 = vector.broadcast %157 : vector<1x64xf32> to vector<200x64xf32>
    %162 = arith.mulf %139, %161 : vector<200x64xf32>
    %163 = vector.broadcast %160 : vector<1x64xf32> to vector<200x64xf32>
    %164 = arith.addf %162, %163 : vector<200x64xf32>
    %cst_125 = arith.constant 0.000000e+00 : f32
    %165 = vector.broadcast %cst_125 : f32 to vector<200x64xf32>
    %166 = arith.maximumf %164, %165 : vector<200x64xf32>
    %167 = vector.broadcast %13 : vector<200x1xf32> to vector<200x64xf32>
    %168 = arith.mulf %166, %167 : vector<200x64xf32>
    %c24_126 = arith.constant 24 : index
    %c0_127 = arith.constant 0 : index
    %169 = vector.load %arg12[%c24_126, %c0_127] : memref<248x64xf32, #tpu.memory_space<vmem>>, vector<200x64xf32>
    tpu.vector_store %arg12[%c24_126, %c0_127], %168 {strides = array<i32>} : memref<248x64xf32, #tpu.memory_space<vmem>>, vector<200x64xf32>,
    %c0_i32_128 = arith.constant 0 : i32
    %170 = tpu.memref_slice %arg17[%c0_i32_128] : memref<2x!tpu.dma_semaphore, #tpu.memory_space<semaphore_mem>> -> memref<1x!tpu.dma_semaphore, #tpu.memory_space<semaphore_mem>>
    %171 = tpu.memref_squeeze %170 : memref<1x!tpu.dma_semaphore, #tpu.memory_space<semaphore_mem>> -> memref<!tpu.dma_semaphore, #tpu.memory_space<semaphore_mem>>
    tpu.wait_dma2 semaphore(%171 : memref<!tpu.dma_semaphore, #tpu.memory_space<semaphore_mem>>) src(%arg6 : memref<9x64x128xf32, #tpu.memory_space<any>>) dst(%arg15 : memref<9x64x128xf32, #tpu.memory_space<vmem>>)
    %c2_129 = arith.constant 2 : index
    %c0_130 = arith.constant 0 : index
    %172 = vector.load %arg12[%c2_129, %c0_130] : memref<248x64xf32, #tpu.memory_space<vmem>>, vector<200x64xf32>
    %c0_131 = arith.constant 0 : index
    %c0_132 = arith.constant 0 : index
    %c0_133 = arith.constant 0 : index
    %173 = vector.load %arg15[%c0_131, %c0_132, %c0_133] : memref<9x64x128xf32, #tpu.memory_space<vmem>>, vector<1x64x128xf32>
    %174 = vector.shape_cast %173 : vector<1x64x128xf32> to vector<64x128xf32>
    %cst_134 = arith.constant dense<0.000000e+00> : vector<200x128xf32>
    %175 = tpu.matmul %172, %174, %cst_134 {dimension_numbers = #tpu.dot_dimension_numbers<[1], [0], [0], [1], [0, 0, 1, 1], [], []>} : vector<200x64xf32>, vector<64x128xf32>, vector<200x128xf32> -> vector<200x128xf32>
    %c4_135 = arith.constant 4 : index
    %c0_136 = arith.constant 0 : index
    %176 = vector.load %arg12[%c4_135, %c0_136] : memref<248x64xf32, #tpu.memory_space<vmem>>, vector<200x64xf32>
    %c1_137 = arith.constant 1 : index
    %c0_138 = arith.constant 0 : index
    %c0_139 = arith.constant 0 : index
    %177 = vector.load %arg15[%c1_137, %c0_138, %c0_139] : memref<9x64x128xf32, #tpu.memory_space<vmem>>, vector<1x64x128xf32>
    %178 = vector.shape_cast %177 : vector<1x64x128xf32> to vector<64x128xf32>
    %cst_140 = arith.constant dense<0.000000e+00> : vector<200x128xf32>
    %179 = tpu.matmul %176, %178, %cst_140 {dimension_numbers = #tpu.dot_dimension_numbers<[1], [0], [0], [1], [0, 0, 1, 1], [], []>} : vector<200x64xf32>, vector<64x128xf32>, vector<200x128xf32> -> vector<200x128xf32>
    %180 = arith.addf %175, %179 : vector<200x128xf32>
    %c6_141 = arith.constant 6 : index
    %c0_142 = arith.constant 0 : index
    %181 = vector.load %arg12[%c6_141, %c0_142] : memref<248x64xf32, #tpu.memory_space<vmem>>, vector<200x64xf32>
    %c2_143 = arith.constant 2 : index
    %c0_144 = arith.constant 0 : index
    %c0_145 = arith.constant 0 : index
    %182 = vector.load %arg15[%c2_143, %c0_144, %c0_145] : memref<9x64x128xf32, #tpu.memory_space<vmem>>, vector<1x64x128xf32>
    %183 = vector.shape_cast %182 : vector<1x64x128xf32> to vector<64x128xf32>
    %cst_146 = arith.constant dense<0.000000e+00> : vector<200x128xf32>
    %184 = tpu.matmul %181, %183, %cst_146 {dimension_numbers = #tpu.dot_dimension_numbers<[1], [0], [0], [1], [0, 0, 1, 1], [], []>} : vector<200x64xf32>, vector<64x128xf32>, vector<200x128xf32> -> vector<200x128xf32>
    %185 = arith.addf %180, %184 : vector<200x128xf32>
    %c22_147 = arith.constant 22 : index
    %c0_148 = arith.constant 0 : index
    %186 = vector.load %arg12[%c22_147, %c0_148] : memref<248x64xf32, #tpu.memory_space<vmem>>, vector<200x64xf32>
    %c3_149 = arith.constant 3 : index
    %c0_150 = arith.constant 0 : index
    %c0_151 = arith.constant 0 : index
    %187 = vector.load %arg15[%c3_149, %c0_150, %c0_151] : memref<9x64x128xf32, #tpu.memory_space<vmem>>, vector<1x64x128xf32>
    %188 = vector.shape_cast %187 : vector<1x64x128xf32> to vector<64x128xf32>
    %cst_152 = arith.constant dense<0.000000e+00> : vector<200x128xf32>
    %189 = tpu.matmul %186, %188, %cst_152 {dimension_numbers = #tpu.dot_dimension_numbers<[1], [0], [0], [1], [0, 0, 1, 1], [], []>} : vector<200x64xf32>, vector<64x128xf32>, vector<200x128xf32> -> vector<200x128xf32>
    %190 = arith.addf %185, %189 : vector<200x128xf32>
    %c24_153 = arith.constant 24 : index
    %c0_154 = arith.constant 0 : index
    %191 = vector.load %arg12[%c24_153, %c0_154] : memref<248x64xf32, #tpu.memory_space<vmem>>, vector<200x64xf32>
    %c4_155 = arith.constant 4 : index
    %c0_156 = arith.constant 0 : index
    %c0_157 = arith.constant 0 : index
    %192 = vector.load %arg15[%c4_155, %c0_156, %c0_157] : memref<9x64x128xf32, #tpu.memory_space<vmem>>, vector<1x64x128xf32>
    %193 = vector.shape_cast %192 : vector<1x64x128xf32> to vector<64x128xf32>
    %cst_158 = arith.constant dense<0.000000e+00> : vector<200x128xf32>
    %194 = tpu.matmul %191, %193, %cst_158 {dimension_numbers = #tpu.dot_dimension_numbers<[1], [0], [0], [1], [0, 0, 1, 1], [], []>} : vector<200x64xf32>, vector<64x128xf32>, vector<200x128xf32> -> vector<200x128xf32>
    %195 = arith.addf %190, %194 : vector<200x128xf32>
    %c26_159 = arith.constant 26 : index
    %c0_160 = arith.constant 0 : index
    %196 = vector.load %arg12[%c26_159, %c0_160] : memref<248x64xf32, #tpu.memory_space<vmem>>, vector<200x64xf32>
    %c5_161 = arith.constant 5 : index
    %c0_162 = arith.constant 0 : index
    %c0_163 = arith.constant 0 : index
    %197 = vector.load %arg15[%c5_161, %c0_162, %c0_163] : memref<9x64x128xf32, #tpu.memory_space<vmem>>, vector<1x64x128xf32>
    %198 = vector.shape_cast %197 : vector<1x64x128xf32> to vector<64x128xf32>
    %cst_164 = arith.constant dense<0.000000e+00> : vector<200x128xf32>
    %199 = tpu.matmul %196, %198, %cst_164 {dimension_numbers = #tpu.dot_dimension_numbers<[1], [0], [0], [1], [0, 0, 1, 1], [], []>} : vector<200x64xf32>, vector<64x128xf32>, vector<200x128xf32> -> vector<200x128xf32>
    %200 = arith.addf %195, %199 : vector<200x128xf32>
    %c42_165 = arith.constant 42 : index
    %c0_166 = arith.constant 0 : index
    %201 = vector.load %arg12[%c42_165, %c0_166] : memref<248x64xf32, #tpu.memory_space<vmem>>, vector<200x64xf32>
    %c6_167 = arith.constant 6 : index
    %c0_168 = arith.constant 0 : index
    %c0_169 = arith.constant 0 : index
    %202 = vector.load %arg15[%c6_167, %c0_168, %c0_169] : memref<9x64x128xf32, #tpu.memory_space<vmem>>, vector<1x64x128xf32>
    %203 = vector.shape_cast %202 : vector<1x64x128xf32> to vector<64x128xf32>
    %cst_170 = arith.constant dense<0.000000e+00> : vector<200x128xf32>
    %204 = tpu.matmul %201, %203, %cst_170 {dimension_numbers = #tpu.dot_dimension_numbers<[1], [0], [0], [1], [0, 0, 1, 1], [], []>} : vector<200x64xf32>, vector<64x128xf32>, vector<200x128xf32> -> vector<200x128xf32>
    %205 = arith.addf %200, %204 : vector<200x128xf32>
    %c44_171 = arith.constant 44 : index
    %c0_172 = arith.constant 0 : index
    %206 = vector.load %arg12[%c44_171, %c0_172] : memref<248x64xf32, #tpu.memory_space<vmem>>, vector<200x64xf32>
    %c7_173 = arith.constant 7 : index
    %c0_174 = arith.constant 0 : index
    %c0_175 = arith.constant 0 : index
    %207 = vector.load %arg15[%c7_173, %c0_174, %c0_175] : memref<9x64x128xf32, #tpu.memory_space<vmem>>, vector<1x64x128xf32>
    %208 = vector.shape_cast %207 : vector<1x64x128xf32> to vector<64x128xf32>
    %cst_176 = arith.constant dense<0.000000e+00> : vector<200x128xf32>
    %209 = tpu.matmul %206, %208, %cst_176 {dimension_numbers = #tpu.dot_dimension_numbers<[1], [0], [0], [1], [0, 0, 1, 1], [], []>} : vector<200x64xf32>, vector<64x128xf32>, vector<200x128xf32> -> vector<200x128xf32>
    %210 = arith.addf %205, %209 : vector<200x128xf32>
    %c46_177 = arith.constant 46 : index
    %c0_178 = arith.constant 0 : index
    %211 = vector.load %arg12[%c46_177, %c0_178] : memref<248x64xf32, #tpu.memory_space<vmem>>, vector<200x64xf32>
    %c8_179 = arith.constant 8 : index
    %c0_180 = arith.constant 0 : index
    %c0_181 = arith.constant 0 : index
    %212 = vector.load %arg15[%c8_179, %c0_180, %c0_181] : memref<9x64x128xf32, #tpu.memory_space<vmem>>, vector<1x64x128xf32>
    %213 = vector.shape_cast %212 : vector<1x64x128xf32> to vector<64x128xf32>
    %cst_182 = arith.constant dense<0.000000e+00> : vector<200x128xf32>
    %214 = tpu.matmul %211, %213, %cst_182 {dimension_numbers = #tpu.dot_dimension_numbers<[1], [0], [0], [1], [0, 0, 1, 1], [], []>} : vector<200x64xf32>, vector<64x128xf32>, vector<200x128xf32> -> vector<200x128xf32>
    %215 = arith.addf %210, %214 : vector<200x128xf32>
    %c0_183 = arith.constant 0 : index
    %c0_184 = arith.constant 0 : index
    %216 = vector.load %arg7[%c0_183, %c0_184] : memref<3x128xf32, #tpu.memory_space<vmem>>, vector<3x128xf32>
    %217 = vector.extract_strided_slice %216 {offsets = [0, 0], sizes = [1, 128], strides = [1, 1]} : vector<3x128xf32> to vector<1x128xf32>
    %218 = vector.broadcast %217 : vector<1x128xf32> to vector<200x128xf32>
    %219 = arith.addf %215, %218 : vector<200x128xf32>
    %220 = vector.broadcast %13 : vector<200x1xf32> to vector<200x128xf32>
    %221 = arith.mulf %219, %220 : vector<200x128xf32>
    %cst_185 = arith.constant dense<0.000000e+00> : vector<128xf32>
    %222 = vector.multi_reduction <add>, %221, %cst_185 [0] : vector<200x128xf32> to vector<128xf32>
    %223 = vector.shape_cast %222 : vector<128xf32> to vector<1x128xf32>
    %224 = arith.mulf %221, %221 : vector<200x128xf32>
    %cst_186 = arith.constant dense<0.000000e+00> : vector<128xf32>
    %225 = vector.multi_reduction <add>, %224, %cst_186 [0] : vector<200x128xf32> to vector<128xf32>
    %226 = vector.shape_cast %225 : vector<128xf32> to vector<1x128xf32>
    %cst_187 = arith.constant 7.812500e-03 : f32
    %227 = vector.broadcast %cst_187 : f32 to vector<1x128xf32>
    %228 = arith.mulf %223, %227 : vector<1x128xf32>
    %cst_188 = arith.constant 7.812500e-03 : f32
    %229 = vector.broadcast %cst_188 : f32 to vector<1x128xf32>
    %230 = arith.mulf %226, %229 : vector<1x128xf32>
    %231 = arith.mulf %228, %228 : vector<1x128xf32>
    %232 = arith.subf %230, %231 : vector<1x128xf32>
    %cst_189 = arith.constant 9.99999974E-6 : f32
    %233 = vector.broadcast %cst_189 : f32 to vector<1x128xf32>
    %234 = arith.addf %232, %233 : vector<1x128xf32>
    %235 = math.rsqrt %234 : vector<1x128xf32>
    %236 = vector.extract_strided_slice %216 {offsets = [1, 0], sizes = [1, 128], strides = [1, 1]} : vector<3x128xf32> to vector<1x128xf32>
    %237 = arith.mulf %235, %236 : vector<1x128xf32>
    %238 = vector.extract_strided_slice %216 {offsets = [2, 0], sizes = [1, 128], strides = [1, 1]} : vector<3x128xf32> to vector<1x128xf32>
    %239 = arith.mulf %228, %237 : vector<1x128xf32>
    %240 = arith.subf %238, %239 : vector<1x128xf32>
    %241 = vector.broadcast %237 : vector<1x128xf32> to vector<200x128xf32>
    %242 = arith.mulf %219, %241 : vector<200x128xf32>
    %243 = vector.broadcast %240 : vector<1x128xf32> to vector<200x128xf32>
    %244 = arith.addf %242, %243 : vector<200x128xf32>
    %cst_190 = arith.constant 0.000000e+00 : f32
    %245 = vector.broadcast %cst_190 : f32 to vector<200x128xf32>
    %246 = arith.maximumf %244, %245 : vector<200x128xf32>
    %247 = vector.broadcast %13 : vector<200x1xf32> to vector<200x128xf32>
    %248 = arith.mulf %246, %247 : vector<200x128xf32>
    %c24_191 = arith.constant 24 : index
    %c0_192 = arith.constant 0 : index
    %249 = vector.load %arg13[%c24_191, %c0_192] : memref<248x128xf32, #tpu.memory_space<vmem>>, vector<200x128xf32>
    tpu.vector_store %arg13[%c24_191, %c0_192], %248 {strides = array<i32>} : memref<248x128xf32, #tpu.memory_space<vmem>>, vector<200x128xf32>,
    %c46_193 = arith.constant 46 : index
    %c0_194 = arith.constant 0 : index
    %250 = vector.load %arg13[%c46_193, %c0_194] : memref<248x128xf32, #tpu.memory_space<vmem>>, vector<16x128xf32>
    %c66 = arith.constant 66 : index
    %c0_195 = arith.constant 0 : index
    %251 = vector.load %arg13[%c66, %c0_195] : memref<248x128xf32, #tpu.memory_space<vmem>>, vector<16x128xf32>
    %252 = arith.addf %250, %251 : vector<16x128xf32>
    %c86 = arith.constant 86 : index
    %c0_196 = arith.constant 0 : index
    %253 = vector.load %arg13[%c86, %c0_196] : memref<248x128xf32, #tpu.memory_space<vmem>>, vector<16x128xf32>
    %254 = arith.addf %252, %253 : vector<16x128xf32>
    %c106 = arith.constant 106 : index
    %c0_197 = arith.constant 0 : index
    %255 = vector.load %arg13[%c106, %c0_197] : memref<248x128xf32, #tpu.memory_space<vmem>>, vector<16x128xf32>
    %256 = arith.addf %254, %255 : vector<16x128xf32>
    %c126 = arith.constant 126 : index
    %c0_198 = arith.constant 0 : index
    %257 = vector.load %arg13[%c126, %c0_198] : memref<248x128xf32, #tpu.memory_space<vmem>>, vector<16x128xf32>
    %258 = arith.addf %256, %257 : vector<16x128xf32>
    %c146 = arith.constant 146 : index
    %c0_199 = arith.constant 0 : index
    %259 = vector.load %arg13[%c146, %c0_199] : memref<248x128xf32, #tpu.memory_space<vmem>>, vector<16x128xf32>
    %260 = arith.addf %258, %259 : vector<16x128xf32>
    %c166 = arith.constant 166 : index
    %c0_200 = arith.constant 0 : index
    %261 = vector.load %arg13[%c166, %c0_200] : memref<248x128xf32, #tpu.memory_space<vmem>>, vector<16x128xf32>
    %262 = arith.addf %260, %261 : vector<16x128xf32>
    %c186 = arith.constant 186 : index
    %c0_201 = arith.constant 0 : index
    %263 = vector.load %arg13[%c186, %c0_201] : memref<248x128xf32, #tpu.memory_space<vmem>>, vector<16x128xf32>
    %264 = arith.addf %262, %263 : vector<16x128xf32>
    %cst_202 = arith.constant 1.250000e-01 : f32
    %265 = vector.broadcast %cst_202 : f32 to vector<16x128xf32>
    %266 = arith.mulf %264, %265 : vector<16x128xf32>
    %267 = vector.extract_strided_slice %266 {offsets = [0, 0], sizes = [2, 128], strides = [1, 1]} : vector<16x128xf32> to vector<2x128xf32>
    %c0_203 = arith.constant 0 : index
    %c0_204 = arith.constant 0 : index
    %268 = vector.load %arg14[%c0_203, %c0_204] : memref<2x1024xf32, #tpu.memory_space<vmem>>, vector<2x128xf32>
    tpu.vector_store %arg14[%c0_203, %c0_204], %267 {strides = array<i32>} : memref<2x1024xf32, #tpu.memory_space<vmem>>, vector<2x128xf32>,
    %269 = vector.extract_strided_slice %266 {offsets = [2, 0], sizes = [2, 128], strides = [1, 1]} : vector<16x128xf32> to vector<2x128xf32>
    %c0_205 = arith.constant 0 : index
    %c128 = arith.constant 128 : index
    %270 = vector.load %arg14[%c0_205, %c128] : memref<2x1024xf32, #tpu.memory_space<vmem>>, vector<2x128xf32>
    tpu.vector_store %arg14[%c0_205, %c128], %269 {strides = array<i32>} : memref<2x1024xf32, #tpu.memory_space<vmem>>, vector<2x128xf32>,
    %271 = vector.extract_strided_slice %266 {offsets = [4, 0], sizes = [2, 128], strides = [1, 1]} : vector<16x128xf32> to vector<2x128xf32>
    %c0_206 = arith.constant 0 : index
    %c256 = arith.constant 256 : index
    %272 = vector.load %arg14[%c0_206, %c256] : memref<2x1024xf32, #tpu.memory_space<vmem>>, vector<2x128xf32>
    tpu.vector_store %arg14[%c0_206, %c256], %271 {strides = array<i32>} : memref<2x1024xf32, #tpu.memory_space<vmem>>, vector<2x128xf32>,
    %273 = vector.extract_strided_slice %266 {offsets = [6, 0], sizes = [2, 128], strides = [1, 1]} : vector<16x128xf32> to vector<2x128xf32>
    %c0_207 = arith.constant 0 : index
    %c384 = arith.constant 384 : index
    %274 = vector.load %arg14[%c0_207, %c384] : memref<2x1024xf32, #tpu.memory_space<vmem>>, vector<2x128xf32>
    tpu.vector_store %arg14[%c0_207, %c384], %273 {strides = array<i32>} : memref<2x1024xf32, #tpu.memory_space<vmem>>, vector<2x128xf32>,
    %275 = vector.extract_strided_slice %266 {offsets = [8, 0], sizes = [2, 128], strides = [1, 1]} : vector<16x128xf32> to vector<2x128xf32>
    %c0_208 = arith.constant 0 : index
    %c512 = arith.constant 512 : index
    %276 = vector.load %arg14[%c0_208, %c512] : memref<2x1024xf32, #tpu.memory_space<vmem>>, vector<2x128xf32>
    tpu.vector_store %arg14[%c0_208, %c512], %275 {strides = array<i32>} : memref<2x1024xf32, #tpu.memory_space<vmem>>, vector<2x128xf32>,
    %277 = vector.extract_strided_slice %266 {offsets = [10, 0], sizes = [2, 128], strides = [1, 1]} : vector<16x128xf32> to vector<2x128xf32>
    %c0_209 = arith.constant 0 : index
    %c640 = arith.constant 640 : index
    %278 = vector.load %arg14[%c0_209, %c640] : memref<2x1024xf32, #tpu.memory_space<vmem>>, vector<2x128xf32>
    tpu.vector_store %arg14[%c0_209, %c640], %277 {strides = array<i32>} : memref<2x1024xf32, #tpu.memory_space<vmem>>, vector<2x128xf32>,
    %279 = vector.extract_strided_slice %266 {offsets = [12, 0], sizes = [2, 128], strides = [1, 1]} : vector<16x128xf32> to vector<2x128xf32>
    %c0_210 = arith.constant 0 : index
    %c768 = arith.constant 768 : index
    %280 = vector.load %arg14[%c0_210, %c768] : memref<2x1024xf32, #tpu.memory_space<vmem>>, vector<2x128xf32>
    tpu.vector_store %arg14[%c0_210, %c768], %279 {strides = array<i32>} : memref<2x1024xf32, #tpu.memory_space<vmem>>, vector<2x128xf32>,
    %281 = vector.extract_strided_slice %266 {offsets = [14, 0], sizes = [2, 128], strides = [1, 1]} : vector<16x128xf32> to vector<2x128xf32>
    %c0_211 = arith.constant 0 : index
    %c896 = arith.constant 896 : index
    %282 = vector.load %arg14[%c0_211, %c896] : memref<2x1024xf32, #tpu.memory_space<vmem>>, vector<2x128xf32>
    tpu.vector_store %arg14[%c0_211, %c896], %281 {strides = array<i32>} : memref<2x1024xf32, #tpu.memory_space<vmem>>, vector<2x128xf32>,
    %c1_i32_212 = arith.constant 1 : i32
    %283 = tpu.memref_slice %arg17[%c1_i32_212] : memref<2x!tpu.dma_semaphore, #tpu.memory_space<semaphore_mem>> -> memref<1x!tpu.dma_semaphore, #tpu.memory_space<semaphore_mem>>
    %284 = tpu.memref_squeeze %283 : memref<1x!tpu.dma_semaphore, #tpu.memory_space<semaphore_mem>> -> memref<!tpu.dma_semaphore, #tpu.memory_space<semaphore_mem>>
    tpu.wait_dma2 semaphore(%284 : memref<!tpu.dma_semaphore, #tpu.memory_space<semaphore_mem>>) src(%arg8 : memref<1024x64xf32, #tpu.memory_space<any>>) dst(%arg16 : memref<1024x64xf32, #tpu.memory_space<vmem>>)
    %c0_213 = arith.constant 0 : index
    %c0_214 = arith.constant 0 : index
    %285 = vector.load %arg14[%c0_213, %c0_214] : memref<2x1024xf32, #tpu.memory_space<vmem>>, vector<2x1024xf32>
    %c0_215 = arith.constant 0 : index
    %c0_216 = arith.constant 0 : index
    %286 = vector.load %arg16[%c0_215, %c0_216] : memref<1024x64xf32, #tpu.memory_space<vmem>>, vector<1024x64xf32>
    %cst_217 = arith.constant dense<0.000000e+00> : vector<2x64xf32>
    %287 = tpu.matmul %285, %286, %cst_217 {dimension_numbers = #tpu.dot_dimension_numbers<[1], [0], [0], [1], [0, 0, 1, 1], [], []>} : vector<2x1024xf32>, vector<1024x64xf32>, vector<2x64xf32> -> vector<2x64xf32>
    %c0_218 = arith.constant 0 : index
    %c0_219 = arith.constant 0 : index
    %288 = vector.load %arg9[%c0_218, %c0_219] : memref<3x64xf32, #tpu.memory_space<vmem>>, vector<3x64xf32>
    %289 = vector.extract_strided_slice %288 {offsets = [0, 0], sizes = [1, 64], strides = [1, 1]} : vector<3x64xf32> to vector<1x64xf32>
    %290 = vector.broadcast %289 : vector<1x64xf32> to vector<2x64xf32>
    %291 = arith.addf %287, %290 : vector<2x64xf32>
    %cst_220 = arith.constant dense<0.000000e+00> : vector<2xf32>
    %292 = vector.multi_reduction <add>, %291, %cst_220 [1] : vector<2x64xf32> to vector<2xf32>
    %293 = vector.shape_cast %292 : vector<2xf32> to vector<2x1xf32>
    %cst_221 = arith.constant 6.400000e+01 : f32
    %294 = vector.broadcast %cst_221 : f32 to vector<2x1xf32>
    %295 = arith.divf %293, %294 : vector<2x1xf32>
    %296 = vector.broadcast %295 : vector<2x1xf32> to vector<2x64xf32>
    %297 = arith.subf %291, %296 : vector<2x64xf32>
    %298 = arith.mulf %297, %297 : vector<2x64xf32>
    %cst_222 = arith.constant dense<0.000000e+00> : vector<2xf32>
    %299 = vector.multi_reduction <add>, %298, %cst_222 [1] : vector<2x64xf32> to vector<2xf32>
    %300 = vector.shape_cast %299 : vector<2xf32> to vector<2x1xf32>
    %cst_223 = arith.constant 6.400000e+01 : f32
    %301 = vector.broadcast %cst_223 : f32 to vector<2x1xf32>
    %302 = arith.divf %300, %301 : vector<2x1xf32>
    %303 = vector.broadcast %295 : vector<2x1xf32> to vector<2x64xf32>
    %304 = arith.subf %291, %303 : vector<2x64xf32>
    %cst_224 = arith.constant 9.99999974E-6 : f32
    %305 = vector.broadcast %cst_224 : f32 to vector<2x1xf32>
    %306 = arith.addf %302, %305 : vector<2x1xf32>
    %307 = math.rsqrt %306 : vector<2x1xf32>
    %308 = vector.broadcast %307 : vector<2x1xf32> to vector<2x64xf32>
    %309 = arith.mulf %304, %308 : vector<2x64xf32>
    %310 = vector.extract_strided_slice %288 {offsets = [1, 0], sizes = [1, 64], strides = [1, 1]} : vector<3x64xf32> to vector<1x64xf32>
    %311 = vector.broadcast %310 : vector<1x64xf32> to vector<2x64xf32>
    %312 = arith.mulf %309, %311 : vector<2x64xf32>
    %313 = vector.extract_strided_slice %288 {offsets = [2, 0], sizes = [1, 64], strides = [1, 1]} : vector<3x64xf32> to vector<1x64xf32>
    %314 = vector.broadcast %313 : vector<1x64xf32> to vector<2x64xf32>
    %315 = arith.addf %312, %314 : vector<2x64xf32>
    %cst_225 = arith.constant 0.000000e+00 : f32
    %316 = vector.broadcast %cst_225 : f32 to vector<2x64xf32>
    %317 = arith.maximumf %315, %316 : vector<2x64xf32>
    %c0_226 = arith.constant 0 : index
    %c0_227 = arith.constant 0 : index
    %318 = vector.load %arg10[%c0_226, %c0_227] : memref<2x64xf32, #tpu.memory_space<vmem>>, vector<2x64xf32>
    tpu.vector_store %arg10[%c0_226, %c0_227], %317 {strides = array<i32>} : memref<2x64xf32, #tpu.memory_space<vmem>>, vector<2x64xf32>,
    return
  }
  func.func @transform_0(%arg0: i32) -> (i32, i32) {
    %c0_i32 = arith.constant 0 : i32
    %c0_i32_0 = arith.constant 0 : i32
    %c0_i32_1 = arith.constant 0 : i32
    return %c0_i32, %c0_i32_0 : i32, i32
  }
  func.func @transform_1(%arg0: i32) -> (i32, i32, i32) {
    %c0_i32 = arith.constant 0 : i32
    %c0_i32_0 = arith.constant 0 : i32
    %c0_i32_1 = arith.constant 0 : i32
    %c0_i32_2 = arith.constant 0 : i32
    return %c0_i32, %c0_i32_0, %c0_i32_1 : i32, i32, i32
  }
  func.func @transform_2(%arg0: i32) -> (i32, i32) {
    %c0_i32 = arith.constant 0 : i32
    %c0_i32_0 = arith.constant 0 : i32
    %c0_i32_1 = arith.constant 0 : i32
    return %c0_i32, %c0_i32_0 : i32, i32
  }
  func.func @transform_3(%arg0: i32) -> (i32, i32, i32) {
    %c0_i32 = arith.constant 0 : i32
    %c0_i32_0 = arith.constant 0 : i32
    %c0_i32_1 = arith.constant 0 : i32
    %c0_i32_2 = arith.constant 0 : i32
    return %c0_i32, %c0_i32_0, %c0_i32_1 : i32, i32, i32
  }
  func.func @transform_4(%arg0: i32) -> (i32, i32) {
    %c0_i32 = arith.constant 0 : i32
    %c0_i32_0 = arith.constant 0 : i32
    %c0_i32_1 = arith.constant 0 : i32
    return %c0_i32, %c0_i32_0 : i32, i32
  }
  func.func @transform_6(%arg0: i32) -> (i32, i32) {
    %c0_i32 = arith.constant 0 : i32
    %c0_i32_0 = arith.constant 0 : i32
    %c0_i32_1 = arith.constant 0 : i32
    return %c0_i32, %c0_i32_0 : i32, i32
  }
  func.func @transform_8(%arg0: i32) -> (i32, i32) {
    %c0_i32 = arith.constant 0 : i32
    %c0_i32_0 = arith.constant 0 : i32
    %c0_i32_1 = arith.constant 0 : i32
    return %c0_i32, %c0_i32_0 : i32, i32
  }
  func.func @transform_9(%arg0: i32) -> (i32, i32) {
    %c0_i32 = arith.constant 0 : i32
    %c0_i32_0 = arith.constant 0 : i32
    %c0_i32_1 = arith.constant 0 : i32
    return %c0_i32, %c0_i32_0 : i32, i32
  }
}

</mosaic_0001>

<llo_original>
// kernel: tpu_custom_call.1
$region0: #{tpu_custom_call.1}
  #allocation0 [shape = 'u32[]', space=smem, size = 0x4, offset = 0x4, fixed_abs, tag = 'smem constant byte address 0x4 - core index']
  #allocation1 [shape = 'u32[72,128]{1,0:T(1,128)}', space=vmem, size = 0x9000, scoped, tag = 'internal scratch']
  #allocation2 [shape = 'f32[248,32]{1,0:T(8,128)}', space=vmem, size = 0x1f000, scoped, tag = 'scratch operand']
  #allocation3 [shape = 'f32[248,64]{1,0:T(8,128)}', space=vmem, size = 0x1f000, scoped, tag = 'scratch operand']
  #allocation4 [shape = 'f32[248,128]{1,0:T(8,128)}', space=vmem, size = 0x1f000, scoped, tag = 'scratch operand']
  #allocation5 [shape = 'f32[2,1024]{1,0:T(2,128)}', space=vmem, size = 0x2000, scoped, tag = 'scratch operand']
  #allocation6 [shape = 'f32[9,64,128]{2,1,0:T(8,128)}', space=vmem, size = 0x48000, scoped, tag = 'scratch operand']
  #allocation7 [shape = 'f32[1024,64]{1,0:T(8,128)}', space=vmem, size = 0x80000, scoped, tag = 'scratch operand']
  #allocation8 [shape = 's32[2]{0}', space=sflag, size = 0x8, scoped, tag = 'scratch operand']
  #allocation11 [shape = 's32[]', space=sflag, size = 0x4, offset = 0, fixed_abs, tag = 'sflag constant byte address 0x0 - dummy sync flag']
  #allocation12 [shape = 's32[]', space=sflag, size = 0x4, offset = 0, fixed_abs, tag = 'sflag constant byte address 0x0 - dummy sync flag']
  %s0 = inlined_call_operand.vmem [shape: f32[248,8], index: 0, kind: input, shape index: {}]
  %s1 = inlined_call_operand.vmem [shape: f32[9,8,32], index: 1, kind: input, shape index: {}]
  %s2 = inlined_call_operand.vmem [shape: f32[3,32], index: 2, kind: input, shape index: {}]
  %s3 = inlined_call_operand.vmem [shape: f32[9,32,64], index: 3, kind: input, shape index: {}]
  %s4 = inlined_call_operand.vmem [shape: f32[3,64], index: 4, kind: input, shape index: {}]
  %s5 = inlined_call_operand.vmem [shape: f32[9,64,128], index: 5, kind: input, shape index: {}]
  %s6 = inlined_call_operand.vmem [shape: f32[3,128], index: 6, kind: input, shape index: {}]
  %s7 = inlined_call_operand.vmem [shape: f32[1024,64], index: 7, kind: input, shape index: {}]
  %s8 = inlined_call_operand.vmem [shape: f32[3,64], index: 8, kind: input, shape index: {}]
  %s9 = inlined_call_operand.hbm [shape: f32[2,64], index: 9, kind: output, shape index: {}]
  %s10 = sld [smem:[#allocation0]]
  $region76: #{tpu_custom_call.1} parent=0
    _
  %s12 = ssub.s32 1, %s10
  %s13 = scalar_select 0, %s12, %s10
  $region1: #{tpu_custom_call.1} parent=0
    #allocation9 [shape = 'u8[1024]{0}', space=vmem, size = 0x400, scoped, tag = 'output window, operand 0, single buffered']
    #allocation10 [shape = 's32[1]{0}', space=sflag, size = 0x4, scoped, tag = 'scoped memory for tpu_custom_call.1']
    %14 = vsyncpa [#allocation10], 0
    // Predicated region
    $region2: #{tpu_custom_call.1} parent=1 // pred_check
      _
    $region3: #{tpu_custom_call.1} parent=1 // pred_check_branch
      %16 = sbr.rel (0) target = $region5
    $region4: #{tpu_custom_call.1} parent=1 // pred_region
      _
    $region5: #{tpu_custom_call.1} parent=1 // pred_fallthru
      _
    // Predicated region
    $region6: #{tpu_custom_call.1} parent=1 // pred_check
      _
    $region7: #{tpu_custom_call.1} parent=1 // pred_check_branch
      %18 = sbr.rel (0) target = $region9
    $region8: #{tpu_custom_call.1} parent=1 // pred_region
      _
    $region9: #{tpu_custom_call.1} parent=1 // pred_fallthru
      _
    // Predicated region
    $region10: #{tpu_custom_call.1} parent=1 // pred_check
      _
    $region11: #{tpu_custom_call.1} parent=1 // pred_check_branch
      %20 = sbr.rel (0) target = $region13
    $region12: #{tpu_custom_call.1} parent=1 // pred_region
      _
    $region13: #{tpu_custom_call.1} parent=1 // pred_fallthru
      _
    // Predicated region
    $region14: #{tpu_custom_call.1} parent=1 // pred_check
      _
    $region15: #{tpu_custom_call.1} parent=1 // pred_check_branch
      %22 = sbr.rel (0) target = $region17
    $region16: #{tpu_custom_call.1} parent=1 // pred_region
      _
    $region17: #{tpu_custom_call.1} parent=1 // pred_fallthru
      _
    // Predicated region
    $region18: #{tpu_custom_call.1} parent=1 // pred_check
      _
    $region19: #{tpu_custom_call.1} parent=1 // pred_check_branch
      %24 = sbr.rel (0) target = $region21
    $region20: #{tpu_custom_call.1} parent=1 // pred_region
      _
    $region21: #{tpu_custom_call.1} parent=1 // pred_fallthru
      _
    // Predicated region
    $region22: #{tpu_custom_call.1} parent=1 // pred_check
      _
    $region23: #{tpu_custom_call.1} parent=1 // pred_check_branch
      %26 = sbr.rel (0) target = $region25
    $region24: #{tpu_custom_call.1} parent=1 // pred_region
      _
    $region25: #{tpu_custom_call.1} parent=1 // pred_fallthru
      _
    // Predicated region
    $region26: #{tpu_custom_call.1} parent=1 // pred_check
      _
    $region27: #{tpu_custom_call.1} parent=1 // pred_check_branch
      %28 = sbr.rel (0) target = $region29
    $region28: #{tpu_custom_call.1} parent=1 // pred_region
      _
    $region29: #{tpu_custom_call.1} parent=1 // pred_fallthru
      _
    // Predicated region
    $region30: #{tpu_custom_call.1} parent=1 // pred_check
      _
    $region31: #{tpu_custom_call.1} parent=1 // pred_check_branch
      %30 = sbr.rel (0) target = $region33
    $region32: #{tpu_custom_call.1} parent=1 // pred_region
      loop: start=0, step=1, limit=1
      $region34: #{tpu_custom_call.1} parent=32 // loop_pre_header
        _
      $region35: #{tpu_custom_call.1} parent=32 // loop_header
        %s32 = sphi 0, %s36
        %p33 = scmp.ge.s32.totalorder %s32, 1
        %s37 = sphi %s5, %s5
        %s38 = sphi [#allocation6], [#allocation6]
      $region36: #{tpu_custom_call.1} parent=32 // loop_header_branch
        %35 = sbr.rel (%p33) target = $region40
      $region37: #{tpu_custom_call.1} parent=32 // loop_body
        %v39 = vld [vmem:[%s37] sm:$0xff]
        %40 = vst [vmem:[%s38] sm:$0xff] %v39
        %v41 = vld [vmem:[%s37 + $0x8] sm:$0xff]
        %42 = vst [vmem:[%s38 + $0x8] sm:$0xff] %v41
        %v43 = vld [vmem:[%s37 + $0x10] sm:$0xff]
        %44 = vst [vmem:[%s38 + $0x10] sm:$0xff] %v43
        %v45 = vld [vmem:[%s37 + $0x18] sm:$0xff]
        %46 = vst [vmem:[%s38 + $0x18] sm:$0xff] %v45
        %v47 = vld [vmem:[%s37 + $0x20] sm:$0xff]
        %48 = vst [vmem:[%s38 + $0x20] sm:$0xff] %v47
        %v49 = vld [vmem:[%s37 + $0x28] sm:$0xff]
        %50 = vst [vmem:[%s38 + $0x28] sm:$0xff] %v49
        %v51 = vld [vmem:[%s37 + $0x30] sm:$0xff]
        %52 = vst [vmem:[%s38 + $0x30] sm:$0xff] %v51
        %v53 = vld [vmem:[%s37 + $0x38] sm:$0xff]
        %54 = vst [vmem:[%s38 + $0x38] sm:$0xff] %v53
        %v55 = vld [vmem:[%s37 + $0x40] sm:$0xff]
        %56 = vst [vmem:[%s38 + $0x40] sm:$0xff] %v55
        %v57 = vld [vmem:[%s37 + $0x48] sm:$0xff]
        %58 = vst [vmem:[%s38 + $0x48] sm:$0xff] %v57
        %v59 = vld [vmem:[%s37 + $0x50] sm:$0xff]
        %60 = vst [vmem:[%s38 + $0x50] sm:$0xff] %v59
        %v61 = vld [vmem:[%s37 + $0x58] sm:$0xff]
        %62 = vst [vmem:[%s38 + $0x58] sm:$0xff] %v61
        %v63 = vld [vmem:[%s37 + $0x60] sm:$0xff]
        %64 = vst [vmem:[%s38 + $0x60] sm:$0xff] %v63
        %v65 = vld [vmem:[%s37 + $0x68] sm:$0xff]
        %66 = vst [vmem:[%s38 + $0x68] sm:$0xff] %v65
        %v67 = vld [vmem:[%s37 + $0x70] sm:$0xff]
        %68 = vst [vmem:[%s38 + $0x70] sm:$0xff] %v67
        %v69 = vld [vmem:[%s37 + $0x78] sm:$0xff]
        %70 = vst [vmem:[%s38 + $0x78] sm:$0xff] %v69
        %v71 = vld [vmem:[%s37 + $0x80] sm:$0xff]
        %72 = vst [vmem:[%s38 + $0x80] sm:$0xff] %v71
        %v73 = vld [vmem:[%s37 + $0x88] sm:$0xff]
        %74 = vst [vmem:[%s38 + $0x88] sm:$0xff] %v73
        %v75 = vld [vmem:[%s37 + $0x90] sm:$0xff]
        %76 = vst [vmem:[%s38 + $0x90] sm:$0xff] %v75
        %v77 = vld [vmem:[%s37 + $0x98] sm:$0xff]
        %78 = vst [vmem:[%s38 + $0x98] sm:$0xff] %v77
        %v79 = vld [vmem:[%s37 + $0xa0] sm:$0xff]
        %80 = vst [vmem:[%s38 + $0xa0] sm:$0xff] %v79
        %v81 = vld [vmem:[%s37 + $0xa8] sm:$0xff]
        %82 = vst [vmem:[%s38 + $0xa8] sm:$0xff] %v81
        %v83 = vld [vmem:[%s37 + $0xb0] sm:$0xff]
        %84 = vst [vmem:[%s38 + $0xb0] sm:$0xff] %v83
        %v85 = vld [vmem:[%s37 + $0xb8] sm:$0xff]
        %86 = vst [vmem:[%s38 + $0xb8] sm:$0xff] %v85
        %v87 = vld [vmem:[%s37 + $0xc0] sm:$0xff]
        %88 = vst [vmem:[%s38 + $0xc0] sm:$0xff] %v87
        %v89 = vld [vmem:[%s37 + $0xc8] sm:$0xff]
        %90 = vst [vmem:[%s38 + $0xc8] sm:$0xff] %v89
        %v91 = vld [vmem:[%s37 + $0xd0] sm:$0xff]
        %92 = vst [vmem:[%s38 + $0xd0] sm:$0xff] %v91
        %v93 = vld [vmem:[%s37 + $0xd8] sm:$0xff]
        %94 = vst [vmem:[%s38 + $0xd8] sm:$0xff] %v93
        %v95 = vld [vmem:[%s37 + $0xe0] sm:$0xff]
        %96 = vst [vmem:[%s38 + $0xe0] sm:$0xff] %v95
        %v97 = vld [vmem:[%s37 + $0xe8] sm:$0xff]
        %98 = vst [vmem:[%s38 + $0xe8] sm:$0xff] %v97
        %v99 = vld [vmem:[%s37 + $0xf0] sm:$0xff]
        %100 = vst [vmem:[%s38 + $0xf0] sm:$0xff] %v99
        %v101 = vld [vmem:[%s37 + $0xf8] sm:$0xff]
        %102 = vst [vmem:[%s38 + $0xf8] sm:$0xff] %v101
        %v103 = vld [vmem:[%s37 + $0x100] sm:$0xff]
        %104 = vst [vmem:[%s38 + $0x100] sm:$0xff] %v103
        %v105 = vld [vmem:[%s37 + $0x108] sm:$0xff]
        %106 = vst [vmem:[%s38 + $0x108] sm:$0xff] %v105
        %v107 = vld [vmem:[%s37 + $0x110] sm:$0xff]
        %108 = vst [vmem:[%s38 + $0x110] sm:$0xff] %v107
        %v109 = vld [vmem:[%s37 + $0x118] sm:$0xff]
        %110 = vst [vmem:[%s38 + $0x118] sm:$0xff] %v109
        %v111 = vld [vmem:[%s37 + $0x120] sm:$0xff]
        %112 = vst [vmem:[%s38 + $0x120] sm:$0xff] %v111
        %v113 = vld [vmem:[%s37 + $0x128] sm:$0xff]
        %114 = vst [vmem:[%s38 + $0x128] sm:$0xff] %v113
        %v115 = vld [vmem:[%s37 + $0x130] sm:$0xff]
        %116 = vst [vmem:[%s38 + $0x130] sm:$0xff] %v115
        %v117 = vld [vmem:[%s37 + $0x138] sm:$0xff]
        %118 = vst [vmem:[%s38 + $0x138] sm:$0xff] %v117
        %v119 = vld [vmem:[%s37 + $0x140] sm:$0xff]
        %120 = vst [vmem:[%s38 + $0x140] sm:$0xff] %v119
        %v121 = vld [vmem:[%s37 + $0x148] sm:$0xff]
        %122 = vst [vmem:[%s38 + $0x148] sm:$0xff] %v121
        %v123 = vld [vmem:[%s37 + $0x150] sm:$0xff]
        %124 = vst [vmem:[%s38 + $0x150] sm:$0xff] %v123
        %v125 = vld [vmem:[%s37 + $0x158] sm:$0xff]
        %126 = vst [vmem:[%s38 + $0x158] sm:$0xff] %v125
        %v127 = vld [vmem:[%s37 + $0x160] sm:$0xff]
        %128 = vst [vmem:[%s38 + $0x160] sm:$0xff] %v127
        %v129 = vld [vmem:[%s37 + $0x168] sm:$0xff]
        %130 = vst [vmem:[%s38 + $0x168] sm:$0xff] %v129
        %v131 = vld [vmem:[%s37 + $0x170] sm:$0xff]
        %132 = vst [vmem:[%s38 + $0x170] sm:$0xff] %v131
        %v133 = vld [vmem:[%s37 + $0x178] sm:$0xff]
        %134 = vst [vmem:[%s38 + $0x178] sm:$0xff] %v133
        %v135 = vld [vmem:[%s37 + $0x180] sm:$0xff]
        %136 = vst [vmem:[%s38 + $0x180] sm:$0xff] %v135
        %v137 = vld [vmem:[%s37 + $0x188] sm:$0xff]
        %138 = vst [vmem:[%s38 + $0x188] sm:$0xff] %v137
        %v139 = vld [vmem:[%s37 + $0x190] sm:$0xff]
        %140 = vst [vmem:[%s38 + $0x190] sm:$0xff] %v139
        %v141 = vld [vmem:[%s37 + $0x198] sm:$0xff]
        %142 = vst [vmem:[%s38 + $0x198] sm:$0xff] %v141
        %v143 = vld [vmem:[%s37 + $0x1a0] sm:$0xff]
        %144 = vst [vmem:[%s38 + $0x1a0] sm:$0xff] %v143
        %v145 = vld [vmem:[%s37 + $0x1a8] sm:$0xff]
        %146 = vst [vmem:[%s38 + $0x1a8] sm:$0xff] %v145
        %v147 = vld [vmem:[%s37 + $0x1b0] sm:$0xff]
        %148 = vst [vmem:[%s38 + $0x1b0] sm:$0xff] %v147
        %v149 = vld [vmem:[%s37 + $0x1b8] sm:$0xff]
        %150 = vst [vmem:[%s38 + $0x1b8] sm:$0xff] %v149
        %v151 = vld [vmem:[%s37 + $0x1c0] sm:$0xff]
        %152 = vst [vmem:[%s38 + $0x1c0] sm:$0xff] %v151
        %v153 = vld [vmem:[%s37 + $0x1c8] sm:$0xff]
        %154 = vst [vmem:[%s38 + $0x1c8] sm:$0xff] %v153
        %v155 = vld [vmem:[%s37 + $0x1d0] sm:$0xff]
        %156 = vst [vmem:[%s38 + $0x1d0] sm:$0xff] %v155
        %v157 = vld [vmem:[%s37 + $0x1d8] sm:$0xff]
        %158 = vst [vmem:[%s38 + $0x1d8] sm:$0xff] %v157
        %v159 = vld [vmem:[%s37 + $0x1e0] sm:$0xff]
        %160 = vst [vmem:[%s38 + $0x1e0] sm:$0xff] %v159
        %v161 = vld [vmem:[%s37 + $0x1e8] sm:$0xff]
        %162 = vst [vmem:[%s38 + $0x1e8] sm:$0xff] %v161
        %v163 = vld [vmem:[%s37 + $0x1f0] sm:$0xff]
        %164 = vst [vmem:[%s38 + $0x1f0] sm:$0xff] %v163
        %v165 = vld [vmem:[%s37 + $0x1f8] sm:$0xff]
        %166 = vst [vmem:[%s38 + $0x1f8] sm:$0xff] %v165
        %v167 = vld [vmem:[%s37 + $0x200] sm:$0xff]
        %168 = vst [vmem:[%s38 + $0x200] sm:$0xff] %v167
        %v169 = vld [vmem:[%s37 + $0x208] sm:$0xff]
        %170 = vst [vmem:[%s38 + $0x208] sm:$0xff] %v169
        %v171 = vld [vmem:[%s37 + $0x210] sm:$0xff]
        %172 = vst [vmem:[%s38 + $0x210] sm:$0xff] %v171
        %v173 = vld [vmem:[%s37 + $0x218] sm:$0xff]
        %174 = vst [vmem:[%s38 + $0x218] sm:$0xff] %v173
        %v175 = vld [vmem:[%s37 + $0x220] sm:$0xff]
        %176 = vst [vmem:[%s38 + $0x220] sm:$0xff] %v175
        %v177 = vld [vmem:[%s37 + $0x228] sm:$0xff]
        %178 = vst [vmem:[%s38 + $0x228] sm:$0xff] %v177
        %v179 = vld [vmem:[%s37 + $0x230] sm:$0xff]
        %180 = vst [vmem:[%s38 + $0x230] sm:$0xff] %v179
        %v181 = vld [vmem:[%s37 + $0x238] sm:$0xff]
        %182 = vst [vmem:[%s38 + $0x238] sm:$0xff] %v181
      $region38: #{tpu_custom_call.1} parent=32 // loop_footer
        %s36 = sadd.s32 1, %s32
      $region39: #{tpu_custom_call.1} parent=32 // loop_footer_branch
        %31 = sbr.rel target = $region35
      $region40: #{tpu_custom_call.1} parent=32 // loop_exit
        _
    $region33: #{tpu_custom_call.1} parent=1 // pred_fallthru
      _
    // Predicated region
    $region41: #{tpu_custom_call.1} parent=1 // pred_check
      _
    $region42: #{tpu_custom_call.1} parent=1 // pred_check_branch
      %184 = sbr.rel target = $region44
    $region43: #{tpu_custom_call.1} parent=1 // pred_region
      _
    $region44: #{tpu_custom_call.1} parent=1 // pred_fallthru
      _
    // Predicated region
    $region45: #{tpu_custom_call.1} parent=1 // pred_check
      _
    $region46: #{tpu_custom_call.1} parent=1 // pred_check_branch
      %187 = sbr.rel (0) target = $region48
    $region47: #{tpu_custom_call.1} parent=1 // pred_region
      %188 = vsyncadd [#allocation8], 9216
    $region48: #{tpu_custom_call.1} parent=1 // pred_fallthru
      _
    %s189 = scalar_lea.sflag [#allocation8], 1
    // Predicated region
    $region49: #{tpu_custom_call.1} parent=1 // pred_check
      _
    $region50: #{tpu_custom_call.1} parent=1 // pred_check_branch
      %191 = sbr.rel (0) target = $region52
    $region51: #{tpu_custom_call.1} parent=1 // pred_region
      loop: start=0, step=1, limit=1
      $region53: #{tpu_custom_call.1} parent=51 // loop_pre_header
        _
      $region54: #{tpu_custom_call.1} parent=51 // loop_header
        %s193 = sphi 0, %s197
        %p194 = scmp.ge.s32.totalorder %s193, 1
        %s198 = sphi %s7, %s7
        %s199 = sphi [#allocation7], [#allocation7]
      $region55: #{tpu_custom_call.1} parent=51 // loop_header_branch
        %196 = sbr.rel (%p194) target = $region59
      $region56: #{tpu_custom_call.1} parent=51 // loop_body
        %v200 = vld [vmem:[%s198] sm:$0xff]
        %201 = vst [vmem:[%s199] sm:$0xff] %v200
        %v202 = vld [vmem:[%s198 + $0x8] sm:$0xff]
        %203 = vst [vmem:[%s199 + $0x8] sm:$0xff] %v202
        %v204 = vld [vmem:[%s198 + $0x10] sm:$0xff]
        %205 = vst [vmem:[%s199 + $0x10] sm:$0xff] %v204
        %v206 = vld [vmem:[%s198 + $0x18] sm:$0xff]
        %207 = vst [vmem:[%s199 + $0x18] sm:$0xff] %v206
        %v208 = vld [vmem:[%s198 + $0x20] sm:$0xff]
        %209 = vst [vmem:[%s199 + $0x20] sm:$0xff] %v208
        %v210 = vld [vmem:[%s198 + $0x28] sm:$0xff]
        %211 = vst [vmem:[%s199 + $0x28] sm:$0xff] %v210
        %v212 = vld [vmem:[%s198 + $0x30] sm:$0xff]
        %213 = vst [vmem:[%s199 + $0x30] sm:$0xff] %v212
        %v214 = vld [vmem:[%s198 + $0x38] sm:$0xff]
        %215 = vst [vmem:[%s199 + $0x38] sm:$0xff] %v214
        %v216 = vld [vmem:[%s198 + $0x40] sm:$0xff]
        %217 = vst [vmem:[%s199 + $0x40] sm:$0xff] %v216
        %v218 = vld [vmem:[%s198 + $0x48] sm:$0xff]
        %219 = vst [vmem:[%s199 + $0x48] sm:$0xff] %v218
        %v220 = vld [vmem:[%s198 + $0x50] sm:$0xff]
        %221 = vst [vmem:[%s199 + $0x50] sm:$0xff] %v220
        %v222 = vld [vmem:[%s198 + $0x58] sm:$0xff]
        %223 = vst [vmem:[%s199 + $0x58] sm:$0xff] %v222
        %v224 = vld [vmem:[%s198 + $0x60] sm:$0xff]
        %225 = vst [vmem:[%s199 + $0x60] sm:$0xff] %v224
        %v226 = vld [vmem:[%s198 + $0x68] sm:$0xff]
        %227 = vst [vmem:[%s199 + $0x68] sm:$0xff] %v226
        %v228 = vld [vmem:[%s198 + $0x70] sm:$0xff]
        %229 = vst [vmem:[%s199 + $0x70] sm:$0xff] %v228
        %v230 = vld [vmem:[%s198 + $0x78] sm:$0xff]
        %231 = vst [vmem:[%s199 + $0x78] sm:$0xff] %v230
        %v232 = vld [vmem:[%s198 + $0x80] sm:$0xff]
        %233 = vst [vmem:[%s199 + $0x80] sm:$0xff] %v232
        %v234 = vld [vmem:[%s198 + $0x88] sm:$0xff]
        %235 = vst [vmem:[%s199 + $0x88] sm:$0xff] %v234
        %v236 = vld [vmem:[%s198 + $0x90] sm:$0xff]
        %237 = vst [vmem:[%s199 + $0x90] sm:$0xff] %v236
        %v238 = vld [vmem:[%s198 + $0x98] sm:$0xff]
        %239 = vst [vmem:[%s199 + $0x98] sm:$0xff] %v238
        %v240 = vld [vmem:[%s198 + $0xa0] sm:$0xff]
        %241 = vst [vmem:[%s199 + $0xa0] sm:$0xff] %v240
        %v242 = vld [vmem:[%s198 + $0xa8] sm:$0xff]
        %243 = vst [vmem:[%s199 + $0xa8] sm:$0xff] %v242
        %v244 = vld [vmem:[%s198 + $0xb0] sm:$0xff]
        %245 = vst [vmem:[%s199 + $0xb0] sm:$0xff] %v244
        %v246 = vld [vmem:[%s198 + $0xb8] sm:$0xff]
        %247 = vst [vmem:[%s199 + $0xb8] sm:$0xff] %v246
        %v248 = vld [vmem:[%s198 + $0xc0] sm:$0xff]
        %249 = vst [vmem:[%s199 + $0xc0] sm:$0xff] %v248
        %v250 = vld [vmem:[%s198 + $0xc8] sm:$0xff]
        %251 = vst [vmem:[%s199 + $0xc8] sm:$0xff] %v250
        %v252 = vld [vmem:[%s198 + $0xd0] sm:$0xff]
        %253 = vst [vmem:[%s199 + $0xd0] sm:$0xff] %v252
        %v254 = vld [vmem:[%s198 + $0xd8] sm:$0xff]
        %255 = vst [vmem:[%s199 + $0xd8] sm:$0xff] %v254
        %v256 = vld [vmem:[%s198 + $0xe0] sm:$0xff]
        %257 = vst [vmem:[%s199 + $0xe0] sm:$0xff] %v256
        %v258 = vld [vmem:[%s198 + $0xe8] sm:$0xff]
        %259 = vst [vmem:[%s199 + $0xe8] sm:$0xff] %v258
        %v260 = vld [vmem:[%s198 + $0xf0] sm:$0xff]
        %261 = vst [vmem:[%s199 + $0xf0] sm:$0xff] %v260
        %v262 = vld [vmem:[%s198 + $0xf8] sm:$0xff]
        %263 = vst [vmem:[%s199 + $0xf8] sm:$0xff] %v262
        %v264 = vld [vmem:[%s198 + $0x100] sm:$0xff]
        %265 = vst [vmem:[%s199 + $0x100] sm:$0xff] %v264
        %v266 = vld [vmem:[%s198 + $0x108] sm:$0xff]
        %267 = vst [vmem:[%s199 + $0x108] sm:$0xff] %v266
        %v268 = vld [vmem:[%s198 + $0x110] sm:$0xff]
        %269 = vst [vmem:[%s199 + $0x110] sm:$0xff] %v268
        %v270 = vld [vmem:[%s198 + $0x118] sm:$0xff]
        %271 = vst [vmem:[%s199 + $0x118] sm:$0xff] %v270
        %v272 = vld [vmem:[%s198 + $0x120] sm:$0xff]
        %273 = vst [vmem:[%s199 + $0x120] sm:$0xff] %v272
        %v274 = vld [vmem:[%s198 + $0x128] sm:$0xff]
        %275 = vst [vmem:[%s199 + $0x128] sm:$0xff] %v274
        %v276 = vld [vmem:[%s198 + $0x130] sm:$0xff]
        %277 = vst [vmem:[%s199 + $0x130] sm:$0xff] %v276
        %v278 = vld [vmem:[%s198 + $0x138] sm:$0xff]
        %279 = vst [vmem:[%s199 + $0x138] sm:$0xff] %v278
        %v280 = vld [vmem:[%s198 + $0x140] sm:$0xff]
        %281 = vst [vmem:[%s199 + $0x140] sm:$0xff] %v280
        %v282 = vld [vmem:[%s198 + $0x148] sm:$0xff]
        %283 = vst [vmem:[%s199 + $0x148] sm:$0xff] %v282
        %v284 = vld [vmem:[%s198 + $0x150] sm:$0xff]
        %285 = vst [vmem:[%s199 + $0x150] sm:$0xff] %v284
        %v286 = vld [vmem:[%s198 + $0x158] sm:$0xff]
        %287 = vst [vmem:[%s199 + $0x158] sm:$0xff] %v286
        %v288 = vld [vmem:[%s198 + $0x160] sm:$0xff]
        %289 = vst [vmem:[%s199 + $0x160] sm:$0xff] %v288
        %v290 = vld [vmem:[%s198 + $0x168] sm:$0xff]
        %291 = vst [vmem:[%s199 + $0x168] sm:$0xff] %v290
        %v292 = vld [vmem:[%s198 + $0x170] sm:$0xff]
        %293 = vst [vmem:[%s199 + $0x170] sm:$0xff] %v292
        %v294 = vld [vmem:[%s198 + $0x178] sm:$0xff]
        %295 = vst [vmem:[%s199 + $0x178] sm:$0xff] %v294
        %v296 = vld [vmem:[%s198 + $0x180] sm:$0xff]
        %297 = vst [vmem:[%s199 + $0x180] sm:$0xff] %v296
        %v298 = vld [vmem:[%s198 + $0x188] sm:$0xff]
        %299 = vst [vmem:[%s199 + $0x188] sm:$0xff] %v298
        %v300 = vld [vmem:[%s198 + $0x190] sm:$0xff]
        %301 = vst [vmem:[%s199 + $0x190] sm:$0xff] %v300
        %v302 = vld [vmem:[%s198 + $0x198] sm:$0xff]
        %303 = vst [vmem:[%s199 + $0x198] sm:$0xff] %v302
        %v304 = vld [vmem:[%s198 + $0x1a0] sm:$0xff]
        %305 = vst [vmem:[%s199 + $0x1a0] sm:$0xff] %v304
        %v306 = vld [vmem:[%s198 + $0x1a8] sm:$0xff]
        %307 = vst [vmem:[%s199 + $0x1a8] sm:$0xff] %v306
        %v308 = vld [vmem:[%s198 + $0x1b0] sm:$0xff]
        %309 = vst [vmem:[%s199 + $0x1b0] sm:$0xff] %v308
        %v310 = vld [vmem:[%s198 + $0x1b8] sm:$0xff]
        %311 = vst [vmem:[%s199 + $0x1b8] sm:$0xff] %v310
        %v312 = vld [vmem:[%s198 + $0x1c0] sm:$0xff]
        %313 = vst [vmem:[%s199 + $0x1c0] sm:$0xff] %v312
        %v314 = vld [vmem:[%s198 + $0x1c8] sm:$0xff]
        %315 = vst [vmem:[%s199 + $0x1c8] sm:$0xff] %v314
        %v316 = vld [vmem:[%s198 + $0x1d0] sm:$0xff]
        %317 = vst [vmem:[%s199 + $0x1d0] sm:$0xff] %v316
        %v318 = vld [vmem:[%s198 + $0x1d8] sm:$0xff]
        %319 = vst [vmem:[%s199 + $0x1d8] sm:$0xff] %v318
        %v320 = vld [vmem:[%s198 + $0x1e0] sm:$0xff]
        %321 = vst [vmem:[%s199 + $0x1e0] sm:$0xff] %v320
        %v322 = vld [vmem:[%s198 + $0x1e8] sm:$0xff]
        %323 = vst [vmem:[%s199 + $0x1e8] sm:$0xff] %v322
        %v324 = vld [vmem:[%s198 + $0x1f0] sm:$0xff]
        %325 = vst [vmem:[%s199 + $0x1f0] sm:$0xff] %v324
        %v326 = vld [vmem:[%s198 + $0x1f8] sm:$0xff]
        %327 = vst [vmem:[%s199 + $0x1f8] sm:$0xff] %v326
        %v328 = vld [vmem:[%s198 + $0x200] sm:$0xff]
        %329 = vst [vmem:[%s199 + $0x200] sm:$0xff] %v328
        %v330 = vld [vmem:[%s198 + $0x208] sm:$0xff]
        %331 = vst [vmem:[%s199 + $0x208] sm:$0xff] %v330
        %v332 = vld [vmem:[%s198 + $0x210] sm:$0xff]
        %333 = vst [vmem:[%s199 + $0x210] sm:$0xff] %v332
        %v334 = vld [vmem:[%s198 + $0x218] sm:$0xff]
        %335 = vst [vmem:[%s199 + $0x218] sm:$0xff] %v334
        %v336 = vld [vmem:[%s198 + $0x220] sm:$0xff]
        %337 = vst [vmem:[%s199 + $0x220] sm:$0xff] %v336
        %v338 = vld [vmem:[%s198 + $0x228] sm:$0xff]
        %339 = vst [vmem:[%s199 + $0x228] sm:$0xff] %v338
        %v340 = vld [vmem:[%s198 + $0x230] sm:$0xff]
        %341 = vst [vmem:[%s199 + $0x230] sm:$0xff] %v340
        %v342 = vld [vmem:[%s198 + $0x238] sm:$0xff]
        %343 = vst [vmem:[%s199 + $0x238] sm:$0xff] %v342
        %v344 = vld [vmem:[%s198 + $0x240] sm:$0xff]
        %345 = vst [vmem:[%s199 + $0x240] sm:$0xff] %v344
        %v346 = vld [vmem:[%s198 + $0x248] sm:$0xff]
        %347 = vst [vmem:[%s199 + $0x248] sm:$0xff] %v346
        %v348 = vld [vmem:[%s198 + $0x250] sm:$0xff]
        %349 = vst [vmem:[%s199 + $0x250] sm:$0xff] %v348
        %v350 = vld [vmem:[%s198 + $0x258] sm:$0xff]
        %351 = vst [vmem:[%s199 + $0x258] sm:$0xff] %v350
        %v352 = vld [vmem:[%s198 + $0x260] sm:$0xff]
        %353 = vst [vmem:[%s199 + $0x260] sm:$0xff] %v352
        %v354 = vld [vmem:[%s198 + $0x268] sm:$0xff]
        %355 = vst [vmem:[%s199 + $0x268] sm:$0xff] %v354
        %v356 = vld [vmem:[%s198 + $0x270] sm:$0xff]
        %357 = vst [vmem:[%s199 + $0x270] sm:$0xff] %v356
        %v358 = vld [vmem:[%s198 + $0x278] sm:$0xff]
        %359 = vst [vmem:[%s199 + $0x278] sm:$0xff] %v358
        %v360 = vld [vmem:[%s198 + $0x280] sm:$0xff]
        %361 = vst [vmem:[%s199 + $0x280] sm:$0xff] %v360
        %v362 = vld [vmem:[%s198 + $0x288] sm:$0xff]
        %363 = vst [vmem:[%s199 + $0x288] sm:$0xff] %v362
        %v364 = vld [vmem:[%s198 + $0x290] sm:$0xff]
        %365 = vst [vmem:[%s199 + $0x290] sm:$0xff] %v364
        %v366 = vld [vmem:[%s198 + $0x298] sm:$0xff]
        %367 = vst [vmem:[%s199 + $0x298] sm:$0xff] %v366
        %v368 = vld [vmem:[%s198 + $0x2a0] sm:$0xff]
        %369 = vst [vmem:[%s199 + $0x2a0] sm:$0xff] %v368
        %v370 = vld [vmem:[%s198 + $0x2a8] sm:$0xff]
        %371 = vst [vmem:[%s199 + $0x2a8] sm:$0xff] %v370
        %v372 = vld [vmem:[%s198 + $0x2b0] sm:$0xff]
        %373 = vst [vmem:[%s199 + $0x2b0] sm:$0xff] %v372
        %v374 = vld [vmem:[%s198 + $0x2b8] sm:$0xff]
        %375 = vst [vmem:[%s199 + $0x2b8] sm:$0xff] %v374
        %v376 = vld [vmem:[%s198 + $0x2c0] sm:$0xff]
        %377 = vst [vmem:[%s199 + $0x2c0] sm:$0xff] %v376
        %v378 = vld [vmem:[%s198 + $0x2c8] sm:$0xff]
        %379 = vst [vmem:[%s199 + $0x2c8] sm:$0xff] %v378
        %v380 = vld [vmem:[%s198 + $0x2d0] sm:$0xff]
        %381 = vst [vmem:[%s199 + $0x2d0] sm:$0xff] %v380
        %v382 = vld [vmem:[%s198 + $0x2d8] sm:$0xff]
        %383 = vst [vmem:[%s199 + $0x2d8] sm:$0xff] %v382
        %v384 = vld [vmem:[%s198 + $0x2e0] sm:$0xff]
        %385 = vst [vmem:[%s199 + $0x2e0] sm:$0xff] %v384
        %v386 = vld [vmem:[%s198 + $0x2e8] sm:$0xff]
        %387 = vst [vmem:[%s199 + $0x2e8] sm:$0xff] %v386
        %v388 = vld [vmem:[%s198 + $0x2f0] sm:$0xff]
        %389 = vst [vmem:[%s199 + $0x2f0] sm:$0xff] %v388
        %v390 = vld [vmem:[%s198 + $0x2f8] sm:$0xff]
        %391 = vst [vmem:[%s199 + $0x2f8] sm:$0xff] %v390
        %v392 = vld [vmem:[%s198 + $0x300] sm:$0xff]
        %393 = vst [vmem:[%s199 + $0x300] sm:$0xff] %v392
        %v394 = vld [vmem:[%s198 + $0x308] sm:$0xff]
        %395 = vst [vmem:[%s199 + $0x308] sm:$0xff] %v394
        %v396 = vld [vmem:[%s198 + $0x310] sm:$0xff]
        %397 = vst [vmem:[%s199 + $0x310] sm:$0xff] %v396
        %v398 = vld [vmem:[%s198 + $0x318] sm:$0xff]
        %399 = vst [vmem:[%s199 + $0x318] sm:$0xff] %v398
        %v400 = vld [vmem:[%s198 + $0x320] sm:$0xff]
        %401 = vst [vmem:[%s199 + $0x320] sm:$0xff] %v400
        %v402 = vld [vmem:[%s198 + $0x328] sm:$0xff]
        %403 = vst [vmem:[%s199 + $0x328] sm:$0xff] %v402
        %v404 = vld [vmem:[%s198 + $0x330] sm:$0xff]
        %405 = vst [vmem:[%s199 + $0x330] sm:$0xff] %v404
        %v406 = vld [vmem:[%s198 + $0x338] sm:$0xff]
        %407 = vst [vmem:[%s199 + $0x338] sm:$0xff] %v406
        %v408 = vld [vmem:[%s198 + $0x340] sm:$0xff]
        %409 = vst [vmem:[%s199 + $0x340] sm:$0xff] %v408
        %v410 = vld [vmem:[%s198 + $0x348] sm:$0xff]
        %411 = vst [vmem:[%s199 + $0x348] sm:$0xff] %v410
        %v412 = vld [vmem:[%s198 + $0x350] sm:$0xff]
        %413 = vst [vmem:[%s199 + $0x350] sm:$0xff] %v412
        %v414 = vld [vmem:[%s198 + $0x358] sm:$0xff]
        %415 = vst [vmem:[%s199 + $0x358] sm:$0xff] %v414
        %v416 = vld [vmem:[%s198 + $0x360] sm:$0xff]
        %417 = vst [vmem:[%s199 + $0x360] sm:$0xff] %v416
        %v418 = vld [vmem:[%s198 + $0x368] sm:$0xff]
        %419 = vst [vmem:[%s199 + $0x368] sm:$0xff] %v418
        %v420 = vld [vmem:[%s198 + $0x370] sm:$0xff]
        %421 = vst [vmem:[%s199 + $0x370] sm:$0xff] %v420
        %v422 = vld [vmem:[%s198 + $0x378] sm:$0xff]
        %423 = vst [vmem:[%s199 + $0x378] sm:$0xff] %v422
        %v424 = vld [vmem:[%s198 + $0x380] sm:$0xff]
        %425 = vst [vmem:[%s199 + $0x380] sm:$0xff] %v424
        %v426 = vld [vmem:[%s198 + $0x388] sm:$0xff]
        %427 = vst [vmem:[%s199 + $0x388] sm:$0xff] %v426
        %v428 = vld [vmem:[%s198 + $0x390] sm:$0xff]
        %429 = vst [vmem:[%s199 + $0x390] sm:$0xff] %v428
        %v430 = vld [vmem:[%s198 + $0x398] sm:$0xff]
        %431 = vst [vmem:[%s199 + $0x398] sm:$0xff] %v430
        %v432 = vld [vmem:[%s198 + $0x3a0] sm:$0xff]
        %433 = vst [vmem:[%s199 + $0x3a0] sm:$0xff] %v432
        %v434 = vld [vmem:[%s198 + $0x3a8] sm:$0xff]
        %435 = vst [vmem:[%s199 + $0x3a8] sm:$0xff] %v434
        %v436 = vld [vmem:[%s198 + $0x3b0] sm:$0xff]
        %437 = vst [vmem:[%s199 + $0x3b0] sm:$0xff] %v436
        %v438 = vld [vmem:[%s198 + $0x3b8] sm:$0xff]
        %439 = vst [vmem:[%s199 + $0x3b8] sm:$0xff] %v438
        %v440 = vld [vmem:[%s198 + $0x3c0] sm:$0xff]
        %441 = vst [vmem:[%s199 + $0x3c0] sm:$0xff] %v440
        %v442 = vld [vmem:[%s198 + $0x3c8] sm:$0xff]
        %443 = vst [vmem:[%s199 + $0x3c8] sm:$0xff] %v442
        %v444 = vld [vmem:[%s198 + $0x3d0] sm:$0xff]
        %445 = vst [vmem:[%s199 + $0x3d0] sm:$0xff] %v444
        %v446 = vld [vmem:[%s198 + $0x3d8] sm:$0xff]
        %447 = vst [vmem:[%s199 + $0x3d8] sm:$0xff] %v446
        %v448 = vld [vmem:[%s198 + $0x3e0] sm:$0xff]
        %449 = vst [vmem:[%s199 + $0x3e0] sm:$0xff] %v448
        %v450 = vld [vmem:[%s198 + $0x3e8] sm:$0xff]
        %451 = vst [vmem:[%s199 + $0x3e8] sm:$0xff] %v450
        %v452 = vld [vmem:[%s198 + $0x3f0] sm:$0xff]
        %453 = vst [vmem:[%s199 + $0x3f0] sm:$0xff] %v452
        %v454 = vld [vmem:[%s198 + $0x3f8] sm:$0xff]
        %455 = vst [vmem:[%s199 + $0x3f8] sm:$0xff] %v454
      $region57: #{tpu_custom_call.1} parent=51 // loop_footer
        %s197 = sadd.s32 1, %s193
      $region58: #{tpu_custom_call.1} parent=51 // loop_footer_branch
        %192 = sbr.rel target = $region54
      $region59: #{tpu_custom_call.1} parent=51 // loop_exit
        _
    $region52: #{tpu_custom_call.1} parent=1 // pred_fallthru
      _
    // Predicated region
    $region60: #{tpu_custom_call.1} parent=1 // pred_check
      _
    $region61: #{tpu_custom_call.1} parent=1 // pred_check_branch
      %457 = sbr.rel target = $region63
    $region62: #{tpu_custom_call.1} parent=1 // pred_region
      _
    $region63: #{tpu_custom_call.1} parent=1 // pred_fallthru
      _
    // Predicated region
    $region64: #{tpu_custom_call.1} parent=1 // pred_check
      _
    $region65: #{tpu_custom_call.1} parent=1 // pred_check_branch
      %460 = sbr.rel (0) target = $region67
    $region66: #{tpu_custom_call.1} parent=1 // pred_region
      %461 = vsyncadd %s189, 16384
    $region67: #{tpu_custom_call.1} parent=1 // pred_fallthru
      _
    %vm462 = vcmask 261120
    %463 = vst.msk [vmem:[#allocation2] sm:$0xff] %vm462, 0.0
    %464 = vst.msk [vmem:[#allocation2 + $0x8] sm:$0xff] %vm462, 0.0
    %465 = vst.msk [vmem:[#allocation2 + $0x10] sm:$0xff] %vm462, 0.0
    %466 = vst.msk [vmem:[#allocation2 + $0xe0] sm:$0xff] %vm462, 0.0
    %467 = vst.msk [vmem:[#allocation2 + $0xe8] sm:$0xff] %vm462, 0.0
    %468 = vst.msk [vmem:[#allocation2 + $0xf0] sm:$0xff] %vm462, 0.0
    %vm469 = vcmask 523264
    %470 = vst.msk [vmem:[#allocation3] sm:$0xff] %vm469, 0.0
    %471 = vst.msk [vmem:[#allocation3 + $0x8] sm:$0xff] %vm469, 0.0
    %472 = vst.msk [vmem:[#allocation3 + $0x10] sm:$0xff] %vm469, 0.0
    %473 = vst.msk [vmem:[#allocation3 + $0xe0] sm:$0xff] %vm469, 0.0
    %474 = vst.msk [vmem:[#allocation3 + $0xe8] sm:$0xff] %vm469, 0.0
    %475 = vst.msk [vmem:[#allocation3 + $0xf0] sm:$0xff] %vm469, 0.0
    %476 = vst [vmem:[#allocation4] sm:$0xff] 0.0
    %477 = vst [vmem:[#allocation4 + $0x8] sm:$0xff] 0.0
    %478 = vst [vmem:[#allocation4 + $0x10] sm:$0xff] 0.0
    %479 = vst [vmem:[#allocation4 + $0xe0] sm:$0xff] 0.0
    %480 = vst [vmem:[#allocation4 + $0xe8] sm:$0xff] 0.0
    %481 = vst [vmem:[#allocation4 + $0xf0] sm:$0xff] 0.0
    %v482 = vld [vmem:[%s0 + $0x18] sm:$0xff]
    %v483 = vld [vmem:[%s0 + $0x20] sm:$0xff]
    %v484 = vld [vmem:[%s0 + $0x28] sm:$0xff]
    %v485 = vld [vmem:[%s0 + $0x30] sm:$0xff]
    %v486 = vld [vmem:[%s0 + $0x38] sm:$0xff]
    %v487 = vld [vmem:[%s0 + $0x40] sm:$0xff]
    %v488 = vld [vmem:[%s0 + $0x48] sm:$0xff]
    %v489 = vld [vmem:[%s0 + $0x50] sm:$0xff]
    %v490 = vld [vmem:[%s0 + $0x58] sm:$0xff]
    %v491 = vld [vmem:[%s0 + $0x60] sm:$0xff]
    %v492 = vld [vmem:[%s0 + $0x68] sm:$0xff]
    %v493 = vld [vmem:[%s0 + $0x70] sm:$0xff]
    %v494 = vld [vmem:[%s0 + $0x78] sm:$0xff]
    %v495 = vld [vmem:[%s0 + $0x80] sm:$0xff]
    %v496 = vld [vmem:[%s0 + $0x88] sm:$0xff]
    %v497 = vld [vmem:[%s0 + $0x90] sm:$0xff]
    %v498 = vld [vmem:[%s0 + $0x98] sm:$0xff]
    %v499 = vld [vmem:[%s0 + $0xa0] sm:$0xff]
    %v500 = vld [vmem:[%s0 + $0xa8] sm:$0xff]
    %v501 = vld [vmem:[%s0 + $0xb0] sm:$0xff]
    %v502 = vld [vmem:[%s0 + $0xb8] sm:$0xff]
    %v503 = vld [vmem:[%s0 + $0xc0] sm:$0xff]
    %v504 = vld [vmem:[%s0 + $0xc8] sm:$0xff]
    %v505 = vld [vmem:[%s0 + $0xd0] sm:$0xff]
    %v506 = vld [vmem:[%s0 + $0xd8] sm:$0xff]
    %v507 = vld [vmem:[%s0 + $0x2] sm:$0xff]
    %v508 = vld [vmem:[%s0 + $0xa] sm:$0xff]
    %v509 = vld [vmem:[%s0 + $0x12] sm:$0xff]
    %v510 = vld [vmem:[%s0 + $0x1a] sm:$0xff]
    %v511 = vld [vmem:[%s0 + $0x22] sm:$0xff]
    %v512 = vld [vmem:[%s0 + $0x2a] sm:$0xff]
    %v513 = vld [vmem:[%s0 + $0x32] sm:$0xff]
    %v514 = vld [vmem:[%s0 + $0x3a] sm:$0xff]
    %v515 = vld [vmem:[%s0 + $0x42] sm:$0xff]
    %v516 = vld [vmem:[%s0 + $0x4a] sm:$0xff]
    %v517 = vld [vmem:[%s0 + $0x52] sm:$0xff]
    %v518 = vld [vmem:[%s0 + $0x5a] sm:$0xff]
    %v519 = vld [vmem:[%s0 + $0x62] sm:$0xff]
    %v520 = vld [vmem:[%s0 + $0x6a] sm:$0xff]
    %v521 = vld [vmem:[%s0 + $0x72] sm:$0xff]
    %v522 = vld [vmem:[%s0 + $0x7a] sm:$0xff]
    %v523 = vld [vmem:[%s0 + $0x82] sm:$0xff]
    %v524 = vld [vmem:[%s0 + $0x8a] sm:$0xff]
    %v525 = vld [vmem:[%s0 + $0x92] sm:$0xff]
    %v526 = vld [vmem:[%s0 + $0x9a] sm:$0xff]
    %v527 = vld [vmem:[%s0 + $0xa2] sm:$0xff]
    %v528 = vld [vmem:[%s0 + $0xaa] sm:$0xff]
    %v529 = vld [vmem:[%s0 + $0xb2] sm:$0xff]
    %v530 = vld [vmem:[%s0 + $0xba] sm:$0xff]
    %v531 = vld [vmem:[%s0 + $0xc2] sm:$0xff]
    %v532 = vld [vmem:[%s1] sm:$0xff]
    %v533 = vld [vmem:[%s0 + $0x4] sm:$0xff]
    %v534 = vld [vmem:[%s0 + $0xc] sm:$0xff]
    %v535 = vld [vmem:[%s0 + $0x14] sm:$0xff]
    %v536 = vld [vmem:[%s0 + $0x1c] sm:$0xff]
    %v537 = vld [vmem:[%s0 + $0x24] sm:$0xff]
    %v538 = vld [vmem:[%s0 + $0x2c] sm:$0xff]
    %v539 = vld [vmem:[%s0 + $0x34] sm:$0xff]
    %v540 = vld [vmem:[%s0 + $0x3c] sm:$0xff]
    %v541 = vld [vmem:[%s0 + $0x44] sm:$0xff]
    %v542 = vld [vmem:[%s0 + $0x4c] sm:$0xff]
    %v543 = vld [vmem:[%s0 + $0x54] sm:$0xff]
    %v544 = vld [vmem:[%s0 + $0x5c] sm:$0xff]
    %v545 = vld [vmem:[%s0 + $0x64] sm:$0xff]
    %v546 = vld [vmem:[%s0 + $0x6c] sm:$0xff]
    %v547 = vld [vmem:[%s0 + $0x74] sm:$0xff]
    %v548 = vld [vmem:[%s0 + $0x7c] sm:$0xff]
    %v549 = vld [vmem:[%s0 + $0x84] sm:$0xff]
    %v550 = vld [vmem:[%s0 + $0x8c] sm:$0xff]
    %v551 = vld [vmem:[%s0 + $0x94] sm:$0xff]
    %v552 = vld [vmem:[%s0 + $0x9c] sm:$0xff]
    %v553 = vld [vmem:[%s0 + $0xa4] sm:$0xff]
    %v554 = vld [vmem:[%s0 + $0xac] sm:$0xff]
    %v555 = vld [vmem:[%s0 + $0xb4] sm:$0xff]
    %v556 = vld [vmem:[%s0 + $0xbc] sm:$0xff]
    %v557 = vld [vmem:[%s0 + $0xc4] sm:$0xff]
    %s558 = scalar_lea.vmem %s1, 8
    %v559 = vld [vmem:[%s558] sm:$0xff]
    %vm560 = vcmask 64512
    %v562 = vsel %vm560, %v533, 0
    %v565 = vsel %vm560, %v534, 0
    %v568 = vsel %vm560, %v535, 0
    %v571 = vsel %vm560, %v536, 0
    %v574 = vsel %vm560, %v537, 0
    %v577 = vsel %vm560, %v538, 0
    %v580 = vsel %vm560, %v539, 0
    %v583 = vsel %vm560, %v540, 0
    %v586 = vsel %vm560, %v541, 0
    %v589 = vsel %vm560, %v542, 0
    %v592 = vsel %vm560, %v543, 0
    %v595 = vsel %vm560, %v544, 0
    %v598 = vsel %vm560, %v545, 0
    %v601 = vsel %vm560, %v546, 0
    %v604 = vsel %vm560, %v547, 0
    %v607 = vsel %vm560, %v548, 0
    %v610 = vsel %vm560, %v549, 0
    %v613 = vsel %vm560, %v550, 0
    %v616 = vsel %vm560, %v551, 0
    %v619 = vsel %vm560, %v552, 0
    %v622 = vsel %vm560, %v553, 0
    %v625 = vsel %vm560, %v554, 0
    %v628 = vsel %vm560, %v555, 0
    %v631 = vsel %vm560, %v556, 0
    %v634 = vsel %vm560, %v557, 0
    %636 = vmatpush.msra.mxu0 0.0
    %637 = vmatpush.msra.mxu0 0.0
    %638 = vmatpush.msra.mxu0 0.0
    %639 = vmatpush.msra.mxu0 0.0
    %640 = vmatpush.msra.mxu0 0.0
    %641 = vmatpush.msra.mxu0 0.0
    %642 = vmatpush.msra.mxu0 0.0
    %643 = vmatpush.msra.mxu0 0.0
    %644 = vmatpush.msra.mxu0 0.0
    %645 = vmatpush.msra.mxu0 0.0
    %646 = vmatpush.msra.mxu0 0.0
    %647 = vmatpush.msra.mxu0 0.0
    %648 = vmatpush.msra.mxu0 0.0
    %649 = vmatpush.msra.mxu0 0.0
    %650 = vmatpush.msra.mxu0 0.0
    %651 = vmatpush.msra.mxu0 %v559
    %652 = vmatmul.f32.gmra.mxu0 %v562
    %v653 = vpop.f32.mrf.mxu0
    %v654 = vadd.f32 0.0, %v653
    %655 = vmatmul.f32.gmra.mxu0 %v565
    %v656 = vpop.f32.mrf.mxu0
    %v657 = vadd.f32 0.0, %v656
    %658 = vmatmul.f32.gmra.mxu0 %v568
    %v659 = vpop.f32.mrf.mxu0
    %v660 = vadd.f32 0.0, %v659
    %661 = vmatmul.f32.gmra.mxu0 %v571
    %v662 = vpop.f32.mrf.mxu0
    %v663 = vadd.f32 0.0, %v662
    %664 = vmatmul.f32.gmra.mxu0 %v574
    %v665 = vpop.f32.mrf.mxu0
    %v666 = vadd.f32 0.0, %v665
    %667 = vmatmul.f32.gmra.mxu0 %v577
    %v668 = vpop.f32.mrf.mxu0
    %v669 = vadd.f32 0.0, %v668
    %670 = vmatmul.f32.gmra.mxu0 %v580
    %v671 = vpop.f32.mrf.mxu0
    %v672 = vadd.f32 0.0, %v671
    %673 = vmatmul.f32.gmra.mxu0 %v583
    %v674 = vpop.f32.mrf.mxu0
    %v675 = vadd.f32 0.0, %v674
    %676 = vmatmul.f32.gmra.mxu0 %v586
    %v677 = vpop.f32.mrf.mxu0
    %v678 = vadd.f32 0.0, %v677
    %679 = vmatmul.f32.gmra.mxu0 %v589
    %v680 = vpop.f32.mrf.mxu0
    %v681 = vadd.f32 0.0, %v680
    %682 = vmatmul.f32.gmra.mxu0 %v592
    %v683 = vpop.f32.mrf.mxu0
    %v684 = vadd.f32 0.0, %v683
    %685 = vmatmul.f32.gmra.mxu0 %v595
    %v686 = vpop.f32.mrf.mxu0
    %v687 = vadd.f32 0.0, %v686
    %688 = vmatmul.f32.gmra.mxu0 %v598
    %v689 = vpop.f32.mrf.mxu0
    %v690 = vadd.f32 0.0, %v689
    %691 = vmatmul.f32.gmra.mxu0 %v601
    %v692 = vpop.f32.mrf.mxu0
    %v693 = vadd.f32 0.0, %v692
    %694 = vmatmul.f32.gmra.mxu0 %v604
    %v695 = vpop.f32.mrf.mxu0
    %v696 = vadd.f32 0.0, %v695
    %697 = vmatmul.f32.gmra.mxu0 %v607
    %v698 = vpop.f32.mrf.mxu0
    %v699 = vadd.f32 0.0, %v698
    %700 = vmatmul.f32.gmra.mxu0 %v610
    %v701 = vpop.f32.mrf.mxu0
    %v702 = vadd.f32 0.0, %v701
    %703 = vmatmul.f32.gmra.mxu0 %v613
    %v704 = vpop.f32.mrf.mxu0
    %v705 = vadd.f32 0.0, %v704
    %706 = vmatmul.f32.gmra.mxu0 %v616
    %v707 = vpop.f32.mrf.mxu0
    %v708 = vadd.f32 0.0, %v707
    %709 = vmatmul.f32.gmra.mxu0 %v619
    %v710 = vpop.f32.mrf.mxu0
    %v711 = vadd.f32 0.0, %v710
    %712 = vmatmul.f32.gmra.mxu0 %v622
    %v713 = vpop.f32.mrf.mxu0
    %v714 = vadd.f32 0.0, %v713
    %715 = vmatmul.f32.gmra.mxu0 %v625
    %v716 = vpop.f32.mrf.mxu0
    %v717 = vadd.f32 0.0, %v716
    %718 = vmatmul.f32.gmra.mxu0 %v628
    %v719 = vpop.f32.mrf.mxu0
    %v720 = vadd.f32 0.0, %v719
    %721 = vmatmul.f32.gmra.mxu0 %v631
    %v722 = vpop.f32.mrf.mxu0
    %v723 = vadd.f32 0.0, %v722
    %724 = vmatmul.f32.gmra.mxu0 %v634
    %v725 = vpop.f32.mrf.mxu0
    %v726 = vadd.f32 0.0, %v725
    %727 = vdwg.mxu0
    %v729 = vsel %vm560, %v507, 0
    %v732 = vsel %vm560, %v508, 0
    %v735 = vsel %vm560, %v509, 0
    %v738 = vsel %vm560, %v510, 0
    %v741 = vsel %vm560, %v511, 0
    %v744 = vsel %vm560, %v512, 0
    %v747 = vsel %vm560, %v513, 0
    %v750 = vsel %vm560, %v514, 0
    %v753 = vsel %vm560, %v515, 0
    %v756 = vsel %vm560, %v516, 0
    %v759 = vsel %vm560, %v517, 0
    %v762 = vsel %vm560, %v518, 0
    %v765 = vsel %vm560, %v519, 0
    %v768 = vsel %vm560, %v520, 0
    %v771 = vsel %vm560, %v521, 0
    %v774 = vsel %vm560, %v522, 0
    %v777 = vsel %vm560, %v523, 0
    %v780 = vsel %vm560, %v524, 0
    %v783 = vsel %vm560, %v525, 0
    %v786 = vsel %vm560, %v526, 0
    %v789 = vsel %vm560, %v527, 0
    %v792 = vsel %vm560, %v528, 0
    %v795 = vsel %vm560, %v529, 0
    %v798 = vsel %vm560, %v530, 0
    %v801 = vsel %vm560, %v531, 0
    %803 = vmatpush.msra.mxu0 0.0
    %804 = vmatpush.msra.mxu0 0.0
    %805 = vmatpush.msra.mxu0 0.0
    %806 = vmatpush.msra.mxu0 0.0
    %807 = vmatpush.msra.mxu0 0.0
    %808 = vmatpush.msra.mxu0 0.0
    %809 = vmatpush.msra.mxu0 0.0
    %810 = vmatpush.msra.mxu0 0.0
    %811 = vmatpush.msra.mxu0 0.0
    %812 = vmatpush.msra.mxu0 0.0
    %813 = vmatpush.msra.mxu0 0.0
    %814 = vmatpush.msra.mxu0 0.0
    %815 = vmatpush.msra.mxu0 0.0
    %816 = vmatpush.msra.mxu0 0.0
    %817 = vmatpush.msra.mxu0 0.0
    %818 = vmatpush.msra.mxu0 %v532
    %819 = vmatmul.f32.gmra.mxu0 %v729
    %v820 = vpop.f32.mrf.mxu0
    %v821 = vadd.f32 %v654, %v820
    %822 = vmatmul.f32.gmra.mxu0 %v732
    %v823 = vpop.f32.mrf.mxu0
    %v824 = vadd.f32 %v657, %v823
    %825 = vmatmul.f32.gmra.mxu0 %v735
    %v826 = vpop.f32.mrf.mxu0
    %v827 = vadd.f32 %v660, %v826
    %828 = vmatmul.f32.gmra.mxu0 %v738
    %v829 = vpop.f32.mrf.mxu0
    %v830 = vadd.f32 %v663, %v829
    %831 = vmatmul.f32.gmra.mxu0 %v741
    %v832 = vpop.f32.mrf.mxu0
    %v833 = vadd.f32 %v666, %v832
    %834 = vmatmul.f32.gmra.mxu0 %v744
    %v835 = vpop.f32.mrf.mxu0
    %v836 = vadd.f32 %v669, %v835
    %837 = vmatmul.f32.gmra.mxu0 %v747
    %v838 = vpop.f32.mrf.mxu0
    %v839 = vadd.f32 %v672, %v838
    %840 = vmatmul.f32.gmra.mxu0 %v750
    %v841 = vpop.f32.mrf.mxu0
    %v842 = vadd.f32 %v675, %v841
    %843 = vmatmul.f32.gmra.mxu0 %v753
    %v844 = vpop.f32.mrf.mxu0
    %v845 = vadd.f32 %v678, %v844
    %846 = vmatmul.f32.gmra.mxu0 %v756
    %v847 = vpop.f32.mrf.mxu0
    %v848 = vadd.f32 %v681, %v847
    %849 = vmatmul.f32.gmra.mxu0 %v759
    %v850 = vpop.f32.mrf.mxu0
    %v851 = vadd.f32 %v684, %v850
    %852 = vmatmul.f32.gmra.mxu0 %v762
    %v853 = vpop.f32.mrf.mxu0
    %v854 = vadd.f32 %v687, %v853
    %855 = vmatmul.f32.gmra.mxu0 %v765
    %v856 = vpop.f32.mrf.mxu0
    %v857 = vadd.f32 %v690, %v856
    %858 = vmatmul.f32.gmra.mxu0 %v768
    %v859 = vpop.f32.mrf.mxu0
    %v860 = vadd.f32 %v693, %v859
    %861 = vmatmul.f32.gmra.mxu0 %v771
    %v862 = vpop.f32.mrf.mxu0
    %v863 = vadd.f32 %v696, %v862
    %864 = vmatmul.f32.gmra.mxu0 %v774
    %v865 = vpop.f32.mrf.mxu0
    %v866 = vadd.f32 %v699, %v865
    %867 = vmatmul.f32.gmra.mxu0 %v777
    %v868 = vpop.f32.mrf.mxu0
    %v869 = vadd.f32 %v702, %v868
    %870 = vmatmul.f32.gmra.mxu0 %v780
    %v871 = vpop.f32.mrf.mxu0
    %v872 = vadd.f32 %v705, %v871
    %873 = vmatmul.f32.gmra.mxu0 %v783
    %v874 = vpop.f32.mrf.mxu0
    %v875 = vadd.f32 %v708, %v874
    %876 = vmatmul.f32.gmra.mxu0 %v786
    %v877 = vpop.f32.mrf.mxu0
    %v878 = vadd.f32 %v711, %v877
    %879 = vmatmul.f32.gmra.mxu0 %v789
    %v880 = vpop.f32.mrf.mxu0
    %v881 = vadd.f32 %v714, %v880
    %882 = vmatmul.f32.gmra.mxu0 %v792
    %v883 = vpop.f32.mrf.mxu0
    %v884 = vadd.f32 %v717, %v883
    %885 = vmatmul.f32.gmra.mxu0 %v795
    %v886 = vpop.f32.mrf.mxu0
    %v887 = vadd.f32 %v720, %v886
    %888 = vmatmul.f32.gmra.mxu0 %v798
    %v889 = vpop.f32.mrf.mxu0
    %v890 = vadd.f32 %v723, %v889
    %891 = vmatmul.f32.gmra.mxu0 %v801
    %v892 = vpop.f32.mrf.mxu0
    %v893 = vadd.f32 %v726, %v892
    %894 = vdwg.mxu0
    %v895 = vld [vmem:[%s0 + $0x6] sm:$0xff]
    %v896 = vld [vmem:[%s0 + $0xe] sm:$0xff]
    %v897 = vld [vmem:[%s0 + $0x16] sm:$0xff]
    %v898 = vld [vmem:[%s0 + $0x1e] sm:$0xff]
    %v899 = vld [vmem:[%s0 + $0x26] sm:$0xff]
    %v900 = vld [vmem:[%s0 + $0x2e] sm:$0xff]
    %v901 = vld [vmem:[%s0 + $0x36] sm:$0xff]
    %v902 = vld [vmem:[%s0 + $0x3e] sm:$0xff]
    %v903 = vld [vmem:[%s0 + $0x46] sm:$0xff]
    %v904 = vld [vmem:[%s0 + $0x4e] sm:$0xff]
    %v905 = vld [vmem:[%s0 + $0x56] sm:$0xff]
    %v906 = vld [vmem:[%s0 + $0x5e] sm:$0xff]
    %v907 = vld [vmem:[%s0 + $0x66] sm:$0xff]
    %v908 = vld [vmem:[%s0 + $0x6e] sm:$0xff]
    %v909 = vld [vmem:[%s0 + $0x76] sm:$0xff]
    %v910 = vld [vmem:[%s0 + $0x7e] sm:$0xff]
    %v911 = vld [vmem:[%s0 + $0x86] sm:$0xff]
    %v912 = vld [vmem:[%s0 + $0x8e] sm:$0xff]
    %v913 = vld [vmem:[%s0 + $0x96] sm:$0xff]
    %v914 = vld [vmem:[%s0 + $0x9e] sm:$0xff]
    %v915 = vld [vmem:[%s0 + $0xa6] sm:$0xff]
    %v916 = vld [vmem:[%s0 + $0xae] sm:$0xff]
    %v917 = vld [vmem:[%s0 + $0xb6] sm:$0xff]
    %v918 = vld [vmem:[%s0 + $0xbe] sm:$0xff]
    %v919 = vld [vmem:[%s0 + $0xc6] sm:$0xff]
    %s920 = scalar_lea.vmem %s1, 16
    %v921 = vld [vmem:[%s920] sm:$0xff]
    %v923 = vsel %vm560, %v895, 0
    %v926 = vsel %vm560, %v896, 0
    %v929 = vsel %vm560, %v897, 0
    %v932 = vsel %vm560, %v898, 0
    %v935 = vsel %vm560, %v899, 0
    %v938 = vsel %vm560, %v900, 0
    %v941 = vsel %vm560, %v901, 0
    %v944 = vsel %vm560, %v902, 0
    %v947 = vsel %vm560, %v903, 0
    %v950 = vsel %vm560, %v904, 0
    %v953 = vsel %vm560, %v905, 0
    %v956 = vsel %vm560, %v906, 0
    %v959 = vsel %vm560, %v907, 0
    %v962 = vsel %vm560, %v908, 0
    %v965 = vsel %vm560, %v909, 0
    %v968 = vsel %vm560, %v910, 0
    %v971 = vsel %vm560, %v911, 0
    %v974 = vsel %vm560, %v912, 0
    %v977 = vsel %vm560, %v913, 0
    %v980 = vsel %vm560, %v914, 0
    %v983 = vsel %vm560, %v915, 0
    %v986 = vsel %vm560, %v916, 0
    %v989 = vsel %vm560, %v917, 0
    %v992 = vsel %vm560, %v918, 0
    %v995 = vsel %vm560, %v919, 0
    %997 = vmatpush.msra.mxu0 0.0
    %998 = vmatpush.msra.mxu0 0.0
    %999 = vmatpush.msra.mxu0 0.0
    %1000 = vmatpush.msra.mxu0 0.0
    %1001 = vmatpush.msra.mxu0 0.0
    %1002 = vmatpush.msra.mxu0 0.0
    %1003 = vmatpush.msra.mxu0 0.0
    %1004 = vmatpush.msra.mxu0 0.0
    %1005 = vmatpush.msra.mxu0 0.0
    %1006 = vmatpush.msra.mxu0 0.0
    %1007 = vmatpush.msra.mxu0 0.0
    %1008 = vmatpush.msra.mxu0 0.0
    %1009 = vmatpush.msra.mxu0 0.0
    %1010 = vmatpush.msra.mxu0 0.0
    %1011 = vmatpush.msra.mxu0 0.0
    %1012 = vmatpush.msra.mxu0 %v921
    %1013 = vmatmul.f32.gmra.mxu0 %v923
    %v1014 = vpop.f32.mrf.mxu0
    %v1015 = vadd.f32 0.0, %v1014
    %1016 = vmatmul.f32.gmra.mxu0 %v926
    %v1017 = vpop.f32.mrf.mxu0
    %v1018 = vadd.f32 0.0, %v1017
    %1019 = vmatmul.f32.gmra.mxu0 %v929
    %v1020 = vpop.f32.mrf.mxu0
    %v1021 = vadd.f32 0.0, %v1020
    %1022 = vmatmul.f32.gmra.mxu0 %v932
    %v1023 = vpop.f32.mrf.mxu0
    %v1024 = vadd.f32 0.0, %v1023
    %1025 = vmatmul.f32.gmra.mxu0 %v935
    %v1026 = vpop.f32.mrf.mxu0
    %v1027 = vadd.f32 0.0, %v1026
    %1028 = vmatmul.f32.gmra.mxu0 %v938
    %v1029 = vpop.f32.mrf.mxu0
    %v1030 = vadd.f32 0.0, %v1029
    %1031 = vmatmul.f32.gmra.mxu0 %v941
    %v1032 = vpop.f32.mrf.mxu0
    %v1033 = vadd.f32 0.0, %v1032
    %1034 = vmatmul.f32.gmra.mxu0 %v944
    %v1035 = vpop.f32.mrf.mxu0
    %v1036 = vadd.f32 0.0, %v1035
    %1037 = vmatmul.f32.gmra.mxu0 %v947
    %v1038 = vpop.f32.mrf.mxu0
    %v1039 = vadd.f32 0.0, %v1038
    %1040 = vmatmul.f32.gmra.mxu0 %v950
    %v1041 = vpop.f32.mrf.mxu0
    %v1042 = vadd.f32 0.0, %v1041
    %1043 = vmatmul.f32.gmra.mxu0 %v953
    %v1044 = vpop.f32.mrf.mxu0
    %v1045 = vadd.f32 0.0, %v1044
    %1046 = vmatmul.f32.gmra.mxu0 %v956
    %v1047 = vpop.f32.mrf.mxu0
    %v1048 = vadd.f32 0.0, %v1047
    %1049 = vmatmul.f32.gmra.mxu0 %v959
    %v1050 = vpop.f32.mrf.mxu0
    %v1051 = vadd.f32 0.0, %v1050
    %1052 = vmatmul.f32.gmra.mxu0 %v962
    %v1053 = vpop.f32.mrf.mxu0
    %v1054 = vadd.f32 0.0, %v1053
    %1055 = vmatmul.f32.gmra.mxu0 %v965
    %v1056 = vpop.f32.mrf.mxu0
    %v1057 = vadd.f32 0.0, %v1056
    %1058 = vmatmul.f32.gmra.mxu0 %v968
    %v1059 = vpop.f32.mrf.mxu0
    %v1060 = vadd.f32 0.0, %v1059
    %1061 = vmatmul.f32.gmra.mxu0 %v971
    %v1062 = vpop.f32.mrf.mxu0
    %v1063 = vadd.f32 0.0, %v1062
    %1064 = vmatmul.f32.gmra.mxu0 %v974
    %v1065 = vpop.f32.mrf.mxu0
    %v1066 = vadd.f32 0.0, %v1065
    %1067 = vmatmul.f32.gmra.mxu0 %v977
    %v1068 = vpop.f32.mrf.mxu0
    %v1069 = vadd.f32 0.0, %v1068
    %1070 = vmatmul.f32.gmra.mxu0 %v980
    %v1071 = vpop.f32.mrf.mxu0
    %v1072 = vadd.f32 0.0, %v1071
    %1073 = vmatmul.f32.gmra.mxu0 %v983
    %v1074 = vpop.f32.mrf.mxu0
    %v1075 = vadd.f32 0.0, %v1074
    %1076 = vmatmul.f32.gmra.mxu0 %v986
    %v1077 = vpop.f32.mrf.mxu0
    %v1078 = vadd.f32 0.0, %v1077
    %1079 = vmatmul.f32.gmra.mxu0 %v989
    %v1080 = vpop.f32.mrf.mxu0
    %v1081 = vadd.f32 0.0, %v1080
    %1082 = vmatmul.f32.gmra.mxu0 %v992
    %v1083 = vpop.f32.mrf.mxu0
    %v1084 = vadd.f32 0.0, %v1083
    %1085 = vmatmul.f32.gmra.mxu0 %v995
    %v1086 = vpop.f32.mrf.mxu0
    %v1087 = vadd.f32 0.0, %v1086
    %1088 = vdwg.mxu0
    %v1089 = vadd.f32 %v821, %v1015
    %v1090 = vadd.f32 %v824, %v1018
    %v1091 = vadd.f32 %v827, %v1021
    %v1092 = vadd.f32 %v830, %v1024
    %v1093 = vadd.f32 %v833, %v1027
    %v1094 = vadd.f32 %v836, %v1030
    %v1095 = vadd.f32 %v839, %v1033
    %v1096 = vadd.f32 %v842, %v1036
    %v1097 = vadd.f32 %v845, %v1039
    %v1098 = vadd.f32 %v848, %v1042
    %v1099 = vadd.f32 %v851, %v1045
    %v1100 = vadd.f32 %v854, %v1048
    %v1101 = vadd.f32 %v857, %v1051
    %v1102 = vadd.f32 %v860, %v1054
    %v1103 = vadd.f32 %v863, %v1057
    %v1104 = vadd.f32 %v866, %v1060
    %v1105 = vadd.f32 %v869, %v1063
    %v1106 = vadd.f32 %v872, %v1066
    %v1107 = vadd.f32 %v875, %v1069
    %v1108 = vadd.f32 %v878, %v1072
    %v1109 = vadd.f32 %v881, %v1075
    %v1110 = vadd.f32 %v884, %v1078
    %v1111 = vadd.f32 %v887, %v1081
    %v1112 = vadd.f32 %v890, %v1084
    %v1113 = vadd.f32 %v893, %v1087
    %v1114 = vld [vmem:[%s0 + $0x16] sm:$0xff]
    %v1115 = vld [vmem:[%s0 + $0x1e] sm:$0xff]
    %v1116 = vld [vmem:[%s0 + $0x26] sm:$0xff]
    %v1117 = vld [vmem:[%s0 + $0x2e] sm:$0xff]
    %v1118 = vld [vmem:[%s0 + $0x36] sm:$0xff]
    %v1119 = vld [vmem:[%s0 + $0x3e] sm:$0xff]
    %v1120 = vld [vmem:[%s0 + $0x46] sm:$0xff]
    %v1121 = vld [vmem:[%s0 + $0x4e] sm:$0xff]
    %v1122 = vld [vmem:[%s0 + $0x56] sm:$0xff]
    %v1123 = vld [vmem:[%s0 + $0x5e] sm:$0xff]
    %v1124 = vld [vmem:[%s0 + $0x66] sm:$0xff]
    %v1125 = vld [vmem:[%s0 + $0x6e] sm:$0xff]
    %v1126 = vld [vmem:[%s0 + $0x76] sm:$0xff]
    %v1127 = vld [vmem:[%s0 + $0x7e] sm:$0xff]
    %v1128 = vld [vmem:[%s0 + $0x86] sm:$0xff]
    %v1129 = vld [vmem:[%s0 + $0x8e] sm:$0xff]
    %v1130 = vld [vmem:[%s0 + $0x96] sm:$0xff]
    %v1131 = vld [vmem:[%s0 + $0x9e] sm:$0xff]
    %v1132 = vld [vmem:[%s0 + $0xa6] sm:$0xff]
    %v1133 = vld [vmem:[%s0 + $0xae] sm:$0xff]
    %v1134 = vld [vmem:[%s0 + $0xb6] sm:$0xff]
    %v1135 = vld [vmem:[%s0 + $0xbe] sm:$0xff]
    %v1136 = vld [vmem:[%s0 + $0xc6] sm:$0xff]
    %v1137 = vld [vmem:[%s0 + $0xce] sm:$0xff]
    %v1138 = vld [vmem:[%s0 + $0xd6] sm:$0xff]
    %s1139 = scalar_lea.vmem %s1, 24
    %v1140 = vld [vmem:[%s1139] sm:$0xff]
    %v1142 = vsel %vm560, %v1114, 0
    %v1145 = vsel %vm560, %v1115, 0
    %v1148 = vsel %vm560, %v1116, 0
    %v1151 = vsel %vm560, %v1117, 0
    %v1154 = vsel %vm560, %v1118, 0
    %v1157 = vsel %vm560, %v1119, 0
    %v1160 = vsel %vm560, %v1120, 0
    %v1163 = vsel %vm560, %v1121, 0
    %v1166 = vsel %vm560, %v1122, 0
    %v1169 = vsel %vm560, %v1123, 0
    %v1172 = vsel %vm560, %v1124, 0
    %v1175 = vsel %vm560, %v1125, 0
    %v1178 = vsel %vm560, %v1126, 0
    %v1181 = vsel %vm560, %v1127, 0
    %v1184 = vsel %vm560, %v1128, 0
    %v1187 = vsel %vm560, %v1129, 0
    %v1190 = vsel %vm560, %v1130, 0
    %v1193 = vsel %vm560, %v1131, 0
    %v1196 = vsel %vm560, %v1132, 0
    %v1199 = vsel %vm560, %v1133, 0
    %v1202 = vsel %vm560, %v1134, 0
    %v1205 = vsel %vm560, %v1135, 0
    %v1208 = vsel %vm560, %v1136, 0
    %v1211 = vsel %vm560, %v1137, 0
    %v1214 = vsel %vm560, %v1138, 0
    %1216 = vmatpush.msra.mxu0 0.0
    %1217 = vmatpush.msra.mxu0 0.0
    %1218 = vmatpush.msra.mxu0 0.0
    %1219 = vmatpush.msra.mxu0 0.0
    %1220 = vmatpush.msra.mxu0 0.0
    %1221 = vmatpush.msra.mxu0 0.0
    %1222 = vmatpush.msra.mxu0 0.0
    %1223 = vmatpush.msra.mxu0 0.0
    %1224 = vmatpush.msra.mxu0 0.0
    %1225 = vmatpush.msra.mxu0 0.0
    %1226 = vmatpush.msra.mxu0 0.0
    %1227 = vmatpush.msra.mxu0 0.0
    %1228 = vmatpush.msra.mxu0 0.0
    %1229 = vmatpush.msra.mxu0 0.0
    %1230 = vmatpush.msra.mxu0 0.0
    %1231 = vmatpush.msra.mxu0 %v1140
    %1232 = vmatmul.f32.gmra.mxu0 %v1142
    %v1233 = vpop.f32.mrf.mxu0
    %v1234 = vadd.f32 0.0, %v1233
    %1235 = vmatmul.f32.gmra.mxu0 %v1145
    %v1236 = vpop.f32.mrf.mxu0
    %v1237 = vadd.f32 0.0, %v1236
    %1238 = vmatmul.f32.gmra.mxu0 %v1148
    %v1239 = vpop.f32.mrf.mxu0
    %v1240 = vadd.f32 0.0, %v1239
    %1241 = vmatmul.f32.gmra.mxu0 %v1151
    %v1242 = vpop.f32.mrf.mxu0
    %v1243 = vadd.f32 0.0, %v1242
    %1244 = vmatmul.f32.gmra.mxu0 %v1154
    %v1245 = vpop.f32.mrf.mxu0
    %v1246 = vadd.f32 0.0, %v1245
    %1247 = vmatmul.f32.gmra.mxu0 %v1157
    %v1248 = vpop.f32.mrf.mxu0
    %v1249 = vadd.f32 0.0, %v1248
    %1250 = vmatmul.f32.gmra.mxu0 %v1160
    %v1251 = vpop.f32.mrf.mxu0
    %v1252 = vadd.f32 0.0, %v1251
    %1253 = vmatmul.f32.gmra.mxu0 %v1163
    %v1254 = vpop.f32.mrf.mxu0
    %v1255 = vadd.f32 0.0, %v1254
    %1256 = vmatmul.f32.gmra.mxu0 %v1166
    %v1257 = vpop.f32.mrf.mxu0
    %v1258 = vadd.f32 0.0, %v1257
    %1259 = vmatmul.f32.gmra.mxu0 %v1169
    %v1260 = vpop.f32.mrf.mxu0
    %v1261 = vadd.f32 0.0, %v1260
    %1262 = vmatmul.f32.gmra.mxu0 %v1172
    %v1263 = vpop.f32.mrf.mxu0
    %v1264 = vadd.f32 0.0, %v1263
    %1265 = vmatmul.f32.gmra.mxu0 %v1175
    %v1266 = vpop.f32.mrf.mxu0
    %v1267 = vadd.f32 0.0, %v1266
    %1268 = vmatmul.f32.gmra.mxu0 %v1178
    %v1269 = vpop.f32.mrf.mxu0
    %v1270 = vadd.f32 0.0, %v1269
    %1271 = vmatmul.f32.gmra.mxu0 %v1181
    %v1272 = vpop.f32.mrf.mxu0
    %v1273 = vadd.f32 0.0, %v1272
    %1274 = vmatmul.f32.gmra.mxu0 %v1184
    %v1275 = vpop.f32.mrf.mxu0
    %v1276 = vadd.f32 0.0, %v1275
    %1277 = vmatmul.f32.gmra.mxu0 %v1187
    %v1278 = vpop.f32.mrf.mxu0
    %v1279 = vadd.f32 0.0, %v1278
    %1280 = vmatmul.f32.gmra.mxu0 %v1190
    %v1281 = vpop.f32.mrf.mxu0
    %v1282 = vadd.f32 0.0, %v1281
    %1283 = vmatmul.f32.gmra.mxu0 %v1193
    %v1284 = vpop.f32.mrf.mxu0
    %v1285 = vadd.f32 0.0, %v1284
    %1286 = vmatmul.f32.gmra.mxu0 %v1196
    %v1287 = vpop.f32.mrf.mxu0
    %v1288 = vadd.f32 0.0, %v1287
    %1289 = vmatmul.f32.gmra.mxu0 %v1199
    %v1290 = vpop.f32.mrf.mxu0
    %v1291 = vadd.f32 0.0, %v1290
    %1292 = vmatmul.f32.gmra.mxu0 %v1202
    %v1293 = vpop.f32.mrf.mxu0
    %v1294 = vadd.f32 0.0, %v1293
    %1295 = vmatmul.f32.gmra.mxu0 %v1205
    %v1296 = vpop.f32.mrf.mxu0
    %v1297 = vadd.f32 0.0, %v1296
    %1298 = vmatmul.f32.gmra.mxu0 %v1208
    %v1299 = vpop.f32.mrf.mxu0
    %v1300 = vadd.f32 0.0, %v1299
    %1301 = vmatmul.f32.gmra.mxu0 %v1211
    %v1302 = vpop.f32.mrf.mxu0
    %v1303 = vadd.f32 0.0, %v1302
    %1304 = vmatmul.f32.gmra.mxu0 %v1214
    %v1305 = vpop.f32.mrf.mxu0
    %v1306 = vadd.f32 0.0, %v1305
    %1307 = vdwg.mxu0
    %v1308 = vadd.f32 %v1089, %v1234
    %v1309 = vadd.f32 %v1090, %v1237
    %v1310 = vadd.f32 %v1091, %v1240
    %v1311 = vadd.f32 %v1092, %v1243
    %v1312 = vadd.f32 %v1093, %v1246
    %v1313 = vadd.f32 %v1094, %v1249
    %v1314 = vadd.f32 %v1095, %v1252
    %v1315 = vadd.f32 %v1096, %v1255
    %v1316 = vadd.f32 %v1097, %v1258
    %v1317 = vadd.f32 %v1098, %v1261
    %v1318 = vadd.f32 %v1099, %v1264
    %v1319 = vadd.f32 %v1100, %v1267
    %v1320 = vadd.f32 %v1101, %v1270
    %v1321 = vadd.f32 %v1102, %v1273
    %v1322 = vadd.f32 %v1103, %v1276
    %v1323 = vadd.f32 %v1104, %v1279
    %v1324 = vadd.f32 %v1105, %v1282
    %v1325 = vadd.f32 %v1106, %v1285
    %v1326 = vadd.f32 %v1107, %v1288
    %v1327 = vadd.f32 %v1108, %v1291
    %v1328 = vadd.f32 %v1109, %v1294
    %v1329 = vadd.f32 %v1110, %v1297
    %v1330 = vadd.f32 %v1111, %v1300
    %v1331 = vadd.f32 %v1112, %v1303
    %v1332 = vadd.f32 %v1113, %v1306
    %s1333 = scalar_lea.vmem %s1, 32
    %v1334 = vld [vmem:[%s1333] sm:$0xff]
    %v1336 = vsel %vm560, %v482, 0
    %v1339 = vsel %vm560, %v483, 0
    %v1342 = vsel %vm560, %v484, 0
    %v1345 = vsel %vm560, %v485, 0
    %v1348 = vsel %vm560, %v486, 0
    %v1351 = vsel %vm560, %v487, 0
    %v1354 = vsel %vm560, %v488, 0
    %v1357 = vsel %vm560, %v489, 0
    %v1360 = vsel %vm560, %v490, 0
    %v1363 = vsel %vm560, %v491, 0
    %v1366 = vsel %vm560, %v492, 0
    %v1369 = vsel %vm560, %v493, 0
    %v1372 = vsel %vm560, %v494, 0
    %v1375 = vsel %vm560, %v495, 0
    %v1378 = vsel %vm560, %v496, 0
    %v1381 = vsel %vm560, %v497, 0
    %v1384 = vsel %vm560, %v498, 0
    %v1387 = vsel %vm560, %v499, 0
    %v1390 = vsel %vm560, %v500, 0
    %v1393 = vsel %vm560, %v501, 0
    %v1396 = vsel %vm560, %v502, 0
    %v1399 = vsel %vm560, %v503, 0
    %v1402 = vsel %vm560, %v504, 0
    %v1405 = vsel %vm560, %v505, 0
    %v1408 = vsel %vm560, %v506, 0
    %1410 = vmatpush.msra.mxu0 0.0
    %1411 = vmatpush.msra.mxu0 0.0
    %1412 = vmatpush.msra.mxu0 0.0
    %1413 = vmatpush.msra.mxu0 0.0
    %1414 = vmatpush.msra.mxu0 0.0
    %1415 = vmatpush.msra.mxu0 0.0
    %1416 = vmatpush.msra.mxu0 0.0
    %1417 = vmatpush.msra.mxu0 0.0
    %1418 = vmatpush.msra.mxu0 0.0
    %1419 = vmatpush.msra.mxu0 0.0
    %1420 = vmatpush.msra.mxu0 0.0
    %1421 = vmatpush.msra.mxu0 0.0
    %1422 = vmatpush.msra.mxu0 0.0
    %1423 = vmatpush.msra.mxu0 0.0
    %1424 = vmatpush.msra.mxu0 0.0
    %1425 = vmatpush.msra.mxu0 %v1334
    %1426 = vmatmul.f32.gmra.mxu0 %v1336
    %v1427 = vpop.f32.mrf.mxu0
    %v1428 = vadd.f32 0.0, %v1427
    %1429 = vmatmul.f32.gmra.mxu0 %v1339
    %v1430 = vpop.f32.mrf.mxu0
    %v1431 = vadd.f32 0.0, %v1430
    %1432 = vmatmul.f32.gmra.mxu0 %v1342
    %v1433 = vpop.f32.mrf.mxu0
    %v1434 = vadd.f32 0.0, %v1433
    %1435 = vmatmul.f32.gmra.mxu0 %v1345
    %v1436 = vpop.f32.mrf.mxu0
    %v1437 = vadd.f32 0.0, %v1436
    %1438 = vmatmul.f32.gmra.mxu0 %v1348
    %v1439 = vpop.f32.mrf.mxu0
    %v1440 = vadd.f32 0.0, %v1439
    %1441 = vmatmul.f32.gmra.mxu0 %v1351
    %v1442 = vpop.f32.mrf.mxu0
    %v1443 = vadd.f32 0.0, %v1442
    %1444 = vmatmul.f32.gmra.mxu0 %v1354
    %v1445 = vpop.f32.mrf.mxu0
    %v1446 = vadd.f32 0.0, %v1445
    %1447 = vmatmul.f32.gmra.mxu0 %v1357
    %v1448 = vpop.f32.mrf.mxu0
    %v1449 = vadd.f32 0.0, %v1448
    %1450 = vmatmul.f32.gmra.mxu0 %v1360
    %v1451 = vpop.f32.mrf.mxu0
    %v1452 = vadd.f32 0.0, %v1451
    %1453 = vmatmul.f32.gmra.mxu0 %v1363
    %v1454 = vpop.f32.mrf.mxu0
    %v1455 = vadd.f32 0.0, %v1454
    %1456 = vmatmul.f32.gmra.mxu0 %v1366
    %v1457 = vpop.f32.mrf.mxu0
    %v1458 = vadd.f32 0.0, %v1457
    %1459 = vmatmul.f32.gmra.mxu0 %v1369
    %v1460 = vpop.f32.mrf.mxu0
    %v1461 = vadd.f32 0.0, %v1460
    %1462 = vmatmul.f32.gmra.mxu0 %v1372
    %v1463 = vpop.f32.mrf.mxu0
    %v1464 = vadd.f32 0.0, %v1463
    %1465 = vmatmul.f32.gmra.mxu0 %v1375
    %v1466 = vpop.f32.mrf.mxu0
    %v1467 = vadd.f32 0.0, %v1466
    %1468 = vmatmul.f32.gmra.mxu0 %v1378
    %v1469 = vpop.f32.mrf.mxu0
    %v1470 = vadd.f32 0.0, %v1469
    %1471 = vmatmul.f32.gmra.mxu0 %v1381
    %v1472 = vpop.f32.mrf.mxu0
    %v1473 = vadd.f32 0.0, %v1472
    %1474 = vmatmul.f32.gmra.mxu0 %v1384
    %v1475 = vpop.f32.mrf.mxu0
    %v1476 = vadd.f32 0.0, %v1475
    %1477 = vmatmul.f32.gmra.mxu0 %v1387
    %v1478 = vpop.f32.mrf.mxu0
    %v1479 = vadd.f32 0.0, %v1478
    %1480 = vmatmul.f32.gmra.mxu0 %v1390
    %v1481 = vpop.f32.mrf.mxu0
    %v1482 = vadd.f32 0.0, %v1481
    %1483 = vmatmul.f32.gmra.mxu0 %v1393
    %v1484 = vpop.f32.mrf.mxu0
    %v1485 = vadd.f32 0.0, %v1484
    %1486 = vmatmul.f32.gmra.mxu0 %v1396
    %v1487 = vpop.f32.mrf.mxu0
    %v1488 = vadd.f32 0.0, %v1487
    %1489 = vmatmul.f32.gmra.mxu0 %v1399
    %v1490 = vpop.f32.mrf.mxu0
    %v1491 = vadd.f32 0.0, %v1490
    %1492 = vmatmul.f32.gmra.mxu0 %v1402
    %v1493 = vpop.f32.mrf.mxu0
    %v1494 = vadd.f32 0.0, %v1493
    %1495 = vmatmul.f32.gmra.mxu0 %v1405
    %v1496 = vpop.f32.mrf.mxu0
    %v1497 = vadd.f32 0.0, %v1496
    %1498 = vmatmul.f32.gmra.mxu0 %v1408
    %v1499 = vpop.f32.mrf.mxu0
    %v1500 = vadd.f32 0.0, %v1499
    %1501 = vdwg.mxu0
    %v1502 = vadd.f32 %v1308, %v1428
    %v1503 = vadd.f32 %v1309, %v1431
    %v1504 = vadd.f32 %v1310, %v1434
    %v1505 = vadd.f32 %v1311, %v1437
    %v1506 = vadd.f32 %v1312, %v1440
    %v1507 = vadd.f32 %v1313, %v1443
    %v1508 = vadd.f32 %v1314, %v1446
    %v1509 = vadd.f32 %v1315, %v1449
    %v1510 = vadd.f32 %v1316, %v1452
    %v1511 = vadd.f32 %v1317, %v1455
    %v1512 = vadd.f32 %v1318, %v1458
    %v1513 = vadd.f32 %v1319, %v1461
    %v1514 = vadd.f32 %v1320, %v1464
    %v1515 = vadd.f32 %v1321, %v1467
    %v1516 = vadd.f32 %v1322, %v1470
    %v1517 = vadd.f32 %v1323, %v1473
    %v1518 = vadd.f32 %v1324, %v1476
    %v1519 = vadd.f32 %v1325, %v1479
    %v1520 = vadd.f32 %v1326, %v1482
    %v1521 = vadd.f32 %v1327, %v1485
    %v1522 = vadd.f32 %v1328, %v1488
    %v1523 = vadd.f32 %v1329, %v1491
    %v1524 = vadd.f32 %v1330, %v1494
    %v1525 = vadd.f32 %v1331, %v1497
    %v1526 = vadd.f32 %v1332, %v1500
    %v1527 = vld [vmem:[%s0 + $0x1a] sm:$0xff]
    %v1528 = vld [vmem:[%s0 + $0x22] sm:$0xff]
    %v1529 = vld [vmem:[%s0 + $0x2a] sm:$0xff]
    %v1530 = vld [vmem:[%s0 + $0x32] sm:$0xff]
    %v1531 = vld [vmem:[%s0 + $0x3a] sm:$0xff]
    %v1532 = vld [vmem:[%s0 + $0x42] sm:$0xff]
    %v1533 = vld [vmem:[%s0 + $0x4a] sm:$0xff]
    %v1534 = vld [vmem:[%s0 + $0x52] sm:$0xff]
    %v1535 = vld [vmem:[%s0 + $0x5a] sm:$0xff]
    %v1536 = vld [vmem:[%s0 + $0x62] sm:$0xff]
    %v1537 = vld [vmem:[%s0 + $0x6a] sm:$0xff]
    %v1538 = vld [vmem:[%s0 + $0x72] sm:$0xff]
    %v1539 = vld [vmem:[%s0 + $0x7a] sm:$0xff]
    %v1540 = vld [vmem:[%s0 + $0x82] sm:$0xff]
    %v1541 = vld [vmem:[%s0 + $0x8a] sm:$0xff]
    %v1542 = vld [vmem:[%s0 + $0x92] sm:$0xff]
    %v1543 = vld [vmem:[%s0 + $0x9a] sm:$0xff]
    %v1544 = vld [vmem:[%s0 + $0xa2] sm:$0xff]
    %v1545 = vld [vmem:[%s0 + $0xaa] sm:$0xff]
    %v1546 = vld [vmem:[%s0 + $0xb2] sm:$0xff]
    %v1547 = vld [vmem:[%s0 + $0xba] sm:$0xff]
    %v1548 = vld [vmem:[%s0 + $0xc2] sm:$0xff]
    %v1549 = vld [vmem:[%s0 + $0xca] sm:$0xff]
    %v1550 = vld [vmem:[%s0 + $0xd2] sm:$0xff]
    %v1551 = vld [vmem:[%s0 + $0xda] sm:$0xff]
    %s1552 = scalar_lea.vmem %s1, 40
    %v1553 = vld [vmem:[%s1552] sm:$0xff]
    %v1555 = vsel %vm560, %v1527, 0
    %v1558 = vsel %vm560, %v1528, 0
    %v1561 = vsel %vm560, %v1529, 0
    %v1564 = vsel %vm560, %v1530, 0
    %v1567 = vsel %vm560, %v1531, 0
    %v1570 = vsel %vm560, %v1532, 0
    %v1573 = vsel %vm560, %v1533, 0
    %v1576 = vsel %vm560, %v1534, 0
    %v1579 = vsel %vm560, %v1535, 0
    %v1582 = vsel %vm560, %v1536, 0
    %v1585 = vsel %vm560, %v1537, 0
    %v1588 = vsel %vm560, %v1538, 0
    %v1591 = vsel %vm560, %v1539, 0
    %v1594 = vsel %vm560, %v1540, 0
    %v1597 = vsel %vm560, %v1541, 0
    %v1600 = vsel %vm560, %v1542, 0
    %v1603 = vsel %vm560, %v1543, 0
    %v1606 = vsel %vm560, %v1544, 0
    %v1609 = vsel %vm560, %v1545, 0
    %v1612 = vsel %vm560, %v1546, 0
    %v1615 = vsel %vm560, %v1547, 0
    %v1618 = vsel %vm560, %v1548, 0
    %v1621 = vsel %vm560, %v1549, 0
    %v1624 = vsel %vm560, %v1550, 0
    %v1627 = vsel %vm560, %v1551, 0
    %1629 = vmatpush.msra.mxu0 0.0
    %1630 = vmatpush.msra.mxu0 0.0
    %1631 = vmatpush.msra.mxu0 0.0
    %1632 = vmatpush.msra.mxu0 0.0
    %1633 = vmatpush.msra.mxu0 0.0
    %1634 = vmatpush.msra.mxu0 0.0
    %1635 = vmatpush.msra.mxu0 0.0
    %1636 = vmatpush.msra.mxu0 0.0
    %1637 = vmatpush.msra.mxu0 0.0
    %1638 = vmatpush.msra.mxu0 0.0
    %1639 = vmatpush.msra.mxu0 0.0
    %1640 = vmatpush.msra.mxu0 0.0
    %1641 = vmatpush.msra.mxu0 0.0
    %1642 = vmatpush.msra.mxu0 0.0
    %1643 = vmatpush.msra.mxu0 0.0
    %1644 = vmatpush.msra.mxu0 %v1553
    %1645 = vmatmul.f32.gmra.mxu0 %v1555
    %v1646 = vpop.f32.mrf.mxu0
    %v1647 = vadd.f32 0.0, %v1646
    %1648 = vmatmul.f32.gmra.mxu0 %v1558
    %v1649 = vpop.f32.mrf.mxu0
    %v1650 = vadd.f32 0.0, %v1649
    %1651 = vmatmul.f32.gmra.mxu0 %v1561
    %v1652 = vpop.f32.mrf.mxu0
    %v1653 = vadd.f32 0.0, %v1652
    %1654 = vmatmul.f32.gmra.mxu0 %v1564
    %v1655 = vpop.f32.mrf.mxu0
    %v1656 = vadd.f32 0.0, %v1655
    %1657 = vmatmul.f32.gmra.mxu0 %v1567
    %v1658 = vpop.f32.mrf.mxu0
    %v1659 = vadd.f32 0.0, %v1658
    %1660 = vmatmul.f32.gmra.mxu0 %v1570
    %v1661 = vpop.f32.mrf.mxu0
    %v1662 = vadd.f32 0.0, %v1661
    %1663 = vmatmul.f32.gmra.mxu0 %v1573
    %v1664 = vpop.f32.mrf.mxu0
    %v1665 = vadd.f32 0.0, %v1664
    %1666 = vmatmul.f32.gmra.mxu0 %v1576
    %v1667 = vpop.f32.mrf.mxu0
    %v1668 = vadd.f32 0.0, %v1667
    %1669 = vmatmul.f32.gmra.mxu0 %v1579
    %v1670 = vpop.f32.mrf.mxu0
    %v1671 = vadd.f32 0.0, %v1670
    %1672 = vmatmul.f32.gmra.mxu0 %v1582
    %v1673 = vpop.f32.mrf.mxu0
    %v1674 = vadd.f32 0.0, %v1673
    %1675 = vmatmul.f32.gmra.mxu0 %v1585
    %v1676 = vpop.f32.mrf.mxu0
    %v1677 = vadd.f32 0.0, %v1676
    %1678 = vmatmul.f32.gmra.mxu0 %v1588
    %v1679 = vpop.f32.mrf.mxu0
    %v1680 = vadd.f32 0.0, %v1679
    %1681 = vmatmul.f32.gmra.mxu0 %v1591
    %v1682 = vpop.f32.mrf.mxu0
    %v1683 = vadd.f32 0.0, %v1682
    %1684 = vmatmul.f32.gmra.mxu0 %v1594
    %v1685 = vpop.f32.mrf.mxu0
    %v1686 = vadd.f32 0.0, %v1685
    %1687 = vmatmul.f32.gmra.mxu0 %v1597
    %v1688 = vpop.f32.mrf.mxu0
    %v1689 = vadd.f32 0.0, %v1688
    %1690 = vmatmul.f32.gmra.mxu0 %v1600
    %v1691 = vpop.f32.mrf.mxu0
    %v1692 = vadd.f32 0.0, %v1691
    %1693 = vmatmul.f32.gmra.mxu0 %v1603
    %v1694 = vpop.f32.mrf.mxu0
    %v1695 = vadd.f32 0.0, %v1694
    %1696 = vmatmul.f32.gmra.mxu0 %v1606
    %v1697 = vpop.f32.mrf.mxu0
    %v1698 = vadd.f32 0.0, %v1697
    %1699 = vmatmul.f32.gmra.mxu0 %v1609
    %v1700 = vpop.f32.mrf.mxu0
    %v1701 = vadd.f32 0.0, %v1700
    %1702 = vmatmul.f32.gmra.mxu0 %v1612
    %v1703 = vpop.f32.mrf.mxu0
    %v1704 = vadd.f32 0.0, %v1703
    %1705 = vmatmul.f32.gmra.mxu0 %v1615
    %v1706 = vpop.f32.mrf.mxu0
    %v1707 = vadd.f32 0.0, %v1706
    %1708 = vmatmul.f32.gmra.mxu0 %v1618
    %v1709 = vpop.f32.mrf.mxu0
    %v1710 = vadd.f32 0.0, %v1709
    %1711 = vmatmul.f32.gmra.mxu0 %v1621
    %v1712 = vpop.f32.mrf.mxu0
    %v1713 = vadd.f32 0.0, %v1712
    %1714 = vmatmul.f32.gmra.mxu0 %v1624
    %v1715 = vpop.f32.mrf.mxu0
    %v1716 = vadd.f32 0.0, %v1715
    %1717 = vmatmul.f32.gmra.mxu0 %v1627
    %v1718 = vpop.f32.mrf.mxu0
    %v1719 = vadd.f32 0.0, %v1718
    %1720 = vdwg.mxu0
    %v1721 = vadd.f32 %v1502, %v1647
    %v1722 = vadd.f32 %v1503, %v1650
    %v1723 = vadd.f32 %v1504, %v1653
    %v1724 = vadd.f32 %v1505, %v1656
    %v1725 = vadd.f32 %v1506, %v1659
    %v1726 = vadd.f32 %v1507, %v1662
    %v1727 = vadd.f32 %v1508, %v1665
    %v1728 = vadd.f32 %v1509, %v1668
    %v1729 = vadd.f32 %v1510, %v1671
    %v1730 = vadd.f32 %v1511, %v1674
    %v1731 = vadd.f32 %v1512, %v1677
    %v1732 = vadd.f32 %v1513, %v1680
    %v1733 = vadd.f32 %v1514, %v1683
    %v1734 = vadd.f32 %v1515, %v1686
    %v1735 = vadd.f32 %v1516, %v1689
    %v1736 = vadd.f32 %v1517, %v1692
    %v1737 = vadd.f32 %v1518, %v1695
    %v1738 = vadd.f32 %v1519, %v1698
    %v1739 = vadd.f32 %v1520, %v1701
    %v1740 = vadd.f32 %v1521, %v1704
    %v1741 = vadd.f32 %v1522, %v1707
    %v1742 = vadd.f32 %v1523, %v1710
    %v1743 = vadd.f32 %v1524, %v1713
    %v1744 = vadd.f32 %v1525, %v1716
    %v1745 = vadd.f32 %v1526, %v1719
    %v1746 = vld [vmem:[%s0 + $0x2a] sm:$0xff]
    %v1747 = vld [vmem:[%s0 + $0x32] sm:$0xff]
    %v1748 = vld [vmem:[%s0 + $0x3a] sm:$0xff]
    %v1749 = vld [vmem:[%s0 + $0x42] sm:$0xff]
    %v1750 = vld [vmem:[%s0 + $0x4a] sm:$0xff]
    %v1751 = vld [vmem:[%s0 + $0x52] sm:$0xff]
    %v1752 = vld [vmem:[%s0 + $0x5a] sm:$0xff]
    %v1753 = vld [vmem:[%s0 + $0x62] sm:$0xff]
    %v1754 = vld [vmem:[%s0 + $0x6a] sm:$0xff]
    %v1755 = vld [vmem:[%s0 + $0x72] sm:$0xff]
    %v1756 = vld [vmem:[%s0 + $0x7a] sm:$0xff]
    %v1757 = vld [vmem:[%s0 + $0x82] sm:$0xff]
    %v1758 = vld [vmem:[%s0 + $0x8a] sm:$0xff]
    %v1759 = vld [vmem:[%s0 + $0x92] sm:$0xff]
    %v1760 = vld [vmem:[%s0 + $0x9a] sm:$0xff]
    %v1761 = vld [vmem:[%s0 + $0xa2] sm:$0xff]
    %v1762 = vld [vmem:[%s0 + $0xaa] sm:$0xff]
    %v1763 = vld [vmem:[%s0 + $0xb2] sm:$0xff]
    %v1764 = vld [vmem:[%s0 + $0xba] sm:$0xff]
    %v1765 = vld [vmem:[%s0 + $0xc2] sm:$0xff]
    %v1766 = vld [vmem:[%s0 + $0xca] sm:$0xff]
    %v1767 = vld [vmem:[%s0 + $0xd2] sm:$0xff]
    %v1768 = vld [vmem:[%s0 + $0xda] sm:$0xff]
    %v1769 = vld [vmem:[%s0 + $0xe2] sm:$0xff]
    %v1770 = vld [vmem:[%s0 + $0xea] sm:$0xff]
    %s1771 = scalar_lea.vmem %s1, 48
    %v1772 = vld [vmem:[%s1771] sm:$0xff]
    %v1774 = vsel %vm560, %v1746, 0
    %v1777 = vsel %vm560, %v1747, 0
    %v1780 = vsel %vm560, %v1748, 0
    %v1783 = vsel %vm560, %v1749, 0
    %v1786 = vsel %vm560, %v1750, 0
    %v1789 = vsel %vm560, %v1751, 0
    %v1792 = vsel %vm560, %v1752, 0
    %v1795 = vsel %vm560, %v1753, 0
    %v1798 = vsel %vm560, %v1754, 0
    %v1801 = vsel %vm560, %v1755, 0
    %v1804 = vsel %vm560, %v1756, 0
    %v1807 = vsel %vm560, %v1757, 0
    %v1810 = vsel %vm560, %v1758, 0
    %v1813 = vsel %vm560, %v1759, 0
    %v1816 = vsel %vm560, %v1760, 0
    %v1819 = vsel %vm560, %v1761, 0
    %v1822 = vsel %vm560, %v1762, 0
    %v1825 = vsel %vm560, %v1763, 0
    %v1828 = vsel %vm560, %v1764, 0
    %v1831 = vsel %vm560, %v1765, 0
    %v1834 = vsel %vm560, %v1766, 0
    %v1837 = vsel %vm560, %v1767, 0
    %v1840 = vsel %vm560, %v1768, 0
    %v1843 = vsel %vm560, %v1769, 0
    %v1846 = vsel %vm560, %v1770, 0
    %1848 = vmatpush.msra.mxu0 0.0
    %1849 = vmatpush.msra.mxu0 0.0
    %1850 = vmatpush.msra.mxu0 0.0
    %1851 = vmatpush.msra.mxu0 0.0
    %1852 = vmatpush.msra.mxu0 0.0
    %1853 = vmatpush.msra.mxu0 0.0
    %1854 = vmatpush.msra.mxu0 0.0
    %1855 = vmatpush.msra.mxu0 0.0
    %1856 = vmatpush.msra.mxu0 0.0
    %1857 = vmatpush.msra.mxu0 0.0
    %1858 = vmatpush.msra.mxu0 0.0
    %1859 = vmatpush.msra.mxu0 0.0
    %1860 = vmatpush.msra.mxu0 0.0
    %1861 = vmatpush.msra.mxu0 0.0
    %1862 = vmatpush.msra.mxu0 0.0
    %1863 = vmatpush.msra.mxu0 %v1772
    %1864 = vmatmul.f32.gmra.mxu0 %v1774
    %v1865 = vpop.f32.mrf.mxu0
    %v1866 = vadd.f32 0.0, %v1865
    %1867 = vmatmul.f32.gmra.mxu0 %v1777
    %v1868 = vpop.f32.mrf.mxu0
    %v1869 = vadd.f32 0.0, %v1868
    %1870 = vmatmul.f32.gmra.mxu0 %v1780
    %v1871 = vpop.f32.mrf.mxu0
    %v1872 = vadd.f32 0.0, %v1871
    %1873 = vmatmul.f32.gmra.mxu0 %v1783
    %v1874 = vpop.f32.mrf.mxu0
    %v1875 = vadd.f32 0.0, %v1874
    %1876 = vmatmul.f32.gmra.mxu0 %v1786
    %v1877 = vpop.f32.mrf.mxu0
    %v1878 = vadd.f32 0.0, %v1877
    %1879 = vmatmul.f32.gmra.mxu0 %v1789
    %v1880 = vpop.f32.mrf.mxu0
    %v1881 = vadd.f32 0.0, %v1880
    %1882 = vmatmul.f32.gmra.mxu0 %v1792
    %v1883 = vpop.f32.mrf.mxu0
    %v1884 = vadd.f32 0.0, %v1883
    %1885 = vmatmul.f32.gmra.mxu0 %v1795
    %v1886 = vpop.f32.mrf.mxu0
    %v1887 = vadd.f32 0.0, %v1886
    %1888 = vmatmul.f32.gmra.mxu0 %v1798
    %v1889 = vpop.f32.mrf.mxu0
    %v1890 = vadd.f32 0.0, %v1889
    %1891 = vmatmul.f32.gmra.mxu0 %v1801
    %v1892 = vpop.f32.mrf.mxu0
    %v1893 = vadd.f32 0.0, %v1892
    %1894 = vmatmul.f32.gmra.mxu0 %v1804
    %v1895 = vpop.f32.mrf.mxu0
    %v1896 = vadd.f32 0.0, %v1895
    %1897 = vmatmul.f32.gmra.mxu0 %v1807
    %v1898 = vpop.f32.mrf.mxu0
    %v1899 = vadd.f32 0.0, %v1898
    %1900 = vmatmul.f32.gmra.mxu0 %v1810
    %v1901 = vpop.f32.mrf.mxu0
    %v1902 = vadd.f32 0.0, %v1901
    %1903 = vmatmul.f32.gmra.mxu0 %v1813
    %v1904 = vpop.f32.mrf.mxu0
    %v1905 = vadd.f32 0.0, %v1904
    %1906 = vmatmul.f32.gmra.mxu0 %v1816
    %v1907 = vpop.f32.mrf.mxu0
    %v1908 = vadd.f32 0.0, %v1907
    %1909 = vmatmul.f32.gmra.mxu0 %v1819
    %v1910 = vpop.f32.mrf.mxu0
    %v1911 = vadd.f32 0.0, %v1910
    %1912 = vmatmul.f32.gmra.mxu0 %v1822
    %v1913 = vpop.f32.mrf.mxu0
    %v1914 = vadd.f32 0.0, %v1913
    %1915 = vmatmul.f32.gmra.mxu0 %v1825
    %v1916 = vpop.f32.mrf.mxu0
    %v1917 = vadd.f32 0.0, %v1916
    %1918 = vmatmul.f32.gmra.mxu0 %v1828
    %v1919 = vpop.f32.mrf.mxu0
    %v1920 = vadd.f32 0.0, %v1919
    %1921 = vmatmul.f32.gmra.mxu0 %v1831
    %v1922 = vpop.f32.mrf.mxu0
    %v1923 = vadd.f32 0.0, %v1922
    %1924 = vmatmul.f32.gmra.mxu0 %v1834
    %v1925 = vpop.f32.mrf.mxu0
    %v1926 = vadd.f32 0.0, %v1925
    %1927 = vmatmul.f32.gmra.mxu0 %v1837
    %v1928 = vpop.f32.mrf.mxu0
    %v1929 = vadd.f32 0.0, %v1928
    %1930 = vmatmul.f32.gmra.mxu0 %v1840
    %v1931 = vpop.f32.mrf.mxu0
    %v1932 = vadd.f32 0.0, %v1931
    %1933 = vmatmul.f32.gmra.mxu0 %v1843
    %v1934 = vpop.f32.mrf.mxu0
    %v1935 = vadd.f32 0.0, %v1934
    %1936 = vmatmul.f32.gmra.mxu0 %v1846
    %v1937 = vpop.f32.mrf.mxu0
    %v1938 = vadd.f32 0.0, %v1937
    %1939 = vdwg.mxu0
    %v1940 = vadd.f32 %v1721, %v1866
    %v1941 = vadd.f32 %v1722, %v1869
    %v1942 = vadd.f32 %v1723, %v1872
    %v1943 = vadd.f32 %v1724, %v1875
    %v1944 = vadd.f32 %v1725, %v1878
    %v1945 = vadd.f32 %v1726, %v1881
    %v1946 = vadd.f32 %v1727, %v1884
    %v1947 = vadd.f32 %v1728, %v1887
    %v1948 = vadd.f32 %v1729, %v1890
    %v1949 = vadd.f32 %v1730, %v1893
    %v1950 = vadd.f32 %v1731, %v1896
    %v1951 = vadd.f32 %v1732, %v1899
    %v1952 = vadd.f32 %v1733, %v1902
    %v1953 = vadd.f32 %v1734, %v1905
    %v1954 = vadd.f32 %v1735, %v1908
    %v1955 = vadd.f32 %v1736, %v1911
    %v1956 = vadd.f32 %v1737, %v1914
    %v1957 = vadd.f32 %v1738, %v1917
    %v1958 = vadd.f32 %v1739, %v1920
    %v1959 = vadd.f32 %v1740, %v1923
    %v1960 = vadd.f32 %v1741, %v1926
    %v1961 = vadd.f32 %v1742, %v1929
    %v1962 = vadd.f32 %v1743, %v1932
    %v1963 = vadd.f32 %v1744, %v1935
    %v1964 = vadd.f32 %v1745, %v1938
    %v1965 = vld [vmem:[%s0 + $0x2c] sm:$0xff]
    %v1966 = vld [vmem:[%s0 + $0x34] sm:$0xff]
    %v1967 = vld [vmem:[%s0 + $0x3c] sm:$0xff]
    %v1968 = vld [vmem:[%s0 + $0x44] sm:$0xff]
    %v1969 = vld [vmem:[%s0 + $0x4c] sm:$0xff]
    %v1970 = vld [vmem:[%s0 + $0x54] sm:$0xff]
    %v1971 = vld [vmem:[%s0 + $0x5c] sm:$0xff]
    %v1972 = vld [vmem:[%s0 + $0x64] sm:$0xff]
    %v1973 = vld [vmem:[%s0 + $0x6c] sm:$0xff]
    %v1974 = vld [vmem:[%s0 + $0x74] sm:$0xff]
    %v1975 = vld [vmem:[%s0 + $0x7c] sm:$0xff]
    %v1976 = vld [vmem:[%s0 + $0x84] sm:$0xff]
    %v1977 = vld [vmem:[%s0 + $0x8c] sm:$0xff]
    %v1978 = vld [vmem:[%s0 + $0x94] sm:$0xff]
    %v1979 = vld [vmem:[%s0 + $0x9c] sm:$0xff]
    %v1980 = vld [vmem:[%s0 + $0xa4] sm:$0xff]
    %v1981 = vld [vmem:[%s0 + $0xac] sm:$0xff]
    %v1982 = vld [vmem:[%s0 + $0xb4] sm:$0xff]
    %v1983 = vld [vmem:[%s0 + $0xbc] sm:$0xff]
    %v1984 = vld [vmem:[%s0 + $0xc4] sm:$0xff]
    %v1985 = vld [vmem:[%s0 + $0xcc] sm:$0xff]
    %v1986 = vld [vmem:[%s0 + $0xd4] sm:$0xff]
    %v1987 = vld [vmem:[%s0 + $0xdc] sm:$0xff]
    %v1988 = vld [vmem:[%s0 + $0xe4] sm:$0xff]
    %v1989 = vld [vmem:[%s0 + $0xec] sm:$0xff]
    %s1990 = scalar_lea.vmem %s1, 56
    %v1991 = vld [vmem:[%s1990] sm:$0xff]
    %v1993 = vsel %vm560, %v1965, 0
    %v1996 = vsel %vm560, %v1966, 0
    %v1999 = vsel %vm560, %v1967, 0
    %v2002 = vsel %vm560, %v1968, 0
    %v2005 = vsel %vm560, %v1969, 0
    %v2008 = vsel %vm560, %v1970, 0
    %v2011 = vsel %vm560, %v1971, 0
    %v2014 = vsel %vm560, %v1972, 0
    %v2017 = vsel %vm560, %v1973, 0
    %v2020 = vsel %vm560, %v1974, 0
    %v2023 = vsel %vm560, %v1975, 0
    %v2026 = vsel %vm560, %v1976, 0
    %v2029 = vsel %vm560, %v1977, 0
    %v2032 = vsel %vm560, %v1978, 0
    %v2035 = vsel %vm560, %v1979, 0
    %v2038 = vsel %vm560, %v1980, 0
    %v2041 = vsel %vm560, %v1981, 0
    %v2044 = vsel %vm560, %v1982, 0
    %v2047 = vsel %vm560, %v1983, 0
    %v2050 = vsel %vm560, %v1984, 0
    %v2053 = vsel %vm560, %v1985, 0
    %v2056 = vsel %vm560, %v1986, 0
    %v2059 = vsel %vm560, %v1987, 0
    %v2062 = vsel %vm560, %v1988, 0
    %v2065 = vsel %vm560, %v1989, 0
    %2067 = vmatpush.msra.mxu0 0.0
    %2068 = vmatpush.msra.mxu0 0.0
    %2069 = vmatpush.msra.mxu0 0.0
    %2070 = vmatpush.msra.mxu0 0.0
    %2071 = vmatpush.msra.mxu0 0.0
    %2072 = vmatpush.msra.mxu0 0.0
    %2073 = vmatpush.msra.mxu0 0.0
    %2074 = vmatpush.msra.mxu0 0.0
    %2075 = vmatpush.msra.mxu0 0.0
    %2076 = vmatpush.msra.mxu0 0.0
    %2077 = vmatpush.msra.mxu0 0.0
    %2078 = vmatpush.msra.mxu0 0.0
    %2079 = vmatpush.msra.mxu0 0.0
    %2080 = vmatpush.msra.mxu0 0.0
    %2081 = vmatpush.msra.mxu0 0.0
    %2082 = vmatpush.msra.mxu0 %v1991
    %2083 = vmatmul.f32.gmra.mxu0 %v1993
    %v2084 = vpop.f32.mrf.mxu0
    %v2085 = vadd.f32 0.0, %v2084
    %2086 = vmatmul.f32.gmra.mxu0 %v1996
    %v2087 = vpop.f32.mrf.mxu0
    %v2088 = vadd.f32 0.0, %v2087
    %2089 = vmatmul.f32.gmra.mxu0 %v1999
    %v2090 = vpop.f32.mrf.mxu0
    %v2091 = vadd.f32 0.0, %v2090
    %2092 = vmatmul.f32.gmra.mxu0 %v2002
    %v2093 = vpop.f32.mrf.mxu0
    %v2094 = vadd.f32 0.0, %v2093
    %2095 = vmatmul.f32.gmra.mxu0 %v2005
    %v2096 = vpop.f32.mrf.mxu0
    %v2097 = vadd.f32 0.0, %v2096
    %2098 = vmatmul.f32.gmra.mxu0 %v2008
    %v2099 = vpop.f32.mrf.mxu0
    %v2100 = vadd.f32 0.0, %v2099
    %2101 = vmatmul.f32.gmra.mxu0 %v2011
    %v2102 = vpop.f32.mrf.mxu0
    %v2103 = vadd.f32 0.0, %v2102
    %2104 = vmatmul.f32.gmra.mxu0 %v2014
    %v2105 = vpop.f32.mrf.mxu0
    %v2106 = vadd.f32 0.0, %v2105
    %2107 = vmatmul.f32.gmra.mxu0 %v2017
    %v2108 = vpop.f32.mrf.mxu0
    %v2109 = vadd.f32 0.0, %v2108
    %2110 = vmatmul.f32.gmra.mxu0 %v2020
    %v2111 = vpop.f32.mrf.mxu0
    %v2112 = vadd.f32 0.0, %v2111
    %2113 = vmatmul.f32.gmra.mxu0 %v2023
    %v2114 = vpop.f32.mrf.mxu0
    %v2115 = vadd.f32 0.0, %v2114
    %2116 = vmatmul.f32.gmra.mxu0 %v2026
    %v2117 = vpop.f32.mrf.mxu0
    %v2118 = vadd.f32 0.0, %v2117
    %2119 = vmatmul.f32.gmra.mxu0 %v2029
    %v2120 = vpop.f32.mrf.mxu0
    %v2121 = vadd.f32 0.0, %v2120
    %2122 = vmatmul.f32.gmra.mxu0 %v2032
    %v2123 = vpop.f32.mrf.mxu0
    %v2124 = vadd.f32 0.0, %v2123
    %2125 = vmatmul.f32.gmra.mxu0 %v2035
    %v2126 = vpop.f32.mrf.mxu0
    %v2127 = vadd.f32 0.0, %v2126
    %2128 = vmatmul.f32.gmra.mxu0 %v2038
    %v2129 = vpop.f32.mrf.mxu0
    %v2130 = vadd.f32 0.0, %v2129
    %2131 = vmatmul.f32.gmra.mxu0 %v2041
    %v2132 = vpop.f32.mrf.mxu0
    %v2133 = vadd.f32 0.0, %v2132
    %2134 = vmatmul.f32.gmra.mxu0 %v2044
    %v2135 = vpop.f32.mrf.mxu0
    %v2136 = vadd.f32 0.0, %v2135
    %2137 = vmatmul.f32.gmra.mxu0 %v2047
    %v2138 = vpop.f32.mrf.mxu0
    %v2139 = vadd.f32 0.0, %v2138
    %2140 = vmatmul.f32.gmra.mxu0 %v2050
    %v2141 = vpop.f32.mrf.mxu0
    %v2142 = vadd.f32 0.0, %v2141
    %2143 = vmatmul.f32.gmra.mxu0 %v2053
    %v2144 = vpop.f32.mrf.mxu0
    %v2145 = vadd.f32 0.0, %v2144
    %2146 = vmatmul.f32.gmra.mxu0 %v2056
    %v2147 = vpop.f32.mrf.mxu0
    %v2148 = vadd.f32 0.0, %v2147
    %2149 = vmatmul.f32.gmra.mxu0 %v2059
    %v2150 = vpop.f32.mrf.mxu0
    %v2151 = vadd.f32 0.0, %v2150
    %2152 = vmatmul.f32.gmra.mxu0 %v2062
    %v2153 = vpop.f32.mrf.mxu0
    %v2154 = vadd.f32 0.0, %v2153
    %2155 = vmatmul.f32.gmra.mxu0 %v2065
    %v2156 = vpop.f32.mrf.mxu0
    %v2157 = vadd.f32 0.0, %v2156
    %2158 = vdwg.mxu0
    %v2159 = vadd.f32 %v1940, %v2085
    %v2160 = vadd.f32 %v1941, %v2088
    %v2161 = vadd.f32 %v1942, %v2091
    %v2162 = vadd.f32 %v1943, %v2094
    %v2163 = vadd.f32 %v1944, %v2097
    %v2164 = vadd.f32 %v1945, %v2100
    %v2165 = vadd.f32 %v1946, %v2103
    %v2166 = vadd.f32 %v1947, %v2106
    %v2167 = vadd.f32 %v1948, %v2109
    %v2168 = vadd.f32 %v1949, %v2112
    %v2169 = vadd.f32 %v1950, %v2115
    %v2170 = vadd.f32 %v1951, %v2118
    %v2171 = vadd.f32 %v1952, %v2121
    %v2172 = vadd.f32 %v1953, %v2124
    %v2173 = vadd.f32 %v1954, %v2127
    %v2174 = vadd.f32 %v1955, %v2130
    %v2175 = vadd.f32 %v1956, %v2133
    %v2176 = vadd.f32 %v1957, %v2136
    %v2177 = vadd.f32 %v1958, %v2139
    %v2178 = vadd.f32 %v1959, %v2142
    %v2179 = vadd.f32 %v1960, %v2145
    %v2180 = vadd.f32 %v1961, %v2148
    %v2181 = vadd.f32 %v1962, %v2151
    %v2182 = vadd.f32 %v1963, %v2154
    %v2183 = vadd.f32 %v1964, %v2157
    %v2184 = vld [vmem:[%s0 + $0x2e] sm:$0xff]
    %v2185 = vld [vmem:[%s0 + $0x36] sm:$0xff]
    %v2186 = vld [vmem:[%s0 + $0x3e] sm:$0xff]
    %v2187 = vld [vmem:[%s0 + $0x46] sm:$0xff]
    %v2188 = vld [vmem:[%s0 + $0x4e] sm:$0xff]
    %v2189 = vld [vmem:[%s0 + $0x56] sm:$0xff]
    %v2190 = vld [vmem:[%s0 + $0x5e] sm:$0xff]
    %v2191 = vld [vmem:[%s0 + $0x66] sm:$0xff]
    %v2192 = vld [vmem:[%s0 + $0x6e] sm:$0xff]
    %v2193 = vld [vmem:[%s0 + $0x76] sm:$0xff]
    %v2194 = vld [vmem:[%s0 + $0x7e] sm:$0xff]
    %v2195 = vld [vmem:[%s0 + $0x86] sm:$0xff]
    %v2196 = vld [vmem:[%s0 + $0x8e] sm:$0xff]
    %v2197 = vld [vmem:[%s0 + $0x96] sm:$0xff]
    %v2198 = vld [vmem:[%s0 + $0x9e] sm:$0xff]
    %v2199 = vld [vmem:[%s0 + $0xa6] sm:$0xff]
    %v2200 = vld [vmem:[%s0 + $0xae] sm:$0xff]
    %v2201 = vld [vmem:[%s0 + $0xb6] sm:$0xff]
    %v2202 = vld [vmem:[%s0 + $0xbe] sm:$0xff]
    %v2203 = vld [vmem:[%s0 + $0xc6] sm:$0xff]
    %v2204 = vld [vmem:[%s0 + $0xce] sm:$0xff]
    %v2205 = vld [vmem:[%s0 + $0xd6] sm:$0xff]
    %v2206 = vld [vmem:[%s0 + $0xde] sm:$0xff]
    %v2207 = vld [vmem:[%s0 + $0xe6] sm:$0xff]
    %v2208 = vld [vmem:[%s0 + $0xee] sm:$0xff]
    %s2209 = scalar_lea.vmem %s1, 64
    %v2210 = vld [vmem:[%s2209] sm:$0xff]
    %v2212 = vsel %vm560, %v2184, 0
    %v2215 = vsel %vm560, %v2185, 0
    %v2218 = vsel %vm560, %v2186, 0
    %v2221 = vsel %vm560, %v2187, 0
    %v2224 = vsel %vm560, %v2188, 0
    %v2227 = vsel %vm560, %v2189, 0
    %v2230 = vsel %vm560, %v2190, 0
    %v2233 = vsel %vm560, %v2191, 0
    %v2236 = vsel %vm560, %v2192, 0
    %v2239 = vsel %vm560, %v2193, 0
    %v2242 = vsel %vm560, %v2194, 0
    %v2245 = vsel %vm560, %v2195, 0
    %v2248 = vsel %vm560, %v2196, 0
    %v2251 = vsel %vm560, %v2197, 0
    %v2254 = vsel %vm560, %v2198, 0
    %v2257 = vsel %vm560, %v2199, 0
    %v2260 = vsel %vm560, %v2200, 0
    %v2263 = vsel %vm560, %v2201, 0
    %v2266 = vsel %vm560, %v2202, 0
    %v2269 = vsel %vm560, %v2203, 0
    %v2272 = vsel %vm560, %v2204, 0
    %v2275 = vsel %vm560, %v2205, 0
    %v2278 = vsel %vm560, %v2206, 0
    %v2281 = vsel %vm560, %v2207, 0
    %v2284 = vsel %vm560, %v2208, 0
    %2286 = vmatpush.msra.mxu0 0.0
    %2287 = vmatpush.msra.mxu0 0.0
    %2288 = vmatpush.msra.mxu0 0.0
    %2289 = vmatpush.msra.mxu0 0.0
    %2290 = vmatpush.msra.mxu0 0.0
    %2291 = vmatpush.msra.mxu0 0.0
    %2292 = vmatpush.msra.mxu0 0.0
    %2293 = vmatpush.msra.mxu0 0.0
    %2294 = vmatpush.msra.mxu0 0.0
    %2295 = vmatpush.msra.mxu0 0.0
    %2296 = vmatpush.msra.mxu0 0.0
    %2297 = vmatpush.msra.mxu0 0.0
    %2298 = vmatpush.msra.mxu0 0.0
    %2299 = vmatpush.msra.mxu0 0.0
    %2300 = vmatpush.msra.mxu0 0.0
    %2301 = vmatpush.msra.mxu0 %v2210
    %2302 = vmatmul.f32.gmra.mxu0 %v2212
    %v2303 = vpop.f32.mrf.mxu0
    %v2304 = vadd.f32 0.0, %v2303
    %2305 = vmatmul.f32.gmra.mxu0 %v2215
    %v2306 = vpop.f32.mrf.mxu0
    %v2307 = vadd.f32 0.0, %v2306
    %2308 = vmatmul.f32.gmra.mxu0 %v2218
    %v2309 = vpop.f32.mrf.mxu0
    %v2310 = vadd.f32 0.0, %v2309
    %2311 = vmatmul.f32.gmra.mxu0 %v2221
    %v2312 = vpop.f32.mrf.mxu0
    %v2313 = vadd.f32 0.0, %v2312
    %2314 = vmatmul.f32.gmra.mxu0 %v2224
    %v2315 = vpop.f32.mrf.mxu0
    %v2316 = vadd.f32 0.0, %v2315
    %2317 = vmatmul.f32.gmra.mxu0 %v2227
    %v2318 = vpop.f32.mrf.mxu0
    %v2319 = vadd.f32 0.0, %v2318
    %2320 = vmatmul.f32.gmra.mxu0 %v2230
    %v2321 = vpop.f32.mrf.mxu0
    %v2322 = vadd.f32 0.0, %v2321
    %2323 = vmatmul.f32.gmra.mxu0 %v2233
    %v2324 = vpop.f32.mrf.mxu0
    %v2325 = vadd.f32 0.0, %v2324
    %2326 = vmatmul.f32.gmra.mxu0 %v2236
    %v2327 = vpop.f32.mrf.mxu0
    %v2328 = vadd.f32 0.0, %v2327
    %2329 = vmatmul.f32.gmra.mxu0 %v2239
    %v2330 = vpop.f32.mrf.mxu0
    %v2331 = vadd.f32 0.0, %v2330
    %2332 = vmatmul.f32.gmra.mxu0 %v2242
    %v2333 = vpop.f32.mrf.mxu0
    %v2334 = vadd.f32 0.0, %v2333
    %2335 = vmatmul.f32.gmra.mxu0 %v2245
    %v2336 = vpop.f32.mrf.mxu0
    %v2337 = vadd.f32 0.0, %v2336
    %2338 = vmatmul.f32.gmra.mxu0 %v2248
    %v2339 = vpop.f32.mrf.mxu0
    %v2340 = vadd.f32 0.0, %v2339
    %2341 = vmatmul.f32.gmra.mxu0 %v2251
    %v2342 = vpop.f32.mrf.mxu0
    %v2343 = vadd.f32 0.0, %v2342
    %2344 = vmatmul.f32.gmra.mxu0 %v2254
    %v2345 = vpop.f32.mrf.mxu0
    %v2346 = vadd.f32 0.0, %v2345
    %2347 = vmatmul.f32.gmra.mxu0 %v2257
    %v2348 = vpop.f32.mrf.mxu0
    %v2349 = vadd.f32 0.0, %v2348
    %2350 = vmatmul.f32.gmra.mxu0 %v2260
    %v2351 = vpop.f32.mrf.mxu0
    %v2352 = vadd.f32 0.0, %v2351
    %2353 = vmatmul.f32.gmra.mxu0 %v2263
    %v2354 = vpop.f32.mrf.mxu0
    %v2355 = vadd.f32 0.0, %v2354
    %2356 = vmatmul.f32.gmra.mxu0 %v2266
    %v2357 = vpop.f32.mrf.mxu0
    %v2358 = vadd.f32 0.0, %v2357
    %2359 = vmatmul.f32.gmra.mxu0 %v2269
    %v2360 = vpop.f32.mrf.mxu0
    %v2361 = vadd.f32 0.0, %v2360
    %2362 = vmatmul.f32.gmra.mxu0 %v2272
    %v2363 = vpop.f32.mrf.mxu0
    %v2364 = vadd.f32 0.0, %v2363
    %2365 = vmatmul.f32.gmra.mxu0 %v2275
    %v2366 = vpop.f32.mrf.mxu0
    %v2367 = vadd.f32 0.0, %v2366
    %2368 = vmatmul.f32.gmra.mxu0 %v2278
    %v2369 = vpop.f32.mrf.mxu0
    %v2370 = vadd.f32 0.0, %v2369
    %2371 = vmatmul.f32.gmra.mxu0 %v2281
    %v2372 = vpop.f32.mrf.mxu0
    %v2373 = vadd.f32 0.0, %v2372
    %2374 = vmatmul.f32.gmra.mxu0 %v2284
    %v2375 = vpop.f32.mrf.mxu0
    %v2376 = vadd.f32 0.0, %v2375
    %2377 = vdwg.mxu0
    %v2378 = vadd.f32 %v2159, %v2304
    %v2379 = vadd.f32 %v2160, %v2307
    %v2380 = vadd.f32 %v2161, %v2310
    %v2381 = vadd.f32 %v2162, %v2313
    %v2382 = vadd.f32 %v2163, %v2316
    %v2383 = vadd.f32 %v2164, %v2319
    %v2384 = vadd.f32 %v2165, %v2322
    %v2385 = vadd.f32 %v2166, %v2325
    %v2386 = vadd.f32 %v2167, %v2328
    %v2387 = vadd.f32 %v2168, %v2331
    %v2388 = vadd.f32 %v2169, %v2334
    %v2389 = vadd.f32 %v2170, %v2337
    %v2390 = vadd.f32 %v2171, %v2340
    %v2391 = vadd.f32 %v2172, %v2343
    %v2392 = vadd.f32 %v2173, %v2346
    %v2393 = vadd.f32 %v2174, %v2349
    %v2394 = vadd.f32 %v2175, %v2352
    %v2395 = vadd.f32 %v2176, %v2355
    %v2396 = vadd.f32 %v2177, %v2358
    %v2397 = vadd.f32 %v2178, %v2361
    %v2398 = vadd.f32 %v2179, %v2364
    %v2399 = vadd.f32 %v2180, %v2367
    %v2400 = vadd.f32 %v2181, %v2370
    %v2401 = vadd.f32 %v2182, %v2373
    %v2402 = vadd.f32 %v2183, %v2376
    %v2403 = vld [vmem:[%s2] sm:$0x7]
    %v2404 = vperm.slane %v2403, 0
    %v2405 = vadd.f32 %v2378, %v2404
    %v2406 = vadd.f32 %v2379, %v2404
    %v2407 = vadd.f32 %v2380, %v2404
    %v2408 = vadd.f32 %v2381, %v2404
    %v2409 = vadd.f32 %v2382, %v2404
    %v2410 = vadd.f32 %v2383, %v2404
    %v2411 = vadd.f32 %v2384, %v2404
    %v2412 = vadd.f32 %v2385, %v2404
    %v2413 = vadd.f32 %v2386, %v2404
    %v2414 = vadd.f32 %v2387, %v2404
    %v2415 = vadd.f32 %v2388, %v2404
    %v2416 = vadd.f32 %v2389, %v2404
    %v2417 = vadd.f32 %v2390, %v2404
    %v2418 = vadd.f32 %v2391, %v2404
    %v2419 = vadd.f32 %v2392, %v2404
    %v2420 = vadd.f32 %v2393, %v2404
    %v2421 = vadd.f32 %v2394, %v2404
    %v2422 = vadd.f32 %v2395, %v2404
    %v2423 = vadd.f32 %v2396, %v2404
    %v2424 = vadd.f32 %v2397, %v2404
    %v2425 = vadd.f32 %v2398, %v2404
    %v2426 = vadd.f32 %v2399, %v2404
    %v2427 = vadd.f32 %v2400, %v2404
    %v2428 = vadd.f32 %v2401, %v2404
    %v2429 = vadd.f32 %v2402, %v2404
    %2430 = vset.pattern.permute.xlu0 7
    %2431 = vperm.xlu0 %2430, %v482
    %v2432 = vpop.permute.xlu0 %2431
    %2434 = vset.pattern.permute.xlu0 7
    %2435 = vperm.xlu0 %2434, %v483
    %v2436 = vpop.permute.xlu0 %2435
    %2438 = vset.pattern.permute.xlu0 7
    %2439 = vperm.xlu0 %2438, %v484
    %v2440 = vpop.permute.xlu0 %2439
    %2442 = vset.pattern.permute.xlu0 7
    %2443 = vperm.xlu0 %2442, %v485
    %v2444 = vpop.permute.xlu0 %2443
    %2446 = vset.pattern.permute.xlu0 7
    %2447 = vperm.xlu0 %2446, %v486
    %v2448 = vpop.permute.xlu0 %2447
    %2450 = vset.pattern.permute.xlu0 7
    %2451 = vperm.xlu0 %2450, %v487
    %v2452 = vpop.permute.xlu0 %2451
    %2454 = vset.pattern.permute.xlu0 7
    %2455 = vperm.xlu0 %2454, %v488
    %v2456 = vpop.permute.xlu0 %2455
    %2458 = vset.pattern.permute.xlu0 7
    %2459 = vperm.xlu0 %2458, %v489
    %v2460 = vpop.permute.xlu0 %2459
    %2462 = vset.pattern.permute.xlu0 7
    %2463 = vperm.xlu0 %2462, %v490
    %v2464 = vpop.permute.xlu0 %2463
    %2466 = vset.pattern.permute.xlu0 7
    %2467 = vperm.xlu0 %2466, %v491
    %v2468 = vpop.permute.xlu0 %2467
    %2470 = vset.pattern.permute.xlu0 7
    %2471 = vperm.xlu0 %2470, %v492
    %v2472 = vpop.permute.xlu0 %2471
    %2474 = vset.pattern.permute.xlu0 7
    %2475 = vperm.xlu0 %2474, %v493
    %v2476 = vpop.permute.xlu0 %2475
    %2478 = vset.pattern.permute.xlu0 7
    %2479 = vperm.xlu0 %2478, %v494
    %v2480 = vpop.permute.xlu0 %2479
    %2482 = vset.pattern.permute.xlu0 7
    %2483 = vperm.xlu0 %2482, %v495
    %v2484 = vpop.permute.xlu0 %2483
    %2486 = vset.pattern.permute.xlu0 7
    %2487 = vperm.xlu0 %2486, %v496
    %v2488 = vpop.permute.xlu0 %2487
    %2490 = vset.pattern.permute.xlu0 7
    %2491 = vperm.xlu0 %2490, %v497
    %v2492 = vpop.permute.xlu0 %2491
    %2494 = vset.pattern.permute.xlu0 7
    %2495 = vperm.xlu0 %2494, %v498
    %v2496 = vpop.permute.xlu0 %2495
    %2498 = vset.pattern.permute.xlu0 7
    %2499 = vperm.xlu0 %2498, %v499
    %v2500 = vpop.permute.xlu0 %2499
    %2502 = vset.pattern.permute.xlu0 7
    %2503 = vperm.xlu0 %2502, %v500
    %v2504 = vpop.permute.xlu0 %2503
    %2506 = vset.pattern.permute.xlu0 7
    %2507 = vperm.xlu0 %2506, %v501
    %v2508 = vpop.permute.xlu0 %2507
    %2510 = vset.pattern.permute.xlu0 7
    %2511 = vperm.xlu0 %2510, %v502
    %v2512 = vpop.permute.xlu0 %2511
    %2514 = vset.pattern.permute.xlu0 7
    %2515 = vperm.xlu0 %2514, %v503
    %v2516 = vpop.permute.xlu0 %2515
    %2518 = vset.pattern.permute.xlu0 7
    %2519 = vperm.xlu0 %2518, %v504
    %v2520 = vpop.permute.xlu0 %2519
    %2522 = vset.pattern.permute.xlu0 7
    %2523 = vperm.xlu0 %2522, %v505
    %v2524 = vpop.permute.xlu0 %2523
    %2526 = vset.pattern.permute.xlu0 7
    %2527 = vperm.xlu0 %2526, %v506
    %v2528 = vpop.permute.xlu0 %2527
    %v2530 = vmul.f32 %v2405, %v2432
    %v2531 = vmul.f32 %v2406, %v2436
    %v2532 = vmul.f32 %v2407, %v2440
    %v2533 = vmul.f32 %v2408, %v2444
    %v2534 = vmul.f32 %v2409, %v2448
    %v2535 = vmul.f32 %v2410, %v2452
    %v2536 = vmul.f32 %v2411, %v2456
    %v2537 = vmul.f32 %v2412, %v2460
    %v2538 = vmul.f32 %v2413, %v2464
    %v2539 = vmul.f32 %v2414, %v2468
    %v2540 = vmul.f32 %v2415, %v2472
    %v2541 = vmul.f32 %v2416, %v2476
    %v2542 = vmul.f32 %v2417, %v2480
    %v2543 = vmul.f32 %v2418, %v2484
    %v2544 = vmul.f32 %v2419, %v2488
    %v2545 = vmul.f32 %v2420, %v2492
    %v2546 = vmul.f32 %v2421, %v2496
    %v2547 = vmul.f32 %v2422, %v2500
    %v2548 = vmul.f32 %v2423, %v2504
    %v2549 = vmul.f32 %v2424, %v2508
    %v2550 = vmul.f32 %v2425, %v2512
    %v2551 = vmul.f32 %v2426, %v2516
    %v2552 = vmul.f32 %v2427, %v2520
    %v2553 = vmul.f32 %v2428, %v2524
    %v2554 = vmul.f32 %v2429, %v2528
    %v2555 = vsel %vm462, %v2530, 0.0
    %v2556 = vsel %vm462, %v2531, 0.0
    %v2557 = vadd.f32 %v2555, %v2556
    %v2558 = vsel %vm462, %v2532, 0.0
    %v2559 = vadd.f32 %v2557, %v2558
    %v2560 = vsel %vm462, %v2533, 0.0
    %v2561 = vadd.f32 %v2559, %v2560
    %v2562 = vsel %vm462, %v2534, 0.0
    %v2563 = vadd.f32 %v2561, %v2562
    %v2564 = vsel %vm462, %v2535, 0.0
    %v2565 = vadd.f32 %v2563, %v2564
    %v2566 = vsel %vm462, %v2536, 0.0
    %v2567 = vadd.f32 %v2565, %v2566
    %v2568 = vsel %vm462, %v2537, 0.0
    %v2569 = vadd.f32 %v2567, %v2568
    %v2570 = vsel %vm462, %v2538, 0.0
    %v2571 = vadd.f32 %v2569, %v2570
    %v2572 = vsel %vm462, %v2539, 0.0
    %v2573 = vadd.f32 %v2571, %v2572
    %v2574 = vsel %vm462, %v2540, 0.0
    %v2575 = vadd.f32 %v2573, %v2574
    %v2576 = vsel %vm462, %v2541, 0.0
    %v2577 = vadd.f32 %v2575, %v2576
    %v2578 = vsel %vm462, %v2542, 0.0
    %v2579 = vadd.f32 %v2577, %v2578
    %v2580 = vsel %vm462, %v2543, 0.0
    %v2581 = vadd.f32 %v2579, %v2580
    %v2582 = vsel %vm462, %v2544, 0.0
    %v2583 = vadd.f32 %v2581, %v2582
    %v2584 = vsel %vm462, %v2545, 0.0
    %v2585 = vadd.f32 %v2583, %v2584
    %v2586 = vsel %vm462, %v2546, 0.0
    %v2587 = vadd.f32 %v2585, %v2586
    %v2588 = vsel %vm462, %v2547, 0.0
    %v2589 = vadd.f32 %v2587, %v2588
    %v2590 = vsel %vm462, %v2548, 0.0
    %v2591 = vadd.f32 %v2589, %v2590
    %v2592 = vsel %vm462, %v2549, 0.0
    %v2593 = vadd.f32 %v2591, %v2592
    %v2594 = vsel %vm462, %v2550, 0.0
    %v2595 = vadd.f32 %v2593, %v2594
    %v2596 = vsel %vm462, %v2551, 0.0
    %v2597 = vadd.f32 %v2595, %v2596
    %v2598 = vsel %vm462, %v2552, 0.0
    %v2599 = vadd.f32 %v2597, %v2598
    %v2600 = vsel %vm462, %v2553, 0.0
    %v2601 = vadd.f32 %v2599, %v2600
    %v2602 = vsel %vm462, %v2554, 0.0
    %v2603 = vadd.f32 %v2601, %v2602
    %v2604 = vrot.slane %v2603, 4
    %v2605 = vadd.f32 %v2603, %v2604
    %v2606 = vrot.slane %v2605, 2
    %v2607 = vadd.f32 %v2605, %v2606
    %v2608 = vrot.slane %v2607, 1
    %v2609 = vadd.f32 %v2607, %v2608
    %v2610 = vmul.f32 %v2530, %v2530
    %v2611 = vmul.f32 %v2531, %v2531
    %v2612 = vmul.f32 %v2532, %v2532
    %v2613 = vmul.f32 %v2533, %v2533
    %v2614 = vmul.f32 %v2534, %v2534
    %v2615 = vmul.f32 %v2535, %v2535
    %v2616 = vmul.f32 %v2536, %v2536
    %v2617 = vmul.f32 %v2537, %v2537
    %v2618 = vmul.f32 %v2538, %v2538
    %v2619 = vmul.f32 %v2539, %v2539
    %v2620 = vmul.f32 %v2540, %v2540
    %v2621 = vmul.f32 %v2541, %v2541
    %v2622 = vmul.f32 %v2542, %v2542
    %v2623 = vmul.f32 %v2543, %v2543
    %v2624 = vmul.f32 %v2544, %v2544
    %v2625 = vmul.f32 %v2545, %v2545
    %v2626 = vmul.f32 %v2546, %v2546
    %v2627 = vmul.f32 %v2547, %v2547
    %v2628 = vmul.f32 %v2548, %v2548
    %v2629 = vmul.f32 %v2549, %v2549
    %v2630 = vmul.f32 %v2550, %v2550
    %v2631 = vmul.f32 %v2551, %v2551
    %v2632 = vmul.f32 %v2552, %v2552
    %v2633 = vmul.f32 %v2553, %v2553
    %v2634 = vmul.f32 %v2554, %v2554
    %v2635 = vsel %vm462, %v2610, 0.0
    %v2636 = vsel %vm462, %v2611, 0.0
    %v2637 = vadd.f32 %v2635, %v2636
    %v2638 = vsel %vm462, %v2612, 0.0
    %v2639 = vadd.f32 %v2637, %v2638
    %v2640 = vsel %vm462, %v2613, 0.0
    %v2641 = vadd.f32 %v2639, %v2640
    %v2642 = vsel %vm462, %v2614, 0.0
    %v2643 = vadd.f32 %v2641, %v2642
    %v2644 = vsel %vm462, %v2615, 0.0
    %v2645 = vadd.f32 %v2643, %v2644
    %v2646 = vsel %vm462, %v2616, 0.0
    %v2647 = vadd.f32 %v2645, %v2646
    %v2648 = vsel %vm462, %v2617, 0.0
    %v2649 = vadd.f32 %v2647, %v2648
    %v2650 = vsel %vm462, %v2618, 0.0
    %v2651 = vadd.f32 %v2649, %v2650
    %v2652 = vsel %vm462, %v2619, 0.0
    %v2653 = vadd.f32 %v2651, %v2652
    %v2654 = vsel %vm462, %v2620, 0.0
    %v2655 = vadd.f32 %v2653, %v2654
    %v2656 = vsel %vm462, %v2621, 0.0
    %v2657 = vadd.f32 %v2655, %v2656
    %v2658 = vsel %vm462, %v2622, 0.0
    %v2659 = vadd.f32 %v2657, %v2658
    %v2660 = vsel %vm462, %v2623, 0.0
    %v2661 = vadd.f32 %v2659, %v2660
    %v2662 = vsel %vm462, %v2624, 0.0
    %v2663 = vadd.f32 %v2661, %v2662
    %v2664 = vsel %vm462, %v2625, 0.0
    %v2665 = vadd.f32 %v2663, %v2664
    %v2666 = vsel %vm462, %v2626, 0.0
    %v2667 = vadd.f32 %v2665, %v2666
    %v2668 = vsel %vm462, %v2627, 0.0
    %v2669 = vadd.f32 %v2667, %v2668
    %v2670 = vsel %vm462, %v2628, 0.0
    %v2671 = vadd.f32 %v2669, %v2670
    %v2672 = vsel %vm462, %v2629, 0.0
    %v2673 = vadd.f32 %v2671, %v2672
    %v2674 = vsel %vm462, %v2630, 0.0
    %v2675 = vadd.f32 %v2673, %v2674
    %v2676 = vsel %vm462, %v2631, 0.0
    %v2677 = vadd.f32 %v2675, %v2676
    %v2678 = vsel %vm462, %v2632, 0.0
    %v2679 = vadd.f32 %v2677, %v2678
    %v2680 = vsel %vm462, %v2633, 0.0
    %v2681 = vadd.f32 %v2679, %v2680
    %v2682 = vsel %vm462, %v2634, 0.0
    %v2683 = vadd.f32 %v2681, %v2682
    %v2684 = vrot.slane %v2683, 4
    %v2685 = vadd.f32 %v2683, %v2684
    %v2686 = vrot.slane %v2685, 2
    %v2687 = vadd.f32 %v2685, %v2686
    %v2688 = vrot.slane %v2687, 1
    %v2689 = vadd.f32 %v2687, %v2688
    %v2690 = vmul.f32 %v2609, 0.0078125
    %v2691 = vmul.f32 %v2689, 0.0078125
    %v2692 = vmul.f32 %v2690, %v2690
    %v2693 = vsub.f32 %v2691, %v2692
    %v2694 = vadd.f32 %v2693, 1e-05
    %v2695 = vrsqrt.pop %v2694
    %v2696 = vmul.f32 %v2695, %v2694
    %v2697 = vmul.f32 %v2696, %v2695
    %v2698 = vmul.f32 0.5, %v2697
    %v2699 = vsub.f32 1.5, %v2698
    %v2700 = vmul.f32 %v2695, %v2699
    %vm2701 = vweird.f32 %v2694
    %vm2702 = vweird.f32 %v2695
    %vm2703 = vmor %vm2701, %vm2702
    %v2704 = vsel %vm2703, %v2695, %v2700
    %v2705 = vmul.f32 %v2704, %v2403
    %v2706 = vmul.f32 %v2690, %v2705
    %v2708 = vrot.slane %v2706, 7
    %v2710 = vsub.f32 %v2403, %v2708
    %v2711 = vperm.slane %v2705, 1
    %v2712 = vmul.f32 %v2405, %v2711
    %v2713 = vmul.f32 %v2406, %v2711
    %v2714 = vmul.f32 %v2407, %v2711
    %v2715 = vmul.f32 %v2408, %v2711
    %v2716 = vmul.f32 %v2409, %v2711
    %v2717 = vmul.f32 %v2410, %v2711
    %v2718 = vmul.f32 %v2411, %v2711
    %v2719 = vmul.f32 %v2412, %v2711
    %v2720 = vmul.f32 %v2413, %v2711
    %v2721 = vmul.f32 %v2414, %v2711
    %v2722 = vmul.f32 %v2415, %v2711
    %v2723 = vmul.f32 %v2416, %v2711
    %v2724 = vmul.f32 %v2417, %v2711
    %v2725 = vmul.f32 %v2418, %v2711
    %v2726 = vmul.f32 %v2419, %v2711
    %v2727 = vmul.f32 %v2420, %v2711
    %v2728 = vmul.f32 %v2421, %v2711
    %v2729 = vmul.f32 %v2422, %v2711
    %v2730 = vmul.f32 %v2423, %v2711
    %v2731 = vmul.f32 %v2424, %v2711
    %v2732 = vmul.f32 %v2425, %v2711
    %v2733 = vmul.f32 %v2426, %v2711
    %v2734 = vmul.f32 %v2427, %v2711
    %v2735 = vmul.f32 %v2428, %v2711
    %v2736 = vmul.f32 %v2429, %v2711
    %v2737 = vperm.slane %v2710, 2
    %v2738 = vadd.f32 %v2712, %v2737
    %v2739 = vadd.f32 %v2713, %v2737
    %v2740 = vadd.f32 %v2714, %v2737
    %v2741 = vadd.f32 %v2715, %v2737
    %v2742 = vadd.f32 %v2716, %v2737
    %v2743 = vadd.f32 %v2717, %v2737
    %v2744 = vadd.f32 %v2718, %v2737
    %v2745 = vadd.f32 %v2719, %v2737
    %v2746 = vadd.f32 %v2720, %v2737
    %v2747 = vadd.f32 %v2721, %v2737
    %v2748 = vadd.f32 %v2722, %v2737
    %v2749 = vadd.f32 %v2723, %v2737
    %v2750 = vadd.f32 %v2724, %v2737
    %v2751 = vadd.f32 %v2725, %v2737
    %v2752 = vadd.f32 %v2726, %v2737
    %v2753 = vadd.f32 %v2727, %v2737
    %v2754 = vadd.f32 %v2728, %v2737
    %v2755 = vadd.f32 %v2729, %v2737
    %v2756 = vadd.f32 %v2730, %v2737
    %v2757 = vadd.f32 %v2731, %v2737
    %v2758 = vadd.f32 %v2732, %v2737
    %v2759 = vadd.f32 %v2733, %v2737
    %v2760 = vadd.f32 %v2734, %v2737
    %v2761 = vadd.f32 %v2735, %v2737
    %v2762 = vadd.f32 %v2736, %v2737
    %v2763 = vmax.f32 %v2738, 0.0
    %v2764 = vmax.f32 %v2739, 0.0
    %v2765 = vmax.f32 %v2740, 0.0
    %v2766 = vmax.f32 %v2741, 0.0
    %v2767 = vmax.f32 %v2742, 0.0
    %v2768 = vmax.f32 %v2743, 0.0
    %v2769 = vmax.f32 %v2744, 0.0
    %v2770 = vmax.f32 %v2745, 0.0
    %v2771 = vmax.f32 %v2746, 0.0
    %v2772 = vmax.f32 %v2747, 0.0
    %v2773 = vmax.f32 %v2748, 0.0
    %v2774 = vmax.f32 %v2749, 0.0
    %v2775 = vmax.f32 %v2750, 0.0
    %v2776 = vmax.f32 %v2751, 0.0
    %v2777 = vmax.f32 %v2752, 0.0
    %v2778 = vmax.f32 %v2753, 0.0
    %v2779 = vmax.f32 %v2754, 0.0
    %v2780 = vmax.f32 %v2755, 0.0
    %v2781 = vmax.f32 %v2756, 0.0
    %v2782 = vmax.f32 %v2757, 0.0
    %v2783 = vmax.f32 %v2758, 0.0
    %v2784 = vmax.f32 %v2759, 0.0
    %v2785 = vmax.f32 %v2760, 0.0
    %v2786 = vmax.f32 %v2761, 0.0
    %v2787 = vmax.f32 %v2762, 0.0
    %v2788 = vmul.f32 %v2763, %v2432
    %v2789 = vmul.f32 %v2764, %v2436
    %v2790 = vmul.f32 %v2765, %v2440
    %v2791 = vmul.f32 %v2766, %v2444
    %v2792 = vmul.f32 %v2767, %v2448
    %v2793 = vmul.f32 %v2768, %v2452
    %v2794 = vmul.f32 %v2769, %v2456
    %v2795 = vmul.f32 %v2770, %v2460
    %v2796 = vmul.f32 %v2771, %v2464
    %v2797 = vmul.f32 %v2772, %v2468
    %v2798 = vmul.f32 %v2773, %v2472
    %v2799 = vmul.f32 %v2774, %v2476
    %v2800 = vmul.f32 %v2775, %v2480
    %v2801 = vmul.f32 %v2776, %v2484
    %v2802 = vmul.f32 %v2777, %v2488
    %v2803 = vmul.f32 %v2778, %v2492
    %v2804 = vmul.f32 %v2779, %v2496
    %v2805 = vmul.f32 %v2780, %v2500
    %v2806 = vmul.f32 %v2781, %v2504
    %v2807 = vmul.f32 %v2782, %v2508
    %v2808 = vmul.f32 %v2783, %v2512
    %v2809 = vmul.f32 %v2784, %v2516
    %v2810 = vmul.f32 %v2785, %v2520
    %v2811 = vmul.f32 %v2786, %v2524
    %v2812 = vmul.f32 %v2787, %v2528
    %2813 = vst.msk [vmem:[#allocation2 + $0x18] sm:$0xff] %vm462, %v2788
    %2814 = vst.msk [vmem:[#allocation2 + $0x20] sm:$0xff] %vm462, %v2789
    %2815 = vst.msk [vmem:[#allocation2 + $0x28] sm:$0xff] %vm462, %v2790
    %2816 = vst.msk [vmem:[#allocation2 + $0x30] sm:$0xff] %vm462, %v2791
    %2817 = vst.msk [vmem:[#allocation2 + $0x38] sm:$0xff] %vm462, %v2792
    %2818 = vst.msk [vmem:[#allocation2 + $0x40] sm:$0xff] %vm462, %v2793
    %2819 = vst.msk [vmem:[#allocation2 + $0x48] sm:$0xff] %vm462, %v2794
    %2820 = vst.msk [vmem:[#allocation2 + $0x50] sm:$0xff] %vm462, %v2795
    %2821 = vst.msk [vmem:[#allocation2 + $0x58] sm:$0xff] %vm462, %v2796
    %2822 = vst.msk [vmem:[#allocation2 + $0x60] sm:$0xff] %vm462, %v2797
    %2823 = vst.msk [vmem:[#allocation2 + $0x68] sm:$0xff] %vm462, %v2798
    %2824 = vst.msk [vmem:[#allocation2 + $0x70] sm:$0xff] %vm462, %v2799
    %2825 = vst.msk [vmem:[#allocation2 + $0x78] sm:$0xff] %vm462, %v2800
    %2826 = vst.msk [vmem:[#allocation2 + $0x80] sm:$0xff] %vm462, %v2801
    %2827 = vst.msk [vmem:[#allocation2 + $0x88] sm:$0xff] %vm462, %v2802
    %2828 = vst.msk [vmem:[#allocation2 + $0x90] sm:$0xff] %vm462, %v2803
    %2829 = vst.msk [vmem:[#allocation2 + $0x98] sm:$0xff] %vm462, %v2804
    %2830 = vst.msk [vmem:[#allocation2 + $0xa0] sm:$0xff] %vm462, %v2805
    %2831 = vst.msk [vmem:[#allocation2 + $0xa8] sm:$0xff] %vm462, %v2806
    %2832 = vst.msk [vmem:[#allocation2 + $0xb0] sm:$0xff] %vm462, %v2807
    %2833 = vst.msk [vmem:[#allocation2 + $0xb8] sm:$0xff] %vm462, %v2808
    %2834 = vst.msk [vmem:[#allocation2 + $0xc0] sm:$0xff] %vm462, %v2809
    %2835 = vst.msk [vmem:[#allocation2 + $0xc8] sm:$0xff] %vm462, %v2810
    %2836 = vst.msk [vmem:[#allocation2 + $0xd0] sm:$0xff] %vm462, %v2811
    %2837 = vst.msk [vmem:[#allocation2 + $0xd8] sm:$0xff] %vm462, %v2812
    %v2838 = vld [vmem:[#allocation2 + $0x2] sm:$0xff]
    %v2839 = vld [vmem:[#allocation2 + $0xa] sm:$0xff]
    %v2840 = vld [vmem:[#allocation2 + $0x12] sm:$0xff]
    %v2841 = vld [vmem:[#allocation2 + $0x1a] sm:$0xff]
    %v2842 = vld [vmem:[#allocation2 + $0x22] sm:$0xff]
    %v2843 = vld [vmem:[#allocation2 + $0x2a] sm:$0xff]
    %v2844 = vld [vmem:[#allocation2 + $0x32] sm:$0xff]
    %v2845 = vld [vmem:[#allocation2 + $0x3a] sm:$0xff]
    %v2846 = vld [vmem:[#allocation2 + $0x42] sm:$0xff]
    %v2847 = vld [vmem:[#allocation2 + $0x4a] sm:$0xff]
    %v2848 = vld [vmem:[#allocation2 + $0x52] sm:$0xff]
    %v2849 = vld [vmem:[#allocation2 + $0x5a] sm:$0xff]
    %v2850 = vld [vmem:[#allocation2 + $0x62] sm:$0xff]
    %v2851 = vld [vmem:[#allocation2 + $0x6a] sm:$0xff]
    %v2852 = vld [vmem:[#allocation2 + $0x72] sm:$0xff]
    %v2853 = vld [vmem:[#allocation2 + $0x7a] sm:$0xff]
    %v2854 = vld [vmem:[#allocation2 + $0x82] sm:$0xff]
    %v2855 = vld [vmem:[#allocation2 + $0x8a] sm:$0xff]
    %v2856 = vld [vmem:[#allocation2 + $0x92] sm:$0xff]
    %v2857 = vld [vmem:[#allocation2 + $0x9a] sm:$0xff]
    %v2858 = vld [vmem:[#allocation2 + $0xa2] sm:$0xff]
    %v2859 = vld [vmem:[#allocation2 + $0xaa] sm:$0xff]
    %v2860 = vld [vmem:[#allocation2 + $0xb2] sm:$0xff]
    %v2861 = vld [vmem:[#allocation2 + $0xba] sm:$0xff]
    %v2862 = vld [vmem:[#allocation2 + $0xc2] sm:$0xff]
    %v2863 = vld [vmem:[%s3] sm:$0xff]
    %v2864 = vld [vmem:[%s3 + $0x8] sm:$0xff]
    %v2865 = vld [vmem:[%s3 + $0x10] sm:$0xff]
    %v2866 = vld [vmem:[%s3 + $0x18] sm:$0xff]
    %v2867 = vld [vmem:[#allocation2 + $0x4] sm:$0xff]
    %v2868 = vld [vmem:[#allocation2 + $0xc] sm:$0xff]
    %v2869 = vld [vmem:[#allocation2 + $0x14] sm:$0xff]
    %v2870 = vld [vmem:[#allocation2 + $0x1c] sm:$0xff]
    %v2871 = vld [vmem:[#allocation2 + $0x24] sm:$0xff]
    %v2872 = vld [vmem:[#allocation2 + $0x2c] sm:$0xff]
    %v2873 = vld [vmem:[#allocation2 + $0x34] sm:$0xff]
    %v2874 = vld [vmem:[#allocation2 + $0x3c] sm:$0xff]
    %v2875 = vld [vmem:[#allocation2 + $0x44] sm:$0xff]
    %v2876 = vld [vmem:[#allocation2 + $0x4c] sm:$0xff]
    %v2877 = vld [vmem:[#allocation2 + $0x54] sm:$0xff]
    %v2878 = vld [vmem:[#allocation2 + $0x5c] sm:$0xff]
    %v2879 = vld [vmem:[#allocation2 + $0x64] sm:$0xff]
    %v2880 = vld [vmem:[#allocation2 + $0x6c] sm:$0xff]
    %v2881 = vld [vmem:[#allocation2 + $0x74] sm:$0xff]
    %v2882 = vld [vmem:[#allocation2 + $0x7c] sm:$0xff]
    %v2883 = vld [vmem:[#allocation2 + $0x84] sm:$0xff]
    %v2884 = vld [vmem:[#allocation2 + $0x8c] sm:$0xff]
    %v2885 = vld [vmem:[#allocation2 + $0x94] sm:$0xff]
    %v2886 = vld [vmem:[#allocation2 + $0x9c] sm:$0xff]
    %v2887 = vld [vmem:[#allocation2 + $0xa4] sm:$0xff]
    %v2888 = vld [vmem:[#allocation2 + $0xac] sm:$0xff]
    %v2889 = vld [vmem:[#allocation2 + $0xb4] sm:$0xff]
    %v2890 = vld [vmem:[#allocation2 + $0xbc] sm:$0xff]
    %v2891 = vld [vmem:[#allocation2 + $0xc4] sm:$0xff]
    %s2892 = scalar_lea.vmem %s3, 32
    %v2893 = vld [vmem:[%s2892] sm:$0xff]
    %v2894 = vld [vmem:[%s2892 + $0x8] sm:$0xff]
    %v2895 = vld [vmem:[%s2892 + $0x10] sm:$0xff]
    %v2896 = vld [vmem:[%s2892 + $0x18] sm:$0xff]
    %v2898 = vsel %vm462, %v2867, 0
    %v2901 = vsel %vm462, %v2868, 0
    %v2904 = vsel %vm462, %v2869, 0
    %v2907 = vsel %vm462, %v2870, 0
    %v2910 = vsel %vm462, %v2871, 0
    %v2913 = vsel %vm462, %v2872, 0
    %v2916 = vsel %vm462, %v2873, 0
    %v2919 = vsel %vm462, %v2874, 0
    %v2922 = vsel %vm462, %v2875, 0
    %v2925 = vsel %vm462, %v2876, 0
    %v2928 = vsel %vm462, %v2877, 0
    %v2931 = vsel %vm462, %v2878, 0
    %v2934 = vsel %vm462, %v2879, 0
    %v2937 = vsel %vm462, %v2880, 0
    %v2940 = vsel %vm462, %v2881, 0
    %v2943 = vsel %vm462, %v2882, 0
    %v2946 = vsel %vm462, %v2883, 0
    %v2949 = vsel %vm462, %v2884, 0
    %v2952 = vsel %vm462, %v2885, 0
    %v2955 = vsel %vm462, %v2886, 0
    %v2958 = vsel %vm462, %v2887, 0
    %v2961 = vsel %vm462, %v2888, 0
    %v2964 = vsel %vm462, %v2889, 0
    %v2967 = vsel %vm462, %v2890, 0
    %v2970 = vsel %vm462, %v2891, 0
    %2972 = vmatpush.msra.mxu0 0.0
    %2973 = vmatpush.msra.mxu0 0.0
    %2974 = vmatpush.msra.mxu0 0.0
    %2975 = vmatpush.msra.mxu0 0.0
    %2976 = vmatpush.msra.mxu0 0.0
    %2977 = vmatpush.msra.mxu0 0.0
    %2978 = vmatpush.msra.mxu0 0.0
    %2979 = vmatpush.msra.mxu0 0.0
    %2980 = vmatpush.msra.mxu0 0.0
    %2981 = vmatpush.msra.mxu0 0.0
    %2982 = vmatpush.msra.mxu0 0.0
    %2983 = vmatpush.msra.mxu0 0.0
    %2984 = vmatpush.msra.mxu0 %v2896
    %2985 = vmatpush.msra.mxu0 %v2895
    %2986 = vmatpush.msra.mxu0 %v2894
    %2987 = vmatpush.msra.mxu0 %v2893
    %2988 = vmatmul.f32.gmra.mxu0 %v2898
    %v2989 = vpop.f32.mrf.mxu0
    %v2990 = vadd.f32 0.0, %v2989
    %2991 = vmatmul.f32.gmra.mxu0 %v2901
    %v2992 = vpop.f32.mrf.mxu0
    %v2993 = vadd.f32 0.0, %v2992
    %2994 = vmatmul.f32.gmra.mxu0 %v2904
    %v2995 = vpop.f32.mrf.mxu0
    %v2996 = vadd.f32 0.0, %v2995
    %2997 = vmatmul.f32.gmra.mxu0 %v2907
    %v2998 = vpop.f32.mrf.mxu0
    %v2999 = vadd.f32 0.0, %v2998
    %3000 = vmatmul.f32.gmra.mxu0 %v2910
    %v3001 = vpop.f32.mrf.mxu0
    %v3002 = vadd.f32 0.0, %v3001
    %3003 = vmatmul.f32.gmra.mxu0 %v2913
    %v3004 = vpop.f32.mrf.mxu0
    %v3005 = vadd.f32 0.0, %v3004
    %3006 = vmatmul.f32.gmra.mxu0 %v2916
    %v3007 = vpop.f32.mrf.mxu0
    %v3008 = vadd.f32 0.0, %v3007
    %3009 = vmatmul.f32.gmra.mxu0 %v2919
    %v3010 = vpop.f32.mrf.mxu0
    %v3011 = vadd.f32 0.0, %v3010
    %3012 = vmatmul.f32.gmra.mxu0 %v2922
    %v3013 = vpop.f32.mrf.mxu0
    %v3014 = vadd.f32 0.0, %v3013
    %3015 = vmatmul.f32.gmra.mxu0 %v2925
    %v3016 = vpop.f32.mrf.mxu0
    %v3017 = vadd.f32 0.0, %v3016
    %3018 = vmatmul.f32.gmra.mxu0 %v2928
    %v3019 = vpop.f32.mrf.mxu0
    %v3020 = vadd.f32 0.0, %v3019
    %3021 = vmatmul.f32.gmra.mxu0 %v2931
    %v3022 = vpop.f32.mrf.mxu0
    %v3023 = vadd.f32 0.0, %v3022
    %3024 = vmatmul.f32.gmra.mxu0 %v2934
    %v3025 = vpop.f32.mrf.mxu0
    %v3026 = vadd.f32 0.0, %v3025
    %3027 = vmatmul.f32.gmra.mxu0 %v2937
    %v3028 = vpop.f32.mrf.mxu0
    %v3029 = vadd.f32 0.0, %v3028
    %3030 = vmatmul.f32.gmra.mxu0 %v2940
    %v3031 = vpop.f32.mrf.mxu0
    %v3032 = vadd.f32 0.0, %v3031
    %3033 = vmatmul.f32.gmra.mxu0 %v2943
    %v3034 = vpop.f32.mrf.mxu0
    %v3035 = vadd.f32 0.0, %v3034
    %3036 = vmatmul.f32.gmra.mxu0 %v2946
    %v3037 = vpop.f32.mrf.mxu0
    %v3038 = vadd.f32 0.0, %v3037
    %3039 = vmatmul.f32.gmra.mxu0 %v2949
    %v3040 = vpop.f32.mrf.mxu0
    %v3041 = vadd.f32 0.0, %v3040
    %3042 = vmatmul.f32.gmra.mxu0 %v2952
    %v3043 = vpop.f32.mrf.mxu0
    %v3044 = vadd.f32 0.0, %v3043
    %3045 = vmatmul.f32.gmra.mxu0 %v2955
    %v3046 = vpop.f32.mrf.mxu0
    %v3047 = vadd.f32 0.0, %v3046
    %3048 = vmatmul.f32.gmra.mxu0 %v2958
    %v3049 = vpop.f32.mrf.mxu0
    %v3050 = vadd.f32 0.0, %v3049
    %3051 = vmatmul.f32.gmra.mxu0 %v2961
    %v3052 = vpop.f32.mrf.mxu0
    %v3053 = vadd.f32 0.0, %v3052
    %3054 = vmatmul.f32.gmra.mxu0 %v2964
    %v3055 = vpop.f32.mrf.mxu0
    %v3056 = vadd.f32 0.0, %v3055
    %3057 = vmatmul.f32.gmra.mxu0 %v2967
    %v3058 = vpop.f32.mrf.mxu0
    %v3059 = vadd.f32 0.0, %v3058
    %3060 = vmatmul.f32.gmra.mxu0 %v2970
    %v3061 = vpop.f32.mrf.mxu0
    %v3062 = vadd.f32 0.0, %v3061
    %3063 = vdwg.mxu0
    %v3065 = vsel %vm462, %v2838, 0
    %v3068 = vsel %vm462, %v2839, 0
    %v3071 = vsel %vm462, %v2840, 0
    %v3074 = vsel %vm462, %v2841, 0
    %v3077 = vsel %vm462, %v2842, 0
    %v3080 = vsel %vm462, %v2843, 0
    %v3083 = vsel %vm462, %v2844, 0
    %v3086 = vsel %vm462, %v2845, 0
    %v3089 = vsel %vm462, %v2846, 0
    %v3092 = vsel %vm462, %v2847, 0
    %v3095 = vsel %vm462, %v2848, 0
    %v3098 = vsel %vm462, %v2849, 0
    %v3101 = vsel %vm462, %v2850, 0
    %v3104 = vsel %vm462, %v2851, 0
    %v3107 = vsel %vm462, %v2852, 0
    %v3110 = vsel %vm462, %v2853, 0
    %v3113 = vsel %vm462, %v2854, 0
    %v3116 = vsel %vm462, %v2855, 0
    %v3119 = vsel %vm462, %v2856, 0
    %v3122 = vsel %vm462, %v2857, 0
    %v3125 = vsel %vm462, %v2858, 0
    %v3128 = vsel %vm462, %v2859, 0
    %v3131 = vsel %vm462, %v2860, 0
    %v3134 = vsel %vm462, %v2861, 0
    %v3137 = vsel %vm462, %v2862, 0
    %3139 = vmatpush.msra.mxu0 0.0
    %3140 = vmatpush.msra.mxu0 0.0
    %3141 = vmatpush.msra.mxu0 0.0
    %3142 = vmatpush.msra.mxu0 0.0
    %3143 = vmatpush.msra.mxu0 0.0
    %3144 = vmatpush.msra.mxu0 0.0
    %3145 = vmatpush.msra.mxu0 0.0
    %3146 = vmatpush.msra.mxu0 0.0
    %3147 = vmatpush.msra.mxu0 0.0
    %3148 = vmatpush.msra.mxu0 0.0
    %3149 = vmatpush.msra.mxu0 0.0
    %3150 = vmatpush.msra.mxu0 0.0
    %3151 = vmatpush.msra.mxu0 %v2866
    %3152 = vmatpush.msra.mxu0 %v2865
    %3153 = vmatpush.msra.mxu0 %v2864
    %3154 = vmatpush.msra.mxu0 %v2863
    %3155 = vmatmul.f32.gmra.mxu0 %v3065
    %v3156 = vpop.f32.mrf.mxu0
    %v3157 = vadd.f32 %v2990, %v3156
    %3158 = vmatmul.f32.gmra.mxu0 %v3068
    %v3159 = vpop.f32.mrf.mxu0
    %v3160 = vadd.f32 %v2993, %v3159
    %3161 = vmatmul.f32.gmra.mxu0 %v3071
    %v3162 = vpop.f32.mrf.mxu0
    %v3163 = vadd.f32 %v2996, %v3162
    %3164 = vmatmul.f32.gmra.mxu0 %v3074
    %v3165 = vpop.f32.mrf.mxu0
    %v3166 = vadd.f32 %v2999, %v3165
    %3167 = vmatmul.f32.gmra.mxu0 %v3077
    %v3168 = vpop.f32.mrf.mxu0
    %v3169 = vadd.f32 %v3002, %v3168
    %3170 = vmatmul.f32.gmra.mxu0 %v3080
    %v3171 = vpop.f32.mrf.mxu0
    %v3172 = vadd.f32 %v3005, %v3171
    %3173 = vmatmul.f32.gmra.mxu0 %v3083
    %v3174 = vpop.f32.mrf.mxu0
    %v3175 = vadd.f32 %v3008, %v3174
    %3176 = vmatmul.f32.gmra.mxu0 %v3086
    %v3177 = vpop.f32.mrf.mxu0
    %v3178 = vadd.f32 %v3011, %v3177
    %3179 = vmatmul.f32.gmra.mxu0 %v3089
    %v3180 = vpop.f32.mrf.mxu0
    %v3181 = vadd.f32 %v3014, %v3180
    %3182 = vmatmul.f32.gmra.mxu0 %v3092
    %v3183 = vpop.f32.mrf.mxu0
    %v3184 = vadd.f32 %v3017, %v3183
    %3185 = vmatmul.f32.gmra.mxu0 %v3095
    %v3186 = vpop.f32.mrf.mxu0
    %v3187 = vadd.f32 %v3020, %v3186
    %3188 = vmatmul.f32.gmra.mxu0 %v3098
    %v3189 = vpop.f32.mrf.mxu0
    %v3190 = vadd.f32 %v3023, %v3189
    %3191 = vmatmul.f32.gmra.mxu0 %v3101
    %v3192 = vpop.f32.mrf.mxu0
    %v3193 = vadd.f32 %v3026, %v3192
    %3194 = vmatmul.f32.gmra.mxu0 %v3104
    %v3195 = vpop.f32.mrf.mxu0
    %v3196 = vadd.f32 %v3029, %v3195
    %3197 = vmatmul.f32.gmra.mxu0 %v3107
    %v3198 = vpop.f32.mrf.mxu0
    %v3199 = vadd.f32 %v3032, %v3198
    %3200 = vmatmul.f32.gmra.mxu0 %v3110
    %v3201 = vpop.f32.mrf.mxu0
    %v3202 = vadd.f32 %v3035, %v3201
    %3203 = vmatmul.f32.gmra.mxu0 %v3113
    %v3204 = vpop.f32.mrf.mxu0
    %v3205 = vadd.f32 %v3038, %v3204
    %3206 = vmatmul.f32.gmra.mxu0 %v3116
    %v3207 = vpop.f32.mrf.mxu0
    %v3208 = vadd.f32 %v3041, %v3207
    %3209 = vmatmul.f32.gmra.mxu0 %v3119
    %v3210 = vpop.f32.mrf.mxu0
    %v3211 = vadd.f32 %v3044, %v3210
    %3212 = vmatmul.f32.gmra.mxu0 %v3122
    %v3213 = vpop.f32.mrf.mxu0
    %v3214 = vadd.f32 %v3047, %v3213
    %3215 = vmatmul.f32.gmra.mxu0 %v3125
    %v3216 = vpop.f32.mrf.mxu0
    %v3217 = vadd.f32 %v3050, %v3216
    %3218 = vmatmul.f32.gmra.mxu0 %v3128
    %v3219 = vpop.f32.mrf.mxu0
    %v3220 = vadd.f32 %v3053, %v3219
    %3221 = vmatmul.f32.gmra.mxu0 %v3131
    %v3222 = vpop.f32.mrf.mxu0
    %v3223 = vadd.f32 %v3056, %v3222
    %3224 = vmatmul.f32.gmra.mxu0 %v3134
    %v3225 = vpop.f32.mrf.mxu0
    %v3226 = vadd.f32 %v3059, %v3225
    %3227 = vmatmul.f32.gmra.mxu0 %v3137
    %v3228 = vpop.f32.mrf.mxu0
    %v3229 = vadd.f32 %v3062, %v3228
    %3230 = vdwg.mxu0
    %v3231 = vld [vmem:[#allocation2 + $0x6] sm:$0xff]
    %v3232 = vld [vmem:[#allocation2 + $0xe] sm:$0xff]
    %v3233 = vld [vmem:[#allocation2 + $0x16] sm:$0xff]
    %v3234 = vld [vmem:[#allocation2 + $0x1e] sm:$0xff]
    %v3235 = vld [vmem:[#allocation2 + $0x26] sm:$0xff]
    %v3236 = vld [vmem:[#allocation2 + $0x2e] sm:$0xff]
    %v3237 = vld [vmem:[#allocation2 + $0x36] sm:$0xff]
    %v3238 = vld [vmem:[#allocation2 + $0x3e] sm:$0xff]
    %v3239 = vld [vmem:[#allocation2 + $0x46] sm:$0xff]
    %v3240 = vld [vmem:[#allocation2 + $0x4e] sm:$0xff]
    %v3241 = vld [vmem:[#allocation2 + $0x56] sm:$0xff]
    %v3242 = vld [vmem:[#allocation2 + $0x5e] sm:$0xff]
    %v3243 = vld [vmem:[#allocation2 + $0x66] sm:$0xff]
    %v3244 = vld [vmem:[#allocation2 + $0x6e] sm:$0xff]
    %v3245 = vld [vmem:[#allocation2 + $0x76] sm:$0xff]
    %v3246 = vld [vmem:[#allocation2 + $0x7e] sm:$0xff]
    %v3247 = vld [vmem:[#allocation2 + $0x86] sm:$0xff]
    %v3248 = vld [vmem:[#allocation2 + $0x8e] sm:$0xff]
    %v3249 = vld [vmem:[#allocation2 + $0x96] sm:$0xff]
    %v3250 = vld [vmem:[#allocation2 + $0x9e] sm:$0xff]
    %v3251 = vld [vmem:[#allocation2 + $0xa6] sm:$0xff]
    %v3252 = vld [vmem:[#allocation2 + $0xae] sm:$0xff]
    %v3253 = vld [vmem:[#allocation2 + $0xb6] sm:$0xff]
    %v3254 = vld [vmem:[#allocation2 + $0xbe] sm:$0xff]
    %v3255 = vld [vmem:[#allocation2 + $0xc6] sm:$0xff]
    %s3256 = scalar_lea.vmem %s3, 64
    %v3257 = vld [vmem:[%s3256] sm:$0xff]
    %v3258 = vld [vmem:[%s3256 + $0x8] sm:$0xff]
    %v3259 = vld [vmem:[%s3256 + $0x10] sm:$0xff]
    %v3260 = vld [vmem:[%s3256 + $0x18] sm:$0xff]
    %v3262 = vsel %vm462, %v3231, 0
    %v3265 = vsel %vm462, %v3232, 0
    %v3268 = vsel %vm462, %v3233, 0
    %v3271 = vsel %vm462, %v3234, 0
    %v3274 = vsel %vm462, %v3235, 0
    %v3277 = vsel %vm462, %v3236, 0
    %v3280 = vsel %vm462, %v3237, 0
    %v3283 = vsel %vm462, %v3238, 0
    %v3286 = vsel %vm462, %v3239, 0
    %v3289 = vsel %vm462, %v3240, 0
    %v3292 = vsel %vm462, %v3241, 0
    %v3295 = vsel %vm462, %v3242, 0
    %v3298 = vsel %vm462, %v3243, 0
    %v3301 = vsel %vm462, %v3244, 0
    %v3304 = vsel %vm462, %v3245, 0
    %v3307 = vsel %vm462, %v3246, 0
    %v3310 = vsel %vm462, %v3247, 0
    %v3313 = vsel %vm462, %v3248, 0
    %v3316 = vsel %vm462, %v3249, 0
    %v3319 = vsel %vm462, %v3250, 0
    %v3322 = vsel %vm462, %v3251, 0
    %v3325 = vsel %vm462, %v3252, 0
    %v3328 = vsel %vm462, %v3253, 0
    %v3331 = vsel %vm462, %v3254, 0
    %v3334 = vsel %vm462, %v3255, 0
    %3336 = vmatpush.msra.mxu0 0.0
    %3337 = vmatpush.msra.mxu0 0.0
    %3338 = vmatpush.msra.mxu0 0.0
    %3339 = vmatpush.msra.mxu0 0.0
    %3340 = vmatpush.msra.mxu0 0.0
    %3341 = vmatpush.msra.mxu0 0.0
    %3342 = vmatpush.msra.mxu0 0.0
    %3343 = vmatpush.msra.mxu0 0.0
    %3344 = vmatpush.msra.mxu0 0.0
    %3345 = vmatpush.msra.mxu0 0.0
    %3346 = vmatpush.msra.mxu0 0.0
    %3347 = vmatpush.msra.mxu0 0.0
    %3348 = vmatpush.msra.mxu0 %v3260
    %3349 = vmatpush.msra.mxu0 %v3259
    %3350 = vmatpush.msra.mxu0 %v3258
    %3351 = vmatpush.msra.mxu0 %v3257
    %3352 = vmatmul.f32.gmra.mxu0 %v3262
    %v3353 = vpop.f32.mrf.mxu0
    %v3354 = vadd.f32 0.0, %v3353
    %3355 = vmatmul.f32.gmra.mxu0 %v3265
    %v3356 = vpop.f32.mrf.mxu0
    %v3357 = vadd.f32 0.0, %v3356
    %3358 = vmatmul.f32.gmra.mxu0 %v3268
    %v3359 = vpop.f32.mrf.mxu0
    %v3360 = vadd.f32 0.0, %v3359
    %3361 = vmatmul.f32.gmra.mxu0 %v3271
    %v3362 = vpop.f32.mrf.mxu0
    %v3363 = vadd.f32 0.0, %v3362
    %3364 = vmatmul.f32.gmra.mxu0 %v3274
    %v3365 = vpop.f32.mrf.mxu0
    %v3366 = vadd.f32 0.0, %v3365
    %3367 = vmatmul.f32.gmra.mxu0 %v3277
    %v3368 = vpop.f32.mrf.mxu0
    %v3369 = vadd.f32 0.0, %v3368
    %3370 = vmatmul.f32.gmra.mxu0 %v3280
    %v3371 = vpop.f32.mrf.mxu0
    %v3372 = vadd.f32 0.0, %v3371
    %3373 = vmatmul.f32.gmra.mxu0 %v3283
    %v3374 = vpop.f32.mrf.mxu0
    %v3375 = vadd.f32 0.0, %v3374
    %3376 = vmatmul.f32.gmra.mxu0 %v3286
    %v3377 = vpop.f32.mrf.mxu0
    %v3378 = vadd.f32 0.0, %v3377
    %3379 = vmatmul.f32.gmra.mxu0 %v3289
    %v3380 = vpop.f32.mrf.mxu0
    %v3381 = vadd.f32 0.0, %v3380
    %3382 = vmatmul.f32.gmra.mxu0 %v3292
    %v3383 = vpop.f32.mrf.mxu0
    %v3384 = vadd.f32 0.0, %v3383
    %3385 = vmatmul.f32.gmra.mxu0 %v3295
    %v3386 = vpop.f32.mrf.mxu0
    %v3387 = vadd.f32 0.0, %v3386
    %3388 = vmatmul.f32.gmra.mxu0 %v3298
    %v3389 = vpop.f32.mrf.mxu0
    %v3390 = vadd.f32 0.0, %v3389
    %3391 = vmatmul.f32.gmra.mxu0 %v3301
    %v3392 = vpop.f32.mrf.mxu0
    %v3393 = vadd.f32 0.0, %v3392
    %3394 = vmatmul.f32.gmra.mxu0 %v3304
    %v3395 = vpop.f32.mrf.mxu0
    %v3396 = vadd.f32 0.0, %v3395
    %3397 = vmatmul.f32.gmra.mxu0 %v3307
    %v3398 = vpop.f32.mrf.mxu0
    %v3399 = vadd.f32 0.0, %v3398
    %3400 = vmatmul.f32.gmra.mxu0 %v3310
    %v3401 = vpop.f32.mrf.mxu0
    %v3402 = vadd.f32 0.0, %v3401
    %3403 = vmatmul.f32.gmra.mxu0 %v3313
    %v3404 = vpop.f32.mrf.mxu0
    %v3405 = vadd.f32 0.0, %v3404
    %3406 = vmatmul.f32.gmra.mxu0 %v3316
    %v3407 = vpop.f32.mrf.mxu0
    %v3408 = vadd.f32 0.0, %v3407
    %3409 = vmatmul.f32.gmra.mxu0 %v3319
    %v3410 = vpop.f32.mrf.mxu0
    %v3411 = vadd.f32 0.0, %v3410
    %3412 = vmatmul.f32.gmra.mxu0 %v3322
    %v3413 = vpop.f32.mrf.mxu0
    %v3414 = vadd.f32 0.0, %v3413
    %3415 = vmatmul.f32.gmra.mxu0 %v3325
    %v3416 = vpop.f32.mrf.mxu0
    %v3417 = vadd.f32 0.0, %v3416
    %3418 = vmatmul.f32.gmra.mxu0 %v3328
    %v3419 = vpop.f32.mrf.mxu0
    %v3420 = vadd.f32 0.0, %v3419
    %3421 = vmatmul.f32.gmra.mxu0 %v3331
    %v3422 = vpop.f32.mrf.mxu0
    %v3423 = vadd.f32 0.0, %v3422
    %3424 = vmatmul.f32.gmra.mxu0 %v3334
    %v3425 = vpop.f32.mrf.mxu0
    %v3426 = vadd.f32 0.0, %v3425
    %3427 = vdwg.mxu0
    %v3428 = vadd.f32 %v3157, %v3354
    %v3429 = vadd.f32 %v3160, %v3357
    %v3430 = vadd.f32 %v3163, %v3360
    %v3431 = vadd.f32 %v3166, %v3363
    %v3432 = vadd.f32 %v3169, %v3366
    %v3433 = vadd.f32 %v3172, %v3369
    %v3434 = vadd.f32 %v3175, %v3372
    %v3435 = vadd.f32 %v3178, %v3375
    %v3436 = vadd.f32 %v3181, %v3378
    %v3437 = vadd.f32 %v3184, %v3381
    %v3438 = vadd.f32 %v3187, %v3384
    %v3439 = vadd.f32 %v3190, %v3387
    %v3440 = vadd.f32 %v3193, %v3390
    %v3441 = vadd.f32 %v3196, %v3393
    %v3442 = vadd.f32 %v3199, %v3396
    %v3443 = vadd.f32 %v3202, %v3399
    %v3444 = vadd.f32 %v3205, %v3402
    %v3445 = vadd.f32 %v3208, %v3405
    %v3446 = vadd.f32 %v3211, %v3408
    %v3447 = vadd.f32 %v3214, %v3411
    %v3448 = vadd.f32 %v3217, %v3414
    %v3449 = vadd.f32 %v3220, %v3417
    %v3450 = vadd.f32 %v3223, %v3420
    %v3451 = vadd.f32 %v3226, %v3423
    %v3452 = vadd.f32 %v3229, %v3426
    %v3453 = vld [vmem:[#allocation2 + $0x16] sm:$0xff]
    %v3454 = vld [vmem:[#allocation2 + $0x1e] sm:$0xff]
    %v3455 = vld [vmem:[#allocation2 + $0x26] sm:$0xff]
    %v3456 = vld [vmem:[#allocation2 + $0x2e] sm:$0xff]
    %v3457 = vld [vmem:[#allocation2 + $0x36] sm:$0xff]
    %v3458 = vld [vmem:[#allocation2 + $0x3e] sm:$0xff]
    %v3459 = vld [vmem:[#allocation2 + $0x46] sm:$0xff]
    %v3460 = vld [vmem:[#allocation2 + $0x4e] sm:$0xff]
    %v3461 = vld [vmem:[#allocation2 + $0x56] sm:$0xff]
    %v3462 = vld [vmem:[#allocation2 + $0x5e] sm:$0xff]
    %v3463 = vld [vmem:[#allocation2 + $0x66] sm:$0xff]
    %v3464 = vld [vmem:[#allocation2 + $0x6e] sm:$0xff]
    %v3465 = vld [vmem:[#allocation2 + $0x76] sm:$0xff]
    %v3466 = vld [vmem:[#allocation2 + $0x7e] sm:$0xff]
    %v3467 = vld [vmem:[#allocation2 + $0x86] sm:$0xff]
    %v3468 = vld [vmem:[#allocation2 + $0x8e] sm:$0xff]
    %v3469 = vld [vmem:[#allocation2 + $0x96] sm:$0xff]
    %v3470 = vld [vmem:[#allocation2 + $0x9e] sm:$0xff]
    %v3471 = vld [vmem:[#allocation2 + $0xa6] sm:$0xff]
    %v3472 = vld [vmem:[#allocation2 + $0xae] sm:$0xff]
    %v3473 = vld [vmem:[#allocation2 + $0xb6] sm:$0xff]
    %v3474 = vld [vmem:[#allocation2 + $0xbe] sm:$0xff]
    %v3475 = vld [vmem:[#allocation2 + $0xc6] sm:$0xff]
    %v3476 = vld [vmem:[#allocation2 + $0xce] sm:$0xff]
    %v3477 = vld [vmem:[#allocation2 + $0xd6] sm:$0xff]
    %s3478 = scalar_lea.vmem %s3, 96
    %v3479 = vld [vmem:[%s3478] sm:$0xff]
    %v3480 = vld [vmem:[%s3478 + $0x8] sm:$0xff]
    %v3481 = vld [vmem:[%s3478 + $0x10] sm:$0xff]
    %v3482 = vld [vmem:[%s3478 + $0x18] sm:$0xff]
    %v3484 = vsel %vm462, %v3453, 0
    %v3487 = vsel %vm462, %v3454, 0
    %v3490 = vsel %vm462, %v3455, 0
    %v3493 = vsel %vm462, %v3456, 0
    %v3496 = vsel %vm462, %v3457, 0
    %v3499 = vsel %vm462, %v3458, 0
    %v3502 = vsel %vm462, %v3459, 0
    %v3505 = vsel %vm462, %v3460, 0
    %v3508 = vsel %vm462, %v3461, 0
    %v3511 = vsel %vm462, %v3462, 0
    %v3514 = vsel %vm462, %v3463, 0
    %v3517 = vsel %vm462, %v3464, 0
    %v3520 = vsel %vm462, %v3465, 0
    %v3523 = vsel %vm462, %v3466, 0
    %v3526 = vsel %vm462, %v3467, 0
    %v3529 = vsel %vm462, %v3468, 0
    %v3532 = vsel %vm462, %v3469, 0
    %v3535 = vsel %vm462, %v3470, 0
    %v3538 = vsel %vm462, %v3471, 0
    %v3541 = vsel %vm462, %v3472, 0
    %v3544 = vsel %vm462, %v3473, 0
    %v3547 = vsel %vm462, %v3474, 0
    %v3550 = vsel %vm462, %v3475, 0
    %v3553 = vsel %vm462, %v3476, 0
    %v3556 = vsel %vm462, %v3477, 0
    %3558 = vmatpush.msra.mxu0 0.0
    %3559 = vmatpush.msra.mxu0 0.0
    %3560 = vmatpush.msra.mxu0 0.0
    %3561 = vmatpush.msra.mxu0 0.0
    %3562 = vmatpush.msra.mxu0 0.0
    %3563 = vmatpush.msra.mxu0 0.0
    %3564 = vmatpush.msra.mxu0 0.0
    %3565 = vmatpush.msra.mxu0 0.0
    %3566 = vmatpush.msra.mxu0 0.0
    %3567 = vmatpush.msra.mxu0 0.0
    %3568 = vmatpush.msra.mxu0 0.0
    %3569 = vmatpush.msra.mxu0 0.0
    %3570 = vmatpush.msra.mxu0 %v3482
    %3571 = vmatpush.msra.mxu0 %v3481
    %3572 = vmatpush.msra.mxu0 %v3480
    %3573 = vmatpush.msra.mxu0 %v3479
    %3574 = vmatmul.f32.gmra.mxu0 %v3484
    %v3575 = vpop.f32.mrf.mxu0
    %v3576 = vadd.f32 0.0, %v3575
    %3577 = vmatmul.f32.gmra.mxu0 %v3487
    %v3578 = vpop.f32.mrf.mxu0
    %v3579 = vadd.f32 0.0, %v3578
    %3580 = vmatmul.f32.gmra.mxu0 %v3490
    %v3581 = vpop.f32.mrf.mxu0
    %v3582 = vadd.f32 0.0, %v3581
    %3583 = vmatmul.f32.gmra.mxu0 %v3493
    %v3584 = vpop.f32.mrf.mxu0
    %v3585 = vadd.f32 0.0, %v3584
    %3586 = vmatmul.f32.gmra.mxu0 %v3496
    %v3587 = vpop.f32.mrf.mxu0
    %v3588 = vadd.f32 0.0, %v3587
    %3589 = vmatmul.f32.gmra.mxu0 %v3499
    %v3590 = vpop.f32.mrf.mxu0
    %v3591 = vadd.f32 0.0, %v3590
    %3592 = vmatmul.f32.gmra.mxu0 %v3502
    %v3593 = vpop.f32.mrf.mxu0
    %v3594 = vadd.f32 0.0, %v3593
    %3595 = vmatmul.f32.gmra.mxu0 %v3505
    %v3596 = vpop.f32.mrf.mxu0
    %v3597 = vadd.f32 0.0, %v3596
    %3598 = vmatmul.f32.gmra.mxu0 %v3508
    %v3599 = vpop.f32.mrf.mxu0
    %v3600 = vadd.f32 0.0, %v3599
    %3601 = vmatmul.f32.gmra.mxu0 %v3511
    %v3602 = vpop.f32.mrf.mxu0
    %v3603 = vadd.f32 0.0, %v3602
    %3604 = vmatmul.f32.gmra.mxu0 %v3514
    %v3605 = vpop.f32.mrf.mxu0
    %v3606 = vadd.f32 0.0, %v3605
    %3607 = vmatmul.f32.gmra.mxu0 %v3517
    %v3608 = vpop.f32.mrf.mxu0
    %v3609 = vadd.f32 0.0, %v3608
    %3610 = vmatmul.f32.gmra.mxu0 %v3520
    %v3611 = vpop.f32.mrf.mxu0
    %v3612 = vadd.f32 0.0, %v3611
    %3613 = vmatmul.f32.gmra.mxu0 %v3523
    %v3614 = vpop.f32.mrf.mxu0
    %v3615 = vadd.f32 0.0, %v3614
    %3616 = vmatmul.f32.gmra.mxu0 %v3526
    %v3617 = vpop.f32.mrf.mxu0
    %v3618 = vadd.f32 0.0, %v3617
    %3619 = vmatmul.f32.gmra.mxu0 %v3529
    %v3620 = vpop.f32.mrf.mxu0
    %v3621 = vadd.f32 0.0, %v3620
    %3622 = vmatmul.f32.gmra.mxu0 %v3532
    %v3623 = vpop.f32.mrf.mxu0
    %v3624 = vadd.f32 0.0, %v3623
    %3625 = vmatmul.f32.gmra.mxu0 %v3535
    %v3626 = vpop.f32.mrf.mxu0
    %v3627 = vadd.f32 0.0, %v3626
    %3628 = vmatmul.f32.gmra.mxu0 %v3538
    %v3629 = vpop.f32.mrf.mxu0
    %v3630 = vadd.f32 0.0, %v3629
    %3631 = vmatmul.f32.gmra.mxu0 %v3541
    %v3632 = vpop.f32.mrf.mxu0
    %v3633 = vadd.f32 0.0, %v3632
    %3634 = vmatmul.f32.gmra.mxu0 %v3544
    %v3635 = vpop.f32.mrf.mxu0
    %v3636 = vadd.f32 0.0, %v3635
    %3637 = vmatmul.f32.gmra.mxu0 %v3547
    %v3638 = vpop.f32.mrf.mxu0
    %v3639 = vadd.f32 0.0, %v3638
    %3640 = vmatmul.f32.gmra.mxu0 %v3550
    %v3641 = vpop.f32.mrf.mxu0
    %v3642 = vadd.f32 0.0, %v3641
    %3643 = vmatmul.f32.gmra.mxu0 %v3553
    %v3644 = vpop.f32.mrf.mxu0
    %v3645 = vadd.f32 0.0, %v3644
    %3646 = vmatmul.f32.gmra.mxu0 %v3556
    %v3647 = vpop.f32.mrf.mxu0
    %v3648 = vadd.f32 0.0, %v3647
    %3649 = vdwg.mxu0
    %v3650 = vadd.f32 %v3428, %v3576
    %v3651 = vadd.f32 %v3429, %v3579
    %v3652 = vadd.f32 %v3430, %v3582
    %v3653 = vadd.f32 %v3431, %v3585
    %v3654 = vadd.f32 %v3432, %v3588
    %v3655 = vadd.f32 %v3433, %v3591
    %v3656 = vadd.f32 %v3434, %v3594
    %v3657 = vadd.f32 %v3435, %v3597
    %v3658 = vadd.f32 %v3436, %v3600
    %v3659 = vadd.f32 %v3437, %v3603
    %v3660 = vadd.f32 %v3438, %v3606
    %v3661 = vadd.f32 %v3439, %v3609
    %v3662 = vadd.f32 %v3440, %v3612
    %v3663 = vadd.f32 %v3441, %v3615
    %v3664 = vadd.f32 %v3442, %v3618
    %v3665 = vadd.f32 %v3443, %v3621
    %v3666 = vadd.f32 %v3444, %v3624
    %v3667 = vadd.f32 %v3445, %v3627
    %v3668 = vadd.f32 %v3446, %v3630
    %v3669 = vadd.f32 %v3447, %v3633
    %v3670 = vadd.f32 %v3448, %v3636
    %v3671 = vadd.f32 %v3449, %v3639
    %v3672 = vadd.f32 %v3450, %v3642
    %v3673 = vadd.f32 %v3451, %v3645
    %v3674 = vadd.f32 %v3452, %v3648
    %v3675 = vld [vmem:[#allocation2 + $0x18] sm:$0xff]
    %v3676 = vld [vmem:[#allocation2 + $0x20] sm:$0xff]
    %v3677 = vld [vmem:[#allocation2 + $0x28] sm:$0xff]
    %v3678 = vld [vmem:[#allocation2 + $0x30] sm:$0xff]
    %v3679 = vld [vmem:[#allocation2 + $0x38] sm:$0xff]
    %v3680 = vld [vmem:[#allocation2 + $0x40] sm:$0xff]
    %v3681 = vld [vmem:[#allocation2 + $0x48] sm:$0xff]
    %v3682 = vld [vmem:[#allocation2 + $0x50] sm:$0xff]
    %v3683 = vld [vmem:[#allocation2 + $0x58] sm:$0xff]
    %v3684 = vld [vmem:[#allocation2 + $0x60] sm:$0xff]
    %v3685 = vld [vmem:[#allocation2 + $0x68] sm:$0xff]
    %v3686 = vld [vmem:[#allocation2 + $0x70] sm:$0xff]
    %v3687 = vld [vmem:[#allocation2 + $0x78] sm:$0xff]
    %v3688 = vld [vmem:[#allocation2 + $0x80] sm:$0xff]
    %v3689 = vld [vmem:[#allocation2 + $0x88] sm:$0xff]
    %v3690 = vld [vmem:[#allocation2 + $0x90] sm:$0xff]
    %v3691 = vld [vmem:[#allocation2 + $0x98] sm:$0xff]
    %v3692 = vld [vmem:[#allocation2 + $0xa0] sm:$0xff]
    %v3693 = vld [vmem:[#allocation2 + $0xa8] sm:$0xff]
    %v3694 = vld [vmem:[#allocation2 + $0xb0] sm:$0xff]
    %v3695 = vld [vmem:[#allocation2 + $0xb8] sm:$0xff]
    %v3696 = vld [vmem:[#allocation2 + $0xc0] sm:$0xff]
    %v3697 = vld [vmem:[#allocation2 + $0xc8] sm:$0xff]
    %v3698 = vld [vmem:[#allocation2 + $0xd0] sm:$0xff]
    %v3699 = vld [vmem:[#allocation2 + $0xd8] sm:$0xff]
    %s3700 = scalar_lea.vmem %s3, 128
    %v3701 = vld [vmem:[%s3700] sm:$0xff]
    %v3702 = vld [vmem:[%s3700 + $0x8] sm:$0xff]
    %v3703 = vld [vmem:[%s3700 + $0x10] sm:$0xff]
    %v3704 = vld [vmem:[%s3700 + $0x18] sm:$0xff]
    %v3706 = vsel %vm462, %v3675, 0
    %v3709 = vsel %vm462, %v3676, 0
    %v3712 = vsel %vm462, %v3677, 0
    %v3715 = vsel %vm462, %v3678, 0
    %v3718 = vsel %vm462, %v3679, 0
    %v3721 = vsel %vm462, %v3680, 0
    %v3724 = vsel %vm462, %v3681, 0
    %v3727 = vsel %vm462, %v3682, 0
    %v3730 = vsel %vm462, %v3683, 0
    %v3733 = vsel %vm462, %v3684, 0
    %v3736 = vsel %vm462, %v3685, 0
    %v3739 = vsel %vm462, %v3686, 0
    %v3742 = vsel %vm462, %v3687, 0
    %v3745 = vsel %vm462, %v3688, 0
    %v3748 = vsel %vm462, %v3689, 0
    %v3751 = vsel %vm462, %v3690, 0
    %v3754 = vsel %vm462, %v3691, 0
    %v3757 = vsel %vm462, %v3692, 0
    %v3760 = vsel %vm462, %v3693, 0
    %v3763 = vsel %vm462, %v3694, 0
    %v3766 = vsel %vm462, %v3695, 0
    %v3769 = vsel %vm462, %v3696, 0
    %v3772 = vsel %vm462, %v3697, 0
    %v3775 = vsel %vm462, %v3698, 0
    %v3778 = vsel %vm462, %v3699, 0
    %3780 = vmatpush.msra.mxu0 0.0
    %3781 = vmatpush.msra.mxu0 0.0
    %3782 = vmatpush.msra.mxu0 0.0
    %3783 = vmatpush.msra.mxu0 0.0
    %3784 = vmatpush.msra.mxu0 0.0
    %3785 = vmatpush.msra.mxu0 0.0
    %3786 = vmatpush.msra.mxu0 0.0
    %3787 = vmatpush.msra.mxu0 0.0
    %3788 = vmatpush.msra.mxu0 0.0
    %3789 = vmatpush.msra.mxu0 0.0
    %3790 = vmatpush.msra.mxu0 0.0
    %3791 = vmatpush.msra.mxu0 0.0
    %3792 = vmatpush.msra.mxu0 %v3704
    %3793 = vmatpush.msra.mxu0 %v3703
    %3794 = vmatpush.msra.mxu0 %v3702
    %3795 = vmatpush.msra.mxu0 %v3701
    %3796 = vmatmul.f32.gmra.mxu0 %v3706
    %v3797 = vpop.f32.mrf.mxu0
    %v3798 = vadd.f32 0.0, %v3797
    %3799 = vmatmul.f32.gmra.mxu0 %v3709
    %v3800 = vpop.f32.mrf.mxu0
    %v3801 = vadd.f32 0.0, %v3800
    %3802 = vmatmul.f32.gmra.mxu0 %v3712
    %v3803 = vpop.f32.mrf.mxu0
    %v3804 = vadd.f32 0.0, %v3803
    %3805 = vmatmul.f32.gmra.mxu0 %v3715
    %v3806 = vpop.f32.mrf.mxu0
    %v3807 = vadd.f32 0.0, %v3806
    %3808 = vmatmul.f32.gmra.mxu0 %v3718
    %v3809 = vpop.f32.mrf.mxu0
    %v3810 = vadd.f32 0.0, %v3809
    %3811 = vmatmul.f32.gmra.mxu0 %v3721
    %v3812 = vpop.f32.mrf.mxu0
    %v3813 = vadd.f32 0.0, %v3812
    %3814 = vmatmul.f32.gmra.mxu0 %v3724
    %v3815 = vpop.f32.mrf.mxu0
    %v3816 = vadd.f32 0.0, %v3815
    %3817 = vmatmul.f32.gmra.mxu0 %v3727
    %v3818 = vpop.f32.mrf.mxu0
    %v3819 = vadd.f32 0.0, %v3818
    %3820 = vmatmul.f32.gmra.mxu0 %v3730
    %v3821 = vpop.f32.mrf.mxu0
    %v3822 = vadd.f32 0.0, %v3821
    %3823 = vmatmul.f32.gmra.mxu0 %v3733
    %v3824 = vpop.f32.mrf.mxu0
    %v3825 = vadd.f32 0.0, %v3824
    %3826 = vmatmul.f32.gmra.mxu0 %v3736
    %v3827 = vpop.f32.mrf.mxu0
    %v3828 = vadd.f32 0.0, %v3827
    %3829 = vmatmul.f32.gmra.mxu0 %v3739
    %v3830 = vpop.f32.mrf.mxu0
    %v3831 = vadd.f32 0.0, %v3830
    %3832 = vmatmul.f32.gmra.mxu0 %v3742
    %v3833 = vpop.f32.mrf.mxu0
    %v3834 = vadd.f32 0.0, %v3833
    %3835 = vmatmul.f32.gmra.mxu0 %v3745
    %v3836 = vpop.f32.mrf.mxu0
    %v3837 = vadd.f32 0.0, %v3836
    %3838 = vmatmul.f32.gmra.mxu0 %v3748
    %v3839 = vpop.f32.mrf.mxu0
    %v3840 = vadd.f32 0.0, %v3839
    %3841 = vmatmul.f32.gmra.mxu0 %v3751
    %v3842 = vpop.f32.mrf.mxu0
    %v3843 = vadd.f32 0.0, %v3842
    %3844 = vmatmul.f32.gmra.mxu0 %v3754
    %v3845 = vpop.f32.mrf.mxu0
    %v3846 = vadd.f32 0.0, %v3845
    %3847 = vmatmul.f32.gmra.mxu0 %v3757
    %v3848 = vpop.f32.mrf.mxu0
    %v3849 = vadd.f32 0.0, %v3848
    %3850 = vmatmul.f32.gmra.mxu0 %v3760
    %v3851 = vpop.f32.mrf.mxu0
    %v3852 = vadd.f32 0.0, %v3851
    %3853 = vmatmul.f32.gmra.mxu0 %v3763
    %v3854 = vpop.f32.mrf.mxu0
    %v3855 = vadd.f32 0.0, %v3854
    %3856 = vmatmul.f32.gmra.mxu0 %v3766
    %v3857 = vpop.f32.mrf.mxu0
    %v3858 = vadd.f32 0.0, %v3857
    %3859 = vmatmul.f32.gmra.mxu0 %v3769
    %v3860 = vpop.f32.mrf.mxu0
    %v3861 = vadd.f32 0.0, %v3860
    %3862 = vmatmul.f32.gmra.mxu0 %v3772
    %v3863 = vpop.f32.mrf.mxu0
    %v3864 = vadd.f32 0.0, %v3863
    %3865 = vmatmul.f32.gmra.mxu0 %v3775
    %v3866 = vpop.f32.mrf.mxu0
    %v3867 = vadd.f32 0.0, %v3866
    %3868 = vmatmul.f32.gmra.mxu0 %v3778
    %v3869 = vpop.f32.mrf.mxu0
    %v3870 = vadd.f32 0.0, %v3869
    %3871 = vdwg.mxu0
    %v3872 = vadd.f32 %v3650, %v3798
    %v3873 = vadd.f32 %v3651, %v3801
    %v3874 = vadd.f32 %v3652, %v3804
    %v3875 = vadd.f32 %v3653, %v3807
    %v3876 = vadd.f32 %v3654, %v3810
    %v3877 = vadd.f32 %v3655, %v3813
    %v3878 = vadd.f32 %v3656, %v3816
    %v3879 = vadd.f32 %v3657, %v3819
    %v3880 = vadd.f32 %v3658, %v3822
    %v3881 = vadd.f32 %v3659, %v3825
    %v3882 = vadd.f32 %v3660, %v3828
    %v3883 = vadd.f32 %v3661, %v3831
    %v3884 = vadd.f32 %v3662, %v3834
    %v3885 = vadd.f32 %v3663, %v3837
    %v3886 = vadd.f32 %v3664, %v3840
    %v3887 = vadd.f32 %v3665, %v3843
    %v3888 = vadd.f32 %v3666, %v3846
    %v3889 = vadd.f32 %v3667, %v3849
    %v3890 = vadd.f32 %v3668, %v3852
    %v3891 = vadd.f32 %v3669, %v3855
    %v3892 = vadd.f32 %v3670, %v3858
    %v3893 = vadd.f32 %v3671, %v3861
    %v3894 = vadd.f32 %v3672, %v3864
    %v3895 = vadd.f32 %v3673, %v3867
    %v3896 = vadd.f32 %v3674, %v3870
    %v3897 = vld [vmem:[#allocation2 + $0x1a] sm:$0xff]
    %v3898 = vld [vmem:[#allocation2 + $0x22] sm:$0xff]
    %v3899 = vld [vmem:[#allocation2 + $0x2a] sm:$0xff]
    %v3900 = vld [vmem:[#allocation2 + $0x32] sm:$0xff]
    %v3901 = vld [vmem:[#allocation2 + $0x3a] sm:$0xff]
    %v3902 = vld [vmem:[#allocation2 + $0x42] sm:$0xff]
    %v3903 = vld [vmem:[#allocation2 + $0x4a] sm:$0xff]
    %v3904 = vld [vmem:[#allocation2 + $0x52] sm:$0xff]
    %v3905 = vld [vmem:[#allocation2 + $0x5a] sm:$0xff]
    %v3906 = vld [vmem:[#allocation2 + $0x62] sm:$0xff]
    %v3907 = vld [vmem:[#allocation2 + $0x6a] sm:$0xff]
    %v3908 = vld [vmem:[#allocation2 + $0x72] sm:$0xff]
    %v3909 = vld [vmem:[#allocation2 + $0x7a] sm:$0xff]
    %v3910 = vld [vmem:[#allocation2 + $0x82] sm:$0xff]
    %v3911 = vld [vmem:[#allocation2 + $0x8a] sm:$0xff]
    %v3912 = vld [vmem:[#allocation2 + $0x92] sm:$0xff]
    %v3913 = vld [vmem:[#allocation2 + $0x9a] sm:$0xff]
    %v3914 = vld [vmem:[#allocation2 + $0xa2] sm:$0xff]
    %v3915 = vld [vmem:[#allocation2 + $0xaa] sm:$0xff]
    %v3916 = vld [vmem:[#allocation2 + $0xb2] sm:$0xff]
    %v3917 = vld [vmem:[#allocation2 + $0xba] sm:$0xff]
    %v3918 = vld [vmem:[#allocation2 + $0xc2] sm:$0xff]
    %v3919 = vld [vmem:[#allocation2 + $0xca] sm:$0xff]
    %v3920 = vld [vmem:[#allocation2 + $0xd2] sm:$0xff]
    %v3921 = vld [vmem:[#allocation2 + $0xda] sm:$0xff]
    %s3922 = scalar_lea.vmem %s3, 160
    %v3923 = vld [vmem:[%s3922] sm:$0xff]
    %v3924 = vld [vmem:[%s3922 + $0x8] sm:$0xff]
    %v3925 = vld [vmem:[%s3922 + $0x10] sm:$0xff]
    %v3926 = vld [vmem:[%s3922 + $0x18] sm:$0xff]
    %v3928 = vsel %vm462, %v3897, 0
    %v3931 = vsel %vm462, %v3898, 0
    %v3934 = vsel %vm462, %v3899, 0
    %v3937 = vsel %vm462, %v3900, 0
    %v3940 = vsel %vm462, %v3901, 0
    %v3943 = vsel %vm462, %v3902, 0
    %v3946 = vsel %vm462, %v3903, 0
    %v3949 = vsel %vm462, %v3904, 0
    %v3952 = vsel %vm462, %v3905, 0
    %v3955 = vsel %vm462, %v3906, 0
    %v3958 = vsel %vm462, %v3907, 0
    %v3961 = vsel %vm462, %v3908, 0
    %v3964 = vsel %vm462, %v3909, 0
    %v3967 = vsel %vm462, %v3910, 0
    %v3970 = vsel %vm462, %v3911, 0
    %v3973 = vsel %vm462, %v3912, 0
    %v3976 = vsel %vm462, %v3913, 0
    %v3979 = vsel %vm462, %v3914, 0
    %v3982 = vsel %vm462, %v3915, 0
    %v3985 = vsel %vm462, %v3916, 0
    %v3988 = vsel %vm462, %v3917, 0
    %v3991 = vsel %vm462, %v3918, 0
    %v3994 = vsel %vm462, %v3919, 0
    %v3997 = vsel %vm462, %v3920, 0
    %v4000 = vsel %vm462, %v3921, 0
    %4002 = vmatpush.msra.mxu0 0.0
    %4003 = vmatpush.msra.mxu0 0.0
    %4004 = vmatpush.msra.mxu0 0.0
    %4005 = vmatpush.msra.mxu0 0.0
    %4006 = vmatpush.msra.mxu0 0.0
    %4007 = vmatpush.msra.mxu0 0.0
    %4008 = vmatpush.msra.mxu0 0.0
    %4009 = vmatpush.msra.mxu0 0.0
    %4010 = vmatpush.msra.mxu0 0.0
    %4011 = vmatpush.msra.mxu0 0.0
    %4012 = vmatpush.msra.mxu0 0.0
    %4013 = vmatpush.msra.mxu0 0.0
    %4014 = vmatpush.msra.mxu0 %v3926
    %4015 = vmatpush.msra.mxu0 %v3925
    %4016 = vmatpush.msra.mxu0 %v3924
    %4017 = vmatpush.msra.mxu0 %v3923
    %4018 = vmatmul.f32.gmra.mxu0 %v3928
    %v4019 = vpop.f32.mrf.mxu0
    %v4020 = vadd.f32 0.0, %v4019
    %4021 = vmatmul.f32.gmra.mxu0 %v3931
    %v4022 = vpop.f32.mrf.mxu0
    %v4023 = vadd.f32 0.0, %v4022
    %4024 = vmatmul.f32.gmra.mxu0 %v3934
    %v4025 = vpop.f32.mrf.mxu0
    %v4026 = vadd.f32 0.0, %v4025
    %4027 = vmatmul.f32.gmra.mxu0 %v3937
    %v4028 = vpop.f32.mrf.mxu0
    %v4029 = vadd.f32 0.0, %v4028
    %4030 = vmatmul.f32.gmra.mxu0 %v3940
    %v4031 = vpop.f32.mrf.mxu0
    %v4032 = vadd.f32 0.0, %v4031
    %4033 = vmatmul.f32.gmra.mxu0 %v3943
    %v4034 = vpop.f32.mrf.mxu0
    %v4035 = vadd.f32 0.0, %v4034
    %4036 = vmatmul.f32.gmra.mxu0 %v3946
    %v4037 = vpop.f32.mrf.mxu0
    %v4038 = vadd.f32 0.0, %v4037
    %4039 = vmatmul.f32.gmra.mxu0 %v3949
    %v4040 = vpop.f32.mrf.mxu0
    %v4041 = vadd.f32 0.0, %v4040
    %4042 = vmatmul.f32.gmra.mxu0 %v3952
    %v4043 = vpop.f32.mrf.mxu0
    %v4044 = vadd.f32 0.0, %v4043
    %4045 = vmatmul.f32.gmra.mxu0 %v3955
    %v4046 = vpop.f32.mrf.mxu0
    %v4047 = vadd.f32 0.0, %v4046
    %4048 = vmatmul.f32.gmra.mxu0 %v3958
    %v4049 = vpop.f32.mrf.mxu0
    %v4050 = vadd.f32 0.0, %v4049
    %4051 = vmatmul.f32.gmra.mxu0 %v3961
    %v4052 = vpop.f32.mrf.mxu0
    %v4053 = vadd.f32 0.0, %v4052
    %4054 = vmatmul.f32.gmra.mxu0 %v3964
    %v4055 = vpop.f32.mrf.mxu0
    %v4056 = vadd.f32 0.0, %v4055
    %4057 = vmatmul.f32.gmra.mxu0 %v3967
    %v4058 = vpop.f32.mrf.mxu0
    %v4059 = vadd.f32 0.0, %v4058
    %4060 = vmatmul.f32.gmra.mxu0 %v3970
    %v4061 = vpop.f32.mrf.mxu0
    %v4062 = vadd.f32 0.0, %v4061
    %4063 = vmatmul.f32.gmra.mxu0 %v3973
    %v4064 = vpop.f32.mrf.mxu0
    %v4065 = vadd.f32 0.0, %v4064
    %4066 = vmatmul.f32.gmra.mxu0 %v3976
    %v4067 = vpop.f32.mrf.mxu0
    %v4068 = vadd.f32 0.0, %v4067
    %4069 = vmatmul.f32.gmra.mxu0 %v3979
    %v4070 = vpop.f32.mrf.mxu0
    %v4071 = vadd.f32 0.0, %v4070
    %4072 = vmatmul.f32.gmra.mxu0 %v3982
    %v4073 = vpop.f32.mrf.mxu0
    %v4074 = vadd.f32 0.0, %v4073
    %4075 = vmatmul.f32.gmra.mxu0 %v3985
    %v4076 = vpop.f32.mrf.mxu0
    %v4077 = vadd.f32 0.0, %v4076
    %4078 = vmatmul.f32.gmra.mxu0 %v3988
    %v4079 = vpop.f32.mrf.mxu0
    %v4080 = vadd.f32 0.0, %v4079
    %4081 = vmatmul.f32.gmra.mxu0 %v3991
    %v4082 = vpop.f32.mrf.mxu0
    %v4083 = vadd.f32 0.0, %v4082
    %4084 = vmatmul.f32.gmra.mxu0 %v3994
    %v4085 = vpop.f32.mrf.mxu0
    %v4086 = vadd.f32 0.0, %v4085
    %4087 = vmatmul.f32.gmra.mxu0 %v3997
    %v4088 = vpop.f32.mrf.mxu0
    %v4089 = vadd.f32 0.0, %v4088
    %4090 = vmatmul.f32.gmra.mxu0 %v4000
    %v4091 = vpop.f32.mrf.mxu0
    %v4092 = vadd.f32 0.0, %v4091
    %4093 = vdwg.mxu0
    %v4094 = vadd.f32 %v3872, %v4020
    %v4095 = vadd.f32 %v3873, %v4023
    %v4096 = vadd.f32 %v3874, %v4026
    %v4097 = vadd.f32 %v3875, %v4029
    %v4098 = vadd.f32 %v3876, %v4032
    %v4099 = vadd.f32 %v3877, %v4035
    %v4100 = vadd.f32 %v3878, %v4038
    %v4101 = vadd.f32 %v3879, %v4041
    %v4102 = vadd.f32 %v3880, %v4044
    %v4103 = vadd.f32 %v3881, %v4047
    %v4104 = vadd.f32 %v3882, %v4050
    %v4105 = vadd.f32 %v3883, %v4053
    %v4106 = vadd.f32 %v3884, %v4056
    %v4107 = vadd.f32 %v3885, %v4059
    %v4108 = vadd.f32 %v3886, %v4062
    %v4109 = vadd.f32 %v3887, %v4065
    %v4110 = vadd.f32 %v3888, %v4068
    %v4111 = vadd.f32 %v3889, %v4071
    %v4112 = vadd.f32 %v3890, %v4074
    %v4113 = vadd.f32 %v3891, %v4077
    %v4114 = vadd.f32 %v3892, %v4080
    %v4115 = vadd.f32 %v3893, %v4083
    %v4116 = vadd.f32 %v3894, %v4086
    %v4117 = vadd.f32 %v3895, %v4089
    %v4118 = vadd.f32 %v3896, %v4092
    %v4119 = vld [vmem:[#allocation2 + $0x2a] sm:$0xff]
    %v4120 = vld [vmem:[#allocation2 + $0x32] sm:$0xff]
    %v4121 = vld [vmem:[#allocation2 + $0x3a] sm:$0xff]
    %v4122 = vld [vmem:[#allocation2 + $0x42] sm:$0xff]
    %v4123 = vld [vmem:[#allocation2 + $0x4a] sm:$0xff]
    %v4124 = vld [vmem:[#allocation2 + $0x52] sm:$0xff]
    %v4125 = vld [vmem:[#allocation2 + $0x5a] sm:$0xff]
    %v4126 = vld [vmem:[#allocation2 + $0x62] sm:$0xff]
    %v4127 = vld [vmem:[#allocation2 + $0x6a] sm:$0xff]
    %v4128 = vld [vmem:[#allocation2 + $0x72] sm:$0xff]
    %v4129 = vld [vmem:[#allocation2 + $0x7a] sm:$0xff]
    %v4130 = vld [vmem:[#allocation2 + $0x82] sm:$0xff]
    %v4131 = vld [vmem:[#allocation2 + $0x8a] sm:$0xff]
    %v4132 = vld [vmem:[#allocation2 + $0x92] sm:$0xff]
    %v4133 = vld [vmem:[#allocation2 + $0x9a] sm:$0xff]
    %v4134 = vld [vmem:[#allocation2 + $0xa2] sm:$0xff]
    %v4135 = vld [vmem:[#allocation2 + $0xaa] sm:$0xff]
    %v4136 = vld [vmem:[#allocation2 + $0xb2] sm:$0xff]
    %v4137 = vld [vmem:[#allocation2 + $0xba] sm:$0xff]
    %v4138 = vld [vmem:[#allocation2 + $0xc2] sm:$0xff]
    %v4139 = vld [vmem:[#allocation2 + $0xca] sm:$0xff]
    %v4140 = vld [vmem:[#allocation2 + $0xd2] sm:$0xff]
    %v4141 = vld [vmem:[#allocation2 + $0xda] sm:$0xff]
    %v4142 = vld [vmem:[#allocation2 + $0xe2] sm:$0xff]
    %v4143 = vld [vmem:[#allocation2 + $0xea] sm:$0xff]
    %s4144 = scalar_lea.vmem %s3, 192
    %v4145 = vld [vmem:[%s4144] sm:$0xff]
    %v4146 = vld [vmem:[%s4144 + $0x8] sm:$0xff]
    %v4147 = vld [vmem:[%s4144 + $0x10] sm:$0xff]
    %v4148 = vld [vmem:[%s4144 + $0x18] sm:$0xff]
    %v4150 = vsel %vm462, %v4119, 0
    %v4153 = vsel %vm462, %v4120, 0
    %v4156 = vsel %vm462, %v4121, 0
    %v4159 = vsel %vm462, %v4122, 0
    %v4162 = vsel %vm462, %v4123, 0
    %v4165 = vsel %vm462, %v4124, 0
    %v4168 = vsel %vm462, %v4125, 0
    %v4171 = vsel %vm462, %v4126, 0
    %v4174 = vsel %vm462, %v4127, 0
    %v4177 = vsel %vm462, %v4128, 0
    %v4180 = vsel %vm462, %v4129, 0
    %v4183 = vsel %vm462, %v4130, 0
    %v4186 = vsel %vm462, %v4131, 0
    %v4189 = vsel %vm462, %v4132, 0
    %v4192 = vsel %vm462, %v4133, 0
    %v4195 = vsel %vm462, %v4134, 0
    %v4198 = vsel %vm462, %v4135, 0
    %v4201 = vsel %vm462, %v4136, 0
    %v4204 = vsel %vm462, %v4137, 0
    %v4207 = vsel %vm462, %v4138, 0
    %v4210 = vsel %vm462, %v4139, 0
    %v4213 = vsel %vm462, %v4140, 0
    %v4216 = vsel %vm462, %v4141, 0
    %v4219 = vsel %vm462, %v4142, 0
    %v4222 = vsel %vm462, %v4143, 0
    %4224 = vmatpush.msra.mxu0 0.0
    %4225 = vmatpush.msra.mxu0 0.0
    %4226 = vmatpush.msra.mxu0 0.0
    %4227 = vmatpush.msra.mxu0 0.0
    %4228 = vmatpush.msra.mxu0 0.0
    %4229 = vmatpush.msra.mxu0 0.0
    %4230 = vmatpush.msra.mxu0 0.0
    %4231 = vmatpush.msra.mxu0 0.0
    %4232 = vmatpush.msra.mxu0 0.0
    %4233 = vmatpush.msra.mxu0 0.0
    %4234 = vmatpush.msra.mxu0 0.0
    %4235 = vmatpush.msra.mxu0 0.0
    %4236 = vmatpush.msra.mxu0 %v4148
    %4237 = vmatpush.msra.mxu0 %v4147
    %4238 = vmatpush.msra.mxu0 %v4146
    %4239 = vmatpush.msra.mxu0 %v4145
    %4240 = vmatmul.f32.gmra.mxu0 %v4150
    %v4241 = vpop.f32.mrf.mxu0
    %v4242 = vadd.f32 0.0, %v4241
    %4243 = vmatmul.f32.gmra.mxu0 %v4153
    %v4244 = vpop.f32.mrf.mxu0
    %v4245 = vadd.f32 0.0, %v4244
    %4246 = vmatmul.f32.gmra.mxu0 %v4156
    %v4247 = vpop.f32.mrf.mxu0
    %v4248 = vadd.f32 0.0, %v4247
    %4249 = vmatmul.f32.gmra.mxu0 %v4159
    %v4250 = vpop.f32.mrf.mxu0
    %v4251 = vadd.f32 0.0, %v4250
    %4252 = vmatmul.f32.gmra.mxu0 %v4162
    %v4253 = vpop.f32.mrf.mxu0
    %v4254 = vadd.f32 0.0, %v4253
    %4255 = vmatmul.f32.gmra.mxu0 %v4165
    %v4256 = vpop.f32.mrf.mxu0
    %v4257 = vadd.f32 0.0, %v4256
    %4258 = vmatmul.f32.gmra.mxu0 %v4168
    %v4259 = vpop.f32.mrf.mxu0
    %v4260 = vadd.f32 0.0, %v4259
    %4261 = vmatmul.f32.gmra.mxu0 %v4171
    %v4262 = vpop.f32.mrf.mxu0
    %v4263 = vadd.f32 0.0, %v4262
    %4264 = vmatmul.f32.gmra.mxu0 %v4174
    %v4265 = vpop.f32.mrf.mxu0
    %v4266 = vadd.f32 0.0, %v4265
    %4267 = vmatmul.f32.gmra.mxu0 %v4177
    %v4268 = vpop.f32.mrf.mxu0
    %v4269 = vadd.f32 0.0, %v4268
    %4270 = vmatmul.f32.gmra.mxu0 %v4180
    %v4271 = vpop.f32.mrf.mxu0
    %v4272 = vadd.f32 0.0, %v4271
    %4273 = vmatmul.f32.gmra.mxu0 %v4183
    %v4274 = vpop.f32.mrf.mxu0
    %v4275 = vadd.f32 0.0, %v4274
    %4276 = vmatmul.f32.gmra.mxu0 %v4186
    %v4277 = vpop.f32.mrf.mxu0
    %v4278 = vadd.f32 0.0, %v4277
    %4279 = vmatmul.f32.gmra.mxu0 %v4189
    %v4280 = vpop.f32.mrf.mxu0
    %v4281 = vadd.f32 0.0, %v4280
    %4282 = vmatmul.f32.gmra.mxu0 %v4192
    %v4283 = vpop.f32.mrf.mxu0
    %v4284 = vadd.f32 0.0, %v4283
    %4285 = vmatmul.f32.gmra.mxu0 %v4195
    %v4286 = vpop.f32.mrf.mxu0
    %v4287 = vadd.f32 0.0, %v4286
    %4288 = vmatmul.f32.gmra.mxu0 %v4198
    %v4289 = vpop.f32.mrf.mxu0
    %v4290 = vadd.f32 0.0, %v4289
    %4291 = vmatmul.f32.gmra.mxu0 %v4201
    %v4292 = vpop.f32.mrf.mxu0
    %v4293 = vadd.f32 0.0, %v4292
    %4294 = vmatmul.f32.gmra.mxu0 %v4204
    %v4295 = vpop.f32.mrf.mxu0
    %v4296 = vadd.f32 0.0, %v4295
    %4297 = vmatmul.f32.gmra.mxu0 %v4207
    %v4298 = vpop.f32.mrf.mxu0
    %v4299 = vadd.f32 0.0, %v4298
    %4300 = vmatmul.f32.gmra.mxu0 %v4210
    %v4301 = vpop.f32.mrf.mxu0
    %v4302 = vadd.f32 0.0, %v4301
    %4303 = vmatmul.f32.gmra.mxu0 %v4213
    %v4304 = vpop.f32.mrf.mxu0
    %v4305 = vadd.f32 0.0, %v4304
    %4306 = vmatmul.f32.gmra.mxu0 %v4216
    %v4307 = vpop.f32.mrf.mxu0
    %v4308 = vadd.f32 0.0, %v4307
    %4309 = vmatmul.f32.gmra.mxu0 %v4219
    %v4310 = vpop.f32.mrf.mxu0
    %v4311 = vadd.f32 0.0, %v4310
    %4312 = vmatmul.f32.gmra.mxu0 %v4222
    %v4313 = vpop.f32.mrf.mxu0
    %v4314 = vadd.f32 0.0, %v4313
    %4315 = vdwg.mxu0
    %v4316 = vadd.f32 %v4094, %v4242
    %v4317 = vadd.f32 %v4095, %v4245
    %v4318 = vadd.f32 %v4096, %v4248
    %v4319 = vadd.f32 %v4097, %v4251
    %v4320 = vadd.f32 %v4098, %v4254
    %v4321 = vadd.f32 %v4099, %v4257
    %v4322 = vadd.f32 %v4100, %v4260
    %v4323 = vadd.f32 %v4101, %v4263
    %v4324 = vadd.f32 %v4102, %v4266
    %v4325 = vadd.f32 %v4103, %v4269
    %v4326 = vadd.f32 %v4104, %v4272
    %v4327 = vadd.f32 %v4105, %v4275
    %v4328 = vadd.f32 %v4106, %v4278
    %v4329 = vadd.f32 %v4107, %v4281
    %v4330 = vadd.f32 %v4108, %v4284
    %v4331 = vadd.f32 %v4109, %v4287
    %v4332 = vadd.f32 %v4110, %v4290
    %v4333 = vadd.f32 %v4111, %v4293
    %v4334 = vadd.f32 %v4112, %v4296
    %v4335 = vadd.f32 %v4113, %v4299
    %v4336 = vadd.f32 %v4114, %v4302
    %v4337 = vadd.f32 %v4115, %v4305
    %v4338 = vadd.f32 %v4116, %v4308
    %v4339 = vadd.f32 %v4117, %v4311
    %v4340 = vadd.f32 %v4118, %v4314
    %v4341 = vld [vmem:[#allocation2 + $0x2c] sm:$0xff]
    %v4342 = vld [vmem:[#allocation2 + $0x34] sm:$0xff]
    %v4343 = vld [vmem:[#allocation2 + $0x3c] sm:$0xff]
    %v4344 = vld [vmem:[#allocation2 + $0x44] sm:$0xff]
    %v4345 = vld [vmem:[#allocation2 + $0x4c] sm:$0xff]
    %v4346 = vld [vmem:[#allocation2 + $0x54] sm:$0xff]
    %v4347 = vld [vmem:[#allocation2 + $0x5c] sm:$0xff]
    %v4348 = vld [vmem:[#allocation2 + $0x64] sm:$0xff]
    %v4349 = vld [vmem:[#allocation2 + $0x6c] sm:$0xff]
    %v4350 = vld [vmem:[#allocation2 + $0x74] sm:$0xff]
    %v4351 = vld [vmem:[#allocation2 + $0x7c] sm:$0xff]
    %v4352 = vld [vmem:[#allocation2 + $0x84] sm:$0xff]
    %v4353 = vld [vmem:[#allocation2 + $0x8c] sm:$0xff]
    %v4354 = vld [vmem:[#allocation2 + $0x94] sm:$0xff]
    %v4355 = vld [vmem:[#allocation2 + $0x9c] sm:$0xff]
    %v4356 = vld [vmem:[#allocation2 + $0xa4] sm:$0xff]
    %v4357 = vld [vmem:[#allocation2 + $0xac] sm:$0xff]
    %v4358 = vld [vmem:[#allocation2 + $0xb4] sm:$0xff]
    %v4359 = vld [vmem:[#allocation2 + $0xbc] sm:$0xff]
    %v4360 = vld [vmem:[#allocation2 + $0xc4] sm:$0xff]
    %v4361 = vld [vmem:[#allocation2 + $0xcc] sm:$0xff]
    %v4362 = vld [vmem:[#allocation2 + $0xd4] sm:$0xff]
    %v4363 = vld [vmem:[#allocation2 + $0xdc] sm:$0xff]
    %v4364 = vld [vmem:[#allocation2 + $0xe4] sm:$0xff]
    %v4365 = vld [vmem:[#allocation2 + $0xec] sm:$0xff]
    %s4366 = scalar_lea.vmem %s3, 224
    %v4367 = vld [vmem:[%s4366] sm:$0xff]
    %v4368 = vld [vmem:[%s4366 + $0x8] sm:$0xff]
    %v4369 = vld [vmem:[%s4366 + $0x10] sm:$0xff]
    %v4370 = vld [vmem:[%s4366 + $0x18] sm:$0xff]
    %v4372 = vsel %vm462, %v4341, 0
    %v4375 = vsel %vm462, %v4342, 0
    %v4378 = vsel %vm462, %v4343, 0
    %v4381 = vsel %vm462, %v4344, 0
    %v4384 = vsel %vm462, %v4345, 0
    %v4387 = vsel %vm462, %v4346, 0
    %v4390 = vsel %vm462, %v4347, 0
    %v4393 = vsel %vm462, %v4348, 0
    %v4396 = vsel %vm462, %v4349, 0
    %v4399 = vsel %vm462, %v4350, 0
    %v4402 = vsel %vm462, %v4351, 0
    %v4405 = vsel %vm462, %v4352, 0
    %v4408 = vsel %vm462, %v4353, 0
    %v4411 = vsel %vm462, %v4354, 0
    %v4414 = vsel %vm462, %v4355, 0
    %v4417 = vsel %vm462, %v4356, 0
    %v4420 = vsel %vm462, %v4357, 0
    %v4423 = vsel %vm462, %v4358, 0
    %v4426 = vsel %vm462, %v4359, 0
    %v4429 = vsel %vm462, %v4360, 0
    %v4432 = vsel %vm462, %v4361, 0
    %v4435 = vsel %vm462, %v4362, 0
    %v4438 = vsel %vm462, %v4363, 0
    %v4441 = vsel %vm462, %v4364, 0
    %v4444 = vsel %vm462, %v4365, 0
    %4446 = vmatpush.msra.mxu0 0.0
    %4447 = vmatpush.msra.mxu0 0.0
    %4448 = vmatpush.msra.mxu0 0.0
    %4449 = vmatpush.msra.mxu0 0.0
    %4450 = vmatpush.msra.mxu0 0.0
    %4451 = vmatpush.msra.mxu0 0.0
    %4452 = vmatpush.msra.mxu0 0.0
    %4453 = vmatpush.msra.mxu0 0.0
    %4454 = vmatpush.msra.mxu0 0.0
    %4455 = vmatpush.msra.mxu0 0.0
    %4456 = vmatpush.msra.mxu0 0.0
    %4457 = vmatpush.msra.mxu0 0.0
    %4458 = vmatpush.msra.mxu0 %v4370
    %4459 = vmatpush.msra.mxu0 %v4369
    %4460 = vmatpush.msra.mxu0 %v4368
    %4461 = vmatpush.msra.mxu0 %v4367
    %4462 = vmatmul.f32.gmra.mxu0 %v4372
    %v4463 = vpop.f32.mrf.mxu0
    %v4464 = vadd.f32 0.0, %v4463
    %4465 = vmatmul.f32.gmra.mxu0 %v4375
    %v4466 = vpop.f32.mrf.mxu0
    %v4467 = vadd.f32 0.0, %v4466
    %4468 = vmatmul.f32.gmra.mxu0 %v4378
    %v4469 = vpop.f32.mrf.mxu0
    %v4470 = vadd.f32 0.0, %v4469
    %4471 = vmatmul.f32.gmra.mxu0 %v4381
    %v4472 = vpop.f32.mrf.mxu0
    %v4473 = vadd.f32 0.0, %v4472
    %4474 = vmatmul.f32.gmra.mxu0 %v4384
    %v4475 = vpop.f32.mrf.mxu0
    %v4476 = vadd.f32 0.0, %v4475
    %4477 = vmatmul.f32.gmra.mxu0 %v4387
    %v4478 = vpop.f32.mrf.mxu0
    %v4479 = vadd.f32 0.0, %v4478
    %4480 = vmatmul.f32.gmra.mxu0 %v4390
    %v4481 = vpop.f32.mrf.mxu0
    %v4482 = vadd.f32 0.0, %v4481
    %4483 = vmatmul.f32.gmra.mxu0 %v4393
    %v4484 = vpop.f32.mrf.mxu0
    %v4485 = vadd.f32 0.0, %v4484
    %4486 = vmatmul.f32.gmra.mxu0 %v4396
    %v4487 = vpop.f32.mrf.mxu0
    %v4488 = vadd.f32 0.0, %v4487
    %4489 = vmatmul.f32.gmra.mxu0 %v4399
    %v4490 = vpop.f32.mrf.mxu0
    %v4491 = vadd.f32 0.0, %v4490
    %4492 = vmatmul.f32.gmra.mxu0 %v4402
    %v4493 = vpop.f32.mrf.mxu0
    %v4494 = vadd.f32 0.0, %v4493
    %4495 = vmatmul.f32.gmra.mxu0 %v4405
    %v4496 = vpop.f32.mrf.mxu0
    %v4497 = vadd.f32 0.0, %v4496
    %4498 = vmatmul.f32.gmra.mxu0 %v4408
    %v4499 = vpop.f32.mrf.mxu0
    %v4500 = vadd.f32 0.0, %v4499
    %4501 = vmatmul.f32.gmra.mxu0 %v4411
    %v4502 = vpop.f32.mrf.mxu0
    %v4503 = vadd.f32 0.0, %v4502
    %4504 = vmatmul.f32.gmra.mxu0 %v4414
    %v4505 = vpop.f32.mrf.mxu0
    %v4506 = vadd.f32 0.0, %v4505
    %4507 = vmatmul.f32.gmra.mxu0 %v4417
    %v4508 = vpop.f32.mrf.mxu0
    %v4509 = vadd.f32 0.0, %v4508
    %4510 = vmatmul.f32.gmra.mxu0 %v4420
    %v4511 = vpop.f32.mrf.mxu0
    %v4512 = vadd.f32 0.0, %v4511
    %4513 = vmatmul.f32.gmra.mxu0 %v4423
    %v4514 = vpop.f32.mrf.mxu0
    %v4515 = vadd.f32 0.0, %v4514
    %4516 = vmatmul.f32.gmra.mxu0 %v4426
    %v4517 = vpop.f32.mrf.mxu0
    %v4518 = vadd.f32 0.0, %v4517
    %4519 = vmatmul.f32.gmra.mxu0 %v4429
    %v4520 = vpop.f32.mrf.mxu0
    %v4521 = vadd.f32 0.0, %v4520
    %4522 = vmatmul.f32.gmra.mxu0 %v4432
    %v4523 = vpop.f32.mrf.mxu0
    %v4524 = vadd.f32 0.0, %v4523
    %4525 = vmatmul.f32.gmra.mxu0 %v4435
    %v4526 = vpop.f32.mrf.mxu0
    %v4527 = vadd.f32 0.0, %v4526
    %4528 = vmatmul.f32.gmra.mxu0 %v4438
    %v4529 = vpop.f32.mrf.mxu0
    %v4530 = vadd.f32 0.0, %v4529
    %4531 = vmatmul.f32.gmra.mxu0 %v4441
    %v4532 = vpop.f32.mrf.mxu0
    %v4533 = vadd.f32 0.0, %v4532
    %4534 = vmatmul.f32.gmra.mxu0 %v4444
    %v4535 = vpop.f32.mrf.mxu0
    %v4536 = vadd.f32 0.0, %v4535
    %4537 = vdwg.mxu0
    %v4538 = vadd.f32 %v4316, %v4464
    %v4539 = vadd.f32 %v4317, %v4467
    %v4540 = vadd.f32 %v4318, %v4470
    %v4541 = vadd.f32 %v4319, %v4473
    %v4542 = vadd.f32 %v4320, %v4476
    %v4543 = vadd.f32 %v4321, %v4479
    %v4544 = vadd.f32 %v4322, %v4482
    %v4545 = vadd.f32 %v4323, %v4485
    %v4546 = vadd.f32 %v4324, %v4488
    %v4547 = vadd.f32 %v4325, %v4491
    %v4548 = vadd.f32 %v4326, %v4494
    %v4549 = vadd.f32 %v4327, %v4497
    %v4550 = vadd.f32 %v4328, %v4500
    %v4551 = vadd.f32 %v4329, %v4503
    %v4552 = vadd.f32 %v4330, %v4506
    %v4553 = vadd.f32 %v4331, %v4509
    %v4554 = vadd.f32 %v4332, %v4512
    %v4555 = vadd.f32 %v4333, %v4515
    %v4556 = vadd.f32 %v4334, %v4518
    %v4557 = vadd.f32 %v4335, %v4521
    %v4558 = vadd.f32 %v4336, %v4524
    %v4559 = vadd.f32 %v4337, %v4527
    %v4560 = vadd.f32 %v4338, %v4530
    %v4561 = vadd.f32 %v4339, %v4533
    %v4562 = vadd.f32 %v4340, %v4536
    %v4563 = vld [vmem:[#allocation2 + $0x2e] sm:$0xff]
    %v4564 = vld [vmem:[#allocation2 + $0x36] sm:$0xff]
    %v4565 = vld [vmem:[#allocation2 + $0x3e] sm:$0xff]
    %v4566 = vld [vmem:[#allocation2 + $0x46] sm:$0xff]
    %v4567 = vld [vmem:[#allocation2 + $0x4e] sm:$0xff]
    %v4568 = vld [vmem:[#allocation2 + $0x56] sm:$0xff]
    %v4569 = vld [vmem:[#allocation2 + $0x5e] sm:$0xff]
    %v4570 = vld [vmem:[#allocation2 + $0x66] sm:$0xff]
    %v4571 = vld [vmem:[#allocation2 + $0x6e] sm:$0xff]
    %v4572 = vld [vmem:[#allocation2 + $0x76] sm:$0xff]
    %v4573 = vld [vmem:[#allocation2 + $0x7e] sm:$0xff]
    %v4574 = vld [vmem:[#allocation2 + $0x86] sm:$0xff]
    %v4575 = vld [vmem:[#allocation2 + $0x8e] sm:$0xff]
    %v4576 = vld [vmem:[#allocation2 + $0x96] sm:$0xff]
    %v4577 = vld [vmem:[#allocation2 + $0x9e] sm:$0xff]
    %v4578 = vld [vmem:[#allocation2 + $0xa6] sm:$0xff]
    %v4579 = vld [vmem:[#allocation2 + $0xae] sm:$0xff]
    %v4580 = vld [vmem:[#allocation2 + $0xb6] sm:$0xff]
    %v4581 = vld [vmem:[#allocation2 + $0xbe] sm:$0xff]
    %v4582 = vld [vmem:[#allocation2 + $0xc6] sm:$0xff]
    %v4583 = vld [vmem:[#allocation2 + $0xce] sm:$0xff]
    %v4584 = vld [vmem:[#allocation2 + $0xd6] sm:$0xff]
    %v4585 = vld [vmem:[#allocation2 + $0xde] sm:$0xff]
    %v4586 = vld [vmem:[#allocation2 + $0xe6] sm:$0xff]
    %v4587 = vld [vmem:[#allocation2 + $0xee] sm:$0xff]
    %s4588 = scalar_lea.vmem %s3, 256
    %v4589 = vld [vmem:[%s4588] sm:$0xff]
    %v4590 = vld [vmem:[%s4588 + $0x8] sm:$0xff]
    %v4591 = vld [vmem:[%s4588 + $0x10] sm:$0xff]
    %v4592 = vld [vmem:[%s4588 + $0x18] sm:$0xff]
    %v4594 = vsel %vm462, %v4563, 0
    %v4597 = vsel %vm462, %v4564, 0
    %v4600 = vsel %vm462, %v4565, 0
    %v4603 = vsel %vm462, %v4566, 0
    %v4606 = vsel %vm462, %v4567, 0
    %v4609 = vsel %vm462, %v4568, 0
    %v4612 = vsel %vm462, %v4569, 0
    %v4615 = vsel %vm462, %v4570, 0
    %v4618 = vsel %vm462, %v4571, 0
    %v4621 = vsel %vm462, %v4572, 0
    %v4624 = vsel %vm462, %v4573, 0
    %v4627 = vsel %vm462, %v4574, 0
    %v4630 = vsel %vm462, %v4575, 0
    %v4633 = vsel %vm462, %v4576, 0
    %v4636 = vsel %vm462, %v4577, 0
    %v4639 = vsel %vm462, %v4578, 0
    %v4642 = vsel %vm462, %v4579, 0
    %v4645 = vsel %vm462, %v4580, 0
    %v4648 = vsel %vm462, %v4581, 0
    %v4651 = vsel %vm462, %v4582, 0
    %v4654 = vsel %vm462, %v4583, 0
    %v4657 = vsel %vm462, %v4584, 0
    %v4660 = vsel %vm462, %v4585, 0
    %v4663 = vsel %vm462, %v4586, 0
    %v4666 = vsel %vm462, %v4587, 0
    %4668 = vmatpush.msra.mxu0 0.0
    %4669 = vmatpush.msra.mxu0 0.0
    %4670 = vmatpush.msra.mxu0 0.0
    %4671 = vmatpush.msra.mxu0 0.0
    %4672 = vmatpush.msra.mxu0 0.0
    %4673 = vmatpush.msra.mxu0 0.0
    %4674 = vmatpush.msra.mxu0 0.0
    %4675 = vmatpush.msra.mxu0 0.0
    %4676 = vmatpush.msra.mxu0 0.0
    %4677 = vmatpush.msra.mxu0 0.0
    %4678 = vmatpush.msra.mxu0 0.0
    %4679 = vmatpush.msra.mxu0 0.0
    %4680 = vmatpush.msra.mxu0 %v4592
    %4681 = vmatpush.msra.mxu0 %v4591
    %4682 = vmatpush.msra.mxu0 %v4590
    %4683 = vmatpush.msra.mxu0 %v4589
    %4684 = vmatmul.f32.gmra.mxu0 %v4594
    %v4685 = vpop.f32.mrf.mxu0
    %v4686 = vadd.f32 0.0, %v4685
    %4687 = vmatmul.f32.gmra.mxu0 %v4597
    %v4688 = vpop.f32.mrf.mxu0
    %v4689 = vadd.f32 0.0, %v4688
    %4690 = vmatmul.f32.gmra.mxu0 %v4600
    %v4691 = vpop.f32.mrf.mxu0
    %v4692 = vadd.f32 0.0, %v4691
    %4693 = vmatmul.f32.gmra.mxu0 %v4603
    %v4694 = vpop.f32.mrf.mxu0
    %v4695 = vadd.f32 0.0, %v4694
    %4696 = vmatmul.f32.gmra.mxu0 %v4606
    %v4697 = vpop.f32.mrf.mxu0
    %v4698 = vadd.f32 0.0, %v4697
    %4699 = vmatmul.f32.gmra.mxu0 %v4609
    %v4700 = vpop.f32.mrf.mxu0
    %v4701 = vadd.f32 0.0, %v4700
    %4702 = vmatmul.f32.gmra.mxu0 %v4612
    %v4703 = vpop.f32.mrf.mxu0
    %v4704 = vadd.f32 0.0, %v4703
    %4705 = vmatmul.f32.gmra.mxu0 %v4615
    %v4706 = vpop.f32.mrf.mxu0
    %v4707 = vadd.f32 0.0, %v4706
    %4708 = vmatmul.f32.gmra.mxu0 %v4618
    %v4709 = vpop.f32.mrf.mxu0
    %v4710 = vadd.f32 0.0, %v4709
    %4711 = vmatmul.f32.gmra.mxu0 %v4621
    %v4712 = vpop.f32.mrf.mxu0
    %v4713 = vadd.f32 0.0, %v4712
    %4714 = vmatmul.f32.gmra.mxu0 %v4624
    %v4715 = vpop.f32.mrf.mxu0
    %v4716 = vadd.f32 0.0, %v4715
    %4717 = vmatmul.f32.gmra.mxu0 %v4627
    %v4718 = vpop.f32.mrf.mxu0
    %v4719 = vadd.f32 0.0, %v4718
    %4720 = vmatmul.f32.gmra.mxu0 %v4630
    %v4721 = vpop.f32.mrf.mxu0
    %v4722 = vadd.f32 0.0, %v4721
    %4723 = vmatmul.f32.gmra.mxu0 %v4633
    %v4724 = vpop.f32.mrf.mxu0
    %v4725 = vadd.f32 0.0, %v4724
    %4726 = vmatmul.f32.gmra.mxu0 %v4636
    %v4727 = vpop.f32.mrf.mxu0
    %v4728 = vadd.f32 0.0, %v4727
    %4729 = vmatmul.f32.gmra.mxu0 %v4639
    %v4730 = vpop.f32.mrf.mxu0
    %v4731 = vadd.f32 0.0, %v4730
    %4732 = vmatmul.f32.gmra.mxu0 %v4642
    %v4733 = vpop.f32.mrf.mxu0
    %v4734 = vadd.f32 0.0, %v4733
    %4735 = vmatmul.f32.gmra.mxu0 %v4645
    %v4736 = vpop.f32.mrf.mxu0
    %v4737 = vadd.f32 0.0, %v4736
    %4738 = vmatmul.f32.gmra.mxu0 %v4648
    %v4739 = vpop.f32.mrf.mxu0
    %v4740 = vadd.f32 0.0, %v4739
    %4741 = vmatmul.f32.gmra.mxu0 %v4651
    %v4742 = vpop.f32.mrf.mxu0
    %v4743 = vadd.f32 0.0, %v4742
    %4744 = vmatmul.f32.gmra.mxu0 %v4654
    %v4745 = vpop.f32.mrf.mxu0
    %v4746 = vadd.f32 0.0, %v4745
    %4747 = vmatmul.f32.gmra.mxu0 %v4657
    %v4748 = vpop.f32.mrf.mxu0
    %v4749 = vadd.f32 0.0, %v4748
    %4750 = vmatmul.f32.gmra.mxu0 %v4660
    %v4751 = vpop.f32.mrf.mxu0
    %v4752 = vadd.f32 0.0, %v4751
    %4753 = vmatmul.f32.gmra.mxu0 %v4663
    %v4754 = vpop.f32.mrf.mxu0
    %v4755 = vadd.f32 0.0, %v4754
    %4756 = vmatmul.f32.gmra.mxu0 %v4666
    %v4757 = vpop.f32.mrf.mxu0
    %v4758 = vadd.f32 0.0, %v4757
    %4759 = vdwg.mxu0
    %v4760 = vadd.f32 %v4538, %v4686
    %v4761 = vadd.f32 %v4539, %v4689
    %v4762 = vadd.f32 %v4540, %v4692
    %v4763 = vadd.f32 %v4541, %v4695
    %v4764 = vadd.f32 %v4542, %v4698
    %v4765 = vadd.f32 %v4543, %v4701
    %v4766 = vadd.f32 %v4544, %v4704
    %v4767 = vadd.f32 %v4545, %v4707
    %v4768 = vadd.f32 %v4546, %v4710
    %v4769 = vadd.f32 %v4547, %v4713
    %v4770 = vadd.f32 %v4548, %v4716
    %v4771 = vadd.f32 %v4549, %v4719
    %v4772 = vadd.f32 %v4550, %v4722
    %v4773 = vadd.f32 %v4551, %v4725
    %v4774 = vadd.f32 %v4552, %v4728
    %v4775 = vadd.f32 %v4553, %v4731
    %v4776 = vadd.f32 %v4554, %v4734
    %v4777 = vadd.f32 %v4555, %v4737
    %v4778 = vadd.f32 %v4556, %v4740
    %v4779 = vadd.f32 %v4557, %v4743
    %v4780 = vadd.f32 %v4558, %v4746
    %v4781 = vadd.f32 %v4559, %v4749
    %v4782 = vadd.f32 %v4560, %v4752
    %v4783 = vadd.f32 %v4561, %v4755
    %v4784 = vadd.f32 %v4562, %v4758
    %v4785 = vld [vmem:[%s4] sm:$0x7]
    %v4786 = vperm.slane %v4785, 0
    %v4787 = vadd.f32 %v4760, %v4786
    %v4788 = vadd.f32 %v4761, %v4786
    %v4789 = vadd.f32 %v4762, %v4786
    %v4790 = vadd.f32 %v4763, %v4786
    %v4791 = vadd.f32 %v4764, %v4786
    %v4792 = vadd.f32 %v4765, %v4786
    %v4793 = vadd.f32 %v4766, %v4786
    %v4794 = vadd.f32 %v4767, %v4786
    %v4795 = vadd.f32 %v4768, %v4786
    %v4796 = vadd.f32 %v4769, %v4786
    %v4797 = vadd.f32 %v4770, %v4786
    %v4798 = vadd.f32 %v4771, %v4786
    %v4799 = vadd.f32 %v4772, %v4786
    %v4800 = vadd.f32 %v4773, %v4786
    %v4801 = vadd.f32 %v4774, %v4786
    %v4802 = vadd.f32 %v4775, %v4786
    %v4803 = vadd.f32 %v4776, %v4786
    %v4804 = vadd.f32 %v4777, %v4786
    %v4805 = vadd.f32 %v4778, %v4786
    %v4806 = vadd.f32 %v4779, %v4786
    %v4807 = vadd.f32 %v4780, %v4786
    %v4808 = vadd.f32 %v4781, %v4786
    %v4809 = vadd.f32 %v4782, %v4786
    %v4810 = vadd.f32 %v4783, %v4786
    %v4811 = vadd.f32 %v4784, %v4786
    %v4812 = vmul.f32 %v4787, %v2432
    %v4813 = vmul.f32 %v4788, %v2436
    %v4814 = vmul.f32 %v4789, %v2440
    %v4815 = vmul.f32 %v4790, %v2444
    %v4816 = vmul.f32 %v4791, %v2448
    %v4817 = vmul.f32 %v4792, %v2452
    %v4818 = vmul.f32 %v4793, %v2456
    %v4819 = vmul.f32 %v4794, %v2460
    %v4820 = vmul.f32 %v4795, %v2464
    %v4821 = vmul.f32 %v4796, %v2468
    %v4822 = vmul.f32 %v4797, %v2472
    %v4823 = vmul.f32 %v4798, %v2476
    %v4824 = vmul.f32 %v4799, %v2480
    %v4825 = vmul.f32 %v4800, %v2484
    %v4826 = vmul.f32 %v4801, %v2488
    %v4827 = vmul.f32 %v4802, %v2492
    %v4828 = vmul.f32 %v4803, %v2496
    %v4829 = vmul.f32 %v4804, %v2500
    %v4830 = vmul.f32 %v4805, %v2504
    %v4831 = vmul.f32 %v4806, %v2508
    %v4832 = vmul.f32 %v4807, %v2512
    %v4833 = vmul.f32 %v4808, %v2516
    %v4834 = vmul.f32 %v4809, %v2520
    %v4835 = vmul.f32 %v4810, %v2524
    %v4836 = vmul.f32 %v4811, %v2528
    %v4837 = vsel %vm469, %v4812, 0.0
    %v4838 = vsel %vm469, %v4813, 0.0
    %v4839 = vadd.f32 %v4837, %v4838
    %v4840 = vsel %vm469, %v4814, 0.0
    %v4841 = vadd.f32 %v4839, %v4840
    %v4842 = vsel %vm469, %v4815, 0.0
    %v4843 = vadd.f32 %v4841, %v4842
    %v4844 = vsel %vm469, %v4816, 0.0
    %v4845 = vadd.f32 %v4843, %v4844
    %v4846 = vsel %vm469, %v4817, 0.0
    %v4847 = vadd.f32 %v4845, %v4846
    %v4848 = vsel %vm469, %v4818, 0.0
    %v4849 = vadd.f32 %v4847, %v4848
    %v4850 = vsel %vm469, %v4819, 0.0
    %v4851 = vadd.f32 %v4849, %v4850
    %v4852 = vsel %vm469, %v4820, 0.0
    %v4853 = vadd.f32 %v4851, %v4852
    %v4854 = vsel %vm469, %v4821, 0.0
    %v4855 = vadd.f32 %v4853, %v4854
    %v4856 = vsel %vm469, %v4822, 0.0
    %v4857 = vadd.f32 %v4855, %v4856
    %v4858 = vsel %vm469, %v4823, 0.0
    %v4859 = vadd.f32 %v4857, %v4858
    %v4860 = vsel %vm469, %v4824, 0.0
    %v4861 = vadd.f32 %v4859, %v4860
    %v4862 = vsel %vm469, %v4825, 0.0
    %v4863 = vadd.f32 %v4861, %v4862
    %v4864 = vsel %vm469, %v4826, 0.0
    %v4865 = vadd.f32 %v4863, %v4864
    %v4866 = vsel %vm469, %v4827, 0.0
    %v4867 = vadd.f32 %v4865, %v4866
    %v4868 = vsel %vm469, %v4828, 0.0
    %v4869 = vadd.f32 %v4867, %v4868
    %v4870 = vsel %vm469, %v4829, 0.0
    %v4871 = vadd.f32 %v4869, %v4870
    %v4872 = vsel %vm469, %v4830, 0.0
    %v4873 = vadd.f32 %v4871, %v4872
    %v4874 = vsel %vm469, %v4831, 0.0
    %v4875 = vadd.f32 %v4873, %v4874
    %v4876 = vsel %vm469, %v4832, 0.0
    %v4877 = vadd.f32 %v4875, %v4876
    %v4878 = vsel %vm469, %v4833, 0.0
    %v4879 = vadd.f32 %v4877, %v4878
    %v4880 = vsel %vm469, %v4834, 0.0
    %v4881 = vadd.f32 %v4879, %v4880
    %v4882 = vsel %vm469, %v4835, 0.0
    %v4883 = vadd.f32 %v4881, %v4882
    %v4884 = vsel %vm469, %v4836, 0.0
    %v4885 = vadd.f32 %v4883, %v4884
    %v4886 = vrot.slane %v4885, 4
    %v4887 = vadd.f32 %v4885, %v4886
    %v4888 = vrot.slane %v4887, 2
    %v4889 = vadd.f32 %v4887, %v4888
    %v4890 = vrot.slane %v4889, 1
    %v4891 = vadd.f32 %v4889, %v4890
    %v4892 = vmul.f32 %v4812, %v4812
    %v4893 = vmul.f32 %v4813, %v4813
    %v4894 = vmul.f32 %v4814, %v4814
    %v4895 = vmul.f32 %v4815, %v4815
    %v4896 = vmul.f32 %v4816, %v4816
    %v4897 = vmul.f32 %v4817, %v4817
    %v4898 = vmul.f32 %v4818, %v4818
    %v4899 = vmul.f32 %v4819, %v4819
    %v4900 = vmul.f32 %v4820, %v4820
    %v4901 = vmul.f32 %v4821, %v4821
    %v4902 = vmul.f32 %v4822, %v4822
    %v4903 = vmul.f32 %v4823, %v4823
    %v4904 = vmul.f32 %v4824, %v4824
    %v4905 = vmul.f32 %v4825, %v4825
    %v4906 = vmul.f32 %v4826, %v4826
    %v4907 = vmul.f32 %v4827, %v4827
    %v4908 = vmul.f32 %v4828, %v4828
    %v4909 = vmul.f32 %v4829, %v4829
    %v4910 = vmul.f32 %v4830, %v4830
    %v4911 = vmul.f32 %v4831, %v4831
    %v4912 = vmul.f32 %v4832, %v4832
    %v4913 = vmul.f32 %v4833, %v4833
    %v4914 = vmul.f32 %v4834, %v4834
    %v4915 = vmul.f32 %v4835, %v4835
    %v4916 = vmul.f32 %v4836, %v4836
    %v4917 = vsel %vm469, %v4892, 0.0
    %v4918 = vsel %vm469, %v4893, 0.0
    %v4919 = vadd.f32 %v4917, %v4918
    %v4920 = vsel %vm469, %v4894, 0.0
    %v4921 = vadd.f32 %v4919, %v4920
    %v4922 = vsel %vm469, %v4895, 0.0
    %v4923 = vadd.f32 %v4921, %v4922
    %v4924 = vsel %vm469, %v4896, 0.0
    %v4925 = vadd.f32 %v4923, %v4924
    %v4926 = vsel %vm469, %v4897, 0.0
    %v4927 = vadd.f32 %v4925, %v4926
    %v4928 = vsel %vm469, %v4898, 0.0
    %v4929 = vadd.f32 %v4927, %v4928
    %v4930 = vsel %vm469, %v4899, 0.0
    %v4931 = vadd.f32 %v4929, %v4930
    %v4932 = vsel %vm469, %v4900, 0.0
    %v4933 = vadd.f32 %v4931, %v4932
    %v4934 = vsel %vm469, %v4901, 0.0
    %v4935 = vadd.f32 %v4933, %v4934
    %v4936 = vsel %vm469, %v4902, 0.0
    %v4937 = vadd.f32 %v4935, %v4936
    %v4938 = vsel %vm469, %v4903, 0.0
    %v4939 = vadd.f32 %v4937, %v4938
    %v4940 = vsel %vm469, %v4904, 0.0
    %v4941 = vadd.f32 %v4939, %v4940
    %v4942 = vsel %vm469, %v4905, 0.0
    %v4943 = vadd.f32 %v4941, %v4942
    %v4944 = vsel %vm469, %v4906, 0.0
    %v4945 = vadd.f32 %v4943, %v4944
    %v4946 = vsel %vm469, %v4907, 0.0
    %v4947 = vadd.f32 %v4945, %v4946
    %v4948 = vsel %vm469, %v4908, 0.0
    %v4949 = vadd.f32 %v4947, %v4948
    %v4950 = vsel %vm469, %v4909, 0.0
    %v4951 = vadd.f32 %v4949, %v4950
    %v4952 = vsel %vm469, %v4910, 0.0
    %v4953 = vadd.f32 %v4951, %v4952
    %v4954 = vsel %vm469, %v4911, 0.0
    %v4955 = vadd.f32 %v4953, %v4954
    %v4956 = vsel %vm469, %v4912, 0.0
    %v4957 = vadd.f32 %v4955, %v4956
    %v4958 = vsel %vm469, %v4913, 0.0
    %v4959 = vadd.f32 %v4957, %v4958
    %v4960 = vsel %vm469, %v4914, 0.0
    %v4961 = vadd.f32 %v4959, %v4960
    %v4962 = vsel %vm469, %v4915, 0.0
    %v4963 = vadd.f32 %v4961, %v4962
    %v4964 = vsel %vm469, %v4916, 0.0
    %v4965 = vadd.f32 %v4963, %v4964
    %v4966 = vrot.slane %v4965, 4
    %v4967 = vadd.f32 %v4965, %v4966
    %v4968 = vrot.slane %v4967, 2
    %v4969 = vadd.f32 %v4967, %v4968
    %v4970 = vrot.slane %v4969, 1
    %v4971 = vadd.f32 %v4969, %v4970
    %v4972 = vmul.f32 %v4891, 0.0078125
    %v4973 = vmul.f32 %v4971, 0.0078125
    %v4974 = vmul.f32 %v4972, %v4972
    %v4975 = vsub.f32 %v4973, %v4974
    %v4976 = vadd.f32 %v4975, 1e-05
    %v4977 = vrsqrt.pop %v4976
    %v4978 = vmul.f32 %v4977, %v4976
    %v4979 = vmul.f32 %v4978, %v4977
    %v4980 = vmul.f32 0.5, %v4979
    %v4981 = vsub.f32 1.5, %v4980
    %v4982 = vmul.f32 %v4977, %v4981
    %vm4983 = vweird.f32 %v4976
    %vm4984 = vweird.f32 %v4977
    %vm4985 = vmor %vm4983, %vm4984
    %v4986 = vsel %vm4985, %v4977, %v4982
    %v4987 = vmul.f32 %v4986, %v4785
    %v4988 = vmul.f32 %v4972, %v4987
    %v4990 = vrot.slane %v4988, 7
    %v4992 = vsub.f32 %v4785, %v4990
    %v4993 = vperm.slane %v4987, 1
    %v4994 = vmul.f32 %v4787, %v4993
    %v4995 = vmul.f32 %v4788, %v4993
    %v4996 = vmul.f32 %v4789, %v4993
    %v4997 = vmul.f32 %v4790, %v4993
    %v4998 = vmul.f32 %v4791, %v4993
    %v4999 = vmul.f32 %v4792, %v4993
    %v5000 = vmul.f32 %v4793, %v4993
    %v5001 = vmul.f32 %v4794, %v4993
    %v5002 = vmul.f32 %v4795, %v4993
    %v5003 = vmul.f32 %v4796, %v4993
    %v5004 = vmul.f32 %v4797, %v4993
    %v5005 = vmul.f32 %v4798, %v4993
    %v5006 = vmul.f32 %v4799, %v4993
    %v5007 = vmul.f32 %v4800, %v4993
    %v5008 = vmul.f32 %v4801, %v4993
    %v5009 = vmul.f32 %v4802, %v4993
    %v5010 = vmul.f32 %v4803, %v4993
    %v5011 = vmul.f32 %v4804, %v4993
    %v5012 = vmul.f32 %v4805, %v4993
    %v5013 = vmul.f32 %v4806, %v4993
    %v5014 = vmul.f32 %v4807, %v4993
    %v5015 = vmul.f32 %v4808, %v4993
    %v5016 = vmul.f32 %v4809, %v4993
    %v5017 = vmul.f32 %v4810, %v4993
    %v5018 = vmul.f32 %v4811, %v4993
    %v5019 = vperm.slane %v4992, 2
    %v5020 = vadd.f32 %v4994, %v5019
    %v5021 = vadd.f32 %v4995, %v5019
    %v5022 = vadd.f32 %v4996, %v5019
    %v5023 = vadd.f32 %v4997, %v5019
    %v5024 = vadd.f32 %v4998, %v5019
    %v5025 = vadd.f32 %v4999, %v5019
    %v5026 = vadd.f32 %v5000, %v5019
    %v5027 = vadd.f32 %v5001, %v5019
    %v5028 = vadd.f32 %v5002, %v5019
    %v5029 = vadd.f32 %v5003, %v5019
    %v5030 = vadd.f32 %v5004, %v5019
    %v5031 = vadd.f32 %v5005, %v5019
    %v5032 = vadd.f32 %v5006, %v5019
    %v5033 = vadd.f32 %v5007, %v5019
    %v5034 = vadd.f32 %v5008, %v5019
    %v5035 = vadd.f32 %v5009, %v5019
    %v5036 = vadd.f32 %v5010, %v5019
    %v5037 = vadd.f32 %v5011, %v5019
    %v5038 = vadd.f32 %v5012, %v5019
    %v5039 = vadd.f32 %v5013, %v5019
    %v5040 = vadd.f32 %v5014, %v5019
    %v5041 = vadd.f32 %v5015, %v5019
    %v5042 = vadd.f32 %v5016, %v5019
    %v5043 = vadd.f32 %v5017, %v5019
    %v5044 = vadd.f32 %v5018, %v5019
    %v5045 = vmax.f32 %v5020, 0.0
    %v5046 = vmax.f32 %v5021, 0.0
    %v5047 = vmax.f32 %v5022, 0.0
    %v5048 = vmax.f32 %v5023, 0.0
    %v5049 = vmax.f32 %v5024, 0.0
    %v5050 = vmax.f32 %v5025, 0.0
    %v5051 = vmax.f32 %v5026, 0.0
    %v5052 = vmax.f32 %v5027, 0.0
    %v5053 = vmax.f32 %v5028, 0.0
    %v5054 = vmax.f32 %v5029, 0.0
    %v5055 = vmax.f32 %v5030, 0.0
    %v5056 = vmax.f32 %v5031, 0.0
    %v5057 = vmax.f32 %v5032, 0.0
    %v5058 = vmax.f32 %v5033, 0.0
    %v5059 = vmax.f32 %v5034, 0.0
    %v5060 = vmax.f32 %v5035, 0.0
    %v5061 = vmax.f32 %v5036, 0.0
    %v5062 = vmax.f32 %v5037, 0.0
    %v5063 = vmax.f32 %v5038, 0.0
    %v5064 = vmax.f32 %v5039, 0.0
    %v5065 = vmax.f32 %v5040, 0.0
    %v5066 = vmax.f32 %v5041, 0.0
    %v5067 = vmax.f32 %v5042, 0.0
    %v5068 = vmax.f32 %v5043, 0.0
    %v5069 = vmax.f32 %v5044, 0.0
    %v5070 = vmul.f32 %v5045, %v2432
    %v5071 = vmul.f32 %v5046, %v2436
    %v5072 = vmul.f32 %v5047, %v2440
    %v5073 = vmul.f32 %v5048, %v2444
    %v5074 = vmul.f32 %v5049, %v2448
    %v5075 = vmul.f32 %v5050, %v2452
    %v5076 = vmul.f32 %v5051, %v2456
    %v5077 = vmul.f32 %v5052, %v2460
    %v5078 = vmul.f32 %v5053, %v2464
    %v5079 = vmul.f32 %v5054, %v2468
    %v5080 = vmul.f32 %v5055, %v2472
    %v5081 = vmul.f32 %v5056, %v2476
    %v5082 = vmul.f32 %v5057, %v2480
    %v5083 = vmul.f32 %v5058, %v2484
    %v5084 = vmul.f32 %v5059, %v2488
    %v5085 = vmul.f32 %v5060, %v2492
    %v5086 = vmul.f32 %v5061, %v2496
    %v5087 = vmul.f32 %v5062, %v2500
    %v5088 = vmul.f32 %v5063, %v2504
    %v5089 = vmul.f32 %v5064, %v2508
    %v5090 = vmul.f32 %v5065, %v2512
    %v5091 = vmul.f32 %v5066, %v2516
    %v5092 = vmul.f32 %v5067, %v2520
    %v5093 = vmul.f32 %v5068, %v2524
    %v5094 = vmul.f32 %v5069, %v2528
    %5095 = vst.msk [vmem:[#allocation3 + $0x18] sm:$0xff] %vm469, %v5070
    %5096 = vst.msk [vmem:[#allocation3 + $0x20] sm:$0xff] %vm469, %v5071
    %5097 = vst.msk [vmem:[#allocation3 + $0x28] sm:$0xff] %vm469, %v5072
    %5098 = vst.msk [vmem:[#allocation3 + $0x30] sm:$0xff] %vm469, %v5073
    %5099 = vst.msk [vmem:[#allocation3 + $0x38] sm:$0xff] %vm469, %v5074
    %5100 = vst.msk [vmem:[#allocation3 + $0x40] sm:$0xff] %vm469, %v5075
    %5101 = vst.msk [vmem:[#allocation3 + $0x48] sm:$0xff] %vm469, %v5076
    %5102 = vst.msk [vmem:[#allocation3 + $0x50] sm:$0xff] %vm469, %v5077
    %5103 = vst.msk [vmem:[#allocation3 + $0x58] sm:$0xff] %vm469, %v5078
    %5104 = vst.msk [vmem:[#allocation3 + $0x60] sm:$0xff] %vm469, %v5079
    %5105 = vst.msk [vmem:[#allocation3 + $0x68] sm:$0xff] %vm469, %v5080
    %5106 = vst.msk [vmem:[#allocation3 + $0x70] sm:$0xff] %vm469, %v5081
    %5107 = vst.msk [vmem:[#allocation3 + $0x78] sm:$0xff] %vm469, %v5082
    %5108 = vst.msk [vmem:[#allocation3 + $0x80] sm:$0xff] %vm469, %v5083
    %5109 = vst.msk [vmem:[#allocation3 + $0x88] sm:$0xff] %vm469, %v5084
    %5110 = vst.msk [vmem:[#allocation3 + $0x90] sm:$0xff] %vm469, %v5085
    %5111 = vst.msk [vmem:[#allocation3 + $0x98] sm:$0xff] %vm469, %v5086
    %5112 = vst.msk [vmem:[#allocation3 + $0xa0] sm:$0xff] %vm469, %v5087
    %5113 = vst.msk [vmem:[#allocation3 + $0xa8] sm:$0xff] %vm469, %v5088
    %5114 = vst.msk [vmem:[#allocation3 + $0xb0] sm:$0xff] %vm469, %v5089
    %5115 = vst.msk [vmem:[#allocation3 + $0xb8] sm:$0xff] %vm469, %v5090
    %5116 = vst.msk [vmem:[#allocation3 + $0xc0] sm:$0xff] %vm469, %v5091
    %5117 = vst.msk [vmem:[#allocation3 + $0xc8] sm:$0xff] %vm469, %v5092
    %5118 = vst.msk [vmem:[#allocation3 + $0xd0] sm:$0xff] %vm469, %v5093
    %5119 = vst.msk [vmem:[#allocation3 + $0xd8] sm:$0xff] %vm469, %v5094
    %s5120 = smul.u32 9, 64
    %s5121 = smul.u32 %s5120, 1
    %s5122 = sshll.u32 %s5121, 4
    %5123 = dma.done [#allocation8], %s5122
    %v5124 = vld [vmem:[#allocation3 + $0x2] sm:$0xff]
    %v5125 = vld [vmem:[#allocation3 + $0xa] sm:$0xff]
    %v5126 = vld [vmem:[#allocation3 + $0x12] sm:$0xff]
    %v5127 = vld [vmem:[#allocation3 + $0x1a] sm:$0xff]
    %v5128 = vld [vmem:[#allocation3 + $0x22] sm:$0xff]
    %v5129 = vld [vmem:[#allocation3 + $0x2a] sm:$0xff]
    %v5130 = vld [vmem:[#allocation3 + $0x32] sm:$0xff]
    %v5131 = vld [vmem:[#allocation3 + $0x3a] sm:$0xff]
    %v5132 = vld [vmem:[#allocation3 + $0x42] sm:$0xff]
    %v5133 = vld [vmem:[#allocation3 + $0x4a] sm:$0xff]
    %v5134 = vld [vmem:[#allocation3 + $0x52] sm:$0xff]
    %v5135 = vld [vmem:[#allocation3 + $0x5a] sm:$0xff]
    %v5136 = vld [vmem:[#allocation3 + $0x62] sm:$0xff]
    %v5137 = vld [vmem:[#allocation3 + $0x6a] sm:$0xff]
    %v5138 = vld [vmem:[#allocation3 + $0x72] sm:$0xff]
    %v5139 = vld [vmem:[#allocation3 + $0x7a] sm:$0xff]
    %v5140 = vld [vmem:[#allocation3 + $0x82] sm:$0xff]
    %v5141 = vld [vmem:[#allocation3 + $0x8a] sm:$0xff]
    %v5142 = vld [vmem:[#allocation3 + $0x92] sm:$0xff]
    %v5143 = vld [vmem:[#allocation3 + $0x9a] sm:$0xff]
    %v5144 = vld [vmem:[#allocation3 + $0xa2] sm:$0xff]
    %v5145 = vld [vmem:[#allocation3 + $0xaa] sm:$0xff]
    %v5146 = vld [vmem:[#allocation3 + $0xb2] sm:$0xff]
    %v5147 = vld [vmem:[#allocation3 + $0xba] sm:$0xff]
    %v5148 = vld [vmem:[#allocation3 + $0xc2] sm:$0xff]
    %v5149 = vld [vmem:[#allocation6] sm:$0xff]
    %v5150 = vld [vmem:[#allocation6 + $0x8] sm:$0xff]
    %v5151 = vld [vmem:[#allocation6 + $0x10] sm:$0xff]
    %v5152 = vld [vmem:[#allocation6 + $0x18] sm:$0xff]
    %v5153 = vld [vmem:[#allocation6 + $0x20] sm:$0xff]
    %v5154 = vld [vmem:[#allocation6 + $0x28] sm:$0xff]
    %v5155 = vld [vmem:[#allocation6 + $0x30] sm:$0xff]
    %v5156 = vld [vmem:[#allocation6 + $0x38] sm:$0xff]
    %v5157 = vld [vmem:[#allocation3 + $0x4] sm:$0xff]
    %v5158 = vld [vmem:[#allocation3 + $0xc] sm:$0xff]
    %v5159 = vld [vmem:[#allocation3 + $0x14] sm:$0xff]
    %v5160 = vld [vmem:[#allocation3 + $0x1c] sm:$0xff]
    %v5161 = vld [vmem:[#allocation3 + $0x24] sm:$0xff]
    %v5162 = vld [vmem:[#allocation3 + $0x2c] sm:$0xff]
    %v5163 = vld [vmem:[#allocation3 + $0x34] sm:$0xff]
    %v5164 = vld [vmem:[#allocation3 + $0x3c] sm:$0xff]
    %v5165 = vld [vmem:[#allocation3 + $0x44] sm:$0xff]
    %v5166 = vld [vmem:[#allocation3 + $0x4c] sm:$0xff]
    %v5167 = vld [vmem:[#allocation3 + $0x54] sm:$0xff]
    %v5168 = vld [vmem:[#allocation3 + $0x5c] sm:$0xff]
    %v5169 = vld [vmem:[#allocation3 + $0x64] sm:$0xff]
    %v5170 = vld [vmem:[#allocation3 + $0x6c] sm:$0xff]
    %v5171 = vld [vmem:[#allocation3 + $0x74] sm:$0xff]
    %v5172 = vld [vmem:[#allocation3 + $0x7c] sm:$0xff]
    %v5173 = vld [vmem:[#allocation3 + $0x84] sm:$0xff]
    %v5174 = vld [vmem:[#allocation3 + $0x8c] sm:$0xff]
    %v5175 = vld [vmem:[#allocation3 + $0x94] sm:$0xff]
    %v5176 = vld [vmem:[#allocation3 + $0x9c] sm:$0xff]
    %v5177 = vld [vmem:[#allocation3 + $0xa4] sm:$0xff]
    %v5178 = vld [vmem:[#allocation3 + $0xac] sm:$0xff]
    %v5179 = vld [vmem:[#allocation3 + $0xb4] sm:$0xff]
    %v5180 = vld [vmem:[#allocation3 + $0xbc] sm:$0xff]
    %v5181 = vld [vmem:[#allocation3 + $0xc4] sm:$0xff]
    %s5182 = scalar_lea.vmem [#allocation6], 64
    %v5183 = vld [vmem:[%s5182] sm:$0xff]
    %v5184 = vld [vmem:[%s5182 + $0x8] sm:$0xff]
    %v5185 = vld [vmem:[%s5182 + $0x10] sm:$0xff]
    %v5186 = vld [vmem:[%s5182 + $0x18] sm:$0xff]
    %v5187 = vld [vmem:[%s5182 + $0x20] sm:$0xff]
    %v5188 = vld [vmem:[%s5182 + $0x28] sm:$0xff]
    %v5189 = vld [vmem:[%s5182 + $0x30] sm:$0xff]
    %v5190 = vld [vmem:[%s5182 + $0x38] sm:$0xff]
    %v5192 = vsel %vm469, %v5157, 0
    %v5195 = vsel %vm469, %v5158, 0
    %v5198 = vsel %vm469, %v5159, 0
    %v5201 = vsel %vm469, %v5160, 0
    %v5204 = vsel %vm469, %v5161, 0
    %v5207 = vsel %vm469, %v5162, 0
    %v5210 = vsel %vm469, %v5163, 0
    %v5213 = vsel %vm469, %v5164, 0
    %v5216 = vsel %vm469, %v5165, 0
    %v5219 = vsel %vm469, %v5166, 0
    %v5222 = vsel %vm469, %v5167, 0
    %v5225 = vsel %vm469, %v5168, 0
    %v5228 = vsel %vm469, %v5169, 0
    %v5231 = vsel %vm469, %v5170, 0
    %v5234 = vsel %vm469, %v5171, 0
    %v5237 = vsel %vm469, %v5172, 0
    %v5240 = vsel %vm469, %v5173, 0
    %v5243 = vsel %vm469, %v5174, 0
    %v5246 = vsel %vm469, %v5175, 0
    %v5249 = vsel %vm469, %v5176, 0
    %v5252 = vsel %vm469, %v5177, 0
    %v5255 = vsel %vm469, %v5178, 0
    %v5258 = vsel %vm469, %v5179, 0
    %v5261 = vsel %vm469, %v5180, 0
    %v5264 = vsel %vm469, %v5181, 0
    %5266 = vmatpush.msra.mxu0 0.0
    %5267 = vmatpush.msra.mxu0 0.0
    %5268 = vmatpush.msra.mxu0 0.0
    %5269 = vmatpush.msra.mxu0 0.0
    %5270 = vmatpush.msra.mxu0 0.0
    %5271 = vmatpush.msra.mxu0 0.0
    %5272 = vmatpush.msra.mxu0 0.0
    %5273 = vmatpush.msra.mxu0 0.0
    %5274 = vmatpush.msra.mxu0 %v5190
    %5275 = vmatpush.msra.mxu0 %v5189
    %5276 = vmatpush.msra.mxu0 %v5188
    %5277 = vmatpush.msra.mxu0 %v5187
    %5278 = vmatpush.msra.mxu0 %v5186
    %5279 = vmatpush.msra.mxu0 %v5185
    %5280 = vmatpush.msra.mxu0 %v5184
    %5281 = vmatpush.msra.mxu0 %v5183
    %5282 = vmatmul.f32.gmra.mxu0 %v5192
    %v5283 = vpop.f32.mrf.mxu0
    %v5284 = vadd.f32 0.0, %v5283
    %5285 = vmatmul.f32.gmra.mxu0 %v5195
    %v5286 = vpop.f32.mrf.mxu0
    %v5287 = vadd.f32 0.0, %v5286
    %5288 = vmatmul.f32.gmra.mxu0 %v5198
    %v5289 = vpop.f32.mrf.mxu0
    %v5290 = vadd.f32 0.0, %v5289
    %5291 = vmatmul.f32.gmra.mxu0 %v5201
    %v5292 = vpop.f32.mrf.mxu0
    %v5293 = vadd.f32 0.0, %v5292
    %5294 = vmatmul.f32.gmra.mxu0 %v5204
    %v5295 = vpop.f32.mrf.mxu0
    %v5296 = vadd.f32 0.0, %v5295
    %5297 = vmatmul.f32.gmra.mxu0 %v5207
    %v5298 = vpop.f32.mrf.mxu0
    %v5299 = vadd.f32 0.0, %v5298
    %5300 = vmatmul.f32.gmra.mxu0 %v5210
    %v5301 = vpop.f32.mrf.mxu0
    %v5302 = vadd.f32 0.0, %v5301
    %5303 = vmatmul.f32.gmra.mxu0 %v5213
    %v5304 = vpop.f32.mrf.mxu0
    %v5305 = vadd.f32 0.0, %v5304
    %5306 = vmatmul.f32.gmra.mxu0 %v5216
    %v5307 = vpop.f32.mrf.mxu0
    %v5308 = vadd.f32 0.0, %v5307
    %5309 = vmatmul.f32.gmra.mxu0 %v5219
    %v5310 = vpop.f32.mrf.mxu0
    %v5311 = vadd.f32 0.0, %v5310
    %5312 = vmatmul.f32.gmra.mxu0 %v5222
    %v5313 = vpop.f32.mrf.mxu0
    %v5314 = vadd.f32 0.0, %v5313
    %5315 = vmatmul.f32.gmra.mxu0 %v5225
    %v5316 = vpop.f32.mrf.mxu0
    %v5317 = vadd.f32 0.0, %v5316
    %5318 = vmatmul.f32.gmra.mxu0 %v5228
    %v5319 = vpop.f32.mrf.mxu0
    %v5320 = vadd.f32 0.0, %v5319
    %5321 = vmatmul.f32.gmra.mxu0 %v5231
    %v5322 = vpop.f32.mrf.mxu0
    %v5323 = vadd.f32 0.0, %v5322
    %5324 = vmatmul.f32.gmra.mxu0 %v5234
    %v5325 = vpop.f32.mrf.mxu0
    %v5326 = vadd.f32 0.0, %v5325
    %5327 = vmatmul.f32.gmra.mxu0 %v5237
    %v5328 = vpop.f32.mrf.mxu0
    %v5329 = vadd.f32 0.0, %v5328
    %5330 = vmatmul.f32.gmra.mxu0 %v5240
    %v5331 = vpop.f32.mrf.mxu0
    %v5332 = vadd.f32 0.0, %v5331
    %5333 = vmatmul.f32.gmra.mxu0 %v5243
    %v5334 = vpop.f32.mrf.mxu0
    %v5335 = vadd.f32 0.0, %v5334
    %5336 = vmatmul.f32.gmra.mxu0 %v5246
    %v5337 = vpop.f32.mrf.mxu0
    %v5338 = vadd.f32 0.0, %v5337
    %5339 = vmatmul.f32.gmra.mxu0 %v5249
    %v5340 = vpop.f32.mrf.mxu0
    %v5341 = vadd.f32 0.0, %v5340
    %5342 = vmatmul.f32.gmra.mxu0 %v5252
    %v5343 = vpop.f32.mrf.mxu0
    %v5344 = vadd.f32 0.0, %v5343
    %5345 = vmatmul.f32.gmra.mxu0 %v5255
    %v5346 = vpop.f32.mrf.mxu0
    %v5347 = vadd.f32 0.0, %v5346
    %5348 = vmatmul.f32.gmra.mxu0 %v5258
    %v5349 = vpop.f32.mrf.mxu0
    %v5350 = vadd.f32 0.0, %v5349
    %5351 = vmatmul.f32.gmra.mxu0 %v5261
    %v5352 = vpop.f32.mrf.mxu0
    %v5353 = vadd.f32 0.0, %v5352
    %5354 = vmatmul.f32.gmra.mxu0 %v5264
    %v5355 = vpop.f32.mrf.mxu0
    %v5356 = vadd.f32 0.0, %v5355
    %5357 = vdwg.mxu0
    %v5359 = vsel %vm469, %v5124, 0
    %v5362 = vsel %vm469, %v5125, 0
    %v5365 = vsel %vm469, %v5126, 0
    %v5368 = vsel %vm469, %v5127, 0
    %v5371 = vsel %vm469, %v5128, 0
    %v5374 = vsel %vm469, %v5129, 0
    %v5377 = vsel %vm469, %v5130, 0
    %v5380 = vsel %vm469, %v5131, 0
    %v5383 = vsel %vm469, %v5132, 0
    %v5386 = vsel %vm469, %v5133, 0
    %v5389 = vsel %vm469, %v5134, 0
    %v5392 = vsel %vm469, %v5135, 0
    %v5395 = vsel %vm469, %v5136, 0
    %v5398 = vsel %vm469, %v5137, 0
    %v5401 = vsel %vm469, %v5138, 0
    %v5404 = vsel %vm469, %v5139, 0
    %v5407 = vsel %vm469, %v5140, 0
    %v5410 = vsel %vm469, %v5141, 0
    %v5413 = vsel %vm469, %v5142, 0
    %v5416 = vsel %vm469, %v5143, 0
    %v5419 = vsel %vm469, %v5144, 0
    %v5422 = vsel %vm469, %v5145, 0
    %v5425 = vsel %vm469, %v5146, 0
    %v5428 = vsel %vm469, %v5147, 0
    %v5431 = vsel %vm469, %v5148, 0
    %5433 = vmatpush.msra.mxu0 0.0
    %5434 = vmatpush.msra.mxu0 0.0
    %5435 = vmatpush.msra.mxu0 0.0
    %5436 = vmatpush.msra.mxu0 0.0
    %5437 = vmatpush.msra.mxu0 0.0
    %5438 = vmatpush.msra.mxu0 0.0
    %5439 = vmatpush.msra.mxu0 0.0
    %5440 = vmatpush.msra.mxu0 0.0
    %5441 = vmatpush.msra.mxu0 %v5156
    %5442 = vmatpush.msra.mxu0 %v5155
    %5443 = vmatpush.msra.mxu0 %v5154
    %5444 = vmatpush.msra.mxu0 %v5153
    %5445 = vmatpush.msra.mxu0 %v5152
    %5446 = vmatpush.msra.mxu0 %v5151
    %5447 = vmatpush.msra.mxu0 %v5150
    %5448 = vmatpush.msra.mxu0 %v5149
    %5449 = vmatmul.f32.gmra.mxu0 %v5359
    %v5450 = vpop.f32.mrf.mxu0
    %v5451 = vadd.f32 %v5284, %v5450
    %5452 = vmatmul.f32.gmra.mxu0 %v5362
    %v5453 = vpop.f32.mrf.mxu0
    %v5454 = vadd.f32 %v5287, %v5453
    %5455 = vmatmul.f32.gmra.mxu0 %v5365
    %v5456 = vpop.f32.mrf.mxu0
    %v5457 = vadd.f32 %v5290, %v5456
    %5458 = vmatmul.f32.gmra.mxu0 %v5368
    %v5459 = vpop.f32.mrf.mxu0
    %v5460 = vadd.f32 %v5293, %v5459
    %5461 = vmatmul.f32.gmra.mxu0 %v5371
    %v5462 = vpop.f32.mrf.mxu0
    %v5463 = vadd.f32 %v5296, %v5462
    %5464 = vmatmul.f32.gmra.mxu0 %v5374
    %v5465 = vpop.f32.mrf.mxu0
    %v5466 = vadd.f32 %v5299, %v5465
    %5467 = vmatmul.f32.gmra.mxu0 %v5377
    %v5468 = vpop.f32.mrf.mxu0
    %v5469 = vadd.f32 %v5302, %v5468
    %5470 = vmatmul.f32.gmra.mxu0 %v5380
    %v5471 = vpop.f32.mrf.mxu0
    %v5472 = vadd.f32 %v5305, %v5471
    %5473 = vmatmul.f32.gmra.mxu0 %v5383
    %v5474 = vpop.f32.mrf.mxu0
    %v5475 = vadd.f32 %v5308, %v5474
    %5476 = vmatmul.f32.gmra.mxu0 %v5386
    %v5477 = vpop.f32.mrf.mxu0
    %v5478 = vadd.f32 %v5311, %v5477
    %5479 = vmatmul.f32.gmra.mxu0 %v5389
    %v5480 = vpop.f32.mrf.mxu0
    %v5481 = vadd.f32 %v5314, %v5480
    %5482 = vmatmul.f32.gmra.mxu0 %v5392
    %v5483 = vpop.f32.mrf.mxu0
    %v5484 = vadd.f32 %v5317, %v5483
    %5485 = vmatmul.f32.gmra.mxu0 %v5395
    %v5486 = vpop.f32.mrf.mxu0
    %v5487 = vadd.f32 %v5320, %v5486
    %5488 = vmatmul.f32.gmra.mxu0 %v5398
    %v5489 = vpop.f32.mrf.mxu0
    %v5490 = vadd.f32 %v5323, %v5489
    %5491 = vmatmul.f32.gmra.mxu0 %v5401
    %v5492 = vpop.f32.mrf.mxu0
    %v5493 = vadd.f32 %v5326, %v5492
    %5494 = vmatmul.f32.gmra.mxu0 %v5404
    %v5495 = vpop.f32.mrf.mxu0
    %v5496 = vadd.f32 %v5329, %v5495
    %5497 = vmatmul.f32.gmra.mxu0 %v5407
    %v5498 = vpop.f32.mrf.mxu0
    %v5499 = vadd.f32 %v5332, %v5498
    %5500 = vmatmul.f32.gmra.mxu0 %v5410
    %v5501 = vpop.f32.mrf.mxu0
    %v5502 = vadd.f32 %v5335, %v5501
    %5503 = vmatmul.f32.gmra.mxu0 %v5413
    %v5504 = vpop.f32.mrf.mxu0
    %v5505 = vadd.f32 %v5338, %v5504
    %5506 = vmatmul.f32.gmra.mxu0 %v5416
    %v5507 = vpop.f32.mrf.mxu0
    %v5508 = vadd.f32 %v5341, %v5507
    %5509 = vmatmul.f32.gmra.mxu0 %v5419
    %v5510 = vpop.f32.mrf.mxu0
    %v5511 = vadd.f32 %v5344, %v5510
    %5512 = vmatmul.f32.gmra.mxu0 %v5422
    %v5513 = vpop.f32.mrf.mxu0
    %v5514 = vadd.f32 %v5347, %v5513
    %5515 = vmatmul.f32.gmra.mxu0 %v5425
    %v5516 = vpop.f32.mrf.mxu0
    %v5517 = vadd.f32 %v5350, %v5516
    %5518 = vmatmul.f32.gmra.mxu0 %v5428
    %v5519 = vpop.f32.mrf.mxu0
    %v5520 = vadd.f32 %v5353, %v5519
    %5521 = vmatmul.f32.gmra.mxu0 %v5431
    %v5522 = vpop.f32.mrf.mxu0
    %v5523 = vadd.f32 %v5356, %v5522
    %5524 = vdwg.mxu0
    %v5525 = vld [vmem:[#allocation3 + $0x6] sm:$0xff]
    %v5526 = vld [vmem:[#allocation3 + $0xe] sm:$0xff]
    %v5527 = vld [vmem:[#allocation3 + $0x16] sm:$0xff]
    %v5528 = vld [vmem:[#allocation3 + $0x1e] sm:$0xff]
    %v5529 = vld [vmem:[#allocation3 + $0x26] sm:$0xff]
    %v5530 = vld [vmem:[#allocation3 + $0x2e] sm:$0xff]
    %v5531 = vld [vmem:[#allocation3 + $0x36] sm:$0xff]
    %v5532 = vld [vmem:[#allocation3 + $0x3e] sm:$0xff]
    %v5533 = vld [vmem:[#allocation3 + $0x46] sm:$0xff]
    %v5534 = vld [vmem:[#allocation3 + $0x4e] sm:$0xff]
    %v5535 = vld [vmem:[#allocation3 + $0x56] sm:$0xff]
    %v5536 = vld [vmem:[#allocation3 + $0x5e] sm:$0xff]
    %v5537 = vld [vmem:[#allocation3 + $0x66] sm:$0xff]
    %v5538 = vld [vmem:[#allocation3 + $0x6e] sm:$0xff]
    %v5539 = vld [vmem:[#allocation3 + $0x76] sm:$0xff]
    %v5540 = vld [vmem:[#allocation3 + $0x7e] sm:$0xff]
    %v5541 = vld [vmem:[#allocation3 + $0x86] sm:$0xff]
    %v5542 = vld [vmem:[#allocation3 + $0x8e] sm:$0xff]
    %v5543 = vld [vmem:[#allocation3 + $0x96] sm:$0xff]
    %v5544 = vld [vmem:[#allocation3 + $0x9e] sm:$0xff]
    %v5545 = vld [vmem:[#allocation3 + $0xa6] sm:$0xff]
    %v5546 = vld [vmem:[#allocation3 + $0xae] sm:$0xff]
    %v5547 = vld [vmem:[#allocation3 + $0xb6] sm:$0xff]
    %v5548 = vld [vmem:[#allocation3 + $0xbe] sm:$0xff]
    %v5549 = vld [vmem:[#allocation3 + $0xc6] sm:$0xff]
    %s5550 = scalar_lea.vmem [#allocation6], 128
    %v5551 = vld [vmem:[%s5550] sm:$0xff]
    %v5552 = vld [vmem:[%s5550 + $0x8] sm:$0xff]
    %v5553 = vld [vmem:[%s5550 + $0x10] sm:$0xff]
    %v5554 = vld [vmem:[%s5550 + $0x18] sm:$0xff]
    %v5555 = vld [vmem:[%s5550 + $0x20] sm:$0xff]
    %v5556 = vld [vmem:[%s5550 + $0x28] sm:$0xff]
    %v5557 = vld [vmem:[%s5550 + $0x30] sm:$0xff]
    %v5558 = vld [vmem:[%s5550 + $0x38] sm:$0xff]
    %v5560 = vsel %vm469, %v5525, 0
    %v5563 = vsel %vm469, %v5526, 0
    %v5566 = vsel %vm469, %v5527, 0
    %v5569 = vsel %vm469, %v5528, 0
    %v5572 = vsel %vm469, %v5529, 0
    %v5575 = vsel %vm469, %v5530, 0
    %v5578 = vsel %vm469, %v5531, 0
    %v5581 = vsel %vm469, %v5532, 0
    %v5584 = vsel %vm469, %v5533, 0
    %v5587 = vsel %vm469, %v5534, 0
    %v5590 = vsel %vm469, %v5535, 0
    %v5593 = vsel %vm469, %v5536, 0
    %v5596 = vsel %vm469, %v5537, 0
    %v5599 = vsel %vm469, %v5538, 0
    %v5602 = vsel %vm469, %v5539, 0
    %v5605 = vsel %vm469, %v5540, 0
    %v5608 = vsel %vm469, %v5541, 0
    %v5611 = vsel %vm469, %v5542, 0
    %v5614 = vsel %vm469, %v5543, 0
    %v5617 = vsel %vm469, %v5544, 0
    %v5620 = vsel %vm469, %v5545, 0
    %v5623 = vsel %vm469, %v5546, 0
    %v5626 = vsel %vm469, %v5547, 0
    %v5629 = vsel %vm469, %v5548, 0
    %v5632 = vsel %vm469, %v5549, 0
    %5634 = vmatpush.msra.mxu0 0.0
    %5635 = vmatpush.msra.mxu0 0.0
    %5636 = vmatpush.msra.mxu0 0.0
    %5637 = vmatpush.msra.mxu0 0.0
    %5638 = vmatpush.msra.mxu0 0.0
    %5639 = vmatpush.msra.mxu0 0.0
    %5640 = vmatpush.msra.mxu0 0.0
    %5641 = vmatpush.msra.mxu0 0.0
    %5642 = vmatpush.msra.mxu0 %v5558
    %5643 = vmatpush.msra.mxu0 %v5557
    %5644 = vmatpush.msra.mxu0 %v5556
    %5645 = vmatpush.msra.mxu0 %v5555
    %5646 = vmatpush.msra.mxu0 %v5554
    %5647 = vmatpush.msra.mxu0 %v5553
    %5648 = vmatpush.msra.mxu0 %v5552
    %5649 = vmatpush.msra.mxu0 %v5551
    %5650 = vmatmul.f32.gmra.mxu0 %v5560
    %v5651 = vpop.f32.mrf.mxu0
    %v5652 = vadd.f32 0.0, %v5651
    %5653 = vmatmul.f32.gmra.mxu0 %v5563
    %v5654 = vpop.f32.mrf.mxu0
    %v5655 = vadd.f32 0.0, %v5654
    %5656 = vmatmul.f32.gmra.mxu0 %v5566
    %v5657 = vpop.f32.mrf.mxu0
    %v5658 = vadd.f32 0.0, %v5657
    %5659 = vmatmul.f32.gmra.mxu0 %v5569
    %v5660 = vpop.f32.mrf.mxu0
    %v5661 = vadd.f32 0.0, %v5660
    %5662 = vmatmul.f32.gmra.mxu0 %v5572
    %v5663 = vpop.f32.mrf.mxu0
    %v5664 = vadd.f32 0.0, %v5663
    %5665 = vmatmul.f32.gmra.mxu0 %v5575
    %v5666 = vpop.f32.mrf.mxu0
    %v5667 = vadd.f32 0.0, %v5666
    %5668 = vmatmul.f32.gmra.mxu0 %v5578
    %v5669 = vpop.f32.mrf.mxu0
    %v5670 = vadd.f32 0.0, %v5669
    %5671 = vmatmul.f32.gmra.mxu0 %v5581
    %v5672 = vpop.f32.mrf.mxu0
    %v5673 = vadd.f32 0.0, %v5672
    %5674 = vmatmul.f32.gmra.mxu0 %v5584
    %v5675 = vpop.f32.mrf.mxu0
    %v5676 = vadd.f32 0.0, %v5675
    %5677 = vmatmul.f32.gmra.mxu0 %v5587
    %v5678 = vpop.f32.mrf.mxu0
    %v5679 = vadd.f32 0.0, %v5678
    %5680 = vmatmul.f32.gmra.mxu0 %v5590
    %v5681 = vpop.f32.mrf.mxu0
    %v5682 = vadd.f32 0.0, %v5681
    %5683 = vmatmul.f32.gmra.mxu0 %v5593
    %v5684 = vpop.f32.mrf.mxu0
    %v5685 = vadd.f32 0.0, %v5684
    %5686 = vmatmul.f32.gmra.mxu0 %v5596
    %v5687 = vpop.f32.mrf.mxu0
    %v5688 = vadd.f32 0.0, %v5687
    %5689 = vmatmul.f32.gmra.mxu0 %v5599
    %v5690 = vpop.f32.mrf.mxu0
    %v5691 = vadd.f32 0.0, %v5690
    %5692 = vmatmul.f32.gmra.mxu0 %v5602
    %v5693 = vpop.f32.mrf.mxu0
    %v5694 = vadd.f32 0.0, %v5693
    %5695 = vmatmul.f32.gmra.mxu0 %v5605
    %v5696 = vpop.f32.mrf.mxu0
    %v5697 = vadd.f32 0.0, %v5696
    %5698 = vmatmul.f32.gmra.mxu0 %v5608
    %v5699 = vpop.f32.mrf.mxu0
    %v5700 = vadd.f32 0.0, %v5699
    %5701 = vmatmul.f32.gmra.mxu0 %v5611
    %v5702 = vpop.f32.mrf.mxu0
    %v5703 = vadd.f32 0.0, %v5702
    %5704 = vmatmul.f32.gmra.mxu0 %v5614
    %v5705 = vpop.f32.mrf.mxu0
    %v5706 = vadd.f32 0.0, %v5705
    %5707 = vmatmul.f32.gmra.mxu0 %v5617
    %v5708 = vpop.f32.mrf.mxu0
    %v5709 = vadd.f32 0.0, %v5708
    %5710 = vmatmul.f32.gmra.mxu0 %v5620
    %v5711 = vpop.f32.mrf.mxu0
    %v5712 = vadd.f32 0.0, %v5711
    %5713 = vmatmul.f32.gmra.mxu0 %v5623
    %v5714 = vpop.f32.mrf.mxu0
    %v5715 = vadd.f32 0.0, %v5714
    %5716 = vmatmul.f32.gmra.mxu0 %v5626
    %v5717 = vpop.f32.mrf.mxu0
    %v5718 = vadd.f32 0.0, %v5717
    %5719 = vmatmul.f32.gmra.mxu0 %v5629
    %v5720 = vpop.f32.mrf.mxu0
    %v5721 = vadd.f32 0.0, %v5720
    %5722 = vmatmul.f32.gmra.mxu0 %v5632
    %v5723 = vpop.f32.mrf.mxu0
    %v5724 = vadd.f32 0.0, %v5723
    %5725 = vdwg.mxu0
    %v5726 = vadd.f32 %v5451, %v5652
    %v5727 = vadd.f32 %v5454, %v5655
    %v5728 = vadd.f32 %v5457, %v5658
    %v5729 = vadd.f32 %v5460, %v5661
    %v5730 = vadd.f32 %v5463, %v5664
    %v5731 = vadd.f32 %v5466, %v5667
    %v5732 = vadd.f32 %v5469, %v5670
    %v5733 = vadd.f32 %v5472, %v5673
    %v5734 = vadd.f32 %v5475, %v5676
    %v5735 = vadd.f32 %v5478, %v5679
    %v5736 = vadd.f32 %v5481, %v5682
    %v5737 = vadd.f32 %v5484, %v5685
    %v5738 = vadd.f32 %v5487, %v5688
    %v5739 = vadd.f32 %v5490, %v5691
    %v5740 = vadd.f32 %v5493, %v5694
    %v5741 = vadd.f32 %v5496, %v5697
    %v5742 = vadd.f32 %v5499, %v5700
    %v5743 = vadd.f32 %v5502, %v5703
    %v5744 = vadd.f32 %v5505, %v5706
    %v5745 = vadd.f32 %v5508, %v5709
    %v5746 = vadd.f32 %v5511, %v5712
    %v5747 = vadd.f32 %v5514, %v5715
    %v5748 = vadd.f32 %v5517, %v5718
    %v5749 = vadd.f32 %v5520, %v5721
    %v5750 = vadd.f32 %v5523, %v5724
    %v5751 = vld [vmem:[#allocation3 + $0x16] sm:$0xff]
    %v5752 = vld [vmem:[#allocation3 + $0x1e] sm:$0xff]
    %v5753 = vld [vmem:[#allocation3 + $0x26] sm:$0xff]
    %v5754 = vld [vmem:[#allocation3 + $0x2e] sm:$0xff]
    %v5755 = vld [vmem:[#allocation3 + $0x36] sm:$0xff]
    %v5756 = vld [vmem:[#allocation3 + $0x3e] sm:$0xff]
    %v5757 = vld [vmem:[#allocation3 + $0x46] sm:$0xff]
    %v5758 = vld [vmem:[#allocation3 + $0x4e] sm:$0xff]
    %v5759 = vld [vmem:[#allocation3 + $0x56] sm:$0xff]
    %v5760 = vld [vmem:[#allocation3 + $0x5e] sm:$0xff]
    %v5761 = vld [vmem:[#allocation3 + $0x66] sm:$0xff]
    %v5762 = vld [vmem:[#allocation3 + $0x6e] sm:$0xff]
    %v5763 = vld [vmem:[#allocation3 + $0x76] sm:$0xff]
    %v5764 = vld [vmem:[#allocation3 + $0x7e] sm:$0xff]
    %v5765 = vld [vmem:[#allocation3 + $0x86] sm:$0xff]
    %v5766 = vld [vmem:[#allocation3 + $0x8e] sm:$0xff]
    %v5767 = vld [vmem:[#allocation3 + $0x96] sm:$0xff]
    %v5768 = vld [vmem:[#allocation3 + $0x9e] sm:$0xff]
    %v5769 = vld [vmem:[#allocation3 + $0xa6] sm:$0xff]
    %v5770 = vld [vmem:[#allocation3 + $0xae] sm:$0xff]
    %v5771 = vld [vmem:[#allocation3 + $0xb6] sm:$0xff]
    %v5772 = vld [vmem:[#allocation3 + $0xbe] sm:$0xff]
    %v5773 = vld [vmem:[#allocation3 + $0xc6] sm:$0xff]
    %v5774 = vld [vmem:[#allocation3 + $0xce] sm:$0xff]
    %v5775 = vld [vmem:[#allocation3 + $0xd6] sm:$0xff]
    %s5776 = scalar_lea.vmem [#allocation6], 192
    %v5777 = vld [vmem:[%s5776] sm:$0xff]
    %v5778 = vld [vmem:[%s5776 + $0x8] sm:$0xff]
    %v5779 = vld [vmem:[%s5776 + $0x10] sm:$0xff]
    %v5780 = vld [vmem:[%s5776 + $0x18] sm:$0xff]
    %v5781 = vld [vmem:[%s5776 + $0x20] sm:$0xff]
    %v5782 = vld [vmem:[%s5776 + $0x28] sm:$0xff]
    %v5783 = vld [vmem:[%s5776 + $0x30] sm:$0xff]
    %v5784 = vld [vmem:[%s5776 + $0x38] sm:$0xff]
    %v5786 = vsel %vm469, %v5751, 0
    %v5789 = vsel %vm469, %v5752, 0
    %v5792 = vsel %vm469, %v5753, 0
    %v5795 = vsel %vm469, %v5754, 0
    %v5798 = vsel %vm469, %v5755, 0
    %v5801 = vsel %vm469, %v5756, 0
    %v5804 = vsel %vm469, %v5757, 0
    %v5807 = vsel %vm469, %v5758, 0
    %v5810 = vsel %vm469, %v5759, 0
    %v5813 = vsel %vm469, %v5760, 0
    %v5816 = vsel %vm469, %v5761, 0
    %v5819 = vsel %vm469, %v5762, 0
    %v5822 = vsel %vm469, %v5763, 0
    %v5825 = vsel %vm469, %v5764, 0
    %v5828 = vsel %vm469, %v5765, 0
    %v5831 = vsel %vm469, %v5766, 0
    %v5834 = vsel %vm469, %v5767, 0
    %v5837 = vsel %vm469, %v5768, 0
    %v5840 = vsel %vm469, %v5769, 0
    %v5843 = vsel %vm469, %v5770, 0
    %v5846 = vsel %vm469, %v5771, 0
    %v5849 = vsel %vm469, %v5772, 0
    %v5852 = vsel %vm469, %v5773, 0
    %v5855 = vsel %vm469, %v5774, 0
    %v5858 = vsel %vm469, %v5775, 0
    %5860 = vmatpush.msra.mxu0 0.0
    %5861 = vmatpush.msra.mxu0 0.0
    %5862 = vmatpush.msra.mxu0 0.0
    %5863 = vmatpush.msra.mxu0 0.0
    %5864 = vmatpush.msra.mxu0 0.0
    %5865 = vmatpush.msra.mxu0 0.0
    %5866 = vmatpush.msra.mxu0 0.0
    %5867 = vmatpush.msra.mxu0 0.0
    %5868 = vmatpush.msra.mxu0 %v5784
    %5869 = vmatpush.msra.mxu0 %v5783
    %5870 = vmatpush.msra.mxu0 %v5782
    %5871 = vmatpush.msra.mxu0 %v5781
    %5872 = vmatpush.msra.mxu0 %v5780
    %5873 = vmatpush.msra.mxu0 %v5779
    %5874 = vmatpush.msra.mxu0 %v5778
    %5875 = vmatpush.msra.mxu0 %v5777
    %5876 = vmatmul.f32.gmra.mxu0 %v5786
    %v5877 = vpop.f32.mrf.mxu0
    %v5878 = vadd.f32 0.0, %v5877
    %5879 = vmatmul.f32.gmra.mxu0 %v5789
    %v5880 = vpop.f32.mrf.mxu0
    %v5881 = vadd.f32 0.0, %v5880
    %5882 = vmatmul.f32.gmra.mxu0 %v5792
    %v5883 = vpop.f32.mrf.mxu0
    %v5884 = vadd.f32 0.0, %v5883
    %5885 = vmatmul.f32.gmra.mxu0 %v5795
    %v5886 = vpop.f32.mrf.mxu0
    %v5887 = vadd.f32 0.0, %v5886
    %5888 = vmatmul.f32.gmra.mxu0 %v5798
    %v5889 = vpop.f32.mrf.mxu0
    %v5890 = vadd.f32 0.0, %v5889
    %5891 = vmatmul.f32.gmra.mxu0 %v5801
    %v5892 = vpop.f32.mrf.mxu0
    %v5893 = vadd.f32 0.0, %v5892
    %5894 = vmatmul.f32.gmra.mxu0 %v5804
    %v5895 = vpop.f32.mrf.mxu0
    %v5896 = vadd.f32 0.0, %v5895
    %5897 = vmatmul.f32.gmra.mxu0 %v5807
    %v5898 = vpop.f32.mrf.mxu0
    %v5899 = vadd.f32 0.0, %v5898
    %5900 = vmatmul.f32.gmra.mxu0 %v5810
    %v5901 = vpop.f32.mrf.mxu0
    %v5902 = vadd.f32 0.0, %v5901
    %5903 = vmatmul.f32.gmra.mxu0 %v5813
    %v5904 = vpop.f32.mrf.mxu0
    %v5905 = vadd.f32 0.0, %v5904
    %5906 = vmatmul.f32.gmra.mxu0 %v5816
    %v5907 = vpop.f32.mrf.mxu0
    %v5908 = vadd.f32 0.0, %v5907
    %5909 = vmatmul.f32.gmra.mxu0 %v5819
    %v5910 = vpop.f32.mrf.mxu0
    %v5911 = vadd.f32 0.0, %v5910
    %5912 = vmatmul.f32.gmra.mxu0 %v5822
    %v5913 = vpop.f32.mrf.mxu0
    %v5914 = vadd.f32 0.0, %v5913
    %5915 = vmatmul.f32.gmra.mxu0 %v5825
    %v5916 = vpop.f32.mrf.mxu0
    %v5917 = vadd.f32 0.0, %v5916
    %5918 = vmatmul.f32.gmra.mxu0 %v5828
    %v5919 = vpop.f32.mrf.mxu0
    %v5920 = vadd.f32 0.0, %v5919
    %5921 = vmatmul.f32.gmra.mxu0 %v5831
    %v5922 = vpop.f32.mrf.mxu0
    %v5923 = vadd.f32 0.0, %v5922
    %5924 = vmatmul.f32.gmra.mxu0 %v5834
    %v5925 = vpop.f32.mrf.mxu0
    %v5926 = vadd.f32 0.0, %v5925
    %5927 = vmatmul.f32.gmra.mxu0 %v5837
    %v5928 = vpop.f32.mrf.mxu0
    %v5929 = vadd.f32 0.0, %v5928
    %5930 = vmatmul.f32.gmra.mxu0 %v5840
    %v5931 = vpop.f32.mrf.mxu0
    %v5932 = vadd.f32 0.0, %v5931
    %5933 = vmatmul.f32.gmra.mxu0 %v5843
    %v5934 = vpop.f32.mrf.mxu0
    %v5935 = vadd.f32 0.0, %v5934
    %5936 = vmatmul.f32.gmra.mxu0 %v5846
    %v5937 = vpop.f32.mrf.mxu0
    %v5938 = vadd.f32 0.0, %v5937
    %5939 = vmatmul.f32.gmra.mxu0 %v5849
    %v5940 = vpop.f32.mrf.mxu0
    %v5941 = vadd.f32 0.0, %v5940
    %5942 = vmatmul.f32.gmra.mxu0 %v5852
    %v5943 = vpop.f32.mrf.mxu0
    %v5944 = vadd.f32 0.0, %v5943
    %5945 = vmatmul.f32.gmra.mxu0 %v5855
    %v5946 = vpop.f32.mrf.mxu0
    %v5947 = vadd.f32 0.0, %v5946
    %5948 = vmatmul.f32.gmra.mxu0 %v5858
    %v5949 = vpop.f32.mrf.mxu0
    %v5950 = vadd.f32 0.0, %v5949
    %5951 = vdwg.mxu0
    %v5952 = vadd.f32 %v5726, %v5878
    %v5953 = vadd.f32 %v5727, %v5881
    %v5954 = vadd.f32 %v5728, %v5884
    %v5955 = vadd.f32 %v5729, %v5887
    %v5956 = vadd.f32 %v5730, %v5890
    %v5957 = vadd.f32 %v5731, %v5893
    %v5958 = vadd.f32 %v5732, %v5896
    %v5959 = vadd.f32 %v5733, %v5899
    %v5960 = vadd.f32 %v5734, %v5902
    %v5961 = vadd.f32 %v5735, %v5905
    %v5962 = vadd.f32 %v5736, %v5908
    %v5963 = vadd.f32 %v5737, %v5911
    %v5964 = vadd.f32 %v5738, %v5914
    %v5965 = vadd.f32 %v5739, %v5917
    %v5966 = vadd.f32 %v5740, %v5920
    %v5967 = vadd.f32 %v5741, %v5923
    %v5968 = vadd.f32 %v5742, %v5926
    %v5969 = vadd.f32 %v5743, %v5929
    %v5970 = vadd.f32 %v5744, %v5932
    %v5971 = vadd.f32 %v5745, %v5935
    %v5972 = vadd.f32 %v5746, %v5938
    %v5973 = vadd.f32 %v5747, %v5941
    %v5974 = vadd.f32 %v5748, %v5944
    %v5975 = vadd.f32 %v5749, %v5947
    %v5976 = vadd.f32 %v5750, %v5950
    %v5977 = vld [vmem:[#allocation3 + $0x18] sm:$0xff]
    %v5978 = vld [vmem:[#allocation3 + $0x20] sm:$0xff]
    %v5979 = vld [vmem:[#allocation3 + $0x28] sm:$0xff]
    %v5980 = vld [vmem:[#allocation3 + $0x30] sm:$0xff]
    %v5981 = vld [vmem:[#allocation3 + $0x38] sm:$0xff]
    %v5982 = vld [vmem:[#allocation3 + $0x40] sm:$0xff]
    %v5983 = vld [vmem:[#allocation3 + $0x48] sm:$0xff]
    %v5984 = vld [vmem:[#allocation3 + $0x50] sm:$0xff]
    %v5985 = vld [vmem:[#allocation3 + $0x58] sm:$0xff]
    %v5986 = vld [vmem:[#allocation3 + $0x60] sm:$0xff]
    %v5987 = vld [vmem:[#allocation3 + $0x68] sm:$0xff]
    %v5988 = vld [vmem:[#allocation3 + $0x70] sm:$0xff]
    %v5989 = vld [vmem:[#allocation3 + $0x78] sm:$0xff]
    %v5990 = vld [vmem:[#allocation3 + $0x80] sm:$0xff]
    %v5991 = vld [vmem:[#allocation3 + $0x88] sm:$0xff]
    %v5992 = vld [vmem:[#allocation3 + $0x90] sm:$0xff]
    %v5993 = vld [vmem:[#allocation3 + $0x98] sm:$0xff]
    %v5994 = vld [vmem:[#allocation3 + $0xa0] sm:$0xff]
    %v5995 = vld [vmem:[#allocation3 + $0xa8] sm:$0xff]
    %v5996 = vld [vmem:[#allocation3 + $0xb0] sm:$0xff]
    %v5997 = vld [vmem:[#allocation3 + $0xb8] sm:$0xff]
    %v5998 = vld [vmem:[#allocation3 + $0xc0] sm:$0xff]
    %v5999 = vld [vmem:[#allocation3 + $0xc8] sm:$0xff]
    %v6000 = vld [vmem:[#allocation3 + $0xd0] sm:$0xff]
    %v6001 = vld [vmem:[#allocation3 + $0xd8] sm:$0xff]
    %s6002 = scalar_lea.vmem [#allocation6], 256
    %v6003 = vld [vmem:[%s6002] sm:$0xff]
    %v6004 = vld [vmem:[%s6002 + $0x8] sm:$0xff]
    %v6005 = vld [vmem:[%s6002 + $0x10] sm:$0xff]
    %v6006 = vld [vmem:[%s6002 + $0x18] sm:$0xff]
    %v6007 = vld [vmem:[%s6002 + $0x20] sm:$0xff]
    %v6008 = vld [vmem:[%s6002 + $0x28] sm:$0xff]
    %v6009 = vld [vmem:[%s6002 + $0x30] sm:$0xff]
    %v6010 = vld [vmem:[%s6002 + $0x38] sm:$0xff]
    %v6012 = vsel %vm469, %v5977, 0
    %v6015 = vsel %vm469, %v5978, 0
    %v6018 = vsel %vm469, %v5979, 0
    %v6021 = vsel %vm469, %v5980, 0
    %v6024 = vsel %vm469, %v5981, 0
    %v6027 = vsel %vm469, %v5982, 0
    %v6030 = vsel %vm469, %v5983, 0
    %v6033 = vsel %vm469, %v5984, 0
    %v6036 = vsel %vm469, %v5985, 0
    %v6039 = vsel %vm469, %v5986, 0
    %v6042 = vsel %vm469, %v5987, 0
    %v6045 = vsel %vm469, %v5988, 0
    %v6048 = vsel %vm469, %v5989, 0
    %v6051 = vsel %vm469, %v5990, 0
    %v6054 = vsel %vm469, %v5991, 0
    %v6057 = vsel %vm469, %v5992, 0
    %v6060 = vsel %vm469, %v5993, 0
    %v6063 = vsel %vm469, %v5994, 0
    %v6066 = vsel %vm469, %v5995, 0
    %v6069 = vsel %vm469, %v5996, 0
    %v6072 = vsel %vm469, %v5997, 0
    %v6075 = vsel %vm469, %v5998, 0
    %v6078 = vsel %vm469, %v5999, 0
    %v6081 = vsel %vm469, %v6000, 0
    %v6084 = vsel %vm469, %v6001, 0
    %6086 = vmatpush.msra.mxu0 0.0
    %6087 = vmatpush.msra.mxu0 0.0
    %6088 = vmatpush.msra.mxu0 0.0
    %6089 = vmatpush.msra.mxu0 0.0
    %6090 = vmatpush.msra.mxu0 0.0
    %6091 = vmatpush.msra.mxu0 0.0
    %6092 = vmatpush.msra.mxu0 0.0
    %6093 = vmatpush.msra.mxu0 0.0
    %6094 = vmatpush.msra.mxu0 %v6010
    %6095 = vmatpush.msra.mxu0 %v6009
    %6096 = vmatpush.msra.mxu0 %v6008
    %6097 = vmatpush.msra.mxu0 %v6007
    %6098 = vmatpush.msra.mxu0 %v6006
    %6099 = vmatpush.msra.mxu0 %v6005
    %6100 = vmatpush.msra.mxu0 %v6004
    %6101 = vmatpush.msra.mxu0 %v6003
    %6102 = vmatmul.f32.gmra.mxu0 %v6012
    %v6103 = vpop.f32.mrf.mxu0
    %v6104 = vadd.f32 0.0, %v6103
    %6105 = vmatmul.f32.gmra.mxu0 %v6015
    %v6106 = vpop.f32.mrf.mxu0
    %v6107 = vadd.f32 0.0, %v6106
    %6108 = vmatmul.f32.gmra.mxu0 %v6018
    %v6109 = vpop.f32.mrf.mxu0
    %v6110 = vadd.f32 0.0, %v6109
    %6111 = vmatmul.f32.gmra.mxu0 %v6021
    %v6112 = vpop.f32.mrf.mxu0
    %v6113 = vadd.f32 0.0, %v6112
    %6114 = vmatmul.f32.gmra.mxu0 %v6024
    %v6115 = vpop.f32.mrf.mxu0
    %v6116 = vadd.f32 0.0, %v6115
    %6117 = vmatmul.f32.gmra.mxu0 %v6027
    %v6118 = vpop.f32.mrf.mxu0
    %v6119 = vadd.f32 0.0, %v6118
    %6120 = vmatmul.f32.gmra.mxu0 %v6030
    %v6121 = vpop.f32.mrf.mxu0
    %v6122 = vadd.f32 0.0, %v6121
    %6123 = vmatmul.f32.gmra.mxu0 %v6033
    %v6124 = vpop.f32.mrf.mxu0
    %v6125 = vadd.f32 0.0, %v6124
    %6126 = vmatmul.f32.gmra.mxu0 %v6036
    %v6127 = vpop.f32.mrf.mxu0
    %v6128 = vadd.f32 0.0, %v6127
    %6129 = vmatmul.f32.gmra.mxu0 %v6039
    %v6130 = vpop.f32.mrf.mxu0
    %v6131 = vadd.f32 0.0, %v6130
    %6132 = vmatmul.f32.gmra.mxu0 %v6042
    %v6133 = vpop.f32.mrf.mxu0
    %v6134 = vadd.f32 0.0, %v6133
    %6135 = vmatmul.f32.gmra.mxu0 %v6045
    %v6136 = vpop.f32.mrf.mxu0
    %v6137 = vadd.f32 0.0, %v6136
    %6138 = vmatmul.f32.gmra.mxu0 %v6048
    %v6139 = vpop.f32.mrf.mxu0
    %v6140 = vadd.f32 0.0, %v6139
    %6141 = vmatmul.f32.gmra.mxu0 %v6051
    %v6142 = vpop.f32.mrf.mxu0
    %v6143 = vadd.f32 0.0, %v6142
    %6144 = vmatmul.f32.gmra.mxu0 %v6054
    %v6145 = vpop.f32.mrf.mxu0
    %v6146 = vadd.f32 0.0, %v6145
    %6147 = vmatmul.f32.gmra.mxu0 %v6057
    %v6148 = vpop.f32.mrf.mxu0
    %v6149 = vadd.f32 0.0, %v6148
    %6150 = vmatmul.f32.gmra.mxu0 %v6060
    %v6151 = vpop.f32.mrf.mxu0
    %v6152 = vadd.f32 0.0, %v6151
    %6153 = vmatmul.f32.gmra.mxu0 %v6063
    %v6154 = vpop.f32.mrf.mxu0
    %v6155 = vadd.f32 0.0, %v6154
    %6156 = vmatmul.f32.gmra.mxu0 %v6066
    %v6157 = vpop.f32.mrf.mxu0
    %v6158 = vadd.f32 0.0, %v6157
    %6159 = vmatmul.f32.gmra.mxu0 %v6069
    %v6160 = vpop.f32.mrf.mxu0
    %v6161 = vadd.f32 0.0, %v6160
    %6162 = vmatmul.f32.gmra.mxu0 %v6072
    %v6163 = vpop.f32.mrf.mxu0
    %v6164 = vadd.f32 0.0, %v6163
    %6165 = vmatmul.f32.gmra.mxu0 %v6075
    %v6166 = vpop.f32.mrf.mxu0
    %v6167 = vadd.f32 0.0, %v6166
    %6168 = vmatmul.f32.gmra.mxu0 %v6078
    %v6169 = vpop.f32.mrf.mxu0
    %v6170 = vadd.f32 0.0, %v6169
    %6171 = vmatmul.f32.gmra.mxu0 %v6081
    %v6172 = vpop.f32.mrf.mxu0
    %v6173 = vadd.f32 0.0, %v6172
    %6174 = vmatmul.f32.gmra.mxu0 %v6084
    %v6175 = vpop.f32.mrf.mxu0
    %v6176 = vadd.f32 0.0, %v6175
    %6177 = vdwg.mxu0
    %v6178 = vadd.f32 %v5952, %v6104
    %v6179 = vadd.f32 %v5953, %v6107
    %v6180 = vadd.f32 %v5954, %v6110
    %v6181 = vadd.f32 %v5955, %v6113
    %v6182 = vadd.f32 %v5956, %v6116
    %v6183 = vadd.f32 %v5957, %v6119
    %v6184 = vadd.f32 %v5958, %v6122
    %v6185 = vadd.f32 %v5959, %v6125
    %v6186 = vadd.f32 %v5960, %v6128
    %v6187 = vadd.f32 %v5961, %v6131
    %v6188 = vadd.f32 %v5962, %v6134
    %v6189 = vadd.f32 %v5963, %v6137
    %v6190 = vadd.f32 %v5964, %v6140
    %v6191 = vadd.f32 %v5965, %v6143
    %v6192 = vadd.f32 %v5966, %v6146
    %v6193 = vadd.f32 %v5967, %v6149
    %v6194 = vadd.f32 %v5968, %v6152
    %v6195 = vadd.f32 %v5969, %v6155
    %v6196 = vadd.f32 %v5970, %v6158
    %v6197 = vadd.f32 %v5971, %v6161
    %v6198 = vadd.f32 %v5972, %v6164
    %v6199 = vadd.f32 %v5973, %v6167
    %v6200 = vadd.f32 %v5974, %v6170
    %v6201 = vadd.f32 %v5975, %v6173
    %v6202 = vadd.f32 %v5976, %v6176
    %v6203 = vld [vmem:[#allocation3 + $0x1a] sm:$0xff]
    %v6204 = vld [vmem:[#allocation3 + $0x22] sm:$0xff]
    %v6205 = vld [vmem:[#allocation3 + $0x2a] sm:$0xff]
    %v6206 = vld [vmem:[#allocation3 + $0x32] sm:$0xff]
    %v6207 = vld [vmem:[#allocation3 + $0x3a] sm:$0xff]
    %v6208 = vld [vmem:[#allocation3 + $0x42] sm:$0xff]
    %v6209 = vld [vmem:[#allocation3 + $0x4a] sm:$0xff]
    %v6210 = vld [vmem:[#allocation3 + $0x52] sm:$0xff]
    %v6211 = vld [vmem:[#allocation3 + $0x5a] sm:$0xff]
    %v6212 = vld [vmem:[#allocation3 + $0x62] sm:$0xff]
    %v6213 = vld [vmem:[#allocation3 + $0x6a] sm:$0xff]
    %v6214 = vld [vmem:[#allocation3 + $0x72] sm:$0xff]
    %v6215 = vld [vmem:[#allocation3 + $0x7a] sm:$0xff]
    %v6216 = vld [vmem:[#allocation3 + $0x82] sm:$0xff]
    %v6217 = vld [vmem:[#allocation3 + $0x8a] sm:$0xff]
    %v6218 = vld [vmem:[#allocation3 + $0x92] sm:$0xff]
    %v6219 = vld [vmem:[#allocation3 + $0x9a] sm:$0xff]
    %v6220 = vld [vmem:[#allocation3 + $0xa2] sm:$0xff]
    %v6221 = vld [vmem:[#allocation3 + $0xaa] sm:$0xff]
    %v6222 = vld [vmem:[#allocation3 + $0xb2] sm:$0xff]
    %v6223 = vld [vmem:[#allocation3 + $0xba] sm:$0xff]
    %v6224 = vld [vmem:[#allocation3 + $0xc2] sm:$0xff]
    %v6225 = vld [vmem:[#allocation3 + $0xca] sm:$0xff]
    %v6226 = vld [vmem:[#allocation3 + $0xd2] sm:$0xff]
    %v6227 = vld [vmem:[#allocation3 + $0xda] sm:$0xff]
    %s6228 = scalar_lea.vmem [#allocation6], 320
    %v6229 = vld [vmem:[%s6228] sm:$0xff]
    %v6230 = vld [vmem:[%s6228 + $0x8] sm:$0xff]
    %v6231 = vld [vmem:[%s6228 + $0x10] sm:$0xff]
    %v6232 = vld [vmem:[%s6228 + $0x18] sm:$0xff]
    %v6233 = vld [vmem:[%s6228 + $0x20] sm:$0xff]
    %v6234 = vld [vmem:[%s6228 + $0x28] sm:$0xff]
    %v6235 = vld [vmem:[%s6228 + $0x30] sm:$0xff]
    %v6236 = vld [vmem:[%s6228 + $0x38] sm:$0xff]
    %v6238 = vsel %vm469, %v6203, 0
    %v6241 = vsel %vm469, %v6204, 0
    %v6244 = vsel %vm469, %v6205, 0
    %v6247 = vsel %vm469, %v6206, 0
    %v6250 = vsel %vm469, %v6207, 0
    %v6253 = vsel %vm469, %v6208, 0
    %v6256 = vsel %vm469, %v6209, 0
    %v6259 = vsel %vm469, %v6210, 0
    %v6262 = vsel %vm469, %v6211, 0
    %v6265 = vsel %vm469, %v6212, 0
    %v6268 = vsel %vm469, %v6213, 0
    %v6271 = vsel %vm469, %v6214, 0
    %v6274 = vsel %vm469, %v6215, 0
    %v6277 = vsel %vm469, %v6216, 0
    %v6280 = vsel %vm469, %v6217, 0
    %v6283 = vsel %vm469, %v6218, 0
    %v6286 = vsel %vm469, %v6219, 0
    %v6289 = vsel %vm469, %v6220, 0
    %v6292 = vsel %vm469, %v6221, 0
    %v6295 = vsel %vm469, %v6222, 0
    %v6298 = vsel %vm469, %v6223, 0
    %v6301 = vsel %vm469, %v6224, 0
    %v6304 = vsel %vm469, %v6225, 0
    %v6307 = vsel %vm469, %v6226, 0
    %v6310 = vsel %vm469, %v6227, 0
    %6312 = vmatpush.msra.mxu0 0.0
    %6313 = vmatpush.msra.mxu0 0.0
    %6314 = vmatpush.msra.mxu0 0.0
    %6315 = vmatpush.msra.mxu0 0.0
    %6316 = vmatpush.msra.mxu0 0.0
    %6317 = vmatpush.msra.mxu0 0.0
    %6318 = vmatpush.msra.mxu0 0.0
    %6319 = vmatpush.msra.mxu0 0.0
    %6320 = vmatpush.msra.mxu0 %v6236
    %6321 = vmatpush.msra.mxu0 %v6235
    %6322 = vmatpush.msra.mxu0 %v6234
    %6323 = vmatpush.msra.mxu0 %v6233
    %6324 = vmatpush.msra.mxu0 %v6232
    %6325 = vmatpush.msra.mxu0 %v6231
    %6326 = vmatpush.msra.mxu0 %v6230
    %6327 = vmatpush.msra.mxu0 %v6229
    %6328 = vmatmul.f32.gmra.mxu0 %v6238
    %v6329 = vpop.f32.mrf.mxu0
    %v6330 = vadd.f32 0.0, %v6329
    %6331 = vmatmul.f32.gmra.mxu0 %v6241
    %v6332 = vpop.f32.mrf.mxu0
    %v6333 = vadd.f32 0.0, %v6332
    %6334 = vmatmul.f32.gmra.mxu0 %v6244
    %v6335 = vpop.f32.mrf.mxu0
    %v6336 = vadd.f32 0.0, %v6335
    %6337 = vmatmul.f32.gmra.mxu0 %v6247
    %v6338 = vpop.f32.mrf.mxu0
    %v6339 = vadd.f32 0.0, %v6338
    %6340 = vmatmul.f32.gmra.mxu0 %v6250
    %v6341 = vpop.f32.mrf.mxu0
    %v6342 = vadd.f32 0.0, %v6341
    %6343 = vmatmul.f32.gmra.mxu0 %v6253
    %v6344 = vpop.f32.mrf.mxu0
    %v6345 = vadd.f32 0.0, %v6344
    %6346 = vmatmul.f32.gmra.mxu0 %v6256
    %v6347 = vpop.f32.mrf.mxu0
    %v6348 = vadd.f32 0.0, %v6347
    %6349 = vmatmul.f32.gmra.mxu0 %v6259
    %v6350 = vpop.f32.mrf.mxu0
    %v6351 = vadd.f32 0.0, %v6350
    %6352 = vmatmul.f32.gmra.mxu0 %v6262
    %v6353 = vpop.f32.mrf.mxu0
    %v6354 = vadd.f32 0.0, %v6353
    %6355 = vmatmul.f32.gmra.mxu0 %v6265
    %v6356 = vpop.f32.mrf.mxu0
    %v6357 = vadd.f32 0.0, %v6356
    %6358 = vmatmul.f32.gmra.mxu0 %v6268
    %v6359 = vpop.f32.mrf.mxu0
    %v6360 = vadd.f32 0.0, %v6359
    %6361 = vmatmul.f32.gmra.mxu0 %v6271
    %v6362 = vpop.f32.mrf.mxu0
    %v6363 = vadd.f32 0.0, %v6362
    %6364 = vmatmul.f32.gmra.mxu0 %v6274
    %v6365 = vpop.f32.mrf.mxu0
    %v6366 = vadd.f32 0.0, %v6365
    %6367 = vmatmul.f32.gmra.mxu0 %v6277
    %v6368 = vpop.f32.mrf.mxu0
    %v6369 = vadd.f32 0.0, %v6368
    %6370 = vmatmul.f32.gmra.mxu0 %v6280
    %v6371 = vpop.f32.mrf.mxu0
    %v6372 = vadd.f32 0.0, %v6371
    %6373 = vmatmul.f32.gmra.mxu0 %v6283
    %v6374 = vpop.f32.mrf.mxu0
    %v6375 = vadd.f32 0.0, %v6374
    %6376 = vmatmul.f32.gmra.mxu0 %v6286
    %v6377 = vpop.f32.mrf.mxu0
    %v6378 = vadd.f32 0.0, %v6377
    %6379 = vmatmul.f32.gmra.mxu0 %v6289
    %v6380 = vpop.f32.mrf.mxu0
    %v6381 = vadd.f32 0.0, %v6380
    %6382 = vmatmul.f32.gmra.mxu0 %v6292
    %v6383 = vpop.f32.mrf.mxu0
    %v6384 = vadd.f32 0.0, %v6383
    %6385 = vmatmul.f32.gmra.mxu0 %v6295
    %v6386 = vpop.f32.mrf.mxu0
    %v6387 = vadd.f32 0.0, %v6386
    %6388 = vmatmul.f32.gmra.mxu0 %v6298
    %v6389 = vpop.f32.mrf.mxu0
    %v6390 = vadd.f32 0.0, %v6389
    %6391 = vmatmul.f32.gmra.mxu0 %v6301
    %v6392 = vpop.f32.mrf.mxu0
    %v6393 = vadd.f32 0.0, %v6392
    %6394 = vmatmul.f32.gmra.mxu0 %v6304
    %v6395 = vpop.f32.mrf.mxu0
    %v6396 = vadd.f32 0.0, %v6395
    %6397 = vmatmul.f32.gmra.mxu0 %v6307
    %v6398 = vpop.f32.mrf.mxu0
    %v6399 = vadd.f32 0.0, %v6398
    %6400 = vmatmul.f32.gmra.mxu0 %v6310
    %v6401 = vpop.f32.mrf.mxu0
    %v6402 = vadd.f32 0.0, %v6401
    %6403 = vdwg.mxu0
    %v6404 = vadd.f32 %v6178, %v6330
    %v6405 = vadd.f32 %v6179, %v6333
    %v6406 = vadd.f32 %v6180, %v6336
    %v6407 = vadd.f32 %v6181, %v6339
    %v6408 = vadd.f32 %v6182, %v6342
    %v6409 = vadd.f32 %v6183, %v6345
    %v6410 = vadd.f32 %v6184, %v6348
    %v6411 = vadd.f32 %v6185, %v6351
    %v6412 = vadd.f32 %v6186, %v6354
    %v6413 = vadd.f32 %v6187, %v6357
    %v6414 = vadd.f32 %v6188, %v6360
    %v6415 = vadd.f32 %v6189, %v6363
    %v6416 = vadd.f32 %v6190, %v6366
    %v6417 = vadd.f32 %v6191, %v6369
    %v6418 = vadd.f32 %v6192, %v6372
    %v6419 = vadd.f32 %v6193, %v6375
    %v6420 = vadd.f32 %v6194, %v6378
    %v6421 = vadd.f32 %v6195, %v6381
    %v6422 = vadd.f32 %v6196, %v6384
    %v6423 = vadd.f32 %v6197, %v6387
    %v6424 = vadd.f32 %v6198, %v6390
    %v6425 = vadd.f32 %v6199, %v6393
    %v6426 = vadd.f32 %v6200, %v6396
    %v6427 = vadd.f32 %v6201, %v6399
    %v6428 = vadd.f32 %v6202, %v6402
    %v6429 = vld [vmem:[#allocation3 + $0x2a] sm:$0xff]
    %v6430 = vld [vmem:[#allocation3 + $0x32] sm:$0xff]
    %v6431 = vld [vmem:[#allocation3 + $0x3a] sm:$0xff]
    %v6432 = vld [vmem:[#allocation3 + $0x42] sm:$0xff]
    %v6433 = vld [vmem:[#allocation3 + $0x4a] sm:$0xff]
    %v6434 = vld [vmem:[#allocation3 + $0x52] sm:$0xff]
    %v6435 = vld [vmem:[#allocation3 + $0x5a] sm:$0xff]
    %v6436 = vld [vmem:[#allocation3 + $0x62] sm:$0xff]
    %v6437 = vld [vmem:[#allocation3 + $0x6a] sm:$0xff]
    %v6438 = vld [vmem:[#allocation3 + $0x72] sm:$0xff]
    %v6439 = vld [vmem:[#allocation3 + $0x7a] sm:$0xff]
    %v6440 = vld [vmem:[#allocation3 + $0x82] sm:$0xff]
    %v6441 = vld [vmem:[#allocation3 + $0x8a] sm:$0xff]
    %v6442 = vld [vmem:[#allocation3 + $0x92] sm:$0xff]
    %v6443 = vld [vmem:[#allocation3 + $0x9a] sm:$0xff]
    %v6444 = vld [vmem:[#allocation3 + $0xa2] sm:$0xff]
    %v6445 = vld [vmem:[#allocation3 + $0xaa] sm:$0xff]
    %v6446 = vld [vmem:[#allocation3 + $0xb2] sm:$0xff]
    %v6447 = vld [vmem:[#allocation3 + $0xba] sm:$0xff]
    %v6448 = vld [vmem:[#allocation3 + $0xc2] sm:$0xff]
    %v6449 = vld [vmem:[#allocation3 + $0xca] sm:$0xff]
    %v6450 = vld [vmem:[#allocation3 + $0xd2] sm:$0xff]
    %v6451 = vld [vmem:[#allocation3 + $0xda] sm:$0xff]
    %v6452 = vld [vmem:[#allocation3 + $0xe2] sm:$0xff]
    %v6453 = vld [vmem:[#allocation3 + $0xea] sm:$0xff]
    %s6454 = scalar_lea.vmem [#allocation6], 384
    %v6455 = vld [vmem:[%s6454] sm:$0xff]
    %v6456 = vld [vmem:[%s6454 + $0x8] sm:$0xff]
    %v6457 = vld [vmem:[%s6454 + $0x10] sm:$0xff]
    %v6458 = vld [vmem:[%s6454 + $0x18] sm:$0xff]
    %v6459 = vld [vmem:[%s6454 + $0x20] sm:$0xff]
    %v6460 = vld [vmem:[%s6454 + $0x28] sm:$0xff]
    %v6461 = vld [vmem:[%s6454 + $0x30] sm:$0xff]
    %v6462 = vld [vmem:[%s6454 + $0x38] sm:$0xff]
    %v6464 = vsel %vm469, %v6429, 0
    %v6467 = vsel %vm469, %v6430, 0
    %v6470 = vsel %vm469, %v6431, 0
    %v6473 = vsel %vm469, %v6432, 0
    %v6476 = vsel %vm469, %v6433, 0
    %v6479 = vsel %vm469, %v6434, 0
    %v6482 = vsel %vm469, %v6435, 0
    %v6485 = vsel %vm469, %v6436, 0
    %v6488 = vsel %vm469, %v6437, 0
    %v6491 = vsel %vm469, %v6438, 0
    %v6494 = vsel %vm469, %v6439, 0
    %v6497 = vsel %vm469, %v6440, 0
    %v6500 = vsel %vm469, %v6441, 0
    %v6503 = vsel %vm469, %v6442, 0
    %v6506 = vsel %vm469, %v6443, 0
    %v6509 = vsel %vm469, %v6444, 0
    %v6512 = vsel %vm469, %v6445, 0
    %v6515 = vsel %vm469, %v6446, 0
    %v6518 = vsel %vm469, %v6447, 0
    %v6521 = vsel %vm469, %v6448, 0
    %v6524 = vsel %vm469, %v6449, 0
    %v6527 = vsel %vm469, %v6450, 0
    %v6530 = vsel %vm469, %v6451, 0
    %v6533 = vsel %vm469, %v6452, 0
    %v6536 = vsel %vm469, %v6453, 0
    %6538 = vmatpush.msra.mxu0 0.0
    %6539 = vmatpush.msra.mxu0 0.0
    %6540 = vmatpush.msra.mxu0 0.0
    %6541 = vmatpush.msra.mxu0 0.0
    %6542 = vmatpush.msra.mxu0 0.0
    %6543 = vmatpush.msra.mxu0 0.0
    %6544 = vmatpush.msra.mxu0 0.0
    %6545 = vmatpush.msra.mxu0 0.0
    %6546 = vmatpush.msra.mxu0 %v6462
    %6547 = vmatpush.msra.mxu0 %v6461
    %6548 = vmatpush.msra.mxu0 %v6460
    %6549 = vmatpush.msra.mxu0 %v6459
    %6550 = vmatpush.msra.mxu0 %v6458
    %6551 = vmatpush.msra.mxu0 %v6457
    %6552 = vmatpush.msra.mxu0 %v6456
    %6553 = vmatpush.msra.mxu0 %v6455
    %6554 = vmatmul.f32.gmra.mxu0 %v6464
    %v6555 = vpop.f32.mrf.mxu0
    %v6556 = vadd.f32 0.0, %v6555
    %6557 = vmatmul.f32.gmra.mxu0 %v6467
    %v6558 = vpop.f32.mrf.mxu0
    %v6559 = vadd.f32 0.0, %v6558
    %6560 = vmatmul.f32.gmra.mxu0 %v6470
    %v6561 = vpop.f32.mrf.mxu0
    %v6562 = vadd.f32 0.0, %v6561
    %6563 = vmatmul.f32.gmra.mxu0 %v6473
    %v6564 = vpop.f32.mrf.mxu0
    %v6565 = vadd.f32 0.0, %v6564
    %6566 = vmatmul.f32.gmra.mxu0 %v6476
    %v6567 = vpop.f32.mrf.mxu0
    %v6568 = vadd.f32 0.0, %v6567
    %6569 = vmatmul.f32.gmra.mxu0 %v6479
    %v6570 = vpop.f32.mrf.mxu0
    %v6571 = vadd.f32 0.0, %v6570
    %6572 = vmatmul.f32.gmra.mxu0 %v6482
    %v6573 = vpop.f32.mrf.mxu0
    %v6574 = vadd.f32 0.0, %v6573
    %6575 = vmatmul.f32.gmra.mxu0 %v6485
    %v6576 = vpop.f32.mrf.mxu0
    %v6577 = vadd.f32 0.0, %v6576
    %6578 = vmatmul.f32.gmra.mxu0 %v6488
    %v6579 = vpop.f32.mrf.mxu0
    %v6580 = vadd.f32 0.0, %v6579
    %6581 = vmatmul.f32.gmra.mxu0 %v6491
    %v6582 = vpop.f32.mrf.mxu0
    %v6583 = vadd.f32 0.0, %v6582
    %6584 = vmatmul.f32.gmra.mxu0 %v6494
    %v6585 = vpop.f32.mrf.mxu0
    %v6586 = vadd.f32 0.0, %v6585
    %6587 = vmatmul.f32.gmra.mxu0 %v6497
    %v6588 = vpop.f32.mrf.mxu0
    %v6589 = vadd.f32 0.0, %v6588
    %6590 = vmatmul.f32.gmra.mxu0 %v6500
    %v6591 = vpop.f32.mrf.mxu0
    %v6592 = vadd.f32 0.0, %v6591
    %6593 = vmatmul.f32.gmra.mxu0 %v6503
    %v6594 = vpop.f32.mrf.mxu0
    %v6595 = vadd.f32 0.0, %v6594
    %6596 = vmatmul.f32.gmra.mxu0 %v6506
    %v6597 = vpop.f32.mrf.mxu0
    %v6598 = vadd.f32 0.0, %v6597
    %6599 = vmatmul.f32.gmra.mxu0 %v6509
    %v6600 = vpop.f32.mrf.mxu0
    %v6601 = vadd.f32 0.0, %v6600
    %6602 = vmatmul.f32.gmra.mxu0 %v6512
    %v6603 = vpop.f32.mrf.mxu0
    %v6604 = vadd.f32 0.0, %v6603
    %6605 = vmatmul.f32.gmra.mxu0 %v6515
    %v6606 = vpop.f32.mrf.mxu0
    %v6607 = vadd.f32 0.0, %v6606
    %6608 = vmatmul.f32.gmra.mxu0 %v6518
    %v6609 = vpop.f32.mrf.mxu0
    %v6610 = vadd.f32 0.0, %v6609
    %6611 = vmatmul.f32.gmra.mxu0 %v6521
    %v6612 = vpop.f32.mrf.mxu0
    %v6613 = vadd.f32 0.0, %v6612
    %6614 = vmatmul.f32.gmra.mxu0 %v6524
    %v6615 = vpop.f32.mrf.mxu0
    %v6616 = vadd.f32 0.0, %v6615
    %6617 = vmatmul.f32.gmra.mxu0 %v6527
    %v6618 = vpop.f32.mrf.mxu0
    %v6619 = vadd.f32 0.0, %v6618
    %6620 = vmatmul.f32.gmra.mxu0 %v6530
    %v6621 = vpop.f32.mrf.mxu0
    %v6622 = vadd.f32 0.0, %v6621
    %6623 = vmatmul.f32.gmra.mxu0 %v6533
    %v6624 = vpop.f32.mrf.mxu0
    %v6625 = vadd.f32 0.0, %v6624
    %6626 = vmatmul.f32.gmra.mxu0 %v6536
    %v6627 = vpop.f32.mrf.mxu0
    %v6628 = vadd.f32 0.0, %v6627
    %6629 = vdwg.mxu0
    %v6630 = vadd.f32 %v6404, %v6556
    %v6631 = vadd.f32 %v6405, %v6559
    %v6632 = vadd.f32 %v6406, %v6562
    %v6633 = vadd.f32 %v6407, %v6565
    %v6634 = vadd.f32 %v6408, %v6568
    %v6635 = vadd.f32 %v6409, %v6571
    %v6636 = vadd.f32 %v6410, %v6574
    %v6637 = vadd.f32 %v6411, %v6577
    %v6638 = vadd.f32 %v6412, %v6580
    %v6639 = vadd.f32 %v6413, %v6583
    %v6640 = vadd.f32 %v6414, %v6586
    %v6641 = vadd.f32 %v6415, %v6589
    %v6642 = vadd.f32 %v6416, %v6592
    %v6643 = vadd.f32 %v6417, %v6595
    %v6644 = vadd.f32 %v6418, %v6598
    %v6645 = vadd.f32 %v6419, %v6601
    %v6646 = vadd.f32 %v6420, %v6604
    %v6647 = vadd.f32 %v6421, %v6607
    %v6648 = vadd.f32 %v6422, %v6610
    %v6649 = vadd.f32 %v6423, %v6613
    %v6650 = vadd.f32 %v6424, %v6616
    %v6651 = vadd.f32 %v6425, %v6619
    %v6652 = vadd.f32 %v6426, %v6622
    %v6653 = vadd.f32 %v6427, %v6625
    %v6654 = vadd.f32 %v6428, %v6628
    %v6655 = vld [vmem:[#allocation3 + $0x2c] sm:$0xff]
    %v6656 = vld [vmem:[#allocation3 + $0x34] sm:$0xff]
    %v6657 = vld [vmem:[#allocation3 + $0x3c] sm:$0xff]
    %v6658 = vld [vmem:[#allocation3 + $0x44] sm:$0xff]
    %v6659 = vld [vmem:[#allocation3 + $0x4c] sm:$0xff]
    %v6660 = vld [vmem:[#allocation3 + $0x54] sm:$0xff]
    %v6661 = vld [vmem:[#allocation3 + $0x5c] sm:$0xff]
    %v6662 = vld [vmem:[#allocation3 + $0x64] sm:$0xff]
    %v6663 = vld [vmem:[#allocation3 + $0x6c] sm:$0xff]
    %v6664 = vld [vmem:[#allocation3 + $0x74] sm:$0xff]
    %v6665 = vld [vmem:[#allocation3 + $0x7c] sm:$0xff]
    %v6666 = vld [vmem:[#allocation3 + $0x84] sm:$0xff]
    %v6667 = vld [vmem:[#allocation3 + $0x8c] sm:$0xff]
    %v6668 = vld [vmem:[#allocation3 + $0x94] sm:$0xff]
    %v6669 = vld [vmem:[#allocation3 + $0x9c] sm:$0xff]
    %v6670 = vld [vmem:[#allocation3 + $0xa4] sm:$0xff]
    %v6671 = vld [vmem:[#allocation3 + $0xac] sm:$0xff]
    %v6672 = vld [vmem:[#allocation3 + $0xb4] sm:$0xff]
    %v6673 = vld [vmem:[#allocation3 + $0xbc] sm:$0xff]
    %v6674 = vld [vmem:[#allocation3 + $0xc4] sm:$0xff]
    %v6675 = vld [vmem:[#allocation3 + $0xcc] sm:$0xff]
    %v6676 = vld [vmem:[#allocation3 + $0xd4] sm:$0xff]
    %v6677 = vld [vmem:[#allocation3 + $0xdc] sm:$0xff]
    %v6678 = vld [vmem:[#allocation3 + $0xe4] sm:$0xff]
    %v6679 = vld [vmem:[#allocation3 + $0xec] sm:$0xff]
    %s6680 = scalar_lea.vmem [#allocation6], 448
    %v6681 = vld [vmem:[%s6680] sm:$0xff]
    %v6682 = vld [vmem:[%s6680 + $0x8] sm:$0xff]
    %v6683 = vld [vmem:[%s6680 + $0x10] sm:$0xff]
    %v6684 = vld [vmem:[%s6680 + $0x18] sm:$0xff]
    %v6685 = vld [vmem:[%s6680 + $0x20] sm:$0xff]
    %v6686 = vld [vmem:[%s6680 + $0x28] sm:$0xff]
    %v6687 = vld [vmem:[%s6680 + $0x30] sm:$0xff]
    %v6688 = vld [vmem:[%s6680 + $0x38] sm:$0xff]
    %v6690 = vsel %vm469, %v6655, 0
    %v6693 = vsel %vm469, %v6656, 0
    %v6696 = vsel %vm469, %v6657, 0
    %v6699 = vsel %vm469, %v6658, 0
    %v6702 = vsel %vm469, %v6659, 0
    %v6705 = vsel %vm469, %v6660, 0
    %v6708 = vsel %vm469, %v6661, 0
    %v6711 = vsel %vm469, %v6662, 0
    %v6714 = vsel %vm469, %v6663, 0
    %v6717 = vsel %vm469, %v6664, 0
    %v6720 = vsel %vm469, %v6665, 0
    %v6723 = vsel %vm469, %v6666, 0
    %v6726 = vsel %vm469, %v6667, 0
    %v6729 = vsel %vm469, %v6668, 0
    %v6732 = vsel %vm469, %v6669, 0
    %v6735 = vsel %vm469, %v6670, 0
    %v6738 = vsel %vm469, %v6671, 0
    %v6741 = vsel %vm469, %v6672, 0
    %v6744 = vsel %vm469, %v6673, 0
    %v6747 = vsel %vm469, %v6674, 0
    %v6750 = vsel %vm469, %v6675, 0
    %v6753 = vsel %vm469, %v6676, 0
    %v6756 = vsel %vm469, %v6677, 0
    %v6759 = vsel %vm469, %v6678, 0
    %v6762 = vsel %vm469, %v6679, 0
    %6764 = vmatpush.msra.mxu0 0.0
    %6765 = vmatpush.msra.mxu0 0.0
    %6766 = vmatpush.msra.mxu0 0.0
    %6767 = vmatpush.msra.mxu0 0.0
    %6768 = vmatpush.msra.mxu0 0.0
    %6769 = vmatpush.msra.mxu0 0.0
    %6770 = vmatpush.msra.mxu0 0.0
    %6771 = vmatpush.msra.mxu0 0.0
    %6772 = vmatpush.msra.mxu0 %v6688
    %6773 = vmatpush.msra.mxu0 %v6687
    %6774 = vmatpush.msra.mxu0 %v6686
    %6775 = vmatpush.msra.mxu0 %v6685
    %6776 = vmatpush.msra.mxu0 %v6684
    %6777 = vmatpush.msra.mxu0 %v6683
    %6778 = vmatpush.msra.mxu0 %v6682
    %6779 = vmatpush.msra.mxu0 %v6681
    %6780 = vmatmul.f32.gmra.mxu0 %v6690
    %v6781 = vpop.f32.mrf.mxu0
    %v6782 = vadd.f32 0.0, %v6781
    %6783 = vmatmul.f32.gmra.mxu0 %v6693
    %v6784 = vpop.f32.mrf.mxu0
    %v6785 = vadd.f32 0.0, %v6784
    %6786 = vmatmul.f32.gmra.mxu0 %v6696
    %v6787 = vpop.f32.mrf.mxu0
    %v6788 = vadd.f32 0.0, %v6787
    %6789 = vmatmul.f32.gmra.mxu0 %v6699
    %v6790 = vpop.f32.mrf.mxu0
    %v6791 = vadd.f32 0.0, %v6790
    %6792 = vmatmul.f32.gmra.mxu0 %v6702
    %v6793 = vpop.f32.mrf.mxu0
    %v6794 = vadd.f32 0.0, %v6793
    %6795 = vmatmul.f32.gmra.mxu0 %v6705
    %v6796 = vpop.f32.mrf.mxu0
    %v6797 = vadd.f32 0.0, %v6796
    %6798 = vmatmul.f32.gmra.mxu0 %v6708
    %v6799 = vpop.f32.mrf.mxu0
    %v6800 = vadd.f32 0.0, %v6799
    %6801 = vmatmul.f32.gmra.mxu0 %v6711
    %v6802 = vpop.f32.mrf.mxu0
    %v6803 = vadd.f32 0.0, %v6802
    %6804 = vmatmul.f32.gmra.mxu0 %v6714
    %v6805 = vpop.f32.mrf.mxu0
    %v6806 = vadd.f32 0.0, %v6805
    %6807 = vmatmul.f32.gmra.mxu0 %v6717
    %v6808 = vpop.f32.mrf.mxu0
    %v6809 = vadd.f32 0.0, %v6808
    %6810 = vmatmul.f32.gmra.mxu0 %v6720
    %v6811 = vpop.f32.mrf.mxu0
    %v6812 = vadd.f32 0.0, %v6811
    %6813 = vmatmul.f32.gmra.mxu0 %v6723
    %v6814 = vpop.f32.mrf.mxu0
    %v6815 = vadd.f32 0.0, %v6814
    %6816 = vmatmul.f32.gmra.mxu0 %v6726
    %v6817 = vpop.f32.mrf.mxu0
    %v6818 = vadd.f32 0.0, %v6817
    %6819 = vmatmul.f32.gmra.mxu0 %v6729
    %v6820 = vpop.f32.mrf.mxu0
    %v6821 = vadd.f32 0.0, %v6820
    %6822 = vmatmul.f32.gmra.mxu0 %v6732
    %v6823 = vpop.f32.mrf.mxu0
    %v6824 = vadd.f32 0.0, %v6823
    %6825 = vmatmul.f32.gmra.mxu0 %v6735
    %v6826 = vpop.f32.mrf.mxu0
    %v6827 = vadd.f32 0.0, %v6826
    %6828 = vmatmul.f32.gmra.mxu0 %v6738
    %v6829 = vpop.f32.mrf.mxu0
    %v6830 = vadd.f32 0.0, %v6829
    %6831 = vmatmul.f32.gmra.mxu0 %v6741
    %v6832 = vpop.f32.mrf.mxu0
    %v6833 = vadd.f32 0.0, %v6832
    %6834 = vmatmul.f32.gmra.mxu0 %v6744
    %v6835 = vpop.f32.mrf.mxu0
    %v6836 = vadd.f32 0.0, %v6835
    %6837 = vmatmul.f32.gmra.mxu0 %v6747
    %v6838 = vpop.f32.mrf.mxu0
    %v6839 = vadd.f32 0.0, %v6838
    %6840 = vmatmul.f32.gmra.mxu0 %v6750
    %v6841 = vpop.f32.mrf.mxu0
    %v6842 = vadd.f32 0.0, %v6841
    %6843 = vmatmul.f32.gmra.mxu0 %v6753
    %v6844 = vpop.f32.mrf.mxu0
    %v6845 = vadd.f32 0.0, %v6844
    %6846 = vmatmul.f32.gmra.mxu0 %v6756
    %v6847 = vpop.f32.mrf.mxu0
    %v6848 = vadd.f32 0.0, %v6847
    %6849 = vmatmul.f32.gmra.mxu0 %v6759
    %v6850 = vpop.f32.mrf.mxu0
    %v6851 = vadd.f32 0.0, %v6850
    %6852 = vmatmul.f32.gmra.mxu0 %v6762
    %v6853 = vpop.f32.mrf.mxu0
    %v6854 = vadd.f32 0.0, %v6853
    %6855 = vdwg.mxu0
    %v6856 = vadd.f32 %v6630, %v6782
    %v6857 = vadd.f32 %v6631, %v6785
    %v6858 = vadd.f32 %v6632, %v6788
    %v6859 = vadd.f32 %v6633, %v6791
    %v6860 = vadd.f32 %v6634, %v6794
    %v6861 = vadd.f32 %v6635, %v6797
    %v6862 = vadd.f32 %v6636, %v6800
    %v6863 = vadd.f32 %v6637, %v6803
    %v6864 = vadd.f32 %v6638, %v6806
    %v6865 = vadd.f32 %v6639, %v6809
    %v6866 = vadd.f32 %v6640, %v6812
    %v6867 = vadd.f32 %v6641, %v6815
    %v6868 = vadd.f32 %v6642, %v6818
    %v6869 = vadd.f32 %v6643, %v6821
    %v6870 = vadd.f32 %v6644, %v6824
    %v6871 = vadd.f32 %v6645, %v6827
    %v6872 = vadd.f32 %v6646, %v6830
    %v6873 = vadd.f32 %v6647, %v6833
    %v6874 = vadd.f32 %v6648, %v6836
    %v6875 = vadd.f32 %v6649, %v6839
    %v6876 = vadd.f32 %v6650, %v6842
    %v6877 = vadd.f32 %v6651, %v6845
    %v6878 = vadd.f32 %v6652, %v6848
    %v6879 = vadd.f32 %v6653, %v6851
    %v6880 = vadd.f32 %v6654, %v6854
    %v6881 = vld [vmem:[#allocation3 + $0x2e] sm:$0xff]
    %v6882 = vld [vmem:[#allocation3 + $0x36] sm:$0xff]
    %v6883 = vld [vmem:[#allocation3 + $0x3e] sm:$0xff]
    %v6884 = vld [vmem:[#allocation3 + $0x46] sm:$0xff]
    %v6885 = vld [vmem:[#allocation3 + $0x4e] sm:$0xff]
    %v6886 = vld [vmem:[#allocation3 + $0x56] sm:$0xff]
    %v6887 = vld [vmem:[#allocation3 + $0x5e] sm:$0xff]
    %v6888 = vld [vmem:[#allocation3 + $0x66] sm:$0xff]
    %v6889 = vld [vmem:[#allocation3 + $0x6e] sm:$0xff]
    %v6890 = vld [vmem:[#allocation3 + $0x76] sm:$0xff]
    %v6891 = vld [vmem:[#allocation3 + $0x7e] sm:$0xff]
    %v6892 = vld [vmem:[#allocation3 + $0x86] sm:$0xff]
    %v6893 = vld [vmem:[#allocation3 + $0x8e] sm:$0xff]
    %v6894 = vld [vmem:[#allocation3 + $0x96] sm:$0xff]
    %v6895 = vld [vmem:[#allocation3 + $0x9e] sm:$0xff]
    %v6896 = vld [vmem:[#allocation3 + $0xa6] sm:$0xff]
    %v6897 = vld [vmem:[#allocation3 + $0xae] sm:$0xff]
    %v6898 = vld [vmem:[#allocation3 + $0xb6] sm:$0xff]
    %v6899 = vld [vmem:[#allocation3 + $0xbe] sm:$0xff]
    %v6900 = vld [vmem:[#allocation3 + $0xc6] sm:$0xff]
    %v6901 = vld [vmem:[#allocation3 + $0xce] sm:$0xff]
    %v6902 = vld [vmem:[#allocation3 + $0xd6] sm:$0xff]
    %v6903 = vld [vmem:[#allocation3 + $0xde] sm:$0xff]
    %v6904 = vld [vmem:[#allocation3 + $0xe6] sm:$0xff]
    %v6905 = vld [vmem:[#allocation3 + $0xee] sm:$0xff]
    %s6906 = scalar_lea.vmem [#allocation6], 512
    %v6907 = vld [vmem:[%s6906] sm:$0xff]
    %v6908 = vld [vmem:[%s6906 + $0x8] sm:$0xff]
    %v6909 = vld [vmem:[%s6906 + $0x10] sm:$0xff]
    %v6910 = vld [vmem:[%s6906 + $0x18] sm:$0xff]
    %v6911 = vld [vmem:[%s6906 + $0x20] sm:$0xff]
    %v6912 = vld [vmem:[%s6906 + $0x28] sm:$0xff]
    %v6913 = vld [vmem:[%s6906 + $0x30] sm:$0xff]
    %v6914 = vld [vmem:[%s6906 + $0x38] sm:$0xff]
    %v6916 = vsel %vm469, %v6881, 0
    %v6919 = vsel %vm469, %v6882, 0
    %v6922 = vsel %vm469, %v6883, 0
    %v6925 = vsel %vm469, %v6884, 0
    %v6928 = vsel %vm469, %v6885, 0
    %v6931 = vsel %vm469, %v6886, 0
    %v6934 = vsel %vm469, %v6887, 0
    %v6937 = vsel %vm469, %v6888, 0
    %v6940 = vsel %vm469, %v6889, 0
    %v6943 = vsel %vm469, %v6890, 0
    %v6946 = vsel %vm469, %v6891, 0
    %v6949 = vsel %vm469, %v6892, 0
    %v6952 = vsel %vm469, %v6893, 0
    %v6955 = vsel %vm469, %v6894, 0
    %v6958 = vsel %vm469, %v6895, 0
    %v6961 = vsel %vm469, %v6896, 0
    %v6964 = vsel %vm469, %v6897, 0
    %v6967 = vsel %vm469, %v6898, 0
    %v6970 = vsel %vm469, %v6899, 0
    %v6973 = vsel %vm469, %v6900, 0
    %v6976 = vsel %vm469, %v6901, 0
    %v6979 = vsel %vm469, %v6902, 0
    %v6982 = vsel %vm469, %v6903, 0
    %v6985 = vsel %vm469, %v6904, 0
    %v6988 = vsel %vm469, %v6905, 0
    %6990 = vmatpush.msra.mxu0 0.0
    %6991 = vmatpush.msra.mxu0 0.0
    %6992 = vmatpush.msra.mxu0 0.0
    %6993 = vmatpush.msra.mxu0 0.0
    %6994 = vmatpush.msra.mxu0 0.0
    %6995 = vmatpush.msra.mxu0 0.0
    %6996 = vmatpush.msra.mxu0 0.0
    %6997 = vmatpush.msra.mxu0 0.0
    %6998 = vmatpush.msra.mxu0 %v6914
    %6999 = vmatpush.msra.mxu0 %v6913
    %7000 = vmatpush.msra.mxu0 %v6912
    %7001 = vmatpush.msra.mxu0 %v6911
    %7002 = vmatpush.msra.mxu0 %v6910
    %7003 = vmatpush.msra.mxu0 %v6909
    %7004 = vmatpush.msra.mxu0 %v6908
    %7005 = vmatpush.msra.mxu0 %v6907
    %7006 = vmatmul.f32.gmra.mxu0 %v6916
    %v7007 = vpop.f32.mrf.mxu0
    %v7008 = vadd.f32 0.0, %v7007
    %7009 = vmatmul.f32.gmra.mxu0 %v6919
    %v7010 = vpop.f32.mrf.mxu0
    %v7011 = vadd.f32 0.0, %v7010
    %7012 = vmatmul.f32.gmra.mxu0 %v6922
    %v7013 = vpop.f32.mrf.mxu0
    %v7014 = vadd.f32 0.0, %v7013
    %7015 = vmatmul.f32.gmra.mxu0 %v6925
    %v7016 = vpop.f32.mrf.mxu0
    %v7017 = vadd.f32 0.0, %v7016
    %7018 = vmatmul.f32.gmra.mxu0 %v6928
    %v7019 = vpop.f32.mrf.mxu0
    %v7020 = vadd.f32 0.0, %v7019
    %7021 = vmatmul.f32.gmra.mxu0 %v6931
    %v7022 = vpop.f32.mrf.mxu0
    %v7023 = vadd.f32 0.0, %v7022
    %7024 = vmatmul.f32.gmra.mxu0 %v6934
    %v7025 = vpop.f32.mrf.mxu0
    %v7026 = vadd.f32 0.0, %v7025
    %7027 = vmatmul.f32.gmra.mxu0 %v6937
    %v7028 = vpop.f32.mrf.mxu0
    %v7029 = vadd.f32 0.0, %v7028
    %7030 = vmatmul.f32.gmra.mxu0 %v6940
    %v7031 = vpop.f32.mrf.mxu0
    %v7032 = vadd.f32 0.0, %v7031
    %7033 = vmatmul.f32.gmra.mxu0 %v6943
    %v7034 = vpop.f32.mrf.mxu0
    %v7035 = vadd.f32 0.0, %v7034
    %7036 = vmatmul.f32.gmra.mxu0 %v6946
    %v7037 = vpop.f32.mrf.mxu0
    %v7038 = vadd.f32 0.0, %v7037
    %7039 = vmatmul.f32.gmra.mxu0 %v6949
    %v7040 = vpop.f32.mrf.mxu0
    %v7041 = vadd.f32 0.0, %v7040
    %7042 = vmatmul.f32.gmra.mxu0 %v6952
    %v7043 = vpop.f32.mrf.mxu0
    %v7044 = vadd.f32 0.0, %v7043
    %7045 = vmatmul.f32.gmra.mxu0 %v6955
    %v7046 = vpop.f32.mrf.mxu0
    %v7047 = vadd.f32 0.0, %v7046
    %7048 = vmatmul.f32.gmra.mxu0 %v6958
    %v7049 = vpop.f32.mrf.mxu0
    %v7050 = vadd.f32 0.0, %v7049
    %7051 = vmatmul.f32.gmra.mxu0 %v6961
    %v7052 = vpop.f32.mrf.mxu0
    %v7053 = vadd.f32 0.0, %v7052
    %7054 = vmatmul.f32.gmra.mxu0 %v6964
    %v7055 = vpop.f32.mrf.mxu0
    %v7056 = vadd.f32 0.0, %v7055
    %7057 = vmatmul.f32.gmra.mxu0 %v6967
    %v7058 = vpop.f32.mrf.mxu0
    %v7059 = vadd.f32 0.0, %v7058
    %7060 = vmatmul.f32.gmra.mxu0 %v6970
    %v7061 = vpop.f32.mrf.mxu0
    %v7062 = vadd.f32 0.0, %v7061
    %7063 = vmatmul.f32.gmra.mxu0 %v6973
    %v7064 = vpop.f32.mrf.mxu0
    %v7065 = vadd.f32 0.0, %v7064
    %7066 = vmatmul.f32.gmra.mxu0 %v6976
    %v7067 = vpop.f32.mrf.mxu0
    %v7068 = vadd.f32 0.0, %v7067
    %7069 = vmatmul.f32.gmra.mxu0 %v6979
    %v7070 = vpop.f32.mrf.mxu0
    %v7071 = vadd.f32 0.0, %v7070
    %7072 = vmatmul.f32.gmra.mxu0 %v6982
    %v7073 = vpop.f32.mrf.mxu0
    %v7074 = vadd.f32 0.0, %v7073
    %7075 = vmatmul.f32.gmra.mxu0 %v6985
    %v7076 = vpop.f32.mrf.mxu0
    %v7077 = vadd.f32 0.0, %v7076
    %7078 = vmatmul.f32.gmra.mxu0 %v6988
    %v7079 = vpop.f32.mrf.mxu0
    %v7080 = vadd.f32 0.0, %v7079
    %7081 = vdwg.mxu0
    %v7082 = vadd.f32 %v6856, %v7008
    %v7083 = vadd.f32 %v6857, %v7011
    %v7084 = vadd.f32 %v6858, %v7014
    %v7085 = vadd.f32 %v6859, %v7017
    %v7086 = vadd.f32 %v6860, %v7020
    %v7087 = vadd.f32 %v6861, %v7023
    %v7088 = vadd.f32 %v6862, %v7026
    %v7089 = vadd.f32 %v6863, %v7029
    %v7090 = vadd.f32 %v6864, %v7032
    %v7091 = vadd.f32 %v6865, %v7035
    %v7092 = vadd.f32 %v6866, %v7038
    %v7093 = vadd.f32 %v6867, %v7041
    %v7094 = vadd.f32 %v6868, %v7044
    %v7095 = vadd.f32 %v6869, %v7047
    %v7096 = vadd.f32 %v6870, %v7050
    %v7097 = vadd.f32 %v6871, %v7053
    %v7098 = vadd.f32 %v6872, %v7056
    %v7099 = vadd.f32 %v6873, %v7059
    %v7100 = vadd.f32 %v6874, %v7062
    %v7101 = vadd.f32 %v6875, %v7065
    %v7102 = vadd.f32 %v6876, %v7068
    %v7103 = vadd.f32 %v6877, %v7071
    %v7104 = vadd.f32 %v6878, %v7074
    %v7105 = vadd.f32 %v6879, %v7077
    %v7106 = vadd.f32 %v6880, %v7080
    %v7107 = vld [vmem:[%s6] sm:$0x7]
    %v7108 = vperm.slane %v7107, 0
    %v7109 = vadd.f32 %v7082, %v7108
    %v7110 = vadd.f32 %v7083, %v7108
    %v7111 = vadd.f32 %v7084, %v7108
    %v7112 = vadd.f32 %v7085, %v7108
    %v7113 = vadd.f32 %v7086, %v7108
    %v7114 = vadd.f32 %v7087, %v7108
    %v7115 = vadd.f32 %v7088, %v7108
    %v7116 = vadd.f32 %v7089, %v7108
    %v7117 = vadd.f32 %v7090, %v7108
    %v7118 = vadd.f32 %v7091, %v7108
    %v7119 = vadd.f32 %v7092, %v7108
    %v7120 = vadd.f32 %v7093, %v7108
    %v7121 = vadd.f32 %v7094, %v7108
    %v7122 = vadd.f32 %v7095, %v7108
    %v7123 = vadd.f32 %v7096, %v7108
    %v7124 = vadd.f32 %v7097, %v7108
    %v7125 = vadd.f32 %v7098, %v7108
    %v7126 = vadd.f32 %v7099, %v7108
    %v7127 = vadd.f32 %v7100, %v7108
    %v7128 = vadd.f32 %v7101, %v7108
    %v7129 = vadd.f32 %v7102, %v7108
    %v7130 = vadd.f32 %v7103, %v7108
    %v7131 = vadd.f32 %v7104, %v7108
    %v7132 = vadd.f32 %v7105, %v7108
    %v7133 = vadd.f32 %v7106, %v7108
    %v7134 = vmul.f32 %v7109, %v2432
    %v7135 = vmul.f32 %v7110, %v2436
    %v7136 = vmul.f32 %v7111, %v2440
    %v7137 = vmul.f32 %v7112, %v2444
    %v7138 = vmul.f32 %v7113, %v2448
    %v7139 = vmul.f32 %v7114, %v2452
    %v7140 = vmul.f32 %v7115, %v2456
    %v7141 = vmul.f32 %v7116, %v2460
    %v7142 = vmul.f32 %v7117, %v2464
    %v7143 = vmul.f32 %v7118, %v2468
    %v7144 = vmul.f32 %v7119, %v2472
    %v7145 = vmul.f32 %v7120, %v2476
    %v7146 = vmul.f32 %v7121, %v2480
    %v7147 = vmul.f32 %v7122, %v2484
    %v7148 = vmul.f32 %v7123, %v2488
    %v7149 = vmul.f32 %v7124, %v2492
    %v7150 = vmul.f32 %v7125, %v2496
    %v7151 = vmul.f32 %v7126, %v2500
    %v7152 = vmul.f32 %v7127, %v2504
    %v7153 = vmul.f32 %v7128, %v2508
    %v7154 = vmul.f32 %v7129, %v2512
    %v7155 = vmul.f32 %v7130, %v2516
    %v7156 = vmul.f32 %v7131, %v2520
    %v7157 = vmul.f32 %v7132, %v2524
    %v7158 = vmul.f32 %v7133, %v2528
    %v7159 = vadd.f32 %v7134, %v7135
    %v7160 = vadd.f32 %v7159, %v7136
    %v7161 = vadd.f32 %v7160, %v7137
    %v7162 = vadd.f32 %v7161, %v7138
    %v7163 = vadd.f32 %v7162, %v7139
    %v7164 = vadd.f32 %v7163, %v7140
    %v7165 = vadd.f32 %v7164, %v7141
    %v7166 = vadd.f32 %v7165, %v7142
    %v7167 = vadd.f32 %v7166, %v7143
    %v7168 = vadd.f32 %v7167, %v7144
    %v7169 = vadd.f32 %v7168, %v7145
    %v7170 = vadd.f32 %v7169, %v7146
    %v7171 = vadd.f32 %v7170, %v7147
    %v7172 = vadd.f32 %v7171, %v7148
    %v7173 = vadd.f32 %v7172, %v7149
    %v7174 = vadd.f32 %v7173, %v7150
    %v7175 = vadd.f32 %v7174, %v7151
    %v7176 = vadd.f32 %v7175, %v7152
    %v7177 = vadd.f32 %v7176, %v7153
    %v7178 = vadd.f32 %v7177, %v7154
    %v7179 = vadd.f32 %v7178, %v7155
    %v7180 = vadd.f32 %v7179, %v7156
    %v7181 = vadd.f32 %v7180, %v7157
    %v7182 = vadd.f32 %v7181, %v7158
    %v7183 = vrot.slane %v7182, 4
    %v7184 = vadd.f32 %v7182, %v7183
    %v7185 = vrot.slane %v7184, 2
    %v7186 = vadd.f32 %v7184, %v7185
    %v7187 = vrot.slane %v7186, 1
    %v7188 = vadd.f32 %v7186, %v7187
    %v7189 = vmul.f32 %v7134, %v7134
    %v7190 = vmul.f32 %v7135, %v7135
    %v7191 = vmul.f32 %v7136, %v7136
    %v7192 = vmul.f32 %v7137, %v7137
    %v7193 = vmul.f32 %v7138, %v7138
    %v7194 = vmul.f32 %v7139, %v7139
    %v7195 = vmul.f32 %v7140, %v7140
    %v7196 = vmul.f32 %v7141, %v7141
    %v7197 = vmul.f32 %v7142, %v7142
    %v7198 = vmul.f32 %v7143, %v7143
    %v7199 = vmul.f32 %v7144, %v7144
    %v7200 = vmul.f32 %v7145, %v7145
    %v7201 = vmul.f32 %v7146, %v7146
    %v7202 = vmul.f32 %v7147, %v7147
    %v7203 = vmul.f32 %v7148, %v7148
    %v7204 = vmul.f32 %v7149, %v7149
    %v7205 = vmul.f32 %v7150, %v7150
    %v7206 = vmul.f32 %v7151, %v7151
    %v7207 = vmul.f32 %v7152, %v7152
    %v7208 = vmul.f32 %v7153, %v7153
    %v7209 = vmul.f32 %v7154, %v7154
    %v7210 = vmul.f32 %v7155, %v7155
    %v7211 = vmul.f32 %v7156, %v7156
    %v7212 = vmul.f32 %v7157, %v7157
    %v7213 = vmul.f32 %v7158, %v7158
    %v7214 = vadd.f32 %v7189, %v7190
    %v7215 = vadd.f32 %v7214, %v7191
    %v7216 = vadd.f32 %v7215, %v7192
    %v7217 = vadd.f32 %v7216, %v7193
    %v7218 = vadd.f32 %v7217, %v7194
    %v7219 = vadd.f32 %v7218, %v7195
    %v7220 = vadd.f32 %v7219, %v7196
    %v7221 = vadd.f32 %v7220, %v7197
    %v7222 = vadd.f32 %v7221, %v7198
    %v7223 = vadd.f32 %v7222, %v7199
    %v7224 = vadd.f32 %v7223, %v7200
    %v7225 = vadd.f32 %v7224, %v7201
    %v7226 = vadd.f32 %v7225, %v7202
    %v7227 = vadd.f32 %v7226, %v7203
    %v7228 = vadd.f32 %v7227, %v7204
    %v7229 = vadd.f32 %v7228, %v7205
    %v7230 = vadd.f32 %v7229, %v7206
    %v7231 = vadd.f32 %v7230, %v7207
    %v7232 = vadd.f32 %v7231, %v7208
    %v7233 = vadd.f32 %v7232, %v7209
    %v7234 = vadd.f32 %v7233, %v7210
    %v7235 = vadd.f32 %v7234, %v7211
    %v7236 = vadd.f32 %v7235, %v7212
    %v7237 = vadd.f32 %v7236, %v7213
    %v7238 = vrot.slane %v7237, 4
    %v7239 = vadd.f32 %v7237, %v7238
    %v7240 = vrot.slane %v7239, 2
    %v7241 = vadd.f32 %v7239, %v7240
    %v7242 = vrot.slane %v7241, 1
    %v7243 = vadd.f32 %v7241, %v7242
    %v7244 = vmul.f32 %v7188, 0.0078125
    %v7245 = vmul.f32 %v7243, 0.0078125
    %v7246 = vmul.f32 %v7244, %v7244
    %v7247 = vsub.f32 %v7245, %v7246
    %v7248 = vadd.f32 %v7247, 1e-05
    %v7249 = vrsqrt.pop %v7248
    %v7250 = vmul.f32 %v7249, %v7248
    %v7251 = vmul.f32 %v7250, %v7249
    %v7252 = vmul.f32 0.5, %v7251
    %v7253 = vsub.f32 1.5, %v7252
    %v7254 = vmul.f32 %v7249, %v7253
    %vm7255 = vweird.f32 %v7248
    %vm7256 = vweird.f32 %v7249
    %vm7257 = vmor %vm7255, %vm7256
    %v7258 = vsel %vm7257, %v7249, %v7254
    %v7259 = vmul.f32 %v7258, %v7107
    %v7260 = vmul.f32 %v7244, %v7259
    %v7262 = vrot.slane %v7260, 7
    %v7264 = vsub.f32 %v7107, %v7262
    %v7265 = vperm.slane %v7259, 1
    %v7266 = vmul.f32 %v7109, %v7265
    %v7267 = vmul.f32 %v7110, %v7265
    %v7268 = vmul.f32 %v7111, %v7265
    %v7269 = vmul.f32 %v7112, %v7265
    %v7270 = vmul.f32 %v7113, %v7265
    %v7271 = vmul.f32 %v7114, %v7265
    %v7272 = vmul.f32 %v7115, %v7265
    %v7273 = vmul.f32 %v7116, %v7265
    %v7274 = vmul.f32 %v7117, %v7265
    %v7275 = vmul.f32 %v7118, %v7265
    %v7276 = vmul.f32 %v7119, %v7265
    %v7277 = vmul.f32 %v7120, %v7265
    %v7278 = vmul.f32 %v7121, %v7265
    %v7279 = vmul.f32 %v7122, %v7265
    %v7280 = vmul.f32 %v7123, %v7265
    %v7281 = vmul.f32 %v7124, %v7265
    %v7282 = vmul.f32 %v7125, %v7265
    %v7283 = vmul.f32 %v7126, %v7265
    %v7284 = vmul.f32 %v7127, %v7265
    %v7285 = vmul.f32 %v7128, %v7265
    %v7286 = vmul.f32 %v7129, %v7265
    %v7287 = vmul.f32 %v7130, %v7265
    %v7288 = vmul.f32 %v7131, %v7265
    %v7289 = vmul.f32 %v7132, %v7265
    %v7290 = vmul.f32 %v7133, %v7265
    %v7291 = vperm.slane %v7264, 2
    %v7292 = vadd.f32 %v7266, %v7291
    %v7293 = vadd.f32 %v7267, %v7291
    %v7294 = vadd.f32 %v7268, %v7291
    %v7295 = vadd.f32 %v7269, %v7291
    %v7296 = vadd.f32 %v7270, %v7291
    %v7297 = vadd.f32 %v7271, %v7291
    %v7298 = vadd.f32 %v7272, %v7291
    %v7299 = vadd.f32 %v7273, %v7291
    %v7300 = vadd.f32 %v7274, %v7291
    %v7301 = vadd.f32 %v7275, %v7291
    %v7302 = vadd.f32 %v7276, %v7291
    %v7303 = vadd.f32 %v7277, %v7291
    %v7304 = vadd.f32 %v7278, %v7291
    %v7305 = vadd.f32 %v7279, %v7291
    %v7306 = vadd.f32 %v7280, %v7291
    %v7307 = vadd.f32 %v7281, %v7291
    %v7308 = vadd.f32 %v7282, %v7291
    %v7309 = vadd.f32 %v7283, %v7291
    %v7310 = vadd.f32 %v7284, %v7291
    %v7311 = vadd.f32 %v7285, %v7291
    %v7312 = vadd.f32 %v7286, %v7291
    %v7313 = vadd.f32 %v7287, %v7291
    %v7314 = vadd.f32 %v7288, %v7291
    %v7315 = vadd.f32 %v7289, %v7291
    %v7316 = vadd.f32 %v7290, %v7291
    %v7317 = vmax.f32 %v7292, 0.0
    %v7318 = vmax.f32 %v7293, 0.0
    %v7319 = vmax.f32 %v7294, 0.0
    %v7320 = vmax.f32 %v7295, 0.0
    %v7321 = vmax.f32 %v7296, 0.0
    %v7322 = vmax.f32 %v7297, 0.0
    %v7323 = vmax.f32 %v7298, 0.0
    %v7324 = vmax.f32 %v7299, 0.0
    %v7325 = vmax.f32 %v7300, 0.0
    %v7326 = vmax.f32 %v7301, 0.0
    %v7327 = vmax.f32 %v7302, 0.0
    %v7328 = vmax.f32 %v7303, 0.0
    %v7329 = vmax.f32 %v7304, 0.0
    %v7330 = vmax.f32 %v7305, 0.0
    %v7331 = vmax.f32 %v7306, 0.0
    %v7332 = vmax.f32 %v7307, 0.0
    %v7333 = vmax.f32 %v7308, 0.0
    %v7334 = vmax.f32 %v7309, 0.0
    %v7335 = vmax.f32 %v7310, 0.0
    %v7336 = vmax.f32 %v7311, 0.0
    %v7337 = vmax.f32 %v7312, 0.0
    %v7338 = vmax.f32 %v7313, 0.0
    %v7339 = vmax.f32 %v7314, 0.0
    %v7340 = vmax.f32 %v7315, 0.0
    %v7341 = vmax.f32 %v7316, 0.0
    %v7342 = vmul.f32 %v7317, %v2432
    %v7343 = vmul.f32 %v7318, %v2436
    %v7344 = vmul.f32 %v7319, %v2440
    %v7345 = vmul.f32 %v7320, %v2444
    %v7346 = vmul.f32 %v7321, %v2448
    %v7347 = vmul.f32 %v7322, %v2452
    %v7348 = vmul.f32 %v7323, %v2456
    %v7349 = vmul.f32 %v7324, %v2460
    %v7350 = vmul.f32 %v7325, %v2464
    %v7351 = vmul.f32 %v7326, %v2468
    %v7352 = vmul.f32 %v7327, %v2472
    %v7353 = vmul.f32 %v7328, %v2476
    %v7354 = vmul.f32 %v7329, %v2480
    %v7355 = vmul.f32 %v7330, %v2484
    %v7356 = vmul.f32 %v7331, %v2488
    %v7357 = vmul.f32 %v7332, %v2492
    %v7358 = vmul.f32 %v7333, %v2496
    %v7359 = vmul.f32 %v7334, %v2500
    %v7360 = vmul.f32 %v7335, %v2504
    %v7361 = vmul.f32 %v7336, %v2508
    %v7362 = vmul.f32 %v7337, %v2512
    %v7363 = vmul.f32 %v7338, %v2516
    %v7364 = vmul.f32 %v7339, %v2520
    %v7365 = vmul.f32 %v7340, %v2524
    %v7366 = vmul.f32 %v7341, %v2528
    %7367 = vst [vmem:[#allocation4 + $0x18] sm:$0xff] %v7342
    %7368 = vst [vmem:[#allocation4 + $0x20] sm:$0xff] %v7343
    %7369 = vst [vmem:[#allocation4 + $0x28] sm:$0xff] %v7344
    %7370 = vst [vmem:[#allocation4 + $0x30] sm:$0xff] %v7345
    %7371 = vst [vmem:[#allocation4 + $0x38] sm:$0xff] %v7346
    %7372 = vst [vmem:[#allocation4 + $0x40] sm:$0xff] %v7347
    %7373 = vst [vmem:[#allocation4 + $0x48] sm:$0xff] %v7348
    %7374 = vst [vmem:[#allocation4 + $0x50] sm:$0xff] %v7349
    %7375 = vst [vmem:[#allocation4 + $0x58] sm:$0xff] %v7350
    %7376 = vst [vmem:[#allocation4 + $0x60] sm:$0xff] %v7351
    %7377 = vst [vmem:[#allocation4 + $0x68] sm:$0xff] %v7352
    %7378 = vst [vmem:[#allocation4 + $0x70] sm:$0xff] %v7353
    %7379 = vst [vmem:[#allocation4 + $0x78] sm:$0xff] %v7354
    %7380 = vst [vmem:[#allocation4 + $0x80] sm:$0xff] %v7355
    %7381 = vst [vmem:[#allocation4 + $0x88] sm:$0xff] %v7356
    %7382 = vst [vmem:[#allocation4 + $0x90] sm:$0xff] %v7357
    %7383 = vst [vmem:[#allocation4 + $0x98] sm:$0xff] %v7358
    %7384 = vst [vmem:[#allocation4 + $0xa0] sm:$0xff] %v7359
    %7385 = vst [vmem:[#allocation4 + $0xa8] sm:$0xff] %v7360
    %7386 = vst [vmem:[#allocation4 + $0xb0] sm:$0xff] %v7361
    %7387 = vst [vmem:[#allocation4 + $0xb8] sm:$0xff] %v7362
    %7388 = vst [vmem:[#allocation4 + $0xc0] sm:$0xff] %v7363
    %7389 = vst [vmem:[#allocation4 + $0xc8] sm:$0xff] %v7364
    %7390 = vst [vmem:[#allocation4 + $0xd0] sm:$0xff] %v7365
    %7391 = vst [vmem:[#allocation4 + $0xd8] sm:$0xff] %v7366
    %v7392 = vld [vmem:[#allocation4 + $0x2e] sm:$0xff]
    %v7393 = vld [vmem:[#allocation4 + $0x36] sm:$0xff]
    %v7394 = vld [vmem:[#allocation4 + $0x42] sm:$0xff]
    %v7395 = vld [vmem:[#allocation4 + $0x4a] sm:$0xff]
    %v7396 = vadd.f32 %v7392, %v7394
    %v7397 = vadd.f32 %v7393, %v7395
    %v7398 = vld [vmem:[#allocation4 + $0x56] sm:$0xff]
    %v7399 = vld [vmem:[#allocation4 + $0x5e] sm:$0xff]
    %v7400 = vadd.f32 %v7396, %v7398
    %v7401 = vadd.f32 %v7397, %v7399
    %v7402 = vld [vmem:[#allocation4 + $0x6a] sm:$0xff]
    %v7403 = vld [vmem:[#allocation4 + $0x72] sm:$0xff]
    %v7404 = vadd.f32 %v7400, %v7402
    %v7405 = vadd.f32 %v7401, %v7403
    %v7406 = vld [vmem:[#allocation4 + $0x7e] sm:$0xff]
    %v7407 = vld [vmem:[#allocation4 + $0x86] sm:$0xff]
    %v7408 = vadd.f32 %v7404, %v7406
    %v7409 = vadd.f32 %v7405, %v7407
    %v7410 = vld [vmem:[#allocation4 + $0x92] sm:$0xff]
    %v7411 = vld [vmem:[#allocation4 + $0x9a] sm:$0xff]
    %v7412 = vadd.f32 %v7408, %v7410
    %v7413 = vadd.f32 %v7409, %v7411
    %v7414 = vld [vmem:[#allocation4 + $0xa6] sm:$0xff]
    %v7415 = vld [vmem:[#allocation4 + $0xae] sm:$0xff]
    %v7416 = vadd.f32 %v7412, %v7414
    %v7417 = vadd.f32 %v7413, %v7415
    %v7418 = vld [vmem:[#allocation4 + $0xba] sm:$0xff]
    %v7419 = vld [vmem:[#allocation4 + $0xc2] sm:$0xff]
    %v7420 = vadd.f32 %v7416, %v7418
    %v7421 = vadd.f32 %v7417, %v7419
    %v7422 = vmul.f32 %v7420, 0.125
    %v7423 = vmul.f32 %v7421, 0.125
    %7424 = vst [vmem:[#allocation5] sm:$0x3] %v7422
    %7426 = vst.sshfl [vmem:[#allocation1] sm:$0xff pattern:$0x73625140] %v7422
    %s7427 = scalar_lea.vmem [#allocation1], 1
    %v7428 = vld [vmem:[%s7427] ss:$4 sm:$0xff]
    %7430 = vst [vmem:[#allocation5 + $0x2] sm:$0x3] %v7428
    %7431 = vst.sshfl [vmem:[#allocation1] sm:$0xff pattern:$0x73625140] %v7422
    %s7432 = scalar_lea.vmem [#allocation1], 2
    %v7433 = vld [vmem:[%s7432] ss:$4 sm:$0xff]
    %7435 = vst [vmem:[#allocation5 + $0x4] sm:$0x3] %v7433
    %7436 = vst.sshfl [vmem:[#allocation1] sm:$0xff pattern:$0x73625140] %v7422
    %s7437 = scalar_lea.vmem [#allocation1], 3
    %v7438 = vld [vmem:[%s7437] ss:$4 sm:$0xff]
    %7440 = vst [vmem:[#allocation5 + $0x6] sm:$0x3] %v7438
    %7441 = vst [vmem:[#allocation5 + $0x8] sm:$0x3] %v7423
    %7443 = vst.sshfl [vmem:[#allocation1] sm:$0xff pattern:$0x73625140] %v7423
    %s7444 = scalar_lea.vmem [#allocation1], 1
    %v7445 = vld [vmem:[%s7444] ss:$4 sm:$0xff]
    %7447 = vst [vmem:[#allocation5 + $0xa] sm:$0x3] %v7445
    %7448 = vst.sshfl [vmem:[#allocation1] sm:$0xff pattern:$0x73625140] %v7423
    %s7449 = scalar_lea.vmem [#allocation1], 2
    %v7450 = vld [vmem:[%s7449] ss:$4 sm:$0xff]
    %7452 = vst [vmem:[#allocation5 + $0xc] sm:$0x3] %v7450
    %7453 = vst.sshfl [vmem:[#allocation1] sm:$0xff pattern:$0x73625140] %v7423
    %s7454 = scalar_lea.vmem [#allocation1], 3
    %v7455 = vld [vmem:[%s7454] ss:$4 sm:$0xff]
    %7457 = vst [vmem:[#allocation5 + $0xe] sm:$0x3] %v7455
    %s7458 = smul.u32 1024, 1
    %s7459 = sshll.u32 %s7458, 4
    %7460 = dma.done %s189, %s7459
    %v7461 = vld [vmem:[#allocation5] sm:$0xff]
    %v7462 = vld [vmem:[#allocation5 + $0x8] sm:$0xff]
    %v7463 = vld [vmem:[#allocation7] sm:$0xff]
    %v7464 = vld [vmem:[#allocation7 + $0x8] sm:$0xff]
    %v7465 = vld [vmem:[#allocation7 + $0x10] sm:$0xff]
    %v7466 = vld [vmem:[#allocation7 + $0x18] sm:$0xff]
    %v7467 = vld [vmem:[#allocation7 + $0x20] sm:$0xff]
    %v7468 = vld [vmem:[#allocation7 + $0x28] sm:$0xff]
    %v7469 = vld [vmem:[#allocation7 + $0x30] sm:$0xff]
    %v7470 = vld [vmem:[#allocation7 + $0x38] sm:$0xff]
    %v7471 = vld [vmem:[#allocation7 + $0x40] sm:$0xff]
    %v7472 = vld [vmem:[#allocation7 + $0x48] sm:$0xff]
    %v7473 = vld [vmem:[#allocation7 + $0x50] sm:$0xff]
    %v7474 = vld [vmem:[#allocation7 + $0x58] sm:$0xff]
    %v7475 = vld [vmem:[#allocation7 + $0x60] sm:$0xff]
    %v7476 = vld [vmem:[#allocation7 + $0x68] sm:$0xff]
    %v7477 = vld [vmem:[#allocation7 + $0x70] sm:$0xff]
    %v7478 = vld [vmem:[#allocation7 + $0x78] sm:$0xff]
    %v7479 = vld [vmem:[#allocation7 + $0x80] sm:$0xff]
    %v7480 = vld [vmem:[#allocation7 + $0x88] sm:$0xff]
    %v7481 = vld [vmem:[#allocation7 + $0x90] sm:$0xff]
    %v7482 = vld [vmem:[#allocation7 + $0x98] sm:$0xff]
    %v7483 = vld [vmem:[#allocation7 + $0xa0] sm:$0xff]
    %v7484 = vld [vmem:[#allocation7 + $0xa8] sm:$0xff]
    %v7485 = vld [vmem:[#allocation7 + $0xb0] sm:$0xff]
    %v7486 = vld [vmem:[#allocation7 + $0xb8] sm:$0xff]
    %v7487 = vld [vmem:[#allocation7 + $0xc0] sm:$0xff]
    %v7488 = vld [vmem:[#allocation7 + $0xc8] sm:$0xff]
    %v7489 = vld [vmem:[#allocation7 + $0xd0] sm:$0xff]
    %v7490 = vld [vmem:[#allocation7 + $0xd8] sm:$0xff]
    %v7491 = vld [vmem:[#allocation7 + $0xe0] sm:$0xff]
    %v7492 = vld [vmem:[#allocation7 + $0xe8] sm:$0xff]
    %v7493 = vld [vmem:[#allocation7 + $0xf0] sm:$0xff]
    %v7494 = vld [vmem:[#allocation7 + $0xf8] sm:$0xff]
    %v7495 = vld [vmem:[#allocation7 + $0x100] sm:$0xff]
    %v7496 = vld [vmem:[#allocation7 + $0x108] sm:$0xff]
    %v7497 = vld [vmem:[#allocation7 + $0x110] sm:$0xff]
    %v7498 = vld [vmem:[#allocation7 + $0x118] sm:$0xff]
    %v7499 = vld [vmem:[#allocation7 + $0x120] sm:$0xff]
    %v7500 = vld [vmem:[#allocation7 + $0x128] sm:$0xff]
    %v7501 = vld [vmem:[#allocation7 + $0x130] sm:$0xff]
    %v7502 = vld [vmem:[#allocation7 + $0x138] sm:$0xff]
    %v7503 = vld [vmem:[#allocation7 + $0x140] sm:$0xff]
    %v7504 = vld [vmem:[#allocation7 + $0x148] sm:$0xff]
    %v7505 = vld [vmem:[#allocation7 + $0x150] sm:$0xff]
    %v7506 = vld [vmem:[#allocation7 + $0x158] sm:$0xff]
    %v7507 = vld [vmem:[#allocation7 + $0x160] sm:$0xff]
    %v7508 = vld [vmem:[#allocation7 + $0x168] sm:$0xff]
    %v7509 = vld [vmem:[#allocation7 + $0x170] sm:$0xff]
    %v7510 = vld [vmem:[#allocation7 + $0x178] sm:$0xff]
    %v7511 = vld [vmem:[#allocation7 + $0x180] sm:$0xff]
    %v7512 = vld [vmem:[#allocation7 + $0x188] sm:$0xff]
    %v7513 = vld [vmem:[#allocation7 + $0x190] sm:$0xff]
    %v7514 = vld [vmem:[#allocation7 + $0x198] sm:$0xff]
    %v7515 = vld [vmem:[#allocation7 + $0x1a0] sm:$0xff]
    %v7516 = vld [vmem:[#allocation7 + $0x1a8] sm:$0xff]
    %v7517 = vld [vmem:[#allocation7 + $0x1b0] sm:$0xff]
    %v7518 = vld [vmem:[#allocation7 + $0x1b8] sm:$0xff]
    %v7519 = vld [vmem:[#allocation7 + $0x1c0] sm:$0xff]
    %v7520 = vld [vmem:[#allocation7 + $0x1c8] sm:$0xff]
    %v7521 = vld [vmem:[#allocation7 + $0x1d0] sm:$0xff]
    %v7522 = vld [vmem:[#allocation7 + $0x1d8] sm:$0xff]
    %v7523 = vld [vmem:[#allocation7 + $0x1e0] sm:$0xff]
    %v7524 = vld [vmem:[#allocation7 + $0x1e8] sm:$0xff]
    %v7525 = vld [vmem:[#allocation7 + $0x1f0] sm:$0xff]
    %v7526 = vld [vmem:[#allocation7 + $0x1f8] sm:$0xff]
    %v7527 = vld [vmem:[#allocation7 + $0x200] sm:$0xff]
    %v7528 = vld [vmem:[#allocation7 + $0x208] sm:$0xff]
    %v7529 = vld [vmem:[#allocation7 + $0x210] sm:$0xff]
    %v7530 = vld [vmem:[#allocation7 + $0x218] sm:$0xff]
    %v7531 = vld [vmem:[#allocation7 + $0x220] sm:$0xff]
    %v7532 = vld [vmem:[#allocation7 + $0x228] sm:$0xff]
    %v7533 = vld [vmem:[#allocation7 + $0x230] sm:$0xff]
    %v7534 = vld [vmem:[#allocation7 + $0x238] sm:$0xff]
    %v7535 = vld [vmem:[#allocation7 + $0x240] sm:$0xff]
    %v7536 = vld [vmem:[#allocation7 + $0x248] sm:$0xff]
    %v7537 = vld [vmem:[#allocation7 + $0x250] sm:$0xff]
    %v7538 = vld [vmem:[#allocation7 + $0x258] sm:$0xff]
    %v7539 = vld [vmem:[#allocation7 + $0x260] sm:$0xff]
    %v7540 = vld [vmem:[#allocation7 + $0x268] sm:$0xff]
    %v7541 = vld [vmem:[#allocation7 + $0x270] sm:$0xff]
    %v7542 = vld [vmem:[#allocation7 + $0x278] sm:$0xff]
    %v7543 = vld [vmem:[#allocation7 + $0x280] sm:$0xff]
    %v7544 = vld [vmem:[#allocation7 + $0x288] sm:$0xff]
    %v7545 = vld [vmem:[#allocation7 + $0x290] sm:$0xff]
    %v7546 = vld [vmem:[#allocation7 + $0x298] sm:$0xff]
    %v7547 = vld [vmem:[#allocation7 + $0x2a0] sm:$0xff]
    %v7548 = vld [vmem:[#allocation7 + $0x2a8] sm:$0xff]
    %v7549 = vld [vmem:[#allocation7 + $0x2b0] sm:$0xff]
    %v7550 = vld [vmem:[#allocation7 + $0x2b8] sm:$0xff]
    %v7551 = vld [vmem:[#allocation7 + $0x2c0] sm:$0xff]
    %v7552 = vld [vmem:[#allocation7 + $0x2c8] sm:$0xff]
    %v7553 = vld [vmem:[#allocation7 + $0x2d0] sm:$0xff]
    %v7554 = vld [vmem:[#allocation7 + $0x2d8] sm:$0xff]
    %v7555 = vld [vmem:[#allocation7 + $0x2e0] sm:$0xff]
    %v7556 = vld [vmem:[#allocation7 + $0x2e8] sm:$0xff]
    %v7557 = vld [vmem:[#allocation7 + $0x2f0] sm:$0xff]
    %v7558 = vld [vmem:[#allocation7 + $0x2f8] sm:$0xff]
    %v7559 = vld [vmem:[#allocation7 + $0x300] sm:$0xff]
    %v7560 = vld [vmem:[#allocation7 + $0x308] sm:$0xff]
    %v7561 = vld [vmem:[#allocation7 + $0x310] sm:$0xff]
    %v7562 = vld [vmem:[#allocation7 + $0x318] sm:$0xff]
    %v7563 = vld [vmem:[#allocation7 + $0x320] sm:$0xff]
    %v7564 = vld [vmem:[#allocation7 + $0x328] sm:$0xff]
    %v7565 = vld [vmem:[#allocation7 + $0x330] sm:$0xff]
    %v7566 = vld [vmem:[#allocation7 + $0x338] sm:$0xff]
    %v7567 = vld [vmem:[#allocation7 + $0x340] sm:$0xff]
    %v7568 = vld [vmem:[#allocation7 + $0x348] sm:$0xff]
    %v7569 = vld [vmem:[#allocation7 + $0x350] sm:$0xff]
    %v7570 = vld [vmem:[#allocation7 + $0x358] sm:$0xff]
    %v7571 = vld [vmem:[#allocation7 + $0x360] sm:$0xff]
    %v7572 = vld [vmem:[#allocation7 + $0x368] sm:$0xff]
    %v7573 = vld [vmem:[#allocation7 + $0x370] sm:$0xff]
    %v7574 = vld [vmem:[#allocation7 + $0x378] sm:$0xff]
    %v7575 = vld [vmem:[#allocation7 + $0x380] sm:$0xff]
    %v7576 = vld [vmem:[#allocation7 + $0x388] sm:$0xff]
    %v7577 = vld [vmem:[#allocation7 + $0x390] sm:$0xff]
    %v7578 = vld [vmem:[#allocation7 + $0x398] sm:$0xff]
    %v7579 = vld [vmem:[#allocation7 + $0x3a0] sm:$0xff]
    %v7580 = vld [vmem:[#allocation7 + $0x3a8] sm:$0xff]
    %v7581 = vld [vmem:[#allocation7 + $0x3b0] sm:$0xff]
    %v7582 = vld [vmem:[#allocation7 + $0x3b8] sm:$0xff]
    %v7583 = vld [vmem:[#allocation7 + $0x3c0] sm:$0xff]
    %v7584 = vld [vmem:[#allocation7 + $0x3c8] sm:$0xff]
    %v7585 = vld [vmem:[#allocation7 + $0x3d0] sm:$0xff]
    %v7586 = vld [vmem:[#allocation7 + $0x3d8] sm:$0xff]
    %v7587 = vld [vmem:[#allocation7 + $0x3e0] sm:$0xff]
    %v7588 = vld [vmem:[#allocation7 + $0x3e8] sm:$0xff]
    %v7589 = vld [vmem:[#allocation7 + $0x3f0] sm:$0xff]
    %v7590 = vld [vmem:[#allocation7 + $0x3f8] sm:$0xff]
    %v7591 = vld [vmem:[%s8] sm:$0x7]
    %v7592 = vperm.slane %v7591, 0
    %7595 = vst [vmem:[#allocation1] ss:$4 sm:$0xff] %v7461
    %s7596 = scalar_lea.vmem [#allocation1], 32
    %7597 = vst [vmem:[%s7596] ss:$4 sm:$0xff] %v7462
    %v7598 = vld.sshfl [vmem:[#allocation1] sm:$0xff pattern:$0x73625140]
    %v7599 = vld.sshfl [vmem:[#allocation1 + $0x8] sm:$0xff pattern:$0x73625140]
    %v7600 = vld.sshfl [vmem:[#allocation1 + $0x10] sm:$0xff pattern:$0x73625140]
    %v7601 = vld.sshfl [vmem:[#allocation1 + $0x18] sm:$0xff pattern:$0x73625140]
    %v7602 = vld.sshfl [vmem:[#allocation1 + $0x20] sm:$0xff pattern:$0x73625140]
    %v7603 = vld.sshfl [vmem:[#allocation1 + $0x28] sm:$0xff pattern:$0x73625140]
    %v7604 = vld.sshfl [vmem:[#allocation1 + $0x30] sm:$0xff pattern:$0x73625140]
    %v7605 = vld.sshfl [vmem:[#allocation1 + $0x38] sm:$0xff pattern:$0x73625140]
    %7614 = vmatpush.msra.mxu0 %v7478
    %7615 = vmatpush.msra.mxu0 %v7477
    %7616 = vmatpush.msra.mxu0 %v7476
    %7617 = vmatpush.msra.mxu0 %v7475
    %7618 = vmatpush.msra.mxu0 %v7474
    %7619 = vmatpush.msra.mxu0 %v7473
    %7620 = vmatpush.msra.mxu0 %v7472
    %7621 = vmatpush.msra.mxu0 %v7471
    %7622 = vmatpush.msra.mxu0 %v7470
    %7623 = vmatpush.msra.mxu0 %v7469
    %7624 = vmatpush.msra.mxu0 %v7468
    %7625 = vmatpush.msra.mxu0 %v7467
    %7626 = vmatpush.msra.mxu0 %v7466
    %7627 = vmatpush.msra.mxu0 %v7465
    %7628 = vmatpush.msra.mxu0 %v7464
    %7629 = vmatpush.msra.mxu0 %v7463
    %7630 = vmatmul.f32.gmra.mxu0 %v7598
    %v7631 = vpop.f32.mrf.mxu0
    %v7632 = vadd.f32 %v7592, %v7631
    %7633 = vdwg.mxu0
    %7634 = vmatpush.msra.mxu0 %v7494
    %7635 = vmatpush.msra.mxu0 %v7493
    %7636 = vmatpush.msra.mxu0 %v7492
    %7637 = vmatpush.msra.mxu0 %v7491
    %7638 = vmatpush.msra.mxu0 %v7490
    %7639 = vmatpush.msra.mxu0 %v7489
    %7640 = vmatpush.msra.mxu0 %v7488
    %7641 = vmatpush.msra.mxu0 %v7487
    %7642 = vmatpush.msra.mxu0 %v7486
    %7643 = vmatpush.msra.mxu0 %v7485
    %7644 = vmatpush.msra.mxu0 %v7484
    %7645 = vmatpush.msra.mxu0 %v7483
    %7646 = vmatpush.msra.mxu0 %v7482
    %7647 = vmatpush.msra.mxu0 %v7481
    %7648 = vmatpush.msra.mxu0 %v7480
    %7649 = vmatpush.msra.mxu0 %v7479
    %7650 = vmatmul.f32.gmra.mxu0 %v7599
    %v7651 = vpop.f32.mrf.mxu0
    %v7652 = vadd.f32 %v7632, %v7651
    %7653 = vdwg.mxu0
    %7654 = vmatpush.msra.mxu0 %v7510
    %7655 = vmatpush.msra.mxu0 %v7509
    %7656 = vmatpush.msra.mxu0 %v7508
    %7657 = vmatpush.msra.mxu0 %v7507
    %7658 = vmatpush.msra.mxu0 %v7506
    %7659 = vmatpush.msra.mxu0 %v7505
    %7660 = vmatpush.msra.mxu0 %v7504
    %7661 = vmatpush.msra.mxu0 %v7503
    %7662 = vmatpush.msra.mxu0 %v7502
    %7663 = vmatpush.msra.mxu0 %v7501
    %7664 = vmatpush.msra.mxu0 %v7500
    %7665 = vmatpush.msra.mxu0 %v7499
    %7666 = vmatpush.msra.mxu0 %v7498
    %7667 = vmatpush.msra.mxu0 %v7497
    %7668 = vmatpush.msra.mxu0 %v7496
    %7669 = vmatpush.msra.mxu0 %v7495
    %7670 = vmatmul.f32.gmra.mxu0 %v7600
    %v7671 = vpop.f32.mrf.mxu0
    %v7672 = vadd.f32 %v7652, %v7671
    %7673 = vdwg.mxu0
    %7674 = vmatpush.msra.mxu0 %v7526
    %7675 = vmatpush.msra.mxu0 %v7525
    %7676 = vmatpush.msra.mxu0 %v7524
    %7677 = vmatpush.msra.mxu0 %v7523
    %7678 = vmatpush.msra.mxu0 %v7522
    %7679 = vmatpush.msra.mxu0 %v7521
    %7680 = vmatpush.msra.mxu0 %v7520
    %7681 = vmatpush.msra.mxu0 %v7519
    %7682 = vmatpush.msra.mxu0 %v7518
    %7683 = vmatpush.msra.mxu0 %v7517
    %7684 = vmatpush.msra.mxu0 %v7516
    %7685 = vmatpush.msra.mxu0 %v7515
    %7686 = vmatpush.msra.mxu0 %v7514
    %7687 = vmatpush.msra.mxu0 %v7513
    %7688 = vmatpush.msra.mxu0 %v7512
    %7689 = vmatpush.msra.mxu0 %v7511
    %7690 = vmatmul.f32.gmra.mxu0 %v7601
    %v7691 = vpop.f32.mrf.mxu0
    %v7692 = vadd.f32 %v7672, %v7691
    %7693 = vdwg.mxu0
    %7694 = vmatpush.msra.mxu0 %v7542
    %7695 = vmatpush.msra.mxu0 %v7541
    %7696 = vmatpush.msra.mxu0 %v7540
    %7697 = vmatpush.msra.mxu0 %v7539
    %7698 = vmatpush.msra.mxu0 %v7538
    %7699 = vmatpush.msra.mxu0 %v7537
    %7700 = vmatpush.msra.mxu0 %v7536
    %7701 = vmatpush.msra.mxu0 %v7535
    %7702 = vmatpush.msra.mxu0 %v7534
    %7703 = vmatpush.msra.mxu0 %v7533
    %7704 = vmatpush.msra.mxu0 %v7532
    %7705 = vmatpush.msra.mxu0 %v7531
    %7706 = vmatpush.msra.mxu0 %v7530
    %7707 = vmatpush.msra.mxu0 %v7529
    %7708 = vmatpush.msra.mxu0 %v7528
    %7709 = vmatpush.msra.mxu0 %v7527
    %7710 = vmatmul.f32.gmra.mxu0 %v7602
    %v7711 = vpop.f32.mrf.mxu0
    %v7712 = vadd.f32 %v7692, %v7711
    %7713 = vdwg.mxu0
    %7714 = vmatpush.msra.mxu0 %v7558
    %7715 = vmatpush.msra.mxu0 %v7557
    %7716 = vmatpush.msra.mxu0 %v7556
    %7717 = vmatpush.msra.mxu0 %v7555
    %7718 = vmatpush.msra.mxu0 %v7554
    %7719 = vmatpush.msra.mxu0 %v7553
    %7720 = vmatpush.msra.mxu0 %v7552
    %7721 = vmatpush.msra.mxu0 %v7551
    %7722 = vmatpush.msra.mxu0 %v7550
    %7723 = vmatpush.msra.mxu0 %v7549
    %7724 = vmatpush.msra.mxu0 %v7548
    %7725 = vmatpush.msra.mxu0 %v7547
    %7726 = vmatpush.msra.mxu0 %v7546
    %7727 = vmatpush.msra.mxu0 %v7545
    %7728 = vmatpush.msra.mxu0 %v7544
    %7729 = vmatpush.msra.mxu0 %v7543
    %7730 = vmatmul.f32.gmra.mxu0 %v7603
    %v7731 = vpop.f32.mrf.mxu0
    %v7732 = vadd.f32 %v7712, %v7731
    %7733 = vdwg.mxu0
    %7734 = vmatpush.msra.mxu0 %v7574
    %7735 = vmatpush.msra.mxu0 %v7573
    %7736 = vmatpush.msra.mxu0 %v7572
    %7737 = vmatpush.msra.mxu0 %v7571
    %7738 = vmatpush.msra.mxu0 %v7570
    %7739 = vmatpush.msra.mxu0 %v7569
    %7740 = vmatpush.msra.mxu0 %v7568
    %7741 = vmatpush.msra.mxu0 %v7567
    %7742 = vmatpush.msra.mxu0 %v7566
    %7743 = vmatpush.msra.mxu0 %v7565
    %7744 = vmatpush.msra.mxu0 %v7564
    %7745 = vmatpush.msra.mxu0 %v7563
    %7746 = vmatpush.msra.mxu0 %v7562
    %7747 = vmatpush.msra.mxu0 %v7561
    %7748 = vmatpush.msra.mxu0 %v7560
    %7749 = vmatpush.msra.mxu0 %v7559
    %7750 = vmatmul.f32.gmra.mxu0 %v7604
    %v7751 = vpop.f32.mrf.mxu0
    %v7752 = vadd.f32 %v7732, %v7751
    %7753 = vdwg.mxu0
    %7754 = vmatpush.msra.mxu0 %v7590
    %7755 = vmatpush.msra.mxu0 %v7589
    %7756 = vmatpush.msra.mxu0 %v7588
    %7757 = vmatpush.msra.mxu0 %v7587
    %7758 = vmatpush.msra.mxu0 %v7586
    %7759 = vmatpush.msra.mxu0 %v7585
    %7760 = vmatpush.msra.mxu0 %v7584
    %7761 = vmatpush.msra.mxu0 %v7583
    %7762 = vmatpush.msra.mxu0 %v7582
    %7763 = vmatpush.msra.mxu0 %v7581
    %7764 = vmatpush.msra.mxu0 %v7580
    %7765 = vmatpush.msra.mxu0 %v7579
    %7766 = vmatpush.msra.mxu0 %v7578
    %7767 = vmatpush.msra.mxu0 %v7577
    %7768 = vmatpush.msra.mxu0 %v7576
    %7769 = vmatpush.msra.mxu0 %v7575
    %7770 = vmatmul.f32.gmra.mxu0 %v7605
    %v7771 = vpop.f32.mrf.mxu0
    %v7772 = vadd.f32 %v7752, %v7771
    %7773 = vdwg.mxu0
    %vm7774 = vcmask 517120
    %v7775 = vsel %vm7774, %v7772, 0.0
    %7776 = vadd.xlane.f32.xlu0 %v7775
    %v7777 = vpop.xlane.xlu0 %7776
    %v7778 = vrcp.pop 64.0
    %v7779 = vmul.f32 64.0, %v7778
    %v7780 = vsub.f32 1.0, %v7779
    %v7781 = vmul.f32 %v7778, %v7780
    %v7782 = vadd.f32 %v7778, %v7781
    %vm7783 = vweird.f32 %v7778
    %v7784 = vsel %vm7783, %v7778, %v7782
    %v7785 = vmul.f32 %v7777, %v7784
    %v7786 = vsub.f32 %v7772, %v7785
    %v7787 = vmul.f32 %v7786, %v7786
    %v7788 = vsel %vm7774, %v7787, 0.0
    %7789 = vadd.xlane.f32.xlu0 %v7788
    %v7790 = vpop.xlane.xlu0 %7789
    %v7791 = vmul.f32 %v7790, %v7784
    %v7792 = vadd.f32 %v7791, 1e-05
    %v7793 = vrsqrt.pop %v7792
    %v7794 = vmul.f32 %v7793, %v7792
    %v7795 = vmul.f32 %v7794, %v7793
    %v7796 = vmul.f32 0.5, %v7795
    %v7797 = vsub.f32 1.5, %v7796
    %v7798 = vmul.f32 %v7793, %v7797
    %vm7799 = vweird.f32 %v7792
    %vm7800 = vweird.f32 %v7793
    %vm7801 = vmor %vm7799, %vm7800
    %v7802 = vsel %vm7801, %v7793, %v7798
    %v7803 = vmul.f32 %v7786, %v7802
    %v7804 = vperm.slane %v7591, 1
    %v7805 = vmul.f32 %v7803, %v7804
    %v7806 = vperm.slane %v7591, 2
    %v7807 = vadd.f32 %v7805, %v7806
    %v7808 = vmax.f32 %v7807, 0.0
    %7809 = vst.msk [vmem:[#allocation9] sm:$0x3] %vm7774, %v7808
    // Predicated region
    $region68: #{tpu_custom_call.1} parent=1 // pred_check
      _
    $region69: #{tpu_custom_call.1} parent=1 // pred_check_branch
      %7811 = sbr.rel (0) target = $region71
    $region70: #{tpu_custom_call.1} parent=1 // pred_region
      %7813 = vsyncadd [#allocation10], 0
      %s7815 = sshll.u32 [#allocation9], 4
      %s7816 = int_to_ptr.vmem [resolvable:$true] %s7815
      %s7817 = sshll.u32 %s9, 4
      %s7818 = int_to_ptr.hbm [resolvable:$true] %s7817
      %7820 = dma.vmem_to_hbm [thread:$0]  %s7816, 32, %s7818, [#allocation10]
    $region71: #{tpu_custom_call.1} parent=1 // pred_fallthru
      _
    // Predicated region
    $region72: #{tpu_custom_call.1} parent=1 // pred_check
      _
    $region73: #{tpu_custom_call.1} parent=1 // pred_check_branch
      %7822 = sbr.rel (0) target = $region75
    $region74: #{tpu_custom_call.1} parent=1 // pred_region
      %7824 = dma.done [#allocation10], 32
    $region75: #{tpu_custom_call.1} parent=1 // pred_fallthru
      _
    %7825 = vsyncpa [#allocation10], 1
  %7826 = vsyncmov [#allocation8]
  %s7827 = vpop.sfrf %7826
  %p7828 = scmp.eq.s32.totalorder %s7827, 0
  %p7829 = pneg %p7828
  %7831 = shalt.err (%p7829)
  %s7832 = scalar_lea.sflag [#allocation8], 1
  %7833 = vsyncmov %s7832
  %s7834 = vpop.sfrf %7833
  %p7835 = scmp.eq.s32.totalorder %s7834, 0
  %p7836 = pneg %p7835
  %7838 = shalt.err (%p7836)

</llo_original>
